<compile_context>
chip_gen: v6e
topology: v6e:2x2x1
jax: 0.10.0
libtpu: 0.0.40
codegen_flags: <defaults>
</compile_context>

<pallas_src>
import jax
import jax.numpy as jnp
from jax.experimental import pallas as pl
from jax.experimental.pallas import tpu as pltpu

BN_EPS = 1e-5
LANE = 128      # channel padding target (vreg lane width)
SUB = 8         # sublane granularity
DATA0 = 8       # column where data starts inside the staging buffer
                # (positive multiple of 8 so interior stores are aligned)


def _round_up(a, b):
    return (a + b - 1) // b * b


def _conv3x3_im2col(pad, patches, wmat_ref, H, WA):
    """3x3 conv over the zero-halo staging buffer via im2col + one MXU matmul.

    pad      : (H+2, WP, CP) bf16 ref; data rows [1, 1+H), data columns start
               at DATA0; all columns < DATA0 and >= DATA0+W are zero.
    patches  : (H*WA, 9*CP) bf16 ref, im2col scratch (rebuilt every call).
    wmat_ref : (9*CP, CP) bf16 ref; row (3*dy + dx)*CP + ci = w[dy, dx, ci, :].
    Returns  : (H*WA, CP) f32; valid conv outputs live in slab columns [0, W).
    """
    CP = pad.shape[2]
    for dx in range(3):
        # One sublane-shifted view per horizontal tap, reused for all dy.
        shifted = pad[:, DATA0 - 1 + dx:DATA0 - 1 + dx + WA, :]   # (H+2, WA, CP)
        for dy in range(3):
            t = dy * 3 + dx
            patches[:, t * CP:(t + 1) * CP] = (
                shifted[dy:dy + H, :, :].reshape(H * WA, CP))
    # Single big-K matmul: (H*WA, 9*CP) @ (9*CP, CP), bf16 in / f32 accumulate.
    return jnp.dot(patches[...], wmat_ref[...],
                   preferred_element_type=jnp.float32)


def _basic_block_kernel(x_ref, w1_ref, w2_ref, b1_ref, b2_ref,
                        o_ref, pad, patches):
    """One batch element per grid step.

    x_ref   : (1, H, W, CP) bf16   NHWC input, channels padded to CP (lanes)
    w*_ref  : (9*CP, CP)    bf16   im2col conv weights with BN scale folded in
    b*_ref  : (1, CP)       f32    folded BN shift
    o_ref   : (1, H, W, CP) bf16
    pad     : (H+2, WP, CP) bf16   zero-halo staging buffer (shared by both convs)
    patches : (H*WA, 9*CP)  bf16   im2col scratch
    """
    H, W, CP = o_ref.shape[1], o_ref.shape[2], o_ref.shape[3]
    Hp, WP = pad.shape[0], pad.shape[1]
    WA = patches.shape[0] // H

    # --- re-zero only the halo ring of the staging buffer -------------------
    # Done every step (NOT under pl.when(program_id == 0)): scratch is
    # per-TensorCore and the batch axis is "parallel"; a core that only runs
    # later grid steps would otherwise see uninitialised halo.  Correctness of
    # the no-mask conv2 path below also relies on this staying per-step.
    zrow = jnp.zeros((1, WP, CP), pad.dtype)
    pad[0:1, :, :] = zrow                                                # top halo row
    pad[Hp - 1:Hp, :, :] = zrow                                          # bottom halo row
    pad[:, 0:DATA0, :] = jnp.zeros((Hp, DATA0, CP), pad.dtype)           # left halo cols
    pad[:, DATA0 + W:, :] = jnp.zeros((Hp, WP - DATA0 - W, CP), pad.dtype)  # right halo cols
    #   (extends to the end of the buffer so the dx=2 tap never reads
    #    uninitialised VMEM)

    # --- conv1: stage x (bf16) into the zero-halo buffer (aligned write) ----
    pad[1:1 + H, DATA0:DATA0 + W, :] = x_ref[0]
    acc = _conv3x3_im2col(pad, patches, w1_ref, H, WA)       # (H*WA, CP) f32

    # bn1 shift (scale already folded into w1) + relu, in f32
    h1 = jnp.maximum(acc + b1_ref[...], 0.0).reshape(H, WA, CP)

    # --- conv2: store only the W valid columns back into the same buffer ----
    # Columns >= DATA0+W are still zero from the per-step halo re-zero, so no
    # masking of the WA-W junk columns is needed.
    pad[1:1 + H, DATA0:DATA0 + W, :] = h1[:, :W, :].astype(pad.dtype)
    acc = _conv3x3_im2col(pad, patches, w2_ref, H, WA)       # (H*WA, CP) f32

    # bn2 shift + residual + relu (all f32); crop the W valid (8-aligned) cols;
    # only the final store rounds to bf16.
    out = acc.reshape(H, WA, CP)[:, :W, :]
    out = out + b2_ref[...] + x_ref[0].astype(jnp.float32)
    o_ref[...] = jnp.maximum(out, 0.0).reshape(1, H, W, CP).astype(o_ref.dtype)


def _im2col_weights(w_oihw, scale_c, cp):
    """OIHW (Cout, Cin, 3, 3) -> (9*cp, cp) bf16 with the BN scale folded into
    the output channels (in f32, before the bf16 cast).
    Row layout: (3*dy + dx)*cp + ci = w[dy, dx, ci, :]."""
    cout, cin, kh, kw = w_oihw.shape
    w = w_oihw.astype(jnp.float32) * scale_c[:, None, None, None]   # fold BN scale
    w = jnp.transpose(w, (2, 3, 1, 0))                              # HWIO
    w = jnp.pad(w, ((0, 0), (0, 0), (0, cp - cin), (0, cp - cout)))
    return w.reshape(kh * kw * cp, cp).astype(jnp.bfloat16)


def _fold_bn(gamma, beta, mean, var, cp, eps=BN_EPS):
    """Eval-mode BN folded to y = x*scale + shift.

    Returns (scale (C,) f32  -- folded into the conv weights by the wrapper,
             shift (1, cp) f32 -- added inside the kernel)."""
    scale = gamma / jnp.sqrt(var + eps)
    shift = beta - mean * scale
    c = gamma.shape[0]
    shift = jnp.pad(shift, (0, cp - c)).reshape(1, cp).astype(jnp.float32)
    return scale.astype(jnp.float32), shift


def _vmem_limit_bytes(H, W, CP, WA, WP):
    """Scoped-VMEM limit derived from actual buffer sizes (with headroom)."""
    bf16, f32 = 2, 4
    x_blk = H * W * CP * bf16
    out_blk = H * W * CP * bf16
    w_blk = 9 * CP * CP * bf16
    bn_blk = CP * f32
    pad_scr = (H + 2) * WP * CP * bf16
    pat_scr = H * WA * 9 * CP * bf16
    live_f32 = 2 * H * WA * CP * f32                 # acc / h1 worst-case spill
    total = (2 * (x_blk + out_blk)                   # double-buffered I/O blocks
             + 2 * (2 * w_blk + 2 * bn_blk)          # double-buffered params
             + pad_scr + pat_scr + live_f32)
    total = total * 3 // 2 + (4 << 20)               # compiler-temporary headroom
    # Clamp: >=16 MiB floor, <=56 MiB so it stays inside v7x's 64 MiB VMEM.
    return int(min(max(total, 16 << 20), 56 << 20))


def basic_block_forward(x_nchw, conv1_w_oihw, conv2_w_oihw, bn1, bn2, eps=BN_EPS):
    """PyTorch BasicBlock forward.  x_nchw: (N, C, H, W) f32 -> (N, C, H, W) f32.

    bn1/bn2 = (gamma, beta, running_mean, running_var), each shape (C,).
    """
    N, C, H, W = x_nchw.shape
    assert conv1_w_oihw.shape == (C, C, 3, 3) and conv2_w_oihw.shape == (C, C, 3, 3), (
        "downsample=None / stride=1 path requires inplanes == planes")
    assert W % SUB == 0, "demo kernel assumes W is a multiple of 8"

    CP = _round_up(C, LANE)                    # channels padded to lane width
    WA = W + SUB                               # im2col slab width (junk cols at [W, WA))
    WP = _round_up(DATA0 + WA + 1, 2 * SUB)    # staging-buffer width (16-aligned)

    # Lane-dense NHWC, bf16 activations (spatial halo is built inside the kernel).
    # TODO(synk): in a full network keep activations in padded-NHWC bf16 between
    # blocks instead of paying this transpose/pad (and the reverse) per call.
    x = jnp.pad(jnp.transpose(x_nchw, (0, 2, 3, 1)).astype(jnp.bfloat16),
                ((0, 0), (0, 0), (0, 0), (0, CP - C)))

    s1, b1 = _fold_bn(*bn1, CP, eps)
    s2, b2 = _fold_bn(*bn2, CP, eps)
    w1 = _im2col_weights(conv1_w_oihw, s1, CP)     # BN1 scale folded in
    w2 = _im2col_weights(conv2_w_oihw, s2, CP)     # BN2 scale folded in

    out_nhwc = pl.pallas_call(
        _basic_block_kernel,
        out_shape=jax.ShapeDtypeStruct((N, H, W, CP), jnp.bfloat16),
        grid_spec=pltpu.PrefetchScalarGridSpec(
            num_scalar_prefetch=0,
            grid=(N,),
            in_specs=[
                pl.BlockSpec((1, H, W, CP), lambda n: (n, 0, 0, 0)),   # x (NHWC, lane-dense)
                pl.BlockSpec((9 * CP, CP), lambda n: (0, 0)),          # conv1 weights (BN1 scale folded)
                pl.BlockSpec((9 * CP, CP), lambda n: (0, 0)),          # conv2 weights (BN2 scale folded)
                pl.BlockSpec((1, CP), lambda n: (0, 0)),               # bn1 shift
                pl.BlockSpec((1, CP), lambda n: (0, 0)),               # bn2 shift
            ],
            out_specs=pl.BlockSpec((1, H, W, CP), lambda n: (n, 0, 0, 0)),
            scratch_shapes=[
                pltpu.VMEM((H + 2, WP, CP), jnp.bfloat16),     # zero-halo staging buffer
                pltpu.VMEM((H * WA, 9 * CP), jnp.bfloat16),    # im2col patches
            ],
        ),
        compiler_params=pltpu.CompilerParams(
            dimension_semantics=("parallel",),
            vmem_limit_bytes=_vmem_limit_bytes(H, W, CP, WA, WP),
        ),
    )(x, w1, w2, b1, b2)

    # Crop channel padding, back to NCHW f32 (drop-in interface for the demo).
    return jnp.transpose(out_nhwc[..., :C], (0, 3, 1, 2)).astype(jnp.float32)


# ----------------------------------------------------------------------------
# Pure-JAX references
# ----------------------------------------------------------------------------
def _conv_ref(a, w):
    return jax.lax.conv_general_dilated(
        a, w, window_strides=(1, 1), padding=((1, 1), (1, 1)),
        dimension_numbers=("NCHW", "OIHW", "NCHW"),
        precision=jax.lax.Precision.HIGHEST)


def _ref_forward_mixed(x, w1_oihw, w2_oihw, bn1, bn2, eps=BN_EPS):
    """Models the kernel's precision policy exactly: BN scale folded into bf16
    conv weights, bf16 conv operands / f32 accumulation, f32 pointwise math,
    bf16 final store."""
    q = lambda t: t.astype(jnp.bfloat16).astype(jnp.float32)

    def fold(gamma, beta, mean, var):
        s = gamma / jnp.sqrt(var + eps)
        return s, beta - mean * s

    s1, b1 = fold(*bn1)
    s2, b2 = fold(*bn2)
    w1f = q(w1_oihw * s1[:, None, None, None])
    w2f = q(w2_oihw * s2[:, None, None, None])

    h = jax.nn.relu(_conv_ref(q(x), w1f) + b1[None, :, None, None])
    out = _conv_ref(q(h), w2f) + b2[None, :, None, None] + q(x)
    return q(jax.nn.relu(out))


def _ref_forward_f32(x, w1_oihw, w2_oihw, bn1, bn2, eps=BN_EPS):
    """Pure-f32 reference matching the PyTorch module (eval-mode BN)."""
    def bn(a, g, b, m, v):
        g, b, m, v = (t[None, :, None, None] for t in (g, b, m, v))
        return (a - m) / jnp.sqrt(v + eps) * g + b

    out = jax.nn.relu(bn(_conv_ref(x, w1_oihw), *bn1))
    out = bn(_conv_ref(out, w2_oihw), *bn2)
    return jax.nn.relu(out + x)


if __name__ == "__main__":
    N, C, H, W = 2, 4, 16, 16          # inplanes = planes = 4 (stride=1, no downsample)
    key = jax.random.PRNGKey(0)
    k = jax.random.split(key, 11)

    x = jax.random.normal(k[0], (N, C, H, W), jnp.float32)
    conv1_w = jax.random.normal(k[1], (C, C, 3, 3), jnp.float32) * 0.2   # OIHW
    conv2_w = jax.random.normal(k[2], (C, C, 3, 3), jnp.float32) * 0.2   # OIHW
    bn1 = (1.0 + 0.1 * jax.random.normal(k[3], (C,), jnp.float32),       # gamma
           0.1 * jax.random.normal(k[4], (C,), jnp.float32),             # beta
           0.1 * jax.random.normal(k[5], (C,), jnp.float32),             # running_mean
           jax.random.uniform(k[6], (C,), jnp.float32, 0.5, 1.5))        # running_var
    bn2 = (1.0 + 0.1 * jax.random.normal(k[7], (C,), jnp.float32),
           0.1 * jax.random.normal(k[8], (C,), jnp.float32),
           0.1 * jax.random.normal(k[9], (C,), jnp.float32),
           jax.random.uniform(k[10], (C,), jnp.float32, 0.5, 1.5))

    out = jax.jit(basic_block_forward)(x, conv1_w, conv2_w, bn1, bn2)
    out = jax.block_until_ready(out)

    ref_mixed = _ref_forward_mixed(x, conv1_w, conv2_w, bn1, bn2)
    ref_f32 = _ref_forward_f32(x, conv1_w, conv2_w, bn1, bn2)

    assert out.shape == (N, C, H, W) and out.dtype == jnp.float32
    err_mixed = float(jnp.max(jnp.abs(out - ref_mixed)))
    err_f32 = float(jnp.max(jnp.abs(out - ref_f32)))
    assert jnp.allclose(out, ref_mixed, rtol=2e-2, atol=2e-2), (
        f"mismatch vs mixed-precision reference: max abs err = {err_mixed}")
    assert jnp.allclose(out, ref_f32, rtol=6e-2, atol=6e-2), (
        f"mismatch vs f32 reference: max abs err = {err_f32}")
    print("KERNEL_OK")
</pallas_src>

<mosaic_0001>
module attributes {stable_mosaic.version = 11 : i64} {
  func.func @_basic_block_kernel(%arg0: i32, %arg1: memref<1x16x16x128xbf16, #tpu.memory_space<vmem>>, %arg2: memref<1152x128xbf16, #tpu.memory_space<vmem>>, %arg3: memref<1152x128xbf16, #tpu.memory_space<vmem>>, %arg4: memref<1x128xf32, #tpu.memory_space<vmem>>, %arg5: memref<1x128xf32, #tpu.memory_space<vmem>>, %arg6: memref<1x16x16x128xbf16, #tpu.memory_space<vmem>>, %arg7: memref<18x48x128xbf16, #tpu.memory_space<vmem>>, %arg8: memref<384x1152xbf16, #tpu.memory_space<vmem>>) attributes {dimension_semantics = [#tpu.dimension_semantics<parallel>], iteration_bounds = array<i64: 2>, scalar_prefetch = 0 : i64, scratch_operands = 2 : i64, tpu.core_type = #tpu.core_type<tc>, window_params = [{transform_indices = @transform_0, window_bounds = array<i64: 1, 16, 16, 128>}, {pipeline_mode = #tpu.pipeline_mode<synchronous>, transform_indices = @transform_1, window_bounds = array<i64: 1152, 128>}, {pipeline_mode = #tpu.pipeline_mode<synchronous>, transform_indices = @transform_2, window_bounds = array<i64: 1152, 128>}, {pipeline_mode = #tpu.pipeline_mode<synchronous>, transform_indices = @transform_3, window_bounds = array<i64: 1, 128>}, {pipeline_mode = #tpu.pipeline_mode<synchronous>, transform_indices = @transform_4, window_bounds = array<i64: 1, 128>}, {transform_indices = @transform_5, window_bounds = array<i64: 1, 16, 16, 128>}]} {
    %cst = arith.constant 0.000000e+00 : bf16
    %0 = vector.broadcast %cst : bf16 to vector<1x48x128xbf16>
    %c0 = arith.constant 0 : index
    %c0_0 = arith.constant 0 : index
    %c0_1 = arith.constant 0 : index
    %1 = vector.load %arg7[%c0, %c0_0, %c0_1] : memref<18x48x128xbf16, #tpu.memory_space<vmem>>, vector<1x48x128xbf16>
    tpu.vector_store %arg7[%c0, %c0_0, %c0_1], %0 {strides = array<i32>} : memref<18x48x128xbf16, #tpu.memory_space<vmem>>, vector<1x48x128xbf16>,
    %c17 = arith.constant 17 : index
    %c0_2 = arith.constant 0 : index
    %c0_3 = arith.constant 0 : index
    %2 = vector.load %arg7[%c17, %c0_2, %c0_3] : memref<18x48x128xbf16, #tpu.memory_space<vmem>>, vector<1x48x128xbf16>
    tpu.vector_store %arg7[%c17, %c0_2, %c0_3], %0 {strides = array<i32>} : memref<18x48x128xbf16, #tpu.memory_space<vmem>>, vector<1x48x128xbf16>,
    %cst_4 = arith.constant 0.000000e+00 : bf16
    %3 = vector.broadcast %cst_4 : bf16 to vector<18x8x128xbf16>
    %c0_5 = arith.constant 0 : index
    %c0_6 = arith.constant 0 : index
    %c0_7 = arith.constant 0 : index
    %4 = vector.load %arg7[%c0_5, %c0_6, %c0_7] : memref<18x48x128xbf16, #tpu.memory_space<vmem>>, vector<18x8x128xbf16>
    tpu.vector_store %arg7[%c0_5, %c0_6, %c0_7], %3 {strides = array<i32>} : memref<18x48x128xbf16, #tpu.memory_space<vmem>>, vector<18x8x128xbf16>,
    %cst_8 = arith.constant 0.000000e+00 : bf16
    %5 = vector.broadcast %cst_8 : bf16 to vector<18x24x128xbf16>
    %c0_9 = arith.constant 0 : index
    %c24 = arith.constant 24 : index
    %c0_10 = arith.constant 0 : index
    %6 = vector.load %arg7[%c0_9, %c24, %c0_10] : memref<18x48x128xbf16, #tpu.memory_space<vmem>>, vector<18x24x128xbf16>
    tpu.vector_store %arg7[%c0_9, %c24, %c0_10], %5 {strides = array<i32>} : memref<18x48x128xbf16, #tpu.memory_space<vmem>>, vector<18x24x128xbf16>,
    %c0_11 = arith.constant 0 : index
    %c0_12 = arith.constant 0 : index
    %c0_13 = arith.constant 0 : index
    %c0_14 = arith.constant 0 : index
    %7 = vector.load %arg1[%c0_11, %c0_12, %c0_13, %c0_14] : memref<1x16x16x128xbf16, #tpu.memory_space<vmem>>, vector<1x16x16x128xbf16>
    %8 = vector.shape_cast %7 : vector<1x16x16x128xbf16> to vector<16x16x128xbf16>
    %c1 = arith.constant 1 : index
    %c8 = arith.constant 8 : index
    %c0_15 = arith.constant 0 : index
    %9 = vector.load %arg7[%c1, %c8, %c0_15] : memref<18x48x128xbf16, #tpu.memory_space<vmem>>, vector<16x16x128xbf16>
    tpu.vector_store %arg7[%c1, %c8, %c0_15], %8 {strides = array<i32>} : memref<18x48x128xbf16, #tpu.memory_space<vmem>>, vector<16x16x128xbf16>,
    %c0_16 = arith.constant 0 : index
    %c7 = arith.constant 7 : index
    %c0_17 = arith.constant 0 : index
    %10 = vector.load %arg7[%c0_16, %c7, %c0_17] : memref<18x48x128xbf16, #tpu.memory_space<vmem>>, vector<18x24x128xbf16>
    %11 = vector.extract_strided_slice %10 {offsets = [0, 0, 0], sizes = [16, 24, 128], strides = [1, 1, 1]} : vector<18x24x128xbf16> to vector<16x24x128xbf16>
    %12 = vector.shape_cast %11 : vector<16x24x128xbf16> to vector<384x128xbf16>
    %c0_18 = arith.constant 0 : index
    %c0_19 = arith.constant 0 : index
    %13 = vector.load %arg8[%c0_18, %c0_19] : memref<384x1152xbf16, #tpu.memory_space<vmem>>, vector<384x128xbf16>
    tpu.vector_store %arg8[%c0_18, %c0_19], %12 {strides = array<i32>} : memref<384x1152xbf16, #tpu.memory_space<vmem>>, vector<384x128xbf16>,
    %14 = vector.extract_strided_slice %10 {offsets = [1, 0, 0], sizes = [16, 24, 128], strides = [1, 1, 1]} : vector<18x24x128xbf16> to vector<16x24x128xbf16>
    %15 = vector.shape_cast %14 : vector<16x24x128xbf16> to vector<384x128xbf16>
    %c0_20 = arith.constant 0 : index
    %c384 = arith.constant 384 : index
    %16 = vector.load %arg8[%c0_20, %c384] : memref<384x1152xbf16, #tpu.memory_space<vmem>>, vector<384x128xbf16>
    tpu.vector_store %arg8[%c0_20, %c384], %15 {strides = array<i32>} : memref<384x1152xbf16, #tpu.memory_space<vmem>>, vector<384x128xbf16>,
    %17 = vector.extract_strided_slice %10 {offsets = [2, 0, 0], sizes = [16, 24, 128], strides = [1, 1, 1]} : vector<18x24x128xbf16> to vector<16x24x128xbf16>
    %18 = vector.shape_cast %17 : vector<16x24x128xbf16> to vector<384x128xbf16>
    %c0_21 = arith.constant 0 : index
    %c768 = arith.constant 768 : index
    %19 = vector.load %arg8[%c0_21, %c768] : memref<384x1152xbf16, #tpu.memory_space<vmem>>, vector<384x128xbf16>
    tpu.vector_store %arg8[%c0_21, %c768], %18 {strides = array<i32>} : memref<384x1152xbf16, #tpu.memory_space<vmem>>, vector<384x128xbf16>,
    %c0_22 = arith.constant 0 : index
    %c8_23 = arith.constant 8 : index
    %c0_24 = arith.constant 0 : index
    %20 = vector.load %arg7[%c0_22, %c8_23, %c0_24] : memref<18x48x128xbf16, #tpu.memory_space<vmem>>, vector<18x24x128xbf16>
    %21 = vector.extract_strided_slice %20 {offsets = [0, 0, 0], sizes = [16, 24, 128], strides = [1, 1, 1]} : vector<18x24x128xbf16> to vector<16x24x128xbf16>
    %22 = vector.shape_cast %21 : vector<16x24x128xbf16> to vector<384x128xbf16>
    %c0_25 = arith.constant 0 : index
    %c128 = arith.constant 128 : index
    %23 = vector.load %arg8[%c0_25, %c128] : memref<384x1152xbf16, #tpu.memory_space<vmem>>, vector<384x128xbf16>
    tpu.vector_store %arg8[%c0_25, %c128], %22 {strides = array<i32>} : memref<384x1152xbf16, #tpu.memory_space<vmem>>, vector<384x128xbf16>,
    %24 = vector.extract_strided_slice %20 {offsets = [1, 0, 0], sizes = [16, 24, 128], strides = [1, 1, 1]} : vector<18x24x128xbf16> to vector<16x24x128xbf16>
    %25 = vector.shape_cast %24 : vector<16x24x128xbf16> to vector<384x128xbf16>
    %c0_26 = arith.constant 0 : index
    %c512 = arith.constant 512 : index
    %26 = vector.load %arg8[%c0_26, %c512] : memref<384x1152xbf16, #tpu.memory_space<vmem>>, vector<384x128xbf16>
    tpu.vector_store %arg8[%c0_26, %c512], %25 {strides = array<i32>} : memref<384x1152xbf16, #tpu.memory_space<vmem>>, vector<384x128xbf16>,
    %27 = vector.extract_strided_slice %20 {offsets = [2, 0, 0], sizes = [16, 24, 128], strides = [1, 1, 1]} : vector<18x24x128xbf16> to vector<16x24x128xbf16>
    %28 = vector.shape_cast %27 : vector<16x24x128xbf16> to vector<384x128xbf16>
    %c0_27 = arith.constant 0 : index
    %c896 = arith.constant 896 : index
    %29 = vector.load %arg8[%c0_27, %c896] : memref<384x1152xbf16, #tpu.memory_space<vmem>>, vector<384x128xbf16>
    tpu.vector_store %arg8[%c0_27, %c896], %28 {strides = array<i32>} : memref<384x1152xbf16, #tpu.memory_space<vmem>>, vector<384x128xbf16>,
    %c0_28 = arith.constant 0 : index
    %c9 = arith.constant 9 : index
    %c0_29 = arith.constant 0 : index
    %30 = vector.load %arg7[%c0_28, %c9, %c0_29] : memref<18x48x128xbf16, #tpu.memory_space<vmem>>, vector<18x24x128xbf16>
    %31 = vector.extract_strided_slice %30 {offsets = [0, 0, 0], sizes = [16, 24, 128], strides = [1, 1, 1]} : vector<18x24x128xbf16> to vector<16x24x128xbf16>
    %32 = vector.shape_cast %31 : vector<16x24x128xbf16> to vector<384x128xbf16>
    %c0_30 = arith.constant 0 : index
    %c256 = arith.constant 256 : index
    %33 = vector.load %arg8[%c0_30, %c256] : memref<384x1152xbf16, #tpu.memory_space<vmem>>, vector<384x128xbf16>
    tpu.vector_store %arg8[%c0_30, %c256], %32 {strides = array<i32>} : memref<384x1152xbf16, #tpu.memory_space<vmem>>, vector<384x128xbf16>,
    %34 = vector.extract_strided_slice %30 {offsets = [1, 0, 0], sizes = [16, 24, 128], strides = [1, 1, 1]} : vector<18x24x128xbf16> to vector<16x24x128xbf16>
    %35 = vector.shape_cast %34 : vector<16x24x128xbf16> to vector<384x128xbf16>
    %c0_31 = arith.constant 0 : index
    %c640 = arith.constant 640 : index
    %36 = vector.load %arg8[%c0_31, %c640] : memref<384x1152xbf16, #tpu.memory_space<vmem>>, vector<384x128xbf16>
    tpu.vector_store %arg8[%c0_31, %c640], %35 {strides = array<i32>} : memref<384x1152xbf16, #tpu.memory_space<vmem>>, vector<384x128xbf16>,
    %37 = vector.extract_strided_slice %30 {offsets = [2, 0, 0], sizes = [16, 24, 128], strides = [1, 1, 1]} : vector<18x24x128xbf16> to vector<16x24x128xbf16>
    %38 = vector.shape_cast %37 : vector<16x24x128xbf16> to vector<384x128xbf16>
    %c0_32 = arith.constant 0 : index
    %c1024 = arith.constant 1024 : index
    %39 = vector.load %arg8[%c0_32, %c1024] : memref<384x1152xbf16, #tpu.memory_space<vmem>>, vector<384x128xbf16>
    tpu.vector_store %arg8[%c0_32, %c1024], %38 {strides = array<i32>} : memref<384x1152xbf16, #tpu.memory_space<vmem>>, vector<384x128xbf16>,
    %c0_33 = arith.constant 0 : index
    %c0_34 = arith.constant 0 : index
    %40 = vector.load %arg8[%c0_33, %c0_34] : memref<384x1152xbf16, #tpu.memory_space<vmem>>, vector<384x1152xbf16>
    %c0_35 = arith.constant 0 : index
    %c0_36 = arith.constant 0 : index
    %41 = vector.load %arg2[%c0_35, %c0_36] : memref<1152x128xbf16, #tpu.memory_space<vmem>>, vector<1152x128xbf16>
    %cst_37 = arith.constant dense<0.000000e+00> : vector<384x128xf32>
    %42 = tpu.matmul %40, %41, %cst_37 {dimension_numbers = #tpu.dot_dimension_numbers<[1], [0], [0], [1], [0, 0, 1, 1], [], []>} : vector<384x1152xbf16>, vector<1152x128xbf16>, vector<384x128xf32> -> vector<384x128xf32>
    %c0_38 = arith.constant 0 : index
    %c0_39 = arith.constant 0 : index
    %43 = vector.load %arg4[%c0_38, %c0_39] : memref<1x128xf32, #tpu.memory_space<vmem>>, vector<1x128xf32>
    %44 = vector.broadcast %43 : vector<1x128xf32> to vector<384x128xf32>
    %45 = arith.addf %42, %44 : vector<384x128xf32>
    %cst_40 = arith.constant 0.000000e+00 : f32
    %46 = vector.broadcast %cst_40 : f32 to vector<384x128xf32>
    %47 = arith.maximumf %45, %46 : vector<384x128xf32>
    %48 = vector.shape_cast %47 : vector<384x128xf32> to vector<16x24x128xf32>
    %49 = vector.extract_strided_slice %48 {offsets = [0, 0, 0], sizes = [16, 16, 128], strides = [1, 1, 1]} : vector<16x24x128xf32> to vector<16x16x128xf32>
    %50 = arith.truncf %49 : vector<16x16x128xf32> to vector<16x16x128xbf16>
    %c1_41 = arith.constant 1 : index
    %c8_42 = arith.constant 8 : index
    %c0_43 = arith.constant 0 : index
    %51 = vector.load %arg7[%c1_41, %c8_42, %c0_43] : memref<18x48x128xbf16, #tpu.memory_space<vmem>>, vector<16x16x128xbf16>
    tpu.vector_store %arg7[%c1_41, %c8_42, %c0_43], %50 {strides = array<i32>} : memref<18x48x128xbf16, #tpu.memory_space<vmem>>, vector<16x16x128xbf16>,
    %c0_44 = arith.constant 0 : index
    %c7_45 = arith.constant 7 : index
    %c0_46 = arith.constant 0 : index
    %52 = vector.load %arg7[%c0_44, %c7_45, %c0_46] : memref<18x48x128xbf16, #tpu.memory_space<vmem>>, vector<18x24x128xbf16>
    %53 = vector.extract_strided_slice %52 {offsets = [0, 0, 0], sizes = [16, 24, 128], strides = [1, 1, 1]} : vector<18x24x128xbf16> to vector<16x24x128xbf16>
    %54 = vector.shape_cast %53 : vector<16x24x128xbf16> to vector<384x128xbf16>
    %c0_47 = arith.constant 0 : index
    %c0_48 = arith.constant 0 : index
    %55 = vector.load %arg8[%c0_47, %c0_48] : memref<384x1152xbf16, #tpu.memory_space<vmem>>, vector<384x128xbf16>
    tpu.vector_store %arg8[%c0_47, %c0_48], %54 {strides = array<i32>} : memref<384x1152xbf16, #tpu.memory_space<vmem>>, vector<384x128xbf16>,
    %56 = vector.extract_strided_slice %52 {offsets = [1, 0, 0], sizes = [16, 24, 128], strides = [1, 1, 1]} : vector<18x24x128xbf16> to vector<16x24x128xbf16>
    %57 = vector.shape_cast %56 : vector<16x24x128xbf16> to vector<384x128xbf16>
    %c0_49 = arith.constant 0 : index
    %c384_50 = arith.constant 384 : index
    %58 = vector.load %arg8[%c0_49, %c384_50] : memref<384x1152xbf16, #tpu.memory_space<vmem>>, vector<384x128xbf16>
    tpu.vector_store %arg8[%c0_49, %c384_50], %57 {strides = array<i32>} : memref<384x1152xbf16, #tpu.memory_space<vmem>>, vector<384x128xbf16>,
    %59 = vector.extract_strided_slice %52 {offsets = [2, 0, 0], sizes = [16, 24, 128], strides = [1, 1, 1]} : vector<18x24x128xbf16> to vector<16x24x128xbf16>
    %60 = vector.shape_cast %59 : vector<16x24x128xbf16> to vector<384x128xbf16>
    %c0_51 = arith.constant 0 : index
    %c768_52 = arith.constant 768 : index
    %61 = vector.load %arg8[%c0_51, %c768_52] : memref<384x1152xbf16, #tpu.memory_space<vmem>>, vector<384x128xbf16>
    tpu.vector_store %arg8[%c0_51, %c768_52], %60 {strides = array<i32>} : memref<384x1152xbf16, #tpu.memory_space<vmem>>, vector<384x128xbf16>,
    %c0_53 = arith.constant 0 : index
    %c8_54 = arith.constant 8 : index
    %c0_55 = arith.constant 0 : index
    %62 = vector.load %arg7[%c0_53, %c8_54, %c0_55] : memref<18x48x128xbf16, #tpu.memory_space<vmem>>, vector<18x24x128xbf16>
    %63 = vector.extract_strided_slice %62 {offsets = [0, 0, 0], sizes = [16, 24, 128], strides = [1, 1, 1]} : vector<18x24x128xbf16> to vector<16x24x128xbf16>
    %64 = vector.shape_cast %63 : vector<16x24x128xbf16> to vector<384x128xbf16>
    %c0_56 = arith.constant 0 : index
    %c128_57 = arith.constant 128 : index
    %65 = vector.load %arg8[%c0_56, %c128_57] : memref<384x1152xbf16, #tpu.memory_space<vmem>>, vector<384x128xbf16>
    tpu.vector_store %arg8[%c0_56, %c128_57], %64 {strides = array<i32>} : memref<384x1152xbf16, #tpu.memory_space<vmem>>, vector<384x128xbf16>,
    %66 = vector.extract_strided_slice %62 {offsets = [1, 0, 0], sizes = [16, 24, 128], strides = [1, 1, 1]} : vector<18x24x128xbf16> to vector<16x24x128xbf16>
    %67 = vector.shape_cast %66 : vector<16x24x128xbf16> to vector<384x128xbf16>
    %c0_58 = arith.constant 0 : index
    %c512_59 = arith.constant 512 : index
    %68 = vector.load %arg8[%c0_58, %c512_59] : memref<384x1152xbf16, #tpu.memory_space<vmem>>, vector<384x128xbf16>
    tpu.vector_store %arg8[%c0_58, %c512_59], %67 {strides = array<i32>} : memref<384x1152xbf16, #tpu.memory_space<vmem>>, vector<384x128xbf16>,
    %69 = vector.extract_strided_slice %62 {offsets = [2, 0, 0], sizes = [16, 24, 128], strides = [1, 1, 1]} : vector<18x24x128xbf16> to vector<16x24x128xbf16>
    %70 = vector.shape_cast %69 : vector<16x24x128xbf16> to vector<384x128xbf16>
    %c0_60 = arith.constant 0 : index
    %c896_61 = arith.constant 896 : index
    %71 = vector.load %arg8[%c0_60, %c896_61] : memref<384x1152xbf16, #tpu.memory_space<vmem>>, vector<384x128xbf16>
    tpu.vector_store %arg8[%c0_60, %c896_61], %70 {strides = array<i32>} : memref<384x1152xbf16, #tpu.memory_space<vmem>>, vector<384x128xbf16>,
    %c0_62 = arith.constant 0 : index
    %c9_63 = arith.constant 9 : index
    %c0_64 = arith.constant 0 : index
    %72 = vector.load %arg7[%c0_62, %c9_63, %c0_64] : memref<18x48x128xbf16, #tpu.memory_space<vmem>>, vector<18x24x128xbf16>
    %73 = vector.extract_strided_slice %72 {offsets = [0, 0, 0], sizes = [16, 24, 128], strides = [1, 1, 1]} : vector<18x24x128xbf16> to vector<16x24x128xbf16>
    %74 = vector.shape_cast %73 : vector<16x24x128xbf16> to vector<384x128xbf16>
    %c0_65 = arith.constant 0 : index
    %c256_66 = arith.constant 256 : index
    %75 = vector.load %arg8[%c0_65, %c256_66] : memref<384x1152xbf16, #tpu.memory_space<vmem>>, vector<384x128xbf16>
    tpu.vector_store %arg8[%c0_65, %c256_66], %74 {strides = array<i32>} : memref<384x1152xbf16, #tpu.memory_space<vmem>>, vector<384x128xbf16>,
    %76 = vector.extract_strided_slice %72 {offsets = [1, 0, 0], sizes = [16, 24, 128], strides = [1, 1, 1]} : vector<18x24x128xbf16> to vector<16x24x128xbf16>
    %77 = vector.shape_cast %76 : vector<16x24x128xbf16> to vector<384x128xbf16>
    %c0_67 = arith.constant 0 : index
    %c640_68 = arith.constant 640 : index
    %78 = vector.load %arg8[%c0_67, %c640_68] : memref<384x1152xbf16, #tpu.memory_space<vmem>>, vector<384x128xbf16>
    tpu.vector_store %arg8[%c0_67, %c640_68], %77 {strides = array<i32>} : memref<384x1152xbf16, #tpu.memory_space<vmem>>, vector<384x128xbf16>,
    %79 = vector.extract_strided_slice %72 {offsets = [2, 0, 0], sizes = [16, 24, 128], strides = [1, 1, 1]} : vector<18x24x128xbf16> to vector<16x24x128xbf16>
    %80 = vector.shape_cast %79 : vector<16x24x128xbf16> to vector<384x128xbf16>
    %c0_69 = arith.constant 0 : index
    %c1024_70 = arith.constant 1024 : index
    %81 = vector.load %arg8[%c0_69, %c1024_70] : memref<384x1152xbf16, #tpu.memory_space<vmem>>, vector<384x128xbf16>
    tpu.vector_store %arg8[%c0_69, %c1024_70], %80 {strides = array<i32>} : memref<384x1152xbf16, #tpu.memory_space<vmem>>, vector<384x128xbf16>,
    %c0_71 = arith.constant 0 : index
    %c0_72 = arith.constant 0 : index
    %82 = vector.load %arg8[%c0_71, %c0_72] : memref<384x1152xbf16, #tpu.memory_space<vmem>>, vector<384x1152xbf16>
    %c0_73 = arith.constant 0 : index
    %c0_74 = arith.constant 0 : index
    %83 = vector.load %arg3[%c0_73, %c0_74] : memref<1152x128xbf16, #tpu.memory_space<vmem>>, vector<1152x128xbf16>
    %cst_75 = arith.constant dense<0.000000e+00> : vector<384x128xf32>
    %84 = tpu.matmul %82, %83, %cst_75 {dimension_numbers = #tpu.dot_dimension_numbers<[1], [0], [0], [1], [0, 0, 1, 1], [], []>} : vector<384x1152xbf16>, vector<1152x128xbf16>, vector<384x128xf32> -> vector<384x128xf32>
    %85 = vector.shape_cast %84 : vector<384x128xf32> to vector<16x24x128xf32>
    %86 = vector.extract_strided_slice %85 {offsets = [0, 0, 0], sizes = [16, 16, 128], strides = [1, 1, 1]} : vector<16x24x128xf32> to vector<16x16x128xf32>
    %c0_76 = arith.constant 0 : index
    %c0_77 = arith.constant 0 : index
    %87 = vector.load %arg5[%c0_76, %c0_77] : memref<1x128xf32, #tpu.memory_space<vmem>>, vector<1x128xf32>
    %88 = vector.shape_cast %87 : vector<1x128xf32> to vector<1x1x128xf32>
    %89 = vector.broadcast %88 : vector<1x1x128xf32> to vector<16x16x128xf32>
    %90 = arith.addf %86, %89 : vector<16x16x128xf32>
    %c0_78 = arith.constant 0 : index
    %c0_79 = arith.constant 0 : index
    %c0_80 = arith.constant 0 : index
    %c0_81 = arith.constant 0 : index
    %91 = vector.load %arg1[%c0_78, %c0_79, %c0_80, %c0_81] : memref<1x16x16x128xbf16, #tpu.memory_space<vmem>>, vector<1x16x16x128xbf16>
    %92 = vector.shape_cast %91 : vector<1x16x16x128xbf16> to vector<16x16x128xbf16>
    %93 = arith.extf %92 : vector<16x16x128xbf16> to vector<16x16x128xf32>
    %94 = arith.addf %90, %93 : vector<16x16x128xf32>
    %cst_82 = arith.constant 0.000000e+00 : f32
    %95 = vector.broadcast %cst_82 : f32 to vector<16x16x128xf32>
    %96 = arith.maximumf %94, %95 : vector<16x16x128xf32>
    %97 = vector.shape_cast %96 : vector<16x16x128xf32> to vector<1x16x16x128xf32>
    %98 = arith.truncf %97 : vector<1x16x16x128xf32> to vector<1x16x16x128xbf16>
    %c0_83 = arith.constant 0 : index
    %c0_84 = arith.constant 0 : index
    %c0_85 = arith.constant 0 : index
    %c0_86 = arith.constant 0 : index
    %99 = vector.load %arg6[%c0_83, %c0_84, %c0_85, %c0_86] : memref<1x16x16x128xbf16, #tpu.memory_space<vmem>>, vector<1x16x16x128xbf16>
    tpu.vector_store %arg6[%c0_83, %c0_84, %c0_85, %c0_86], %98 {strides = array<i32>} : memref<1x16x16x128xbf16, #tpu.memory_space<vmem>>, vector<1x16x16x128xbf16>,
    return
  }
  func.func @transform_0(%arg0: i32) -> (i32, i32, i32, i32) {
    %c0_i32 = arith.constant 0 : i32
    %c0_i32_0 = arith.constant 0 : i32
    %c0_i32_1 = arith.constant 0 : i32
    %c0_i32_2 = arith.constant 0 : i32
    return %arg0, %c0_i32, %c0_i32_0, %c0_i32_1 : i32, i32, i32, i32
  }
  func.func @transform_1(%arg0: i32) -> (i32, i32) {
    %c0_i32 = arith.constant 0 : i32
    %c0_i32_0 = arith.constant 0 : i32
    %c0_i32_1 = arith.constant 0 : i32
    return %c0_i32, %c0_i32_0 : i32, i32
  }
  func.func @transform_2(%arg0: i32) -> (i32, i32) {
    %c0_i32 = arith.constant 0 : i32
    %c0_i32_0 = arith.constant 0 : i32
    %c0_i32_1 = arith.constant 0 : i32
    return %c0_i32, %c0_i32_0 : i32, i32
  }
  func.func @transform_3(%arg0: i32) -> (i32, i32) {
    %c0_i32 = arith.constant 0 : i32
    %c0_i32_0 = arith.constant 0 : i32
    %c0_i32_1 = arith.constant 0 : i32
    return %c0_i32, %c0_i32_0 : i32, i32
  }
  func.func @transform_4(%arg0: i32) -> (i32, i32) {
    %c0_i32 = arith.constant 0 : i32
    %c0_i32_0 = arith.constant 0 : i32
    %c0_i32_1 = arith.constant 0 : i32
    return %c0_i32, %c0_i32_0 : i32, i32
  }
  func.func @transform_5(%arg0: i32) -> (i32, i32, i32, i32) {
    %c0_i32 = arith.constant 0 : i32
    %c0_i32_0 = arith.constant 0 : i32
    %c0_i32_1 = arith.constant 0 : i32
    %c0_i32_2 = arith.constant 0 : i32
    return %arg0, %c0_i32, %c0_i32_0, %c0_i32_1 : i32, i32, i32, i32
  }
}

</mosaic_0001>

<llo_original>
// kernel: basic_block_forward.1
$region0: #{basic_block_forward.1}
  #allocation0 [shape = 'u32[]', space=smem, size = 0x4, offset = 0x4, fixed_abs, tag = 'smem constant byte address 0x4 - core index']
  #allocation1 [shape = 'u32[144,128]{1,0:T(1,128)}', space=vmem, size = 0x12000, scoped, tag = 'internal scratch']
  #allocation2 [shape = 'bf16[18,48,128]{2,1,0:T(8,128)(2,1)}', space=vmem, size = 0x36000, scoped, tag = 'scratch operand']
  #allocation3 [shape = 'bf16[384,1152]{1,0:T(8,128)(2,1)}', space=vmem, size = 0xd8000, scoped, tag = 'scratch operand']
  %s0 = inlined_call_operand.vmem [shape: bf16[2,16,16,128], index: 0, kind: input, shape index: {}]
  %s1 = inlined_call_operand.vmem [shape: bf16[1152,128], index: 1, kind: input, shape index: {}]
  %s2 = inlined_call_operand.vmem [shape: bf16[1152,128], index: 2, kind: input, shape index: {}]
  %s3 = inlined_call_operand.vmem [shape: f32[1,128], index: 3, kind: input, shape index: {}]
  %s4 = inlined_call_operand.vmem [shape: f32[1,128], index: 4, kind: input, shape index: {}]
  %s5 = inlined_call_operand.vmem [shape: bf16[2,16,16,128], index: 5, kind: output, shape index: {}]
  %s6 = sld [smem:[#allocation0]]
  $region53: #{basic_block_forward.1} parent=0
    _
  %s8 = ssub.s32 1, %s6
  %s9 = scalar_select 0, %s8, %s6
  loop: start=0, step=1, limit=4
  $region2: #{basic_block_forward.1} parent=0 // loop_pre_header
    _
  $region3: #{basic_block_forward.1} parent=0 // loop_header
    %s11 = sphi 0, %s15
    %p12 = scmp.ge.s32.totalorder %s11, 4
    %s21 = sphi 0, %s23
    %s24 = sphi 0, %s21
    %s25 = sphi 0, %s24
    %s41 = sphi 0, %s25
    %s45 = sphi 0, %s45
    %s47 = sphi 0, %s45
    %s48 = sphi 0, %s47
    %s62 = sphi 0, %s48
    %s66 = sphi 0, %s66
    %s68 = sphi 0, %s66
    %s69 = sphi 0, %s68
    %s83 = sphi 0, %s69
    %s87 = sphi 0, %s87
    %s89 = sphi 0, %s87
    %s90 = sphi 0, %s89
    %s104 = sphi 0, %s90
    %s108 = sphi 0, %s108
    %s110 = sphi 0, %s108
    %s111 = sphi 0, %s110
    %s125 = sphi 0, %s111
    %s131 = sphi 0, %s133
    %s134 = sphi 0, %s131
    %s135 = sphi 0, %s134
    %s151 = sphi 0, %s135
  $region4: #{basic_block_forward.1} parent=0 // loop_header_branch
    %14 = sbr.rel (%p12) target = $region8
  $region5: #{basic_block_forward.1} parent=0 // loop_body
    %s16 = ssub.s32 %s11, 1
    %s17 = ssub.s32 %s11, 2
    %s18 = sadd.s32 %s11, 1
    %s19 = ssub.s32 %s11, %s18
    %p20 = scmp.eq.s32.totalorder %s19, 0
    %s22 = sadd.s32 %s21, 1
    %s23 = scalar_select %p20, %s21, %s22
    %p26 = pneg %p20
    %p27 = scmp.eq.s32.totalorder %s11, 1
    %p28 = por %p26, %p27
    %p29 = scmp.ne.s32.totalorder %s21, %s24
    %p30 = scmp.eq.s32.totalorder %s11, 0
    %p31 = por %p29, %p30
    %p32 = scmp.ne.s32.totalorder %s21, %s24
    %p33 = scmp.eq.s32.totalorder %s16, 1
    %p34 = por %p32, %p33
    %p35 = scmp.ne.s32.totalorder %s24, %s25
    %p36 = scmp.eq.s32.totalorder %s16, 0
    %p37 = por %p35, %p36
    %p38 = scmp.ne.s32.totalorder %s24, %s25
    %p39 = scmp.eq.s32.totalorder %s17, 1
    %p40 = por %p38, %p39
    %p42 = scmp.ne.s32.totalorder %s25, %s41
    %p43 = scmp.eq.s32.totalorder %s17, 0
    %p44 = por %p42, %p43
    %s46 = sadd.s32 %s45, 1
    %p49 = scmp.eq.s32.totalorder %s11, 1
    %p50 = scmp.ne.s32.totalorder %s45, %s47
    %p51 = scmp.eq.s32.totalorder %s11, 0
    %p52 = por %p50, %p51
    %p53 = scmp.ne.s32.totalorder %s45, %s47
    %p54 = scmp.eq.s32.totalorder %s16, 1
    %p55 = por %p53, %p54
    %p56 = scmp.ne.s32.totalorder %s47, %s48
    %p57 = scmp.eq.s32.totalorder %s16, 0
    %p58 = por %p56, %p57
    %p59 = scmp.ne.s32.totalorder %s47, %s48
    %p60 = scmp.eq.s32.totalorder %s17, 1
    %p61 = por %p59, %p60
    %p63 = scmp.ne.s32.totalorder %s48, %s62
    %p64 = scmp.eq.s32.totalorder %s17, 0
    %p65 = por %p63, %p64
    %s67 = sadd.s32 %s66, 1
    %p70 = scmp.eq.s32.totalorder %s11, 1
    %p71 = scmp.ne.s32.totalorder %s66, %s68
    %p72 = scmp.eq.s32.totalorder %s11, 0
    %p73 = por %p71, %p72
    %p74 = scmp.ne.s32.totalorder %s66, %s68
    %p75 = scmp.eq.s32.totalorder %s16, 1
    %p76 = por %p74, %p75
    %p77 = scmp.ne.s32.totalorder %s68, %s69
    %p78 = scmp.eq.s32.totalorder %s16, 0
    %p79 = por %p77, %p78
    %p80 = scmp.ne.s32.totalorder %s68, %s69
    %p81 = scmp.eq.s32.totalorder %s17, 1
    %p82 = por %p80, %p81
    %p84 = scmp.ne.s32.totalorder %s69, %s83
    %p85 = scmp.eq.s32.totalorder %s17, 0
    %p86 = por %p84, %p85
    %s88 = sadd.s32 %s87, 1
    %p91 = scmp.eq.s32.totalorder %s11, 1
    %p92 = scmp.ne.s32.totalorder %s87, %s89
    %p93 = scmp.eq.s32.totalorder %s11, 0
    %p94 = por %p92, %p93
    %p95 = scmp.ne.s32.totalorder %s87, %s89
    %p96 = scmp.eq.s32.totalorder %s16, 1
    %p97 = por %p95, %p96
    %p98 = scmp.ne.s32.totalorder %s89, %s90
    %p99 = scmp.eq.s32.totalorder %s16, 0
    %p100 = por %p98, %p99
    %p101 = scmp.ne.s32.totalorder %s89, %s90
    %p102 = scmp.eq.s32.totalorder %s17, 1
    %p103 = por %p101, %p102
    %p105 = scmp.ne.s32.totalorder %s90, %s104
    %p106 = scmp.eq.s32.totalorder %s17, 0
    %p107 = por %p105, %p106
    %s109 = sadd.s32 %s108, 1
    %p112 = scmp.eq.s32.totalorder %s11, 1
    %p113 = scmp.ne.s32.totalorder %s108, %s110
    %p114 = scmp.eq.s32.totalorder %s11, 0
    %p115 = por %p113, %p114
    %p116 = scmp.ne.s32.totalorder %s108, %s110
    %p117 = scmp.eq.s32.totalorder %s16, 1
    %p118 = por %p116, %p117
    %p119 = scmp.ne.s32.totalorder %s110, %s111
    %p120 = scmp.eq.s32.totalorder %s16, 0
    %p121 = por %p119, %p120
    %p122 = scmp.ne.s32.totalorder %s110, %s111
    %p123 = scmp.eq.s32.totalorder %s17, 1
    %p124 = por %p122, %p123
    %p126 = scmp.ne.s32.totalorder %s111, %s125
    %p127 = scmp.eq.s32.totalorder %s17, 0
    %p128 = por %p126, %p127
    %s129 = ssub.s32 %s11, %s18
    %p130 = scmp.eq.s32.totalorder %s129, 0
    %s132 = sadd.s32 %s131, 1
    %s133 = scalar_select %p130, %s131, %s132
    %p136 = pneg %p130
    %p137 = scmp.eq.s32.totalorder %s11, 1
    %p138 = por %p136, %p137
    %p139 = scmp.ne.s32.totalorder %s131, %s134
    %p140 = scmp.eq.s32.totalorder %s11, 0
    %p141 = por %p139, %p140
    %p142 = scmp.ne.s32.totalorder %s131, %s134
    %p143 = scmp.eq.s32.totalorder %s16, 1
    %p144 = por %p142, %p143
    %p145 = scmp.ne.s32.totalorder %s134, %s135
    %p146 = scmp.eq.s32.totalorder %s16, 0
    %p147 = por %p145, %p146
    %p148 = scmp.ne.s32.totalorder %s134, %s135
    %p149 = scmp.eq.s32.totalorder %s17, 1
    %p150 = por %p148, %p149
    %p152 = scmp.ne.s32.totalorder %s135, %s151
    %p153 = scmp.eq.s32.totalorder %s17, 0
    %p154 = por %p152, %p153
    %p155 = scmp.le.s32.totalorder 1, %s11
    %p156 = scmp.lt.s32.totalorder %s11, 3
    %p157 = pnand %p155, %p156
    %p158 = pneg %p157
    // Predicated region
    $region9: #{basic_block_forward.1} parent=5 // pred_check
      _
    $region10: #{basic_block_forward.1} parent=5 // pred_check_branch
      %160 = sbr.rel (%p157) target = $region12
    $region11: #{basic_block_forward.1} parent=5 // pred_region
      %s161 = ssub.s32 %s11, 1
      // Predicated region
      $region13: #{basic_block_forward.1} parent=11 // pred_check
        %p162 = pneg %p58
      $region14: #{basic_block_forward.1} parent=11 // pred_check_branch
        %164 = sbr.rel (%p162) target = $region16
      $region15: #{basic_block_forward.1} parent=11 // pred_region
        _
      $region16: #{basic_block_forward.1} parent=11 // pred_fallthru
        _
      // Predicated region
      $region17: #{basic_block_forward.1} parent=11 // pred_check
        %p165 = pneg %p79
      $region18: #{basic_block_forward.1} parent=11 // pred_check_branch
        %167 = sbr.rel (%p165) target = $region20
      $region19: #{basic_block_forward.1} parent=11 // pred_region
        _
      $region20: #{basic_block_forward.1} parent=11 // pred_fallthru
        _
      // Predicated region
      $region21: #{basic_block_forward.1} parent=11 // pred_check
        %p168 = pneg %p100
      $region22: #{basic_block_forward.1} parent=11 // pred_check_branch
        %170 = sbr.rel (%p168) target = $region24
      $region23: #{basic_block_forward.1} parent=11 // pred_region
        _
      $region24: #{basic_block_forward.1} parent=11 // pred_fallthru
        _
      // Predicated region
      $region25: #{basic_block_forward.1} parent=11 // pred_check
        %p171 = pneg %p121
      $region26: #{basic_block_forward.1} parent=11 // pred_check_branch
        %173 = sbr.rel (%p171) target = $region28
      $region27: #{basic_block_forward.1} parent=11 // pred_region
        _
      $region28: #{basic_block_forward.1} parent=11 // pred_fallthru
        _
    $region12: #{basic_block_forward.1} parent=5 // pred_fallthru
      _
    %p174 = scmp.lt.s32.totalorder %s11, 2
    // Predicated region
    $region29: #{basic_block_forward.1} parent=5 // pred_check
      %p175 = pneg %p174
    $region30: #{basic_block_forward.1} parent=5 // pred_check_branch
      %177 = sbr.rel (%p175) target = $region32
    $region31: #{basic_block_forward.1} parent=5 // pred_region
      // Predicated region
      $region33: #{basic_block_forward.1} parent=31 // pred_check
        %p178 = pneg %p31
      $region34: #{basic_block_forward.1} parent=31 // pred_check_branch
        %180 = sbr.rel (%p178) target = $region36
      $region35: #{basic_block_forward.1} parent=31 // pred_region
        %p181 = scmp.lt.s32.totalorder %s11, 1
        %s182 = scalar_select %p181, %s11, 1
        %s183 = smul.addr %s182, 32
        %s184 = smul.addr %s183, 4
        %s185 = scalar_lea.vmem %s0, %s184
      $region36: #{basic_block_forward.1} parent=31 // pred_fallthru
        _
    $region32: #{basic_block_forward.1} parent=5 // pred_fallthru
      _
    %p186 = scmp.le.s32.totalorder 1, %s11
    %p187 = scmp.lt.s32.totalorder %s11, 3
    %p188 = pnand %p186, %p187
    %p189 = pneg %p188
    // Predicated region
    $region37: #{basic_block_forward.1} parent=5 // pred_check
      _
    $region38: #{basic_block_forward.1} parent=5 // pred_check_branch
      %191 = sbr.rel (%p188) target = $region40
    $region39: #{basic_block_forward.1} parent=5 // pred_region
      %s192 = ssub.s32 %s11, 1
      %p193 = scmp.lt.s32.totalorder %s16, 1
      %s194 = scalar_select %p193, %s16, 1
      %s195 = smul.addr %s194, 32
      %s196 = smul.addr %s195, 4
      %s197 = scalar_lea.vmem %s0, %s196
      %p198 = pneg %p37
      %p199 = pneg %p34
      %p200 = pneg %p58
      %p201 = pneg %p55
      %p202 = pneg %p79
      %p203 = pneg %p76
      %p204 = pneg %p100
      %p205 = pneg %p97
      %p206 = pneg %p121
      %p207 = pneg %p118
      %p208 = pneg %p147
      %p209 = pneg %p144
      %p210 = scmp.lt.s32.totalorder %s16, 1
      %s211 = scalar_select %p210, %s16, 1
      %s212 = smul.addr %s211, 32
      %s213 = smul.addr %s212, 4
      %s214 = scalar_lea.vmem %s5, %s213
      %p215 = scmp.lt.s32.totalorder %s16, 1
      %s216 = scalar_select %p215, %s16, 1
      %s217 = smul.addr %s216, 32
      %s218 = smul.addr %s217, 4
      %s219 = scalar_lea.vmem %s0, %s218
      %p220 = scmp.lt.s32.totalorder %s16, 1
      %s221 = scalar_select %p220, %s16, 1
      %s222 = smul.addr %s221, 32
      %s223 = smul.addr %s222, 4
      %s224 = scalar_lea.vmem %s5, %s223
      %226 = vst [vmem:[#allocation2] sm:$0xf] 0
      %227 = vst [vmem:[#allocation2 + $0x4] sm:$0xf] 0
      %228 = vst [vmem:[#allocation2 + $0x8] sm:$0xf] 0
      %229 = vst [vmem:[#allocation2 + $0xc] sm:$0xf] 0
      %230 = vst [vmem:[#allocation2 + $0x10] sm:$0xf] 0
      %231 = vst [vmem:[#allocation2 + $0x14] sm:$0xf] 0
      %s232 = scalar_lea.vmem [#allocation2], 408
      %233 = vst [vmem:[%s232] sm:$0xf] 0
      %234 = vst [vmem:[%s232 + $0x4] sm:$0xf] 0
      %235 = vst [vmem:[%s232 + $0x8] sm:$0xf] 0
      %236 = vst [vmem:[%s232 + $0xc] sm:$0xf] 0
      %237 = vst [vmem:[%s232 + $0x10] sm:$0xf] 0
      %238 = vst [vmem:[%s232 + $0x14] sm:$0xf] 0
      %239 = vst [vmem:[#allocation2] sm:$0xf] 0
      %240 = vst [vmem:[#allocation2 + $0x18] sm:$0xf] 0
      %241 = vst [vmem:[#allocation2 + $0x30] sm:$0xf] 0
      %242 = vst [vmem:[#allocation2 + $0x48] sm:$0xf] 0
      %243 = vst [vmem:[#allocation2 + $0x60] sm:$0xf] 0
      %244 = vst [vmem:[#allocation2 + $0x78] sm:$0xf] 0
      %245 = vst [vmem:[#allocation2 + $0x90] sm:$0xf] 0
      %246 = vst [vmem:[#allocation2 + $0xa8] sm:$0xf] 0
      %247 = vst [vmem:[#allocation2 + $0xc0] sm:$0xf] 0
      %248 = vst [vmem:[#allocation2 + $0xd8] sm:$0xf] 0
      %249 = vst [vmem:[#allocation2 + $0xf0] sm:$0xf] 0
      %250 = vst [vmem:[#allocation2 + $0x108] sm:$0xf] 0
      %251 = vst [vmem:[#allocation2 + $0x120] sm:$0xf] 0
      %252 = vst [vmem:[#allocation2 + $0x138] sm:$0xf] 0
      %253 = vst [vmem:[#allocation2 + $0x150] sm:$0xf] 0
      %254 = vst [vmem:[#allocation2 + $0x168] sm:$0xf] 0
      %255 = vst [vmem:[#allocation2 + $0x180] sm:$0xf] 0
      %256 = vst [vmem:[#allocation2 + $0x198] sm:$0xf] 0
      %257 = vst [vmem:[#allocation2 + $0xc] sm:$0xf] 0
      %258 = vst [vmem:[#allocation2 + $0x10] sm:$0xf] 0
      %259 = vst [vmem:[#allocation2 + $0x14] sm:$0xf] 0
      %260 = vst [vmem:[#allocation2 + $0x24] sm:$0xf] 0
      %261 = vst [vmem:[#allocation2 + $0x28] sm:$0xf] 0
      %262 = vst [vmem:[#allocation2 + $0x2c] sm:$0xf] 0
      %263 = vst [vmem:[#allocation2 + $0x3c] sm:$0xf] 0
      %264 = vst [vmem:[#allocation2 + $0x40] sm:$0xf] 0
      %265 = vst [vmem:[#allocation2 + $0x44] sm:$0xf] 0
      %266 = vst [vmem:[#allocation2 + $0x54] sm:$0xf] 0
      %267 = vst [vmem:[#allocation2 + $0x58] sm:$0xf] 0
      %268 = vst [vmem:[#allocation2 + $0x5c] sm:$0xf] 0
      %269 = vst [vmem:[#allocation2 + $0x6c] sm:$0xf] 0
      %270 = vst [vmem:[#allocation2 + $0x70] sm:$0xf] 0
      %271 = vst [vmem:[#allocation2 + $0x74] sm:$0xf] 0
      %272 = vst [vmem:[#allocation2 + $0x84] sm:$0xf] 0
      %273 = vst [vmem:[#allocation2 + $0x88] sm:$0xf] 0
      %274 = vst [vmem:[#allocation2 + $0x8c] sm:$0xf] 0
      %275 = vst [vmem:[#allocation2 + $0x9c] sm:$0xf] 0
      %276 = vst [vmem:[#allocation2 + $0xa0] sm:$0xf] 0
      %277 = vst [vmem:[#allocation2 + $0xa4] sm:$0xf] 0
      %278 = vst [vmem:[#allocation2 + $0xb4] sm:$0xf] 0
      %279 = vst [vmem:[#allocation2 + $0xb8] sm:$0xf] 0
      %280 = vst [vmem:[#allocation2 + $0xbc] sm:$0xf] 0
      %281 = vst [vmem:[#allocation2 + $0xcc] sm:$0xf] 0
      %282 = vst [vmem:[#allocation2 + $0xd0] sm:$0xf] 0
      %283 = vst [vmem:[#allocation2 + $0xd4] sm:$0xf] 0
      %284 = vst [vmem:[#allocation2 + $0xe4] sm:$0xf] 0
      %285 = vst [vmem:[#allocation2 + $0xe8] sm:$0xf] 0
      %286 = vst [vmem:[#allocation2 + $0xec] sm:$0xf] 0
      %287 = vst [vmem:[#allocation2 + $0xfc] sm:$0xf] 0
      %288 = vst [vmem:[#allocation2 + $0x100] sm:$0xf] 0
      %289 = vst [vmem:[#allocation2 + $0x104] sm:$0xf] 0
      %290 = vst [vmem:[#allocation2 + $0x114] sm:$0xf] 0
      %291 = vst [vmem:[#allocation2 + $0x118] sm:$0xf] 0
      %292 = vst [vmem:[#allocation2 + $0x11c] sm:$0xf] 0
      %293 = vst [vmem:[#allocation2 + $0x12c] sm:$0xf] 0
      %294 = vst [vmem:[#allocation2 + $0x130] sm:$0xf] 0
      %295 = vst [vmem:[#allocation2 + $0x134] sm:$0xf] 0
      %296 = vst [vmem:[#allocation2 + $0x144] sm:$0xf] 0
      %297 = vst [vmem:[#allocation2 + $0x148] sm:$0xf] 0
      %298 = vst [vmem:[#allocation2 + $0x14c] sm:$0xf] 0
      %299 = vst [vmem:[#allocation2 + $0x15c] sm:$0xf] 0
      %300 = vst [vmem:[#allocation2 + $0x160] sm:$0xf] 0
      %301 = vst [vmem:[#allocation2 + $0x164] sm:$0xf] 0
      %302 = vst [vmem:[#allocation2 + $0x174] sm:$0xf] 0
      %303 = vst [vmem:[#allocation2 + $0x178] sm:$0xf] 0
      %304 = vst [vmem:[#allocation2 + $0x17c] sm:$0xf] 0
      %305 = vst [vmem:[#allocation2 + $0x18c] sm:$0xf] 0
      %306 = vst [vmem:[#allocation2 + $0x190] sm:$0xf] 0
      %307 = vst [vmem:[#allocation2 + $0x194] sm:$0xf] 0
      %308 = vst [vmem:[#allocation2 + $0x1a4] sm:$0xf] 0
      %309 = vst [vmem:[#allocation2 + $0x1a8] sm:$0xf] 0
      %310 = vst [vmem:[#allocation2 + $0x1ac] sm:$0xf] 0
      %v311 = vld [vmem:[%s219] sm:$0xf]
      %v312 = vld [vmem:[%s219 + $0x4] sm:$0xf]
      %v313 = vld [vmem:[%s219 + $0x8] sm:$0xf]
      %v314 = vld [vmem:[%s219 + $0xc] sm:$0xf]
      %v315 = vld [vmem:[%s219 + $0x10] sm:$0xf]
      %v316 = vld [vmem:[%s219 + $0x14] sm:$0xf]
      %v317 = vld [vmem:[%s219 + $0x18] sm:$0xf]
      %v318 = vld [vmem:[%s219 + $0x1c] sm:$0xf]
      %v319 = vld [vmem:[%s219 + $0x20] sm:$0xf]
      %v320 = vld [vmem:[%s219 + $0x24] sm:$0xf]
      %v321 = vld [vmem:[%s219 + $0x28] sm:$0xf]
      %v322 = vld [vmem:[%s219 + $0x2c] sm:$0xf]
      %v323 = vld [vmem:[%s219 + $0x30] sm:$0xf]
      %v324 = vld [vmem:[%s219 + $0x34] sm:$0xf]
      %v325 = vld [vmem:[%s219 + $0x38] sm:$0xf]
      %v326 = vld [vmem:[%s219 + $0x3c] sm:$0xf]
      %v327 = vld [vmem:[%s219 + $0x40] sm:$0xf]
      %v328 = vld [vmem:[%s219 + $0x44] sm:$0xf]
      %v329 = vld [vmem:[%s219 + $0x48] sm:$0xf]
      %v330 = vld [vmem:[%s219 + $0x4c] sm:$0xf]
      %v331 = vld [vmem:[%s219 + $0x50] sm:$0xf]
      %v332 = vld [vmem:[%s219 + $0x54] sm:$0xf]
      %v333 = vld [vmem:[%s219 + $0x58] sm:$0xf]
      %v334 = vld [vmem:[%s219 + $0x5c] sm:$0xf]
      %v335 = vld [vmem:[%s219 + $0x60] sm:$0xf]
      %v336 = vld [vmem:[%s219 + $0x64] sm:$0xf]
      %v337 = vld [vmem:[%s219 + $0x68] sm:$0xf]
      %v338 = vld [vmem:[%s219 + $0x6c] sm:$0xf]
      %v339 = vld [vmem:[%s219 + $0x70] sm:$0xf]
      %v340 = vld [vmem:[%s219 + $0x74] sm:$0xf]
      %v341 = vld [vmem:[%s219 + $0x78] sm:$0xf]
      %v342 = vld [vmem:[%s219 + $0x7c] sm:$0xf]
      %s343 = scalar_lea.vmem [#allocation2], 24
      %344 = vst [vmem:[%s343 + $0x4] sm:$0xf] %v311
      %345 = vst [vmem:[%s343 + $0x8] sm:$0xf] %v312
      %346 = vst [vmem:[%s343 + $0x1c] sm:$0xf] %v313
      %347 = vst [vmem:[%s343 + $0x20] sm:$0xf] %v314
      %348 = vst [vmem:[%s343 + $0x34] sm:$0xf] %v315
      %349 = vst [vmem:[%s343 + $0x38] sm:$0xf] %v316
      %350 = vst [vmem:[%s343 + $0x4c] sm:$0xf] %v317
      %351 = vst [vmem:[%s343 + $0x50] sm:$0xf] %v318
      %352 = vst [vmem:[%s343 + $0x64] sm:$0xf] %v319
      %353 = vst [vmem:[%s343 + $0x68] sm:$0xf] %v320
      %354 = vst [vmem:[%s343 + $0x7c] sm:$0xf] %v321
      %355 = vst [vmem:[%s343 + $0x80] sm:$0xf] %v322
      %356 = vst [vmem:[%s343 + $0x94] sm:$0xf] %v323
      %357 = vst [vmem:[%s343 + $0x98] sm:$0xf] %v324
      %358 = vst [vmem:[%s343 + $0xac] sm:$0xf] %v325
      %359 = vst [vmem:[%s343 + $0xb0] sm:$0xf] %v326
      %360 = vst [vmem:[%s343 + $0xc4] sm:$0xf] %v327
      %361 = vst [vmem:[%s343 + $0xc8] sm:$0xf] %v328
      %362 = vst [vmem:[%s343 + $0xdc] sm:$0xf] %v329
      %363 = vst [vmem:[%s343 + $0xe0] sm:$0xf] %v330
      %364 = vst [vmem:[%s343 + $0xf4] sm:$0xf] %v331
      %365 = vst [vmem:[%s343 + $0xf8] sm:$0xf] %v332
      %366 = vst [vmem:[%s343 + $0x10c] sm:$0xf] %v333
      %367 = vst [vmem:[%s343 + $0x110] sm:$0xf] %v334
      %368 = vst [vmem:[%s343 + $0x124] sm:$0xf] %v335
      %369 = vst [vmem:[%s343 + $0x128] sm:$0xf] %v336
      %370 = vst [vmem:[%s343 + $0x13c] sm:$0xf] %v337
      %371 = vst [vmem:[%s343 + $0x140] sm:$0xf] %v338
      %372 = vst [vmem:[%s343 + $0x154] sm:$0xf] %v339
      %373 = vst [vmem:[%s343 + $0x158] sm:$0xf] %v340
      %374 = vst [vmem:[%s343 + $0x16c] sm:$0xf] %v341
      %375 = vst [vmem:[%s343 + $0x170] sm:$0xf] %v342
      %v376 = vld [vmem:[#allocation2] sm:$0x8]
      %v377 = vld [vmem:[#allocation2 + $0x4] sm:$0xf]
      %v378 = vld [vmem:[#allocation2 + $0x8] sm:$0xf]
      %v379 = vld [vmem:[#allocation2 + $0xc] sm:$0xf]
      %v380 = vld [vmem:[#allocation2 + $0x18] sm:$0x8]
      %v381 = vld [vmem:[#allocation2 + $0x1c] sm:$0xf]
      %v382 = vld [vmem:[#allocation2 + $0x20] sm:$0xf]
      %v383 = vld [vmem:[#allocation2 + $0x24] sm:$0xf]
      %v384 = vld [vmem:[#allocation2 + $0x30] sm:$0x8]
      %v385 = vld [vmem:[#allocation2 + $0x34] sm:$0xf]
      %v386 = vld [vmem:[#allocation2 + $0x38] sm:$0xf]
      %v387 = vld [vmem:[#allocation2 + $0x3c] sm:$0xf]
      %v388 = vld [vmem:[#allocation2 + $0x48] sm:$0x8]
      %v389 = vld [vmem:[#allocation2 + $0x4c] sm:$0xf]
      %v390 = vld [vmem:[#allocation2 + $0x50] sm:$0xf]
      %v391 = vld [vmem:[#allocation2 + $0x54] sm:$0xf]
      %v392 = vld [vmem:[#allocation2 + $0x60] sm:$0x8]
      %v393 = vld [vmem:[#allocation2 + $0x64] sm:$0xf]
      %v394 = vld [vmem:[#allocation2 + $0x68] sm:$0xf]
      %v395 = vld [vmem:[#allocation2 + $0x6c] sm:$0xf]
      %v396 = vld [vmem:[#allocation2 + $0x78] sm:$0x8]
      %v397 = vld [vmem:[#allocation2 + $0x7c] sm:$0xf]
      %v398 = vld [vmem:[#allocation2 + $0x80] sm:$0xf]
      %v399 = vld [vmem:[#allocation2 + $0x84] sm:$0xf]
      %v400 = vld [vmem:[#allocation2 + $0x90] sm:$0x8]
      %v401 = vld [vmem:[#allocation2 + $0x94] sm:$0xf]
      %v402 = vld [vmem:[#allocation2 + $0x98] sm:$0xf]
      %v403 = vld [vmem:[#allocation2 + $0x9c] sm:$0xf]
      %v404 = vld [vmem:[#allocation2 + $0xa8] sm:$0x8]
      %v405 = vld [vmem:[#allocation2 + $0xac] sm:$0xf]
      %v406 = vld [vmem:[#allocation2 + $0xb0] sm:$0xf]
      %v407 = vld [vmem:[#allocation2 + $0xb4] sm:$0xf]
      %v408 = vld [vmem:[#allocation2 + $0xc0] sm:$0x8]
      %v409 = vld [vmem:[#allocation2 + $0xc4] sm:$0xf]
      %v410 = vld [vmem:[#allocation2 + $0xc8] sm:$0xf]
      %v411 = vld [vmem:[#allocation2 + $0xcc] sm:$0xf]
      %v412 = vld [vmem:[#allocation2 + $0xd8] sm:$0x8]
      %v413 = vld [vmem:[#allocation2 + $0xdc] sm:$0xf]
      %v414 = vld [vmem:[#allocation2 + $0xe0] sm:$0xf]
      %v415 = vld [vmem:[#allocation2 + $0xe4] sm:$0xf]
      %v416 = vld [vmem:[#allocation2 + $0xf0] sm:$0x8]
      %v417 = vld [vmem:[#allocation2 + $0xf4] sm:$0xf]
      %v418 = vld [vmem:[#allocation2 + $0xf8] sm:$0xf]
      %v419 = vld [vmem:[#allocation2 + $0xfc] sm:$0xf]
      %v420 = vld [vmem:[#allocation2 + $0x108] sm:$0x8]
      %v421 = vld [vmem:[#allocation2 + $0x10c] sm:$0xf]
      %v422 = vld [vmem:[#allocation2 + $0x110] sm:$0xf]
      %v423 = vld [vmem:[#allocation2 + $0x114] sm:$0xf]
      %v424 = vld [vmem:[#allocation2 + $0x120] sm:$0x8]
      %v425 = vld [vmem:[#allocation2 + $0x124] sm:$0xf]
      %v426 = vld [vmem:[#allocation2 + $0x128] sm:$0xf]
      %v427 = vld [vmem:[#allocation2 + $0x12c] sm:$0xf]
      %v428 = vld [vmem:[#allocation2 + $0x138] sm:$0x8]
      %v429 = vld [vmem:[#allocation2 + $0x13c] sm:$0xf]
      %v430 = vld [vmem:[#allocation2 + $0x140] sm:$0xf]
      %v431 = vld [vmem:[#allocation2 + $0x144] sm:$0xf]
      %v432 = vld [vmem:[#allocation2 + $0x150] sm:$0x8]
      %v433 = vld [vmem:[#allocation2 + $0x154] sm:$0xf]
      %v434 = vld [vmem:[#allocation2 + $0x158] sm:$0xf]
      %v435 = vld [vmem:[#allocation2 + $0x15c] sm:$0xf]
      %v436 = vld [vmem:[#allocation2 + $0x168] sm:$0x8]
      %v437 = vld [vmem:[#allocation2 + $0x16c] sm:$0xf]
      %v438 = vld [vmem:[#allocation2 + $0x170] sm:$0xf]
      %v439 = vld [vmem:[#allocation2 + $0x174] sm:$0xf]
      %v440 = vld [vmem:[#allocation2 + $0x180] sm:$0x8]
      %v441 = vld [vmem:[#allocation2 + $0x184] sm:$0xf]
      %v442 = vld [vmem:[#allocation2 + $0x188] sm:$0xf]
      %v443 = vld [vmem:[#allocation2 + $0x18c] sm:$0xf]
      %v444 = vld [vmem:[#allocation2 + $0x198] sm:$0x8]
      %v445 = vld [vmem:[#allocation2 + $0x19c] sm:$0xf]
      %v446 = vld [vmem:[#allocation2 + $0x1a0] sm:$0xf]
      %v447 = vld [vmem:[#allocation2 + $0x1a4] sm:$0xf]
      %vm448 = vsmask.f32 256
      %vm449 = vsmask.f32 4368
      %vm450 = vmor %vm448, %vm449
      %v452 = vshrl.u32 %v376, 16
      %v454 = vrot.slane %v452, 7
      %v455 = vrot.slane %v454, 4
      %v457 = vshrl.u32 %v377, 16
      %v459 = vrot.slane %v457, 7
      %v460 = vshll.u32 %v377, 16
      %v462 = vor.u32 %v459, %v460
      %v463 = vsel %vm450, %v455, %v462
      %v464 = vrot.slane %v459, 4
      %v466 = vshrl.u32 %v378, 16
      %v468 = vrot.slane %v466, 7
      %v469 = vshll.u32 %v378, 16
      %v471 = vor.u32 %v468, %v469
      %v472 = vsel %vm450, %v464, %v471
      %v473 = vrot.slane %v468, 4
      %v475 = vshrl.u32 %v379, 16
      %v477 = vrot.slane %v475, 7
      %v478 = vshll.u32 %v379, 16
      %v480 = vor.u32 %v477, %v478
      %v481 = vsel %vm450, %v473, %v480
      %v483 = vshrl.u32 %v380, 16
      %v485 = vrot.slane %v483, 7
      %v486 = vrot.slane %v485, 4
      %v488 = vshrl.u32 %v381, 16
      %v490 = vrot.slane %v488, 7
      %v491 = vshll.u32 %v381, 16
      %v493 = vor.u32 %v490, %v491
      %v494 = vsel %vm450, %v486, %v493
      %v495 = vrot.slane %v490, 4
      %v497 = vshrl.u32 %v382, 16
      %v499 = vrot.slane %v497, 7
      %v500 = vshll.u32 %v382, 16
      %v502 = vor.u32 %v499, %v500
      %v503 = vsel %vm450, %v495, %v502
      %v504 = vrot.slane %v499, 4
      %v506 = vshrl.u32 %v383, 16
      %v508 = vrot.slane %v506, 7
      %v509 = vshll.u32 %v383, 16
      %v511 = vor.u32 %v508, %v509
      %v512 = vsel %vm450, %v504, %v511
      %v514 = vshrl.u32 %v384, 16
      %v516 = vrot.slane %v514, 7
      %v517 = vrot.slane %v516, 4
      %v519 = vshrl.u32 %v385, 16
      %v521 = vrot.slane %v519, 7
      %v522 = vshll.u32 %v385, 16
      %v524 = vor.u32 %v521, %v522
      %v525 = vsel %vm450, %v517, %v524
      %v526 = vrot.slane %v521, 4
      %v528 = vshrl.u32 %v386, 16
      %v530 = vrot.slane %v528, 7
      %v531 = vshll.u32 %v386, 16
      %v533 = vor.u32 %v530, %v531
      %v534 = vsel %vm450, %v526, %v533
      %v535 = vrot.slane %v530, 4
      %v537 = vshrl.u32 %v387, 16
      %v539 = vrot.slane %v537, 7
      %v540 = vshll.u32 %v387, 16
      %v542 = vor.u32 %v539, %v540
      %v543 = vsel %vm450, %v535, %v542
      %v545 = vshrl.u32 %v388, 16
      %v547 = vrot.slane %v545, 7
      %v548 = vrot.slane %v547, 4
      %v550 = vshrl.u32 %v389, 16
      %v552 = vrot.slane %v550, 7
      %v553 = vshll.u32 %v389, 16
      %v555 = vor.u32 %v552, %v553
      %v556 = vsel %vm450, %v548, %v555
      %v557 = vrot.slane %v552, 4
      %v559 = vshrl.u32 %v390, 16
      %v561 = vrot.slane %v559, 7
      %v562 = vshll.u32 %v390, 16
      %v564 = vor.u32 %v561, %v562
      %v565 = vsel %vm450, %v557, %v564
      %v566 = vrot.slane %v561, 4
      %v568 = vshrl.u32 %v391, 16
      %v570 = vrot.slane %v568, 7
      %v571 = vshll.u32 %v391, 16
      %v573 = vor.u32 %v570, %v571
      %v574 = vsel %vm450, %v566, %v573
      %v576 = vshrl.u32 %v392, 16
      %v578 = vrot.slane %v576, 7
      %v579 = vrot.slane %v578, 4
      %v581 = vshrl.u32 %v393, 16
      %v583 = vrot.slane %v581, 7
      %v584 = vshll.u32 %v393, 16
      %v586 = vor.u32 %v583, %v584
      %v587 = vsel %vm450, %v579, %v586
      %v588 = vrot.slane %v583, 4
      %v590 = vshrl.u32 %v394, 16
      %v592 = vrot.slane %v590, 7
      %v593 = vshll.u32 %v394, 16
      %v595 = vor.u32 %v592, %v593
      %v596 = vsel %vm450, %v588, %v595
      %v597 = vrot.slane %v592, 4
      %v599 = vshrl.u32 %v395, 16
      %v601 = vrot.slane %v599, 7
      %v602 = vshll.u32 %v395, 16
      %v604 = vor.u32 %v601, %v602
      %v605 = vsel %vm450, %v597, %v604
      %v607 = vshrl.u32 %v396, 16
      %v609 = vrot.slane %v607, 7
      %v610 = vrot.slane %v609, 4
      %v612 = vshrl.u32 %v397, 16
      %v614 = vrot.slane %v612, 7
      %v615 = vshll.u32 %v397, 16
      %v617 = vor.u32 %v614, %v615
      %v618 = vsel %vm450, %v610, %v617
      %v619 = vrot.slane %v614, 4
      %v621 = vshrl.u32 %v398, 16
      %v623 = vrot.slane %v621, 7
      %v624 = vshll.u32 %v398, 16
      %v626 = vor.u32 %v623, %v624
      %v627 = vsel %vm450, %v619, %v626
      %v628 = vrot.slane %v623, 4
      %v630 = vshrl.u32 %v399, 16
      %v632 = vrot.slane %v630, 7
      %v633 = vshll.u32 %v399, 16
      %v635 = vor.u32 %v632, %v633
      %v636 = vsel %vm450, %v628, %v635
      %v638 = vshrl.u32 %v400, 16
      %v640 = vrot.slane %v638, 7
      %v641 = vrot.slane %v640, 4
      %v643 = vshrl.u32 %v401, 16
      %v645 = vrot.slane %v643, 7
      %v646 = vshll.u32 %v401, 16
      %v648 = vor.u32 %v645, %v646
      %v649 = vsel %vm450, %v641, %v648
      %v650 = vrot.slane %v645, 4
      %v652 = vshrl.u32 %v402, 16
      %v654 = vrot.slane %v652, 7
      %v655 = vshll.u32 %v402, 16
      %v657 = vor.u32 %v654, %v655
      %v658 = vsel %vm450, %v650, %v657
      %v659 = vrot.slane %v654, 4
      %v661 = vshrl.u32 %v403, 16
      %v663 = vrot.slane %v661, 7
      %v664 = vshll.u32 %v403, 16
      %v666 = vor.u32 %v663, %v664
      %v667 = vsel %vm450, %v659, %v666
      %v669 = vshrl.u32 %v404, 16
      %v671 = vrot.slane %v669, 7
      %v672 = vrot.slane %v671, 4
      %v674 = vshrl.u32 %v405, 16
      %v676 = vrot.slane %v674, 7
      %v677 = vshll.u32 %v405, 16
      %v679 = vor.u32 %v676, %v677
      %v680 = vsel %vm450, %v672, %v679
      %v681 = vrot.slane %v676, 4
      %v683 = vshrl.u32 %v406, 16
      %v685 = vrot.slane %v683, 7
      %v686 = vshll.u32 %v406, 16
      %v688 = vor.u32 %v685, %v686
      %v689 = vsel %vm450, %v681, %v688
      %v690 = vrot.slane %v685, 4
      %v692 = vshrl.u32 %v407, 16
      %v694 = vrot.slane %v692, 7
      %v695 = vshll.u32 %v407, 16
      %v697 = vor.u32 %v694, %v695
      %v698 = vsel %vm450, %v690, %v697
      %v700 = vshrl.u32 %v408, 16
      %v702 = vrot.slane %v700, 7
      %v703 = vrot.slane %v702, 4
      %v705 = vshrl.u32 %v409, 16
      %v707 = vrot.slane %v705, 7
      %v708 = vshll.u32 %v409, 16
      %v710 = vor.u32 %v707, %v708
      %v711 = vsel %vm450, %v703, %v710
      %v712 = vrot.slane %v707, 4
      %v714 = vshrl.u32 %v410, 16
      %v716 = vrot.slane %v714, 7
      %v717 = vshll.u32 %v410, 16
      %v719 = vor.u32 %v716, %v717
      %v720 = vsel %vm450, %v712, %v719
      %v721 = vrot.slane %v716, 4
      %v723 = vshrl.u32 %v411, 16
      %v725 = vrot.slane %v723, 7
      %v726 = vshll.u32 %v411, 16
      %v728 = vor.u32 %v725, %v726
      %v729 = vsel %vm450, %v721, %v728
      %v731 = vshrl.u32 %v412, 16
      %v733 = vrot.slane %v731, 7
      %v734 = vrot.slane %v733, 4
      %v736 = vshrl.u32 %v413, 16
      %v738 = vrot.slane %v736, 7
      %v739 = vshll.u32 %v413, 16
      %v741 = vor.u32 %v738, %v739
      %v742 = vsel %vm450, %v734, %v741
      %v743 = vrot.slane %v738, 4
      %v745 = vshrl.u32 %v414, 16
      %v747 = vrot.slane %v745, 7
      %v748 = vshll.u32 %v414, 16
      %v750 = vor.u32 %v747, %v748
      %v751 = vsel %vm450, %v743, %v750
      %v752 = vrot.slane %v747, 4
      %v754 = vshrl.u32 %v415, 16
      %v756 = vrot.slane %v754, 7
      %v757 = vshll.u32 %v415, 16
      %v759 = vor.u32 %v756, %v757
      %v760 = vsel %vm450, %v752, %v759
      %v762 = vshrl.u32 %v416, 16
      %v764 = vrot.slane %v762, 7
      %v765 = vrot.slane %v764, 4
      %v767 = vshrl.u32 %v417, 16
      %v769 = vrot.slane %v767, 7
      %v770 = vshll.u32 %v417, 16
      %v772 = vor.u32 %v769, %v770
      %v773 = vsel %vm450, %v765, %v772
      %v774 = vrot.slane %v769, 4
      %v776 = vshrl.u32 %v418, 16
      %v778 = vrot.slane %v776, 7
      %v779 = vshll.u32 %v418, 16
      %v781 = vor.u32 %v778, %v779
      %v782 = vsel %vm450, %v774, %v781
      %v783 = vrot.slane %v778, 4
      %v785 = vshrl.u32 %v419, 16
      %v787 = vrot.slane %v785, 7
      %v788 = vshll.u32 %v419, 16
      %v790 = vor.u32 %v787, %v788
      %v791 = vsel %vm450, %v783, %v790
      %v793 = vshrl.u32 %v420, 16
      %v795 = vrot.slane %v793, 7
      %v796 = vrot.slane %v795, 4
      %v798 = vshrl.u32 %v421, 16
      %v800 = vrot.slane %v798, 7
      %v801 = vshll.u32 %v421, 16
      %v803 = vor.u32 %v800, %v801
      %v804 = vsel %vm450, %v796, %v803
      %v805 = vrot.slane %v800, 4
      %v807 = vshrl.u32 %v422, 16
      %v809 = vrot.slane %v807, 7
      %v810 = vshll.u32 %v422, 16
      %v812 = vor.u32 %v809, %v810
      %v813 = vsel %vm450, %v805, %v812
      %v814 = vrot.slane %v809, 4
      %v816 = vshrl.u32 %v423, 16
      %v818 = vrot.slane %v816, 7
      %v819 = vshll.u32 %v423, 16
      %v821 = vor.u32 %v818, %v819
      %v822 = vsel %vm450, %v814, %v821
      %v824 = vshrl.u32 %v424, 16
      %v826 = vrot.slane %v824, 7
      %v827 = vrot.slane %v826, 4
      %v829 = vshrl.u32 %v425, 16
      %v831 = vrot.slane %v829, 7
      %v832 = vshll.u32 %v425, 16
      %v834 = vor.u32 %v831, %v832
      %v835 = vsel %vm450, %v827, %v834
      %v836 = vrot.slane %v831, 4
      %v838 = vshrl.u32 %v426, 16
      %v840 = vrot.slane %v838, 7
      %v841 = vshll.u32 %v426, 16
      %v843 = vor.u32 %v840, %v841
      %v844 = vsel %vm450, %v836, %v843
      %v845 = vrot.slane %v840, 4
      %v847 = vshrl.u32 %v427, 16
      %v849 = vrot.slane %v847, 7
      %v850 = vshll.u32 %v427, 16
      %v852 = vor.u32 %v849, %v850
      %v853 = vsel %vm450, %v845, %v852
      %v855 = vshrl.u32 %v428, 16
      %v857 = vrot.slane %v855, 7
      %v858 = vrot.slane %v857, 4
      %v860 = vshrl.u32 %v429, 16
      %v862 = vrot.slane %v860, 7
      %v863 = vshll.u32 %v429, 16
      %v865 = vor.u32 %v862, %v863
      %v866 = vsel %vm450, %v858, %v865
      %v867 = vrot.slane %v862, 4
      %v869 = vshrl.u32 %v430, 16
      %v871 = vrot.slane %v869, 7
      %v872 = vshll.u32 %v430, 16
      %v874 = vor.u32 %v871, %v872
      %v875 = vsel %vm450, %v867, %v874
      %v876 = vrot.slane %v871, 4
      %v878 = vshrl.u32 %v431, 16
      %v880 = vrot.slane %v878, 7
      %v881 = vshll.u32 %v431, 16
      %v883 = vor.u32 %v880, %v881
      %v884 = vsel %vm450, %v876, %v883
      %v886 = vshrl.u32 %v432, 16
      %v888 = vrot.slane %v886, 7
      %v889 = vrot.slane %v888, 4
      %v891 = vshrl.u32 %v433, 16
      %v893 = vrot.slane %v891, 7
      %v894 = vshll.u32 %v433, 16
      %v896 = vor.u32 %v893, %v894
      %v897 = vsel %vm450, %v889, %v896
      %v898 = vrot.slane %v893, 4
      %v900 = vshrl.u32 %v434, 16
      %v902 = vrot.slane %v900, 7
      %v903 = vshll.u32 %v434, 16
      %v905 = vor.u32 %v902, %v903
      %v906 = vsel %vm450, %v898, %v905
      %v907 = vrot.slane %v902, 4
      %v909 = vshrl.u32 %v435, 16
      %v911 = vrot.slane %v909, 7
      %v912 = vshll.u32 %v435, 16
      %v914 = vor.u32 %v911, %v912
      %v915 = vsel %vm450, %v907, %v914
      %v917 = vshrl.u32 %v436, 16
      %v919 = vrot.slane %v917, 7
      %v920 = vrot.slane %v919, 4
      %v922 = vshrl.u32 %v437, 16
      %v924 = vrot.slane %v922, 7
      %v925 = vshll.u32 %v437, 16
      %v927 = vor.u32 %v924, %v925
      %v928 = vsel %vm450, %v920, %v927
      %v929 = vrot.slane %v924, 4
      %v931 = vshrl.u32 %v438, 16
      %v933 = vrot.slane %v931, 7
      %v934 = vshll.u32 %v438, 16
      %v936 = vor.u32 %v933, %v934
      %v937 = vsel %vm450, %v929, %v936
      %v938 = vrot.slane %v933, 4
      %v940 = vshrl.u32 %v439, 16
      %v942 = vrot.slane %v940, 7
      %v943 = vshll.u32 %v439, 16
      %v945 = vor.u32 %v942, %v943
      %v946 = vsel %vm450, %v938, %v945
      %995 = vst [vmem:[#allocation3] sm:$0xf] %v463
      %996 = vst [vmem:[#allocation3 + $0x24] sm:$0xf] %v472
      %997 = vst [vmem:[#allocation3 + $0x48] sm:$0xf] %v481
      %998 = vst [vmem:[#allocation3 + $0x6c] sm:$0xf] %v494
      %999 = vst [vmem:[#allocation3 + $0x90] sm:$0xf] %v503
      %1000 = vst [vmem:[#allocation3 + $0xb4] sm:$0xf] %v512
      %1001 = vst [vmem:[#allocation3 + $0xd8] sm:$0xf] %v525
      %1002 = vst [vmem:[#allocation3 + $0xfc] sm:$0xf] %v534
      %1003 = vst [vmem:[#allocation3 + $0x120] sm:$0xf] %v543
      %1004 = vst [vmem:[#allocation3 + $0x144] sm:$0xf] %v556
      %1005 = vst [vmem:[#allocation3 + $0x168] sm:$0xf] %v565
      %1006 = vst [vmem:[#allocation3 + $0x18c] sm:$0xf] %v574
      %1007 = vst [vmem:[#allocation3 + $0x1b0] sm:$0xf] %v587
      %1008 = vst [vmem:[#allocation3 + $0x1d4] sm:$0xf] %v596
      %1009 = vst [vmem:[#allocation3 + $0x1f8] sm:$0xf] %v605
      %1010 = vst [vmem:[#allocation3 + $0x21c] sm:$0xf] %v618
      %1011 = vst [vmem:[#allocation3 + $0x240] sm:$0xf] %v627
      %1012 = vst [vmem:[#allocation3 + $0x264] sm:$0xf] %v636
      %1013 = vst [vmem:[#allocation3 + $0x288] sm:$0xf] %v649
      %1014 = vst [vmem:[#allocation3 + $0x2ac] sm:$0xf] %v658
      %1015 = vst [vmem:[#allocation3 + $0x2d0] sm:$0xf] %v667
      %1016 = vst [vmem:[#allocation3 + $0x2f4] sm:$0xf] %v680
      %1017 = vst [vmem:[#allocation3 + $0x318] sm:$0xf] %v689
      %1018 = vst [vmem:[#allocation3 + $0x33c] sm:$0xf] %v698
      %1019 = vst [vmem:[#allocation3 + $0x360] sm:$0xf] %v711
      %1020 = vst [vmem:[#allocation3 + $0x384] sm:$0xf] %v720
      %1021 = vst [vmem:[#allocation3 + $0x3a8] sm:$0xf] %v729
      %1022 = vst [vmem:[#allocation3 + $0x3cc] sm:$0xf] %v742
      %1023 = vst [vmem:[#allocation3 + $0x3f0] sm:$0xf] %v751
      %1024 = vst [vmem:[#allocation3 + $0x414] sm:$0xf] %v760
      %1025 = vst [vmem:[#allocation3 + $0x438] sm:$0xf] %v773
      %1026 = vst [vmem:[#allocation3 + $0x45c] sm:$0xf] %v782
      %1027 = vst [vmem:[#allocation3 + $0x480] sm:$0xf] %v791
      %1028 = vst [vmem:[#allocation3 + $0x4a4] sm:$0xf] %v804
      %1029 = vst [vmem:[#allocation3 + $0x4c8] sm:$0xf] %v813
      %1030 = vst [vmem:[#allocation3 + $0x4ec] sm:$0xf] %v822
      %1031 = vst [vmem:[#allocation3 + $0x510] sm:$0xf] %v835
      %1032 = vst [vmem:[#allocation3 + $0x534] sm:$0xf] %v844
      %1033 = vst [vmem:[#allocation3 + $0x558] sm:$0xf] %v853
      %1034 = vst [vmem:[#allocation3 + $0x57c] sm:$0xf] %v866
      %1035 = vst [vmem:[#allocation3 + $0x5a0] sm:$0xf] %v875
      %1036 = vst [vmem:[#allocation3 + $0x5c4] sm:$0xf] %v884
      %1037 = vst [vmem:[#allocation3 + $0x5e8] sm:$0xf] %v897
      %1038 = vst [vmem:[#allocation3 + $0x60c] sm:$0xf] %v906
      %1039 = vst [vmem:[#allocation3 + $0x630] sm:$0xf] %v915
      %1040 = vst [vmem:[#allocation3 + $0x654] sm:$0xf] %v928
      %1041 = vst [vmem:[#allocation3 + $0x678] sm:$0xf] %v937
      %1042 = vst [vmem:[#allocation3 + $0x69c] sm:$0xf] %v946
      %v1044 = vshrl.u32 %v440, 16
      %v1046 = vrot.slane %v1044, 7
      %v1047 = vrot.slane %v1046, 4
      %v1049 = vshrl.u32 %v441, 16
      %v1051 = vrot.slane %v1049, 7
      %v1052 = vshll.u32 %v441, 16
      %v1054 = vor.u32 %v1051, %v1052
      %v1055 = vsel %vm450, %v1047, %v1054
      %v1056 = vrot.slane %v1051, 4
      %v1058 = vshrl.u32 %v442, 16
      %v1060 = vrot.slane %v1058, 7
      %v1061 = vshll.u32 %v442, 16
      %v1063 = vor.u32 %v1060, %v1061
      %v1064 = vsel %vm450, %v1056, %v1063
      %v1065 = vrot.slane %v1060, 4
      %v1067 = vshrl.u32 %v443, 16
      %v1069 = vrot.slane %v1067, 7
      %v1070 = vshll.u32 %v443, 16
      %v1072 = vor.u32 %v1069, %v1070
      %v1073 = vsel %vm450, %v1065, %v1072
      %1077 = vst [vmem:[#allocation3 + $0xc] sm:$0xf] %v494
      %1078 = vst [vmem:[#allocation3 + $0x30] sm:$0xf] %v503
      %1079 = vst [vmem:[#allocation3 + $0x54] sm:$0xf] %v512
      %1080 = vst [vmem:[#allocation3 + $0x78] sm:$0xf] %v525
      %1081 = vst [vmem:[#allocation3 + $0x9c] sm:$0xf] %v534
      %1082 = vst [vmem:[#allocation3 + $0xc0] sm:$0xf] %v543
      %1083 = vst [vmem:[#allocation3 + $0xe4] sm:$0xf] %v556
      %1084 = vst [vmem:[#allocation3 + $0x108] sm:$0xf] %v565
      %1085 = vst [vmem:[#allocation3 + $0x12c] sm:$0xf] %v574
      %1086 = vst [vmem:[#allocation3 + $0x150] sm:$0xf] %v587
      %1087 = vst [vmem:[#allocation3 + $0x174] sm:$0xf] %v596
      %1088 = vst [vmem:[#allocation3 + $0x198] sm:$0xf] %v605
      %1089 = vst [vmem:[#allocation3 + $0x1bc] sm:$0xf] %v618
      %1090 = vst [vmem:[#allocation3 + $0x1e0] sm:$0xf] %v627
      %1091 = vst [vmem:[#allocation3 + $0x204] sm:$0xf] %v636
      %1092 = vst [vmem:[#allocation3 + $0x228] sm:$0xf] %v649
      %1093 = vst [vmem:[#allocation3 + $0x24c] sm:$0xf] %v658
      %1094 = vst [vmem:[#allocation3 + $0x270] sm:$0xf] %v667
      %1095 = vst [vmem:[#allocation3 + $0x294] sm:$0xf] %v680
      %1096 = vst [vmem:[#allocation3 + $0x2b8] sm:$0xf] %v689
      %1097 = vst [vmem:[#allocation3 + $0x2dc] sm:$0xf] %v698
      %1098 = vst [vmem:[#allocation3 + $0x300] sm:$0xf] %v711
      %1099 = vst [vmem:[#allocation3 + $0x324] sm:$0xf] %v720
      %1100 = vst [vmem:[#allocation3 + $0x348] sm:$0xf] %v729
      %1101 = vst [vmem:[#allocation3 + $0x36c] sm:$0xf] %v742
      %1102 = vst [vmem:[#allocation3 + $0x390] sm:$0xf] %v751
      %1103 = vst [vmem:[#allocation3 + $0x3b4] sm:$0xf] %v760
      %1104 = vst [vmem:[#allocation3 + $0x3d8] sm:$0xf] %v773
      %1105 = vst [vmem:[#allocation3 + $0x3fc] sm:$0xf] %v782
      %1106 = vst [vmem:[#allocation3 + $0x420] sm:$0xf] %v791
      %1107 = vst [vmem:[#allocation3 + $0x444] sm:$0xf] %v804
      %1108 = vst [vmem:[#allocation3 + $0x468] sm:$0xf] %v813
      %1109 = vst [vmem:[#allocation3 + $0x48c] sm:$0xf] %v822
      %1110 = vst [vmem:[#allocation3 + $0x4b0] sm:$0xf] %v835
      %1111 = vst [vmem:[#allocation3 + $0x4d4] sm:$0xf] %v844
      %1112 = vst [vmem:[#allocation3 + $0x4f8] sm:$0xf] %v853
      %1113 = vst [vmem:[#allocation3 + $0x51c] sm:$0xf] %v866
      %1114 = vst [vmem:[#allocation3 + $0x540] sm:$0xf] %v875
      %1115 = vst [vmem:[#allocation3 + $0x564] sm:$0xf] %v884
      %1116 = vst [vmem:[#allocation3 + $0x588] sm:$0xf] %v897
      %1117 = vst [vmem:[#allocation3 + $0x5ac] sm:$0xf] %v906
      %1118 = vst [vmem:[#allocation3 + $0x5d0] sm:$0xf] %v915
      %1119 = vst [vmem:[#allocation3 + $0x5f4] sm:$0xf] %v928
      %1120 = vst [vmem:[#allocation3 + $0x618] sm:$0xf] %v937
      %1121 = vst [vmem:[#allocation3 + $0x63c] sm:$0xf] %v946
      %1122 = vst [vmem:[#allocation3 + $0x660] sm:$0xf] %v1055
      %1123 = vst [vmem:[#allocation3 + $0x684] sm:$0xf] %v1064
      %1124 = vst [vmem:[#allocation3 + $0x6a8] sm:$0xf] %v1073
      %v1126 = vshrl.u32 %v444, 16
      %v1128 = vrot.slane %v1126, 7
      %v1129 = vrot.slane %v1128, 4
      %v1131 = vshrl.u32 %v445, 16
      %v1133 = vrot.slane %v1131, 7
      %v1134 = vshll.u32 %v445, 16
      %v1136 = vor.u32 %v1133, %v1134
      %v1137 = vsel %vm450, %v1129, %v1136
      %v1138 = vrot.slane %v1133, 4
      %v1140 = vshrl.u32 %v446, 16
      %v1142 = vrot.slane %v1140, 7
      %v1143 = vshll.u32 %v446, 16
      %v1145 = vor.u32 %v1142, %v1143
      %v1146 = vsel %vm450, %v1138, %v1145
      %v1147 = vrot.slane %v1142, 4
      %v1149 = vshrl.u32 %v447, 16
      %v1151 = vrot.slane %v1149, 7
      %v1152 = vshll.u32 %v447, 16
      %v1154 = vor.u32 %v1151, %v1152
      %v1155 = vsel %vm450, %v1147, %v1154
      %1159 = vst [vmem:[#allocation3 + $0x18] sm:$0xf] %v525
      %1160 = vst [vmem:[#allocation3 + $0x3c] sm:$0xf] %v534
      %1161 = vst [vmem:[#allocation3 + $0x60] sm:$0xf] %v543
      %1162 = vst [vmem:[#allocation3 + $0x84] sm:$0xf] %v556
      %1163 = vst [vmem:[#allocation3 + $0xa8] sm:$0xf] %v565
      %1164 = vst [vmem:[#allocation3 + $0xcc] sm:$0xf] %v574
      %1165 = vst [vmem:[#allocation3 + $0xf0] sm:$0xf] %v587
      %1166 = vst [vmem:[#allocation3 + $0x114] sm:$0xf] %v596
      %1167 = vst [vmem:[#allocation3 + $0x138] sm:$0xf] %v605
      %1168 = vst [vmem:[#allocation3 + $0x15c] sm:$0xf] %v618
      %1169 = vst [vmem:[#allocation3 + $0x180] sm:$0xf] %v627
      %1170 = vst [vmem:[#allocation3 + $0x1a4] sm:$0xf] %v636
      %1171 = vst [vmem:[#allocation3 + $0x1c8] sm:$0xf] %v649
      %1172 = vst [vmem:[#allocation3 + $0x1ec] sm:$0xf] %v658
      %1173 = vst [vmem:[#allocation3 + $0x210] sm:$0xf] %v667
      %1174 = vst [vmem:[#allocation3 + $0x234] sm:$0xf] %v680
      %1175 = vst [vmem:[#allocation3 + $0x258] sm:$0xf] %v689
      %1176 = vst [vmem:[#allocation3 + $0x27c] sm:$0xf] %v698
      %1177 = vst [vmem:[#allocation3 + $0x2a0] sm:$0xf] %v711
      %1178 = vst [vmem:[#allocation3 + $0x2c4] sm:$0xf] %v720
      %1179 = vst [vmem:[#allocation3 + $0x2e8] sm:$0xf] %v729
      %1180 = vst [vmem:[#allocation3 + $0x30c] sm:$0xf] %v742
      %1181 = vst [vmem:[#allocation3 + $0x330] sm:$0xf] %v751
      %1182 = vst [vmem:[#allocation3 + $0x354] sm:$0xf] %v760
      %1183 = vst [vmem:[#allocation3 + $0x378] sm:$0xf] %v773
      %1184 = vst [vmem:[#allocation3 + $0x39c] sm:$0xf] %v782
      %1185 = vst [vmem:[#allocation3 + $0x3c0] sm:$0xf] %v791
      %1186 = vst [vmem:[#allocation3 + $0x3e4] sm:$0xf] %v804
      %1187 = vst [vmem:[#allocation3 + $0x408] sm:$0xf] %v813
      %1188 = vst [vmem:[#allocation3 + $0x42c] sm:$0xf] %v822
      %1189 = vst [vmem:[#allocation3 + $0x450] sm:$0xf] %v835
      %1190 = vst [vmem:[#allocation3 + $0x474] sm:$0xf] %v844
      %1191 = vst [vmem:[#allocation3 + $0x498] sm:$0xf] %v853
      %1192 = vst [vmem:[#allocation3 + $0x4bc] sm:$0xf] %v866
      %1193 = vst [vmem:[#allocation3 + $0x4e0] sm:$0xf] %v875
      %1194 = vst [vmem:[#allocation3 + $0x504] sm:$0xf] %v884
      %1195 = vst [vmem:[#allocation3 + $0x528] sm:$0xf] %v897
      %1196 = vst [vmem:[#allocation3 + $0x54c] sm:$0xf] %v906
      %1197 = vst [vmem:[#allocation3 + $0x570] sm:$0xf] %v915
      %1198 = vst [vmem:[#allocation3 + $0x594] sm:$0xf] %v928
      %1199 = vst [vmem:[#allocation3 + $0x5b8] sm:$0xf] %v937
      %1200 = vst [vmem:[#allocation3 + $0x5dc] sm:$0xf] %v946
      %1201 = vst [vmem:[#allocation3 + $0x600] sm:$0xf] %v1055
      %1202 = vst [vmem:[#allocation3 + $0x624] sm:$0xf] %v1064
      %1203 = vst [vmem:[#allocation3 + $0x648] sm:$0xf] %v1073
      %1204 = vst [vmem:[#allocation3 + $0x66c] sm:$0xf] %v1137
      %1205 = vst [vmem:[#allocation3 + $0x690] sm:$0xf] %v1146
      %1206 = vst [vmem:[#allocation3 + $0x6b4] sm:$0xf] %v1155
      %v1207 = vld [vmem:[#allocation2 + $0x4] sm:$0xf]
      %v1208 = vld [vmem:[#allocation2 + $0x8] sm:$0xf]
      %v1209 = vld [vmem:[#allocation2 + $0xc] sm:$0xf]
      %v1210 = vld [vmem:[#allocation2 + $0x1c] sm:$0xf]
      %v1211 = vld [vmem:[#allocation2 + $0x20] sm:$0xf]
      %v1212 = vld [vmem:[#allocation2 + $0x24] sm:$0xf]
      %v1213 = vld [vmem:[#allocation2 + $0x34] sm:$0xf]
      %v1214 = vld [vmem:[#allocation2 + $0x38] sm:$0xf]
      %v1215 = vld [vmem:[#allocation2 + $0x3c] sm:$0xf]
      %v1216 = vld [vmem:[#allocation2 + $0x4c] sm:$0xf]
      %v1217 = vld [vmem:[#allocation2 + $0x50] sm:$0xf]
      %v1218 = vld [vmem:[#allocation2 + $0x54] sm:$0xf]
      %v1219 = vld [vmem:[#allocation2 + $0x64] sm:$0xf]
      %v1220 = vld [vmem:[#allocation2 + $0x68] sm:$0xf]
      %v1221 = vld [vmem:[#allocation2 + $0x6c] sm:$0xf]
      %v1222 = vld [vmem:[#allocation2 + $0x7c] sm:$0xf]
      %v1223 = vld [vmem:[#allocation2 + $0x80] sm:$0xf]
      %v1224 = vld [vmem:[#allocation2 + $0x84] sm:$0xf]
      %v1225 = vld [vmem:[#allocation2 + $0x94] sm:$0xf]
      %v1226 = vld [vmem:[#allocation2 + $0x98] sm:$0xf]
      %v1227 = vld [vmem:[#allocation2 + $0x9c] sm:$0xf]
      %v1228 = vld [vmem:[#allocation2 + $0xac] sm:$0xf]
      %v1229 = vld [vmem:[#allocation2 + $0xb0] sm:$0xf]
      %v1230 = vld [vmem:[#allocation2 + $0xb4] sm:$0xf]
      %v1231 = vld [vmem:[#allocation2 + $0xc4] sm:$0xf]
      %v1232 = vld [vmem:[#allocation2 + $0xc8] sm:$0xf]
      %v1233 = vld [vmem:[#allocation2 + $0xcc] sm:$0xf]
      %v1234 = vld [vmem:[#allocation2 + $0xdc] sm:$0xf]
      %v1235 = vld [vmem:[#allocation2 + $0xe0] sm:$0xf]
      %v1236 = vld [vmem:[#allocation2 + $0xe4] sm:$0xf]
      %v1237 = vld [vmem:[#allocation2 + $0xf4] sm:$0xf]
      %v1238 = vld [vmem:[#allocation2 + $0xf8] sm:$0xf]
      %v1239 = vld [vmem:[#allocation2 + $0xfc] sm:$0xf]
      %v1240 = vld [vmem:[#allocation2 + $0x10c] sm:$0xf]
      %v1241 = vld [vmem:[#allocation2 + $0x110] sm:$0xf]
      %v1242 = vld [vmem:[#allocation2 + $0x114] sm:$0xf]
      %v1243 = vld [vmem:[#allocation2 + $0x124] sm:$0xf]
      %v1244 = vld [vmem:[#allocation2 + $0x128] sm:$0xf]
      %v1245 = vld [vmem:[#allocation2 + $0x12c] sm:$0xf]
      %v1246 = vld [vmem:[#allocation2 + $0x13c] sm:$0xf]
      %v1247 = vld [vmem:[#allocation2 + $0x140] sm:$0xf]
      %v1248 = vld [vmem:[#allocation2 + $0x144] sm:$0xf]
      %v1249 = vld [vmem:[#allocation2 + $0x154] sm:$0xf]
      %v1250 = vld [vmem:[#allocation2 + $0x158] sm:$0xf]
      %v1251 = vld [vmem:[#allocation2 + $0x15c] sm:$0xf]
      %v1252 = vld [vmem:[#allocation2 + $0x16c] sm:$0xf]
      %v1253 = vld [vmem:[#allocation2 + $0x170] sm:$0xf]
      %v1254 = vld [vmem:[#allocation2 + $0x174] sm:$0xf]
      %v1255 = vld [vmem:[#allocation2 + $0x184] sm:$0xf]
      %v1256 = vld [vmem:[#allocation2 + $0x188] sm:$0xf]
      %v1257 = vld [vmem:[#allocation2 + $0x18c] sm:$0xf]
      %v1258 = vld [vmem:[#allocation2 + $0x19c] sm:$0xf]
      %v1259 = vld [vmem:[#allocation2 + $0x1a0] sm:$0xf]
      %v1260 = vld [vmem:[#allocation2 + $0x1a4] sm:$0xf]
      %1261 = vst [vmem:[#allocation3 + $0x4] sm:$0xf] %v1207
      %1262 = vst [vmem:[#allocation3 + $0x28] sm:$0xf] %v1208
      %1263 = vst [vmem:[#allocation3 + $0x4c] sm:$0xf] %v1209
      %1264 = vst [vmem:[#allocation3 + $0x70] sm:$0xf] %v1210
      %1265 = vst [vmem:[#allocation3 + $0x94] sm:$0xf] %v1211
      %1266 = vst [vmem:[#allocation3 + $0xb8] sm:$0xf] %v1212
      %1267 = vst [vmem:[#allocation3 + $0xdc] sm:$0xf] %v1213
      %1268 = vst [vmem:[#allocation3 + $0x100] sm:$0xf] %v1214
      %1269 = vst [vmem:[#allocation3 + $0x124] sm:$0xf] %v1215
      %1270 = vst [vmem:[#allocation3 + $0x148] sm:$0xf] %v1216
      %1271 = vst [vmem:[#allocation3 + $0x16c] sm:$0xf] %v1217
      %1272 = vst [vmem:[#allocation3 + $0x190] sm:$0xf] %v1218
      %1273 = vst [vmem:[#allocation3 + $0x1b4] sm:$0xf] %v1219
      %1274 = vst [vmem:[#allocation3 + $0x1d8] sm:$0xf] %v1220
      %1275 = vst [vmem:[#allocation3 + $0x1fc] sm:$0xf] %v1221
      %1276 = vst [vmem:[#allocation3 + $0x220] sm:$0xf] %v1222
      %1277 = vst [vmem:[#allocation3 + $0x244] sm:$0xf] %v1223
      %1278 = vst [vmem:[#allocation3 + $0x268] sm:$0xf] %v1224
      %1279 = vst [vmem:[#allocation3 + $0x28c] sm:$0xf] %v1225
      %1280 = vst [vmem:[#allocation3 + $0x2b0] sm:$0xf] %v1226
      %1281 = vst [vmem:[#allocation3 + $0x2d4] sm:$0xf] %v1227
      %1282 = vst [vmem:[#allocation3 + $0x2f8] sm:$0xf] %v1228
      %1283 = vst [vmem:[#allocation3 + $0x31c] sm:$0xf] %v1229
      %1284 = vst [vmem:[#allocation3 + $0x340] sm:$0xf] %v1230
      %1285 = vst [vmem:[#allocation3 + $0x364] sm:$0xf] %v1231
      %1286 = vst [vmem:[#allocation3 + $0x388] sm:$0xf] %v1232
      %1287 = vst [vmem:[#allocation3 + $0x3ac] sm:$0xf] %v1233
      %1288 = vst [vmem:[#allocation3 + $0x3d0] sm:$0xf] %v1234
      %1289 = vst [vmem:[#allocation3 + $0x3f4] sm:$0xf] %v1235
      %1290 = vst [vmem:[#allocation3 + $0x418] sm:$0xf] %v1236
      %1291 = vst [vmem:[#allocation3 + $0x43c] sm:$0xf] %v1237
      %1292 = vst [vmem:[#allocation3 + $0x460] sm:$0xf] %v1238
      %1293 = vst [vmem:[#allocation3 + $0x484] sm:$0xf] %v1239
      %1294 = vst [vmem:[#allocation3 + $0x4a8] sm:$0xf] %v1240
      %1295 = vst [vmem:[#allocation3 + $0x4cc] sm:$0xf] %v1241
      %1296 = vst [vmem:[#allocation3 + $0x4f0] sm:$0xf] %v1242
      %1297 = vst [vmem:[#allocation3 + $0x514] sm:$0xf] %v1243
      %1298 = vst [vmem:[#allocation3 + $0x538] sm:$0xf] %v1244
      %1299 = vst [vmem:[#allocation3 + $0x55c] sm:$0xf] %v1245
      %1300 = vst [vmem:[#allocation3 + $0x580] sm:$0xf] %v1246
      %1301 = vst [vmem:[#allocation3 + $0x5a4] sm:$0xf] %v1247
      %1302 = vst [vmem:[#allocation3 + $0x5c8] sm:$0xf] %v1248
      %1303 = vst [vmem:[#allocation3 + $0x5ec] sm:$0xf] %v1249
      %1304 = vst [vmem:[#allocation3 + $0x610] sm:$0xf] %v1250
      %1305 = vst [vmem:[#allocation3 + $0x634] sm:$0xf] %v1251
      %1306 = vst [vmem:[#allocation3 + $0x658] sm:$0xf] %v1252
      %1307 = vst [vmem:[#allocation3 + $0x67c] sm:$0xf] %v1253
      %1308 = vst [vmem:[#allocation3 + $0x6a0] sm:$0xf] %v1254
      %1309 = vst [vmem:[#allocation3 + $0x10] sm:$0xf] %v1210
      %1310 = vst [vmem:[#allocation3 + $0x34] sm:$0xf] %v1211
      %1311 = vst [vmem:[#allocation3 + $0x58] sm:$0xf] %v1212
      %1312 = vst [vmem:[#allocation3 + $0x7c] sm:$0xf] %v1213
      %1313 = vst [vmem:[#allocation3 + $0xa0] sm:$0xf] %v1214
      %1314 = vst [vmem:[#allocation3 + $0xc4] sm:$0xf] %v1215
      %1315 = vst [vmem:[#allocation3 + $0xe8] sm:$0xf] %v1216
      %1316 = vst [vmem:[#allocation3 + $0x10c] sm:$0xf] %v1217
      %1317 = vst [vmem:[#allocation3 + $0x130] sm:$0xf] %v1218
      %1318 = vst [vmem:[#allocation3 + $0x154] sm:$0xf] %v1219
      %1319 = vst [vmem:[#allocation3 + $0x178] sm:$0xf] %v1220
      %1320 = vst [vmem:[#allocation3 + $0x19c] sm:$0xf] %v1221
      %1321 = vst [vmem:[#allocation3 + $0x1c0] sm:$0xf] %v1222
      %1322 = vst [vmem:[#allocation3 + $0x1e4] sm:$0xf] %v1223
      %1323 = vst [vmem:[#allocation3 + $0x208] sm:$0xf] %v1224
      %1324 = vst [vmem:[#allocation3 + $0x22c] sm:$0xf] %v1225
      %1325 = vst [vmem:[#allocation3 + $0x250] sm:$0xf] %v1226
      %1326 = vst [vmem:[#allocation3 + $0x274] sm:$0xf] %v1227
      %1327 = vst [vmem:[#allocation3 + $0x298] sm:$0xf] %v1228
      %1328 = vst [vmem:[#allocation3 + $0x2bc] sm:$0xf] %v1229
      %1329 = vst [vmem:[#allocation3 + $0x2e0] sm:$0xf] %v1230
      %1330 = vst [vmem:[#allocation3 + $0x304] sm:$0xf] %v1231
      %1331 = vst [vmem:[#allocation3 + $0x328] sm:$0xf] %v1232
      %1332 = vst [vmem:[#allocation3 + $0x34c] sm:$0xf] %v1233
      %1333 = vst [vmem:[#allocation3 + $0x370] sm:$0xf] %v1234
      %1334 = vst [vmem:[#allocation3 + $0x394] sm:$0xf] %v1235
      %1335 = vst [vmem:[#allocation3 + $0x3b8] sm:$0xf] %v1236
      %1336 = vst [vmem:[#allocation3 + $0x3dc] sm:$0xf] %v1237
      %1337 = vst [vmem:[#allocation3 + $0x400] sm:$0xf] %v1238
      %1338 = vst [vmem:[#allocation3 + $0x424] sm:$0xf] %v1239
      %1339 = vst [vmem:[#allocation3 + $0x448] sm:$0xf] %v1240
      %1340 = vst [vmem:[#allocation3 + $0x46c] sm:$0xf] %v1241
      %1341 = vst [vmem:[#allocation3 + $0x490] sm:$0xf] %v1242
      %1342 = vst [vmem:[#allocation3 + $0x4b4] sm:$0xf] %v1243
      %1343 = vst [vmem:[#allocation3 + $0x4d8] sm:$0xf] %v1244
      %1344 = vst [vmem:[#allocation3 + $0x4fc] sm:$0xf] %v1245
      %1345 = vst [vmem:[#allocation3 + $0x520] sm:$0xf] %v1246
      %1346 = vst [vmem:[#allocation3 + $0x544] sm:$0xf] %v1247
      %1347 = vst [vmem:[#allocation3 + $0x568] sm:$0xf] %v1248
      %1348 = vst [vmem:[#allocation3 + $0x58c] sm:$0xf] %v1249
      %1349 = vst [vmem:[#allocation3 + $0x5b0] sm:$0xf] %v1250
      %1350 = vst [vmem:[#allocation3 + $0x5d4] sm:$0xf] %v1251
      %1351 = vst [vmem:[#allocation3 + $0x5f8] sm:$0xf] %v1252
      %1352 = vst [vmem:[#allocation3 + $0x61c] sm:$0xf] %v1253
      %1353 = vst [vmem:[#allocation3 + $0x640] sm:$0xf] %v1254
      %1354 = vst [vmem:[#allocation3 + $0x664] sm:$0xf] %v1255
      %1355 = vst [vmem:[#allocation3 + $0x688] sm:$0xf] %v1256
      %1356 = vst [vmem:[#allocation3 + $0x6ac] sm:$0xf] %v1257
      %1357 = vst [vmem:[#allocation3 + $0x1c] sm:$0xf] %v1213
      %1358 = vst [vmem:[#allocation3 + $0x40] sm:$0xf] %v1214
      %1359 = vst [vmem:[#allocation3 + $0x64] sm:$0xf] %v1215
      %1360 = vst [vmem:[#allocation3 + $0x88] sm:$0xf] %v1216
      %1361 = vst [vmem:[#allocation3 + $0xac] sm:$0xf] %v1217
      %1362 = vst [vmem:[#allocation3 + $0xd0] sm:$0xf] %v1218
      %1363 = vst [vmem:[#allocation3 + $0xf4] sm:$0xf] %v1219
      %1364 = vst [vmem:[#allocation3 + $0x118] sm:$0xf] %v1220
      %1365 = vst [vmem:[#allocation3 + $0x13c] sm:$0xf] %v1221
      %1366 = vst [vmem:[#allocation3 + $0x160] sm:$0xf] %v1222
      %1367 = vst [vmem:[#allocation3 + $0x184] sm:$0xf] %v1223
      %1368 = vst [vmem:[#allocation3 + $0x1a8] sm:$0xf] %v1224
      %1369 = vst [vmem:[#allocation3 + $0x1cc] sm:$0xf] %v1225
      %1370 = vst [vmem:[#allocation3 + $0x1f0] sm:$0xf] %v1226
      %1371 = vst [vmem:[#allocation3 + $0x214] sm:$0xf] %v1227
      %1372 = vst [vmem:[#allocation3 + $0x238] sm:$0xf] %v1228
      %1373 = vst [vmem:[#allocation3 + $0x25c] sm:$0xf] %v1229
      %1374 = vst [vmem:[#allocation3 + $0x280] sm:$0xf] %v1230
      %1375 = vst [vmem:[#allocation3 + $0x2a4] sm:$0xf] %v1231
      %1376 = vst [vmem:[#allocation3 + $0x2c8] sm:$0xf] %v1232
      %1377 = vst [vmem:[#allocation3 + $0x2ec] sm:$0xf] %v1233
      %1378 = vst [vmem:[#allocation3 + $0x310] sm:$0xf] %v1234
      %1379 = vst [vmem:[#allocation3 + $0x334] sm:$0xf] %v1235
      %1380 = vst [vmem:[#allocation3 + $0x358] sm:$0xf] %v1236
      %1381 = vst [vmem:[#allocation3 + $0x37c] sm:$0xf] %v1237
      %1382 = vst [vmem:[#allocation3 + $0x3a0] sm:$0xf] %v1238
      %1383 = vst [vmem:[#allocation3 + $0x3c4] sm:$0xf] %v1239
      %1384 = vst [vmem:[#allocation3 + $0x3e8] sm:$0xf] %v1240
      %1385 = vst [vmem:[#allocation3 + $0x40c] sm:$0xf] %v1241
      %1386 = vst [vmem:[#allocation3 + $0x430] sm:$0xf] %v1242
      %1387 = vst [vmem:[#allocation3 + $0x454] sm:$0xf] %v1243
      %1388 = vst [vmem:[#allocation3 + $0x478] sm:$0xf] %v1244
      %1389 = vst [vmem:[#allocation3 + $0x49c] sm:$0xf] %v1245
      %1390 = vst [vmem:[#allocation3 + $0x4c0] sm:$0xf] %v1246
      %1391 = vst [vmem:[#allocation3 + $0x4e4] sm:$0xf] %v1247
      %1392 = vst [vmem:[#allocation3 + $0x508] sm:$0xf] %v1248
      %1393 = vst [vmem:[#allocation3 + $0x52c] sm:$0xf] %v1249
      %1394 = vst [vmem:[#allocation3 + $0x550] sm:$0xf] %v1250
      %1395 = vst [vmem:[#allocation3 + $0x574] sm:$0xf] %v1251
      %1396 = vst [vmem:[#allocation3 + $0x598] sm:$0xf] %v1252
      %1397 = vst [vmem:[#allocation3 + $0x5bc] sm:$0xf] %v1253
      %1398 = vst [vmem:[#allocation3 + $0x5e0] sm:$0xf] %v1254
      %1399 = vst [vmem:[#allocation3 + $0x604] sm:$0xf] %v1255
      %1400 = vst [vmem:[#allocation3 + $0x628] sm:$0xf] %v1256
      %1401 = vst [vmem:[#allocation3 + $0x64c] sm:$0xf] %v1257
      %1402 = vst [vmem:[#allocation3 + $0x670] sm:$0xf] %v1258
      %1403 = vst [vmem:[#allocation3 + $0x694] sm:$0xf] %v1259
      %1404 = vst [vmem:[#allocation3 + $0x6b8] sm:$0xf] %v1260
      %v1405 = vld [vmem:[#allocation2 + $0x4] sm:$0xf]
      %v1406 = vld [vmem:[#allocation2 + $0x8] sm:$0xf]
      %v1407 = vld [vmem:[#allocation2 + $0xc] sm:$0xf]
      %v1408 = vld [vmem:[#allocation2 + $0x10] sm:$0x1]
      %v1409 = vld [vmem:[#allocation2 + $0x1c] sm:$0xf]
      %v1410 = vld [vmem:[#allocation2 + $0x20] sm:$0xf]
      %v1411 = vld [vmem:[#allocation2 + $0x24] sm:$0xf]
      %v1412 = vld [vmem:[#allocation2 + $0x28] sm:$0x1]
      %v1413 = vld [vmem:[#allocation2 + $0x34] sm:$0xf]
      %v1414 = vld [vmem:[#allocation2 + $0x38] sm:$0xf]
      %v1415 = vld [vmem:[#allocation2 + $0x3c] sm:$0xf]
      %v1416 = vld [vmem:[#allocation2 + $0x40] sm:$0x1]
      %v1417 = vld [vmem:[#allocation2 + $0x4c] sm:$0xf]
      %v1418 = vld [vmem:[#allocation2 + $0x50] sm:$0xf]
      %v1419 = vld [vmem:[#allocation2 + $0x54] sm:$0xf]
      %v1420 = vld [vmem:[#allocation2 + $0x58] sm:$0x1]
      %v1421 = vld [vmem:[#allocation2 + $0x64] sm:$0xf]
      %v1422 = vld [vmem:[#allocation2 + $0x68] sm:$0xf]
      %v1423 = vld [vmem:[#allocation2 + $0x6c] sm:$0xf]
      %v1424 = vld [vmem:[#allocation2 + $0x70] sm:$0x1]
      %v1425 = vld [vmem:[#allocation2 + $0x7c] sm:$0xf]
      %v1426 = vld [vmem:[#allocation2 + $0x80] sm:$0xf]
      %v1427 = vld [vmem:[#allocation2 + $0x84] sm:$0xf]
      %v1428 = vld [vmem:[#allocation2 + $0x88] sm:$0x1]
      %v1429 = vld [vmem:[#allocation2 + $0x94] sm:$0xf]
      %v1430 = vld [vmem:[#allocation2 + $0x98] sm:$0xf]
      %v1431 = vld [vmem:[#allocation2 + $0x9c] sm:$0xf]
      %v1432 = vld [vmem:[#allocation2 + $0xa0] sm:$0x1]
      %v1433 = vld [vmem:[#allocation2 + $0xac] sm:$0xf]
      %v1434 = vld [vmem:[#allocation2 + $0xb0] sm:$0xf]
      %v1435 = vld [vmem:[#allocation2 + $0xb4] sm:$0xf]
      %v1436 = vld [vmem:[#allocation2 + $0xb8] sm:$0x1]
      %v1437 = vld [vmem:[#allocation2 + $0xc4] sm:$0xf]
      %v1438 = vld [vmem:[#allocation2 + $0xc8] sm:$0xf]
      %v1439 = vld [vmem:[#allocation2 + $0xcc] sm:$0xf]
      %v1440 = vld [vmem:[#allocation2 + $0xd0] sm:$0x1]
      %v1441 = vld [vmem:[#allocation2 + $0xdc] sm:$0xf]
      %v1442 = vld [vmem:[#allocation2 + $0xe0] sm:$0xf]
      %v1443 = vld [vmem:[#allocation2 + $0xe4] sm:$0xf]
      %v1444 = vld [vmem:[#allocation2 + $0xe8] sm:$0x1]
      %v1445 = vld [vmem:[#allocation2 + $0xf4] sm:$0xf]
      %v1446 = vld [vmem:[#allocation2 + $0xf8] sm:$0xf]
      %v1447 = vld [vmem:[#allocation2 + $0xfc] sm:$0xf]
      %v1448 = vld [vmem:[#allocation2 + $0x100] sm:$0x1]
      %v1449 = vld [vmem:[#allocation2 + $0x10c] sm:$0xf]
      %v1450 = vld [vmem:[#allocation2 + $0x110] sm:$0xf]
      %v1451 = vld [vmem:[#allocation2 + $0x114] sm:$0xf]
      %v1452 = vld [vmem:[#allocation2 + $0x118] sm:$0x1]
      %v1453 = vld [vmem:[#allocation2 + $0x124] sm:$0xf]
      %v1454 = vld [vmem:[#allocation2 + $0x128] sm:$0xf]
      %v1455 = vld [vmem:[#allocation2 + $0x12c] sm:$0xf]
      %v1456 = vld [vmem:[#allocation2 + $0x130] sm:$0x1]
      %v1457 = vld [vmem:[#allocation2 + $0x13c] sm:$0xf]
      %v1458 = vld [vmem:[#allocation2 + $0x140] sm:$0xf]
      %v1459 = vld [vmem:[#allocation2 + $0x144] sm:$0xf]
      %v1460 = vld [vmem:[#allocation2 + $0x148] sm:$0x1]
      %v1461 = vld [vmem:[#allocation2 + $0x154] sm:$0xf]
      %v1462 = vld [vmem:[#allocation2 + $0x158] sm:$0xf]
      %v1463 = vld [vmem:[#allocation2 + $0x15c] sm:$0xf]
      %v1464 = vld [vmem:[#allocation2 + $0x160] sm:$0x1]
      %v1465 = vld [vmem:[#allocation2 + $0x16c] sm:$0xf]
      %v1466 = vld [vmem:[#allocation2 + $0x170] sm:$0xf]
      %v1467 = vld [vmem:[#allocation2 + $0x174] sm:$0xf]
      %v1468 = vld [vmem:[#allocation2 + $0x178] sm:$0x1]
      %v1469 = vld [vmem:[#allocation2 + $0x184] sm:$0xf]
      %v1470 = vld [vmem:[#allocation2 + $0x188] sm:$0xf]
      %v1471 = vld [vmem:[#allocation2 + $0x18c] sm:$0xf]
      %v1472 = vld [vmem:[#allocation2 + $0x190] sm:$0x1]
      %v1473 = vld [vmem:[#allocation2 + $0x19c] sm:$0xf]
      %v1474 = vld [vmem:[#allocation2 + $0x1a0] sm:$0xf]
      %v1475 = vld [vmem:[#allocation2 + $0x1a4] sm:$0xf]
      %v1476 = vld [vmem:[#allocation2 + $0x1a8] sm:$0x1]
      %vm1477 = vsmask.f32 3328
      %vm1478 = vsmask.f32 7440
      %vm1479 = vmor %vm1477, %vm1478
      %v1481 = vshrl.u32 %v1405, 16
      %v1483 = vrot.slane %v1481, 4
      %v1484 = vshll.u32 %v1405, 16
      %v1486 = vrot.slane %v1484, 5
      %v1487 = vor.u32 %v1483, %v1486
      %v1488 = vrot.slane %v1487, 4
      %v1490 = vshll.u32 %v1406, 16
      %v1492 = vrot.slane %v1490, 5
      %v1493 = vsel %vm1479, %v1488, %v1492
      %v1494 = vshrl.u32 %v1406, 16
      %v1496 = vrot.slane %v1494, 4
      %v1497 = vor.u32 %v1496, %v1492
      %v1498 = vrot.slane %v1497, 4
      %v1500 = vshll.u32 %v1407, 16
      %v1502 = vrot.slane %v1500, 5
      %v1503 = vsel %vm1479, %v1498, %v1502
      %v1504 = vshrl.u32 %v1407, 16
      %v1506 = vrot.slane %v1504, 4
      %v1507 = vor.u32 %v1506, %v1502
      %v1508 = vrot.slane %v1507, 4
      %v1510 = vshll.u32 %v1408, 16
      %v1512 = vrot.slane %v1510, 5
      %v1513 = vsel %vm1479, %v1508, %v1512
      %v1515 = vshrl.u32 %v1409, 16
      %v1517 = vrot.slane %v1515, 4
      %v1518 = vshll.u32 %v1409, 16
      %v1520 = vrot.slane %v1518, 5
      %v1521 = vor.u32 %v1517, %v1520
      %v1522 = vrot.slane %v1521, 4
      %v1524 = vshll.u32 %v1410, 16
      %v1526 = vrot.slane %v1524, 5
      %v1527 = vsel %vm1479, %v1522, %v1526
      %v1528 = vshrl.u32 %v1410, 16
      %v1530 = vrot.slane %v1528, 4
      %v1531 = vor.u32 %v1530, %v1526
      %v1532 = vrot.slane %v1531, 4
      %v1534 = vshll.u32 %v1411, 16
      %v1536 = vrot.slane %v1534, 5
      %v1537 = vsel %vm1479, %v1532, %v1536
      %v1538 = vshrl.u32 %v1411, 16
      %v1540 = vrot.slane %v1538, 4
      %v1541 = vor.u32 %v1540, %v1536
      %v1542 = vrot.slane %v1541, 4
      %v1544 = vshll.u32 %v1412, 16
      %v1546 = vrot.slane %v1544, 5
      %v1547 = vsel %vm1479, %v1542, %v1546
      %v1549 = vshrl.u32 %v1413, 16
      %v1551 = vrot.slane %v1549, 4
      %v1552 = vshll.u32 %v1413, 16
      %v1554 = vrot.slane %v1552, 5
      %v1555 = vor.u32 %v1551, %v1554
      %v1556 = vrot.slane %v1555, 4
      %v1558 = vshll.u32 %v1414, 16
      %v1560 = vrot.slane %v1558, 5
      %v1561 = vsel %vm1479, %v1556, %v1560
      %v1562 = vshrl.u32 %v1414, 16
      %v1564 = vrot.slane %v1562, 4
      %v1565 = vor.u32 %v1564, %v1560
      %v1566 = vrot.slane %v1565, 4
      %v1568 = vshll.u32 %v1415, 16
      %v1570 = vrot.slane %v1568, 5
      %v1571 = vsel %vm1479, %v1566, %v1570
      %v1572 = vshrl.u32 %v1415, 16
      %v1574 = vrot.slane %v1572, 4
      %v1575 = vor.u32 %v1574, %v1570
      %v1576 = vrot.slane %v1575, 4
      %v1578 = vshll.u32 %v1416, 16
      %v1580 = vrot.slane %v1578, 5
      %v1581 = vsel %vm1479, %v1576, %v1580
      %v1583 = vshrl.u32 %v1417, 16
      %v1585 = vrot.slane %v1583, 4
      %v1586 = vshll.u32 %v1417, 16
      %v1588 = vrot.slane %v1586, 5
      %v1589 = vor.u32 %v1585, %v1588
      %v1590 = vrot.slane %v1589, 4
      %v1592 = vshll.u32 %v1418, 16
      %v1594 = vrot.slane %v1592, 5
      %v1595 = vsel %vm1479, %v1590, %v1594
      %v1596 = vshrl.u32 %v1418, 16
      %v1598 = vrot.slane %v1596, 4
      %v1599 = vor.u32 %v1598, %v1594
      %v1600 = vrot.slane %v1599, 4
      %v1602 = vshll.u32 %v1419, 16
      %v1604 = vrot.slane %v1602, 5
      %v1605 = vsel %vm1479, %v1600, %v1604
      %v1606 = vshrl.u32 %v1419, 16
      %v1608 = vrot.slane %v1606, 4
      %v1609 = vor.u32 %v1608, %v1604
      %v1610 = vrot.slane %v1609, 4
      %v1612 = vshll.u32 %v1420, 16
      %v1614 = vrot.slane %v1612, 5
      %v1615 = vsel %vm1479, %v1610, %v1614
      %v1617 = vshrl.u32 %v1421, 16
      %v1619 = vrot.slane %v1617, 4
      %v1620 = vshll.u32 %v1421, 16
      %v1622 = vrot.slane %v1620, 5
      %v1623 = vor.u32 %v1619, %v1622
      %v1624 = vrot.slane %v1623, 4
      %v1626 = vshll.u32 %v1422, 16
      %v1628 = vrot.slane %v1626, 5
      %v1629 = vsel %vm1479, %v1624, %v1628
      %v1630 = vshrl.u32 %v1422, 16
      %v1632 = vrot.slane %v1630, 4
      %v1633 = vor.u32 %v1632, %v1628
      %v1634 = vrot.slane %v1633, 4
      %v1636 = vshll.u32 %v1423, 16
      %v1638 = vrot.slane %v1636, 5
      %v1639 = vsel %vm1479, %v1634, %v1638
      %v1640 = vshrl.u32 %v1423, 16
      %v1642 = vrot.slane %v1640, 4
      %v1643 = vor.u32 %v1642, %v1638
      %v1644 = vrot.slane %v1643, 4
      %v1646 = vshll.u32 %v1424, 16
      %v1648 = vrot.slane %v1646, 5
      %v1649 = vsel %vm1479, %v1644, %v1648
      %v1651 = vshrl.u32 %v1425, 16
      %v1653 = vrot.slane %v1651, 4
      %v1654 = vshll.u32 %v1425, 16
      %v1656 = vrot.slane %v1654, 5
      %v1657 = vor.u32 %v1653, %v1656
      %v1658 = vrot.slane %v1657, 4
      %v1660 = vshll.u32 %v1426, 16
      %v1662 = vrot.slane %v1660, 5
      %v1663 = vsel %vm1479, %v1658, %v1662
      %v1664 = vshrl.u32 %v1426, 16
      %v1666 = vrot.slane %v1664, 4
      %v1667 = vor.u32 %v1666, %v1662
      %v1668 = vrot.slane %v1667, 4
      %v1670 = vshll.u32 %v1427, 16
      %v1672 = vrot.slane %v1670, 5
      %v1673 = vsel %vm1479, %v1668, %v1672
      %v1674 = vshrl.u32 %v1427, 16
      %v1676 = vrot.slane %v1674, 4
      %v1677 = vor.u32 %v1676, %v1672
      %v1678 = vrot.slane %v1677, 4
      %v1680 = vshll.u32 %v1428, 16
      %v1682 = vrot.slane %v1680, 5
      %v1683 = vsel %vm1479, %v1678, %v1682
      %v1685 = vshrl.u32 %v1429, 16
      %v1687 = vrot.slane %v1685, 4
      %v1688 = vshll.u32 %v1429, 16
      %v1690 = vrot.slane %v1688, 5
      %v1691 = vor.u32 %v1687, %v1690
      %v1692 = vrot.slane %v1691, 4
      %v1694 = vshll.u32 %v1430, 16
      %v1696 = vrot.slane %v1694, 5
      %v1697 = vsel %vm1479, %v1692, %v1696
      %v1698 = vshrl.u32 %v1430, 16
      %v1700 = vrot.slane %v1698, 4
      %v1701 = vor.u32 %v1700, %v1696
      %v1702 = vrot.slane %v1701, 4
      %v1704 = vshll.u32 %v1431, 16
      %v1706 = vrot.slane %v1704, 5
      %v1707 = vsel %vm1479, %v1702, %v1706
      %v1708 = vshrl.u32 %v1431, 16
      %v1710 = vrot.slane %v1708, 4
      %v1711 = vor.u32 %v1710, %v1706
      %v1712 = vrot.slane %v1711, 4
      %v1714 = vshll.u32 %v1432, 16
      %v1716 = vrot.slane %v1714, 5
      %v1717 = vsel %vm1479, %v1712, %v1716
      %v1719 = vshrl.u32 %v1433, 16
      %v1721 = vrot.slane %v1719, 4
      %v1722 = vshll.u32 %v1433, 16
      %v1724 = vrot.slane %v1722, 5
      %v1725 = vor.u32 %v1721, %v1724
      %v1726 = vrot.slane %v1725, 4
      %v1728 = vshll.u32 %v1434, 16
      %v1730 = vrot.slane %v1728, 5
      %v1731 = vsel %vm1479, %v1726, %v1730
      %v1732 = vshrl.u32 %v1434, 16
      %v1734 = vrot.slane %v1732, 4
      %v1735 = vor.u32 %v1734, %v1730
      %v1736 = vrot.slane %v1735, 4
      %v1738 = vshll.u32 %v1435, 16
      %v1740 = vrot.slane %v1738, 5
      %v1741 = vsel %vm1479, %v1736, %v1740
      %v1742 = vshrl.u32 %v1435, 16
      %v1744 = vrot.slane %v1742, 4
      %v1745 = vor.u32 %v1744, %v1740
      %v1746 = vrot.slane %v1745, 4
      %v1748 = vshll.u32 %v1436, 16
      %v1750 = vrot.slane %v1748, 5
      %v1751 = vsel %vm1479, %v1746, %v1750
      %v1753 = vshrl.u32 %v1437, 16
      %v1755 = vrot.slane %v1753, 4
      %v1756 = vshll.u32 %v1437, 16
      %v1758 = vrot.slane %v1756, 5
      %v1759 = vor.u32 %v1755, %v1758
      %v1760 = vrot.slane %v1759, 4
      %v1762 = vshll.u32 %v1438, 16
      %v1764 = vrot.slane %v1762, 5
      %v1765 = vsel %vm1479, %v1760, %v1764
      %v1766 = vshrl.u32 %v1438, 16
      %v1768 = vrot.slane %v1766, 4
      %v1769 = vor.u32 %v1768, %v1764
      %v1770 = vrot.slane %v1769, 4
      %v1772 = vshll.u32 %v1439, 16
      %v1774 = vrot.slane %v1772, 5
      %v1775 = vsel %vm1479, %v1770, %v1774
      %v1776 = vshrl.u32 %v1439, 16
      %v1778 = vrot.slane %v1776, 4
      %v1779 = vor.u32 %v1778, %v1774
      %v1780 = vrot.slane %v1779, 4
      %v1782 = vshll.u32 %v1440, 16
      %v1784 = vrot.slane %v1782, 5
      %v1785 = vsel %vm1479, %v1780, %v1784
      %v1787 = vshrl.u32 %v1441, 16
      %v1789 = vrot.slane %v1787, 4
      %v1790 = vshll.u32 %v1441, 16
      %v1792 = vrot.slane %v1790, 5
      %v1793 = vor.u32 %v1789, %v1792
      %v1794 = vrot.slane %v1793, 4
      %v1796 = vshll.u32 %v1442, 16
      %v1798 = vrot.slane %v1796, 5
      %v1799 = vsel %vm1479, %v1794, %v1798
      %v1800 = vshrl.u32 %v1442, 16
      %v1802 = vrot.slane %v1800, 4
      %v1803 = vor.u32 %v1802, %v1798
      %v1804 = vrot.slane %v1803, 4
      %v1806 = vshll.u32 %v1443, 16
      %v1808 = vrot.slane %v1806, 5
      %v1809 = vsel %vm1479, %v1804, %v1808
      %v1810 = vshrl.u32 %v1443, 16
      %v1812 = vrot.slane %v1810, 4
      %v1813 = vor.u32 %v1812, %v1808
      %v1814 = vrot.slane %v1813, 4
      %v1816 = vshll.u32 %v1444, 16
      %v1818 = vrot.slane %v1816, 5
      %v1819 = vsel %vm1479, %v1814, %v1818
      %v1821 = vshrl.u32 %v1445, 16
      %v1823 = vrot.slane %v1821, 4
      %v1824 = vshll.u32 %v1445, 16
      %v1826 = vrot.slane %v1824, 5
      %v1827 = vor.u32 %v1823, %v1826
      %v1828 = vrot.slane %v1827, 4
      %v1830 = vshll.u32 %v1446, 16
      %v1832 = vrot.slane %v1830, 5
      %v1833 = vsel %vm1479, %v1828, %v1832
      %v1834 = vshrl.u32 %v1446, 16
      %v1836 = vrot.slane %v1834, 4
      %v1837 = vor.u32 %v1836, %v1832
      %v1838 = vrot.slane %v1837, 4
      %v1840 = vshll.u32 %v1447, 16
      %v1842 = vrot.slane %v1840, 5
      %v1843 = vsel %vm1479, %v1838, %v1842
      %v1844 = vshrl.u32 %v1447, 16
      %v1846 = vrot.slane %v1844, 4
      %v1847 = vor.u32 %v1846, %v1842
      %v1848 = vrot.slane %v1847, 4
      %v1850 = vshll.u32 %v1448, 16
      %v1852 = vrot.slane %v1850, 5
      %v1853 = vsel %vm1479, %v1848, %v1852
      %v1855 = vshrl.u32 %v1449, 16
      %v1857 = vrot.slane %v1855, 4
      %v1858 = vshll.u32 %v1449, 16
      %v1860 = vrot.slane %v1858, 5
      %v1861 = vor.u32 %v1857, %v1860
      %v1862 = vrot.slane %v1861, 4
      %v1864 = vshll.u32 %v1450, 16
      %v1866 = vrot.slane %v1864, 5
      %v1867 = vsel %vm1479, %v1862, %v1866
      %v1868 = vshrl.u32 %v1450, 16
      %v1870 = vrot.slane %v1868, 4
      %v1871 = vor.u32 %v1870, %v1866
      %v1872 = vrot.slane %v1871, 4
      %v1874 = vshll.u32 %v1451, 16
      %v1876 = vrot.slane %v1874, 5
      %v1877 = vsel %vm1479, %v1872, %v1876
      %v1878 = vshrl.u32 %v1451, 16
      %v1880 = vrot.slane %v1878, 4
      %v1881 = vor.u32 %v1880, %v1876
      %v1882 = vrot.slane %v1881, 4
      %v1884 = vshll.u32 %v1452, 16
      %v1886 = vrot.slane %v1884, 5
      %v1887 = vsel %vm1479, %v1882, %v1886
      %v1889 = vshrl.u32 %v1453, 16
      %v1891 = vrot.slane %v1889, 4
      %v1892 = vshll.u32 %v1453, 16
      %v1894 = vrot.slane %v1892, 5
      %v1895 = vor.u32 %v1891, %v1894
      %v1896 = vrot.slane %v1895, 4
      %v1898 = vshll.u32 %v1454, 16
      %v1900 = vrot.slane %v1898, 5
      %v1901 = vsel %vm1479, %v1896, %v1900
      %v1902 = vshrl.u32 %v1454, 16
      %v1904 = vrot.slane %v1902, 4
      %v1905 = vor.u32 %v1904, %v1900
      %v1906 = vrot.slane %v1905, 4
      %v1908 = vshll.u32 %v1455, 16
      %v1910 = vrot.slane %v1908, 5
      %v1911 = vsel %vm1479, %v1906, %v1910
      %v1912 = vshrl.u32 %v1455, 16
      %v1914 = vrot.slane %v1912, 4
      %v1915 = vor.u32 %v1914, %v1910
      %v1916 = vrot.slane %v1915, 4
      %v1918 = vshll.u32 %v1456, 16
      %v1920 = vrot.slane %v1918, 5
      %v1921 = vsel %vm1479, %v1916, %v1920
      %v1923 = vshrl.u32 %v1457, 16
      %v1925 = vrot.slane %v1923, 4
      %v1926 = vshll.u32 %v1457, 16
      %v1928 = vrot.slane %v1926, 5
      %v1929 = vor.u32 %v1925, %v1928
      %v1930 = vrot.slane %v1929, 4
      %v1932 = vshll.u32 %v1458, 16
      %v1934 = vrot.slane %v1932, 5
      %v1935 = vsel %vm1479, %v1930, %v1934
      %v1936 = vshrl.u32 %v1458, 16
      %v1938 = vrot.slane %v1936, 4
      %v1939 = vor.u32 %v1938, %v1934
      %v1940 = vrot.slane %v1939, 4
      %v1942 = vshll.u32 %v1459, 16
      %v1944 = vrot.slane %v1942, 5
      %v1945 = vsel %vm1479, %v1940, %v1944
      %v1946 = vshrl.u32 %v1459, 16
      %v1948 = vrot.slane %v1946, 4
      %v1949 = vor.u32 %v1948, %v1944
      %v1950 = vrot.slane %v1949, 4
      %v1952 = vshll.u32 %v1460, 16
      %v1954 = vrot.slane %v1952, 5
      %v1955 = vsel %vm1479, %v1950, %v1954
      %v1957 = vshrl.u32 %v1461, 16
      %v1959 = vrot.slane %v1957, 4
      %v1960 = vshll.u32 %v1461, 16
      %v1962 = vrot.slane %v1960, 5
      %v1963 = vor.u32 %v1959, %v1962
      %v1964 = vrot.slane %v1963, 4
      %v1966 = vshll.u32 %v1462, 16
      %v1968 = vrot.slane %v1966, 5
      %v1969 = vsel %vm1479, %v1964, %v1968
      %v1970 = vshrl.u32 %v1462, 16
      %v1972 = vrot.slane %v1970, 4
      %v1973 = vor.u32 %v1972, %v1968
      %v1974 = vrot.slane %v1973, 4
      %v1976 = vshll.u32 %v1463, 16
      %v1978 = vrot.slane %v1976, 5
      %v1979 = vsel %vm1479, %v1974, %v1978
      %v1980 = vshrl.u32 %v1463, 16
      %v1982 = vrot.slane %v1980, 4
      %v1983 = vor.u32 %v1982, %v1978
      %v1984 = vrot.slane %v1983, 4
      %v1986 = vshll.u32 %v1464, 16
      %v1988 = vrot.slane %v1986, 5
      %v1989 = vsel %vm1479, %v1984, %v1988
      %v1991 = vshrl.u32 %v1465, 16
      %v1993 = vrot.slane %v1991, 4
      %v1994 = vshll.u32 %v1465, 16
      %v1996 = vrot.slane %v1994, 5
      %v1997 = vor.u32 %v1993, %v1996
      %v1998 = vrot.slane %v1997, 4
      %v2000 = vshll.u32 %v1466, 16
      %v2002 = vrot.slane %v2000, 5
      %v2003 = vsel %vm1479, %v1998, %v2002
      %v2004 = vshrl.u32 %v1466, 16
      %v2006 = vrot.slane %v2004, 4
      %v2007 = vor.u32 %v2006, %v2002
      %v2008 = vrot.slane %v2007, 4
      %v2010 = vshll.u32 %v1467, 16
      %v2012 = vrot.slane %v2010, 5
      %v2013 = vsel %vm1479, %v2008, %v2012
      %v2014 = vshrl.u32 %v1467, 16
      %v2016 = vrot.slane %v2014, 4
      %v2017 = vor.u32 %v2016, %v2012
      %v2018 = vrot.slane %v2017, 4
      %v2020 = vshll.u32 %v1468, 16
      %v2022 = vrot.slane %v2020, 5
      %v2023 = vsel %vm1479, %v2018, %v2022
      %2072 = vst [vmem:[#allocation3 + $0x8] sm:$0xf] %v1493
      %2073 = vst [vmem:[#allocation3 + $0x2c] sm:$0xf] %v1503
      %2074 = vst [vmem:[#allocation3 + $0x50] sm:$0xf] %v1513
      %2075 = vst [vmem:[#allocation3 + $0x74] sm:$0xf] %v1527
      %2076 = vst [vmem:[#allocation3 + $0x98] sm:$0xf] %v1537
      %2077 = vst [vmem:[#allocation3 + $0xbc] sm:$0xf] %v1547
      %2078 = vst [vmem:[#allocation3 + $0xe0] sm:$0xf] %v1561
      %2079 = vst [vmem:[#allocation3 + $0x104] sm:$0xf] %v1571
      %2080 = vst [vmem:[#allocation3 + $0x128] sm:$0xf] %v1581
      %2081 = vst [vmem:[#allocation3 + $0x14c] sm:$0xf] %v1595
      %2082 = vst [vmem:[#allocation3 + $0x170] sm:$0xf] %v1605
      %2083 = vst [vmem:[#allocation3 + $0x194] sm:$0xf] %v1615
      %2084 = vst [vmem:[#allocation3 + $0x1b8] sm:$0xf] %v1629
      %2085 = vst [vmem:[#allocation3 + $0x1dc] sm:$0xf] %v1639
      %2086 = vst [vmem:[#allocation3 + $0x200] sm:$0xf] %v1649
      %2087 = vst [vmem:[#allocation3 + $0x224] sm:$0xf] %v1663
      %2088 = vst [vmem:[#allocation3 + $0x248] sm:$0xf] %v1673
      %2089 = vst [vmem:[#allocation3 + $0x26c] sm:$0xf] %v1683
      %2090 = vst [vmem:[#allocation3 + $0x290] sm:$0xf] %v1697
      %2091 = vst [vmem:[#allocation3 + $0x2b4] sm:$0xf] %v1707
      %2092 = vst [vmem:[#allocation3 + $0x2d8] sm:$0xf] %v1717
      %2093 = vst [vmem:[#allocation3 + $0x2fc] sm:$0xf] %v1731
      %2094 = vst [vmem:[#allocation3 + $0x320] sm:$0xf] %v1741
      %2095 = vst [vmem:[#allocation3 + $0x344] sm:$0xf] %v1751
      %2096 = vst [vmem:[#allocation3 + $0x368] sm:$0xf] %v1765
      %2097 = vst [vmem:[#allocation3 + $0x38c] sm:$0xf] %v1775
      %2098 = vst [vmem:[#allocation3 + $0x3b0] sm:$0xf] %v1785
      %2099 = vst [vmem:[#allocation3 + $0x3d4] sm:$0xf] %v1799
      %2100 = vst [vmem:[#allocation3 + $0x3f8] sm:$0xf] %v1809
      %2101 = vst [vmem:[#allocation3 + $0x41c] sm:$0xf] %v1819
      %2102 = vst [vmem:[#allocation3 + $0x440] sm:$0xf] %v1833
      %2103 = vst [vmem:[#allocation3 + $0x464] sm:$0xf] %v1843
      %2104 = vst [vmem:[#allocation3 + $0x488] sm:$0xf] %v1853
      %2105 = vst [vmem:[#allocation3 + $0x4ac] sm:$0xf] %v1867
      %2106 = vst [vmem:[#allocation3 + $0x4d0] sm:$0xf] %v1877
      %2107 = vst [vmem:[#allocation3 + $0x4f4] sm:$0xf] %v1887
      %2108 = vst [vmem:[#allocation3 + $0x518] sm:$0xf] %v1901
      %2109 = vst [vmem:[#allocation3 + $0x53c] sm:$0xf] %v1911
      %2110 = vst [vmem:[#allocation3 + $0x560] sm:$0xf] %v1921
      %2111 = vst [vmem:[#allocation3 + $0x584] sm:$0xf] %v1935
      %2112 = vst [vmem:[#allocation3 + $0x5a8] sm:$0xf] %v1945
      %2113 = vst [vmem:[#allocation3 + $0x5cc] sm:$0xf] %v1955
      %2114 = vst [vmem:[#allocation3 + $0x5f0] sm:$0xf] %v1969
      %2115 = vst [vmem:[#allocation3 + $0x614] sm:$0xf] %v1979
      %2116 = vst [vmem:[#allocation3 + $0x638] sm:$0xf] %v1989
      %2117 = vst [vmem:[#allocation3 + $0x65c] sm:$0xf] %v2003
      %2118 = vst [vmem:[#allocation3 + $0x680] sm:$0xf] %v2013
      %2119 = vst [vmem:[#allocation3 + $0x6a4] sm:$0xf] %v2023
      %v2121 = vshrl.u32 %v1469, 16
      %v2123 = vrot.slane %v2121, 4
      %v2124 = vshll.u32 %v1469, 16
      %v2126 = vrot.slane %v2124, 5
      %v2127 = vor.u32 %v2123, %v2126
      %v2128 = vrot.slane %v2127, 4
      %v2130 = vshll.u32 %v1470, 16
      %v2132 = vrot.slane %v2130, 5
      %v2133 = vsel %vm1479, %v2128, %v2132
      %v2134 = vshrl.u32 %v1470, 16
      %v2136 = vrot.slane %v2134, 4
      %v2137 = vor.u32 %v2136, %v2132
      %v2138 = vrot.slane %v2137, 4
      %v2140 = vshll.u32 %v1471, 16
      %v2142 = vrot.slane %v2140, 5
      %v2143 = vsel %vm1479, %v2138, %v2142
      %v2144 = vshrl.u32 %v1471, 16
      %v2146 = vrot.slane %v2144, 4
      %v2147 = vor.u32 %v2146, %v2142
      %v2148 = vrot.slane %v2147, 4
      %v2150 = vshll.u32 %v1472, 16
      %v2152 = vrot.slane %v2150, 5
      %v2153 = vsel %vm1479, %v2148, %v2152
      %2157 = vst [vmem:[#allocation3 + $0x14] sm:$0xf] %v1527
      %2158 = vst [vmem:[#allocation3 + $0x38] sm:$0xf] %v1537
      %2159 = vst [vmem:[#allocation3 + $0x5c] sm:$0xf] %v1547
      %2160 = vst [vmem:[#allocation3 + $0x80] sm:$0xf] %v1561
      %2161 = vst [vmem:[#allocation3 + $0xa4] sm:$0xf] %v1571
      %2162 = vst [vmem:[#allocation3 + $0xc8] sm:$0xf] %v1581
      %2163 = vst [vmem:[#allocation3 + $0xec] sm:$0xf] %v1595
      %2164 = vst [vmem:[#allocation3 + $0x110] sm:$0xf] %v1605
      %2165 = vst [vmem:[#allocation3 + $0x134] sm:$0xf] %v1615
      %2166 = vst [vmem:[#allocation3 + $0x158] sm:$0xf] %v1629
      %2167 = vst [vmem:[#allocation3 + $0x17c] sm:$0xf] %v1639
      %2168 = vst [vmem:[#allocation3 + $0x1a0] sm:$0xf] %v1649
      %2169 = vst [vmem:[#allocation3 + $0x1c4] sm:$0xf] %v1663
      %2170 = vst [vmem:[#allocation3 + $0x1e8] sm:$0xf] %v1673
      %2171 = vst [vmem:[#allocation3 + $0x20c] sm:$0xf] %v1683
      %2172 = vst [vmem:[#allocation3 + $0x230] sm:$0xf] %v1697
      %2173 = vst [vmem:[#allocation3 + $0x254] sm:$0xf] %v1707
      %2174 = vst [vmem:[#allocation3 + $0x278] sm:$0xf] %v1717
      %2175 = vst [vmem:[#allocation3 + $0x29c] sm:$0xf] %v1731
      %2176 = vst [vmem:[#allocation3 + $0x2c0] sm:$0xf] %v1741
      %2177 = vst [vmem:[#allocation3 + $0x2e4] sm:$0xf] %v1751
      %2178 = vst [vmem:[#allocation3 + $0x308] sm:$0xf] %v1765
      %2179 = vst [vmem:[#allocation3 + $0x32c] sm:$0xf] %v1775
      %2180 = vst [vmem:[#allocation3 + $0x350] sm:$0xf] %v1785
      %2181 = vst [vmem:[#allocation3 + $0x374] sm:$0xf] %v1799
      %2182 = vst [vmem:[#allocation3 + $0x398] sm:$0xf] %v1809
      %2183 = vst [vmem:[#allocation3 + $0x3bc] sm:$0xf] %v1819
      %2184 = vst [vmem:[#allocation3 + $0x3e0] sm:$0xf] %v1833
      %2185 = vst [vmem:[#allocation3 + $0x404] sm:$0xf] %v1843
      %2186 = vst [vmem:[#allocation3 + $0x428] sm:$0xf] %v1853
      %2187 = vst [vmem:[#allocation3 + $0x44c] sm:$0xf] %v1867
      %2188 = vst [vmem:[#allocation3 + $0x470] sm:$0xf] %v1877
      %2189 = vst [vmem:[#allocation3 + $0x494] sm:$0xf] %v1887
      %2190 = vst [vmem:[#allocation3 + $0x4b8] sm:$0xf] %v1901
      %2191 = vst [vmem:[#allocation3 + $0x4dc] sm:$0xf] %v1911
      %2192 = vst [vmem:[#allocation3 + $0x500] sm:$0xf] %v1921
      %2193 = vst [vmem:[#allocation3 + $0x524] sm:$0xf] %v1935
      %2194 = vst [vmem:[#allocation3 + $0x548] sm:$0xf] %v1945
      %2195 = vst [vmem:[#allocation3 + $0x56c] sm:$0xf] %v1955
      %2196 = vst [vmem:[#allocation3 + $0x590] sm:$0xf] %v1969
      %2197 = vst [vmem:[#allocation3 + $0x5b4] sm:$0xf] %v1979
      %2198 = vst [vmem:[#allocation3 + $0x5d8] sm:$0xf] %v1989
      %2199 = vst [vmem:[#allocation3 + $0x5fc] sm:$0xf] %v2003
      %2200 = vst [vmem:[#allocation3 + $0x620] sm:$0xf] %v2013
      %2201 = vst [vmem:[#allocation3 + $0x644] sm:$0xf] %v2023
      %2202 = vst [vmem:[#allocation3 + $0x668] sm:$0xf] %v2133
      %2203 = vst [vmem:[#allocation3 + $0x68c] sm:$0xf] %v2143
      %2204 = vst [vmem:[#allocation3 + $0x6b0] sm:$0xf] %v2153
      %v2206 = vshrl.u32 %v1473, 16
      %v2208 = vrot.slane %v2206, 4
      %v2209 = vshll.u32 %v1473, 16
      %v2211 = vrot.slane %v2209, 5
      %v2212 = vor.u32 %v2208, %v2211
      %v2213 = vrot.slane %v2212, 4
      %v2215 = vshll.u32 %v1474, 16
      %v2217 = vrot.slane %v2215, 5
      %v2218 = vsel %vm1479, %v2213, %v2217
      %v2219 = vshrl.u32 %v1474, 16
      %v2221 = vrot.slane %v2219, 4
      %v2222 = vor.u32 %v2221, %v2217
      %v2223 = vrot.slane %v2222, 4
      %v2225 = vshll.u32 %v1475, 16
      %v2227 = vrot.slane %v2225, 5
      %v2228 = vsel %vm1479, %v2223, %v2227
      %v2229 = vshrl.u32 %v1475, 16
      %v2231 = vrot.slane %v2229, 4
      %v2232 = vor.u32 %v2231, %v2227
      %v2233 = vrot.slane %v2232, 4
      %v2235 = vshll.u32 %v1476, 16
      %v2237 = vrot.slane %v2235, 5
      %v2238 = vsel %vm1479, %v2233, %v2237
      %2242 = vst [vmem:[#allocation3 + $0x20] sm:$0xf] %v1561
      %2243 = vst [vmem:[#allocation3 + $0x44] sm:$0xf] %v1571
      %2244 = vst [vmem:[#allocation3 + $0x68] sm:$0xf] %v1581
      %2245 = vst [vmem:[#allocation3 + $0x8c] sm:$0xf] %v1595
      %2246 = vst [vmem:[#allocation3 + $0xb0] sm:$0xf] %v1605
      %2247 = vst [vmem:[#allocation3 + $0xd4] sm:$0xf] %v1615
      %2248 = vst [vmem:[#allocation3 + $0xf8] sm:$0xf] %v1629
      %2249 = vst [vmem:[#allocation3 + $0x11c] sm:$0xf] %v1639
      %2250 = vst [vmem:[#allocation3 + $0x140] sm:$0xf] %v1649
      %2251 = vst [vmem:[#allocation3 + $0x164] sm:$0xf] %v1663
      %2252 = vst [vmem:[#allocation3 + $0x188] sm:$0xf] %v1673
      %2253 = vst [vmem:[#allocation3 + $0x1ac] sm:$0xf] %v1683
      %2254 = vst [vmem:[#allocation3 + $0x1d0] sm:$0xf] %v1697
      %2255 = vst [vmem:[#allocation3 + $0x1f4] sm:$0xf] %v1707
      %2256 = vst [vmem:[#allocation3 + $0x218] sm:$0xf] %v1717
      %2257 = vst [vmem:[#allocation3 + $0x23c] sm:$0xf] %v1731
      %2258 = vst [vmem:[#allocation3 + $0x260] sm:$0xf] %v1741
      %2259 = vst [vmem:[#allocation3 + $0x284] sm:$0xf] %v1751
      %2260 = vst [vmem:[#allocation3 + $0x2a8] sm:$0xf] %v1765
      %2261 = vst [vmem:[#allocation3 + $0x2cc] sm:$0xf] %v1775
      %2262 = vst [vmem:[#allocation3 + $0x2f0] sm:$0xf] %v1785
      %2263 = vst [vmem:[#allocation3 + $0x314] sm:$0xf] %v1799
      %2264 = vst [vmem:[#allocation3 + $0x338] sm:$0xf] %v1809
      %2265 = vst [vmem:[#allocation3 + $0x35c] sm:$0xf] %v1819
      %2266 = vst [vmem:[#allocation3 + $0x380] sm:$0xf] %v1833
      %2267 = vst [vmem:[#allocation3 + $0x3a4] sm:$0xf] %v1843
      %2268 = vst [vmem:[#allocation3 + $0x3c8] sm:$0xf] %v1853
      %2269 = vst [vmem:[#allocation3 + $0x3ec] sm:$0xf] %v1867
      %2270 = vst [vmem:[#allocation3 + $0x410] sm:$0xf] %v1877
      %2271 = vst [vmem:[#allocation3 + $0x434] sm:$0xf] %v1887
      %2272 = vst [vmem:[#allocation3 + $0x458] sm:$0xf] %v1901
      %2273 = vst [vmem:[#allocation3 + $0x47c] sm:$0xf] %v1911
      %2274 = vst [vmem:[#allocation3 + $0x4a0] sm:$0xf] %v1921
      %2275 = vst [vmem:[#allocation3 + $0x4c4] sm:$0xf] %v1935
      %2276 = vst [vmem:[#allocation3 + $0x4e8] sm:$0xf] %v1945
      %2277 = vst [vmem:[#allocation3 + $0x50c] sm:$0xf] %v1955
      %2278 = vst [vmem:[#allocation3 + $0x530] sm:$0xf] %v1969
      %2279 = vst [vmem:[#allocation3 + $0x554] sm:$0xf] %v1979
      %2280 = vst [vmem:[#allocation3 + $0x578] sm:$0xf] %v1989
      %2281 = vst [vmem:[#allocation3 + $0x59c] sm:$0xf] %v2003
      %2282 = vst [vmem:[#allocation3 + $0x5c0] sm:$0xf] %v2013
      %2283 = vst [vmem:[#allocation3 + $0x5e4] sm:$0xf] %v2023
      %2284 = vst [vmem:[#allocation3 + $0x608] sm:$0xf] %v2133
      %2285 = vst [vmem:[#allocation3 + $0x62c] sm:$0xf] %v2143
      %2286 = vst [vmem:[#allocation3 + $0x650] sm:$0xf] %v2153
      %2287 = vst [vmem:[#allocation3 + $0x674] sm:$0xf] %v2218
      %2288 = vst [vmem:[#allocation3 + $0x698] sm:$0xf] %v2228
      %2289 = vst [vmem:[#allocation3 + $0x6bc] sm:$0xf] %v2238
      %v2290 = vld [vmem:[#allocation3] sm:$0xff]
      %v2291 = vld [vmem:[#allocation3 + $0x8] sm:$0xff]
      %v2292 = vld [vmem:[#allocation3 + $0x10] sm:$0xff]
      %v2293 = vld [vmem:[#allocation3 + $0x18] sm:$0xff]
      %v2294 = vld [vmem:[#allocation3 + $0x20] sm:$0xf]
      %v2295 = vld [vmem:[#allocation3 + $0x24] sm:$0xff]
      %v2296 = vld [vmem:[#allocation3 + $0x2c] sm:$0xff]
      %v2297 = vld [vmem:[#allocation3 + $0x34] sm:$0xff]
      %v2298 = vld [vmem:[#allocation3 + $0x3c] sm:$0xff]
      %v2299 = vld [vmem:[#allocation3 + $0x44] sm:$0xf]
      %v2300 = vld [vmem:[#allocation3 + $0x48] sm:$0xff]
      %v2301 = vld [vmem:[#allocation3 + $0x50] sm:$0xff]
      %v2302 = vld [vmem:[#allocation3 + $0x58] sm:$0xff]
      %v2303 = vld [vmem:[#allocation3 + $0x60] sm:$0xff]
      %v2304 = vld [vmem:[#allocation3 + $0x68] sm:$0xf]
      %v2305 = vld [vmem:[#allocation3 + $0x6c] sm:$0xff]
      %v2306 = vld [vmem:[#allocation3 + $0x74] sm:$0xff]
      %v2307 = vld [vmem:[#allocation3 + $0x7c] sm:$0xff]
      %v2308 = vld [vmem:[#allocation3 + $0x84] sm:$0xff]
      %v2309 = vld [vmem:[#allocation3 + $0x8c] sm:$0xf]
      %v2310 = vld [vmem:[#allocation3 + $0x90] sm:$0xff]
      %v2311 = vld [vmem:[#allocation3 + $0x98] sm:$0xff]
      %v2312 = vld [vmem:[#allocation3 + $0xa0] sm:$0xff]
      %v2313 = vld [vmem:[#allocation3 + $0xa8] sm:$0xff]
      %v2314 = vld [vmem:[#allocation3 + $0xb0] sm:$0xf]
      %v2315 = vld [vmem:[#allocation3 + $0xb4] sm:$0xff]
      %v2316 = vld [vmem:[#allocation3 + $0xbc] sm:$0xff]
      %v2317 = vld [vmem:[#allocation3 + $0xc4] sm:$0xff]
      %v2318 = vld [vmem:[#allocation3 + $0xcc] sm:$0xff]
      %v2319 = vld [vmem:[#allocation3 + $0xd4] sm:$0xf]
      %v2320 = vld [vmem:[#allocation3 + $0xd8] sm:$0xff]
      %v2321 = vld [vmem:[#allocation3 + $0xe0] sm:$0xff]
      %v2322 = vld [vmem:[#allocation3 + $0xe8] sm:$0xff]
      %v2323 = vld [vmem:[#allocation3 + $0xf0] sm:$0xff]
      %v2324 = vld [vmem:[#allocation3 + $0xf8] sm:$0xf]
      %v2325 = vld [vmem:[#allocation3 + $0xfc] sm:$0xff]
      %v2326 = vld [vmem:[#allocation3 + $0x104] sm:$0xff]
      %v2327 = vld [vmem:[#allocation3 + $0x10c] sm:$0xff]
      %v2328 = vld [vmem:[#allocation3 + $0x114] sm:$0xff]
      %v2329 = vld [vmem:[#allocation3 + $0x11c] sm:$0xf]
      %v2330 = vld [vmem:[#allocation3 + $0x120] sm:$0xff]
      %v2331 = vld [vmem:[#allocation3 + $0x128] sm:$0xff]
      %v2332 = vld [vmem:[#allocation3 + $0x130] sm:$0xff]
      %v2333 = vld [vmem:[#allocation3 + $0x138] sm:$0xff]
      %v2334 = vld [vmem:[#allocation3 + $0x140] sm:$0xf]
      %v2335 = vld [vmem:[#allocation3 + $0x144] sm:$0xff]
      %v2336 = vld [vmem:[#allocation3 + $0x14c] sm:$0xff]
      %v2337 = vld [vmem:[#allocation3 + $0x154] sm:$0xff]
      %v2338 = vld [vmem:[#allocation3 + $0x15c] sm:$0xff]
      %v2339 = vld [vmem:[#allocation3 + $0x164] sm:$0xf]
      %v2340 = vld [vmem:[#allocation3 + $0x168] sm:$0xff]
      %v2341 = vld [vmem:[#allocation3 + $0x170] sm:$0xff]
      %v2342 = vld [vmem:[#allocation3 + $0x178] sm:$0xff]
      %v2343 = vld [vmem:[#allocation3 + $0x180] sm:$0xff]
      %v2344 = vld [vmem:[#allocation3 + $0x188] sm:$0xf]
      %v2345 = vld [vmem:[#allocation3 + $0x18c] sm:$0xff]
      %v2346 = vld [vmem:[#allocation3 + $0x194] sm:$0xff]
      %v2347 = vld [vmem:[#allocation3 + $0x19c] sm:$0xff]
      %v2348 = vld [vmem:[#allocation3 + $0x1a4] sm:$0xff]
      %v2349 = vld [vmem:[#allocation3 + $0x1ac] sm:$0xf]
      %v2350 = vld [vmem:[#allocation3 + $0x1b0] sm:$0xff]
      %v2351 = vld [vmem:[#allocation3 + $0x1b8] sm:$0xff]
      %v2352 = vld [vmem:[#allocation3 + $0x1c0] sm:$0xff]
      %v2353 = vld [vmem:[#allocation3 + $0x1c8] sm:$0xff]
      %v2354 = vld [vmem:[#allocation3 + $0x1d0] sm:$0xf]
      %v2355 = vld [vmem:[#allocation3 + $0x1d4] sm:$0xff]
      %v2356 = vld [vmem:[#allocation3 + $0x1dc] sm:$0xff]
      %v2357 = vld [vmem:[#allocation3 + $0x1e4] sm:$0xff]
      %v2358 = vld [vmem:[#allocation3 + $0x1ec] sm:$0xff]
      %v2359 = vld [vmem:[#allocation3 + $0x1f4] sm:$0xf]
      %v2360 = vld [vmem:[#allocation3 + $0x1f8] sm:$0xff]
      %v2361 = vld [vmem:[#allocation3 + $0x200] sm:$0xff]
      %v2362 = vld [vmem:[#allocation3 + $0x208] sm:$0xff]
      %v2363 = vld [vmem:[#allocation3 + $0x210] sm:$0xff]
      %v2364 = vld [vmem:[#allocation3 + $0x218] sm:$0xf]
      %v2365 = vld [vmem:[#allocation3 + $0x21c] sm:$0xff]
      %v2366 = vld [vmem:[#allocation3 + $0x224] sm:$0xff]
      %v2367 = vld [vmem:[#allocation3 + $0x22c] sm:$0xff]
      %v2368 = vld [vmem:[#allocation3 + $0x234] sm:$0xff]
      %v2369 = vld [vmem:[#allocation3 + $0x23c] sm:$0xf]
      %v2370 = vld [vmem:[#allocation3 + $0x240] sm:$0xff]
      %v2371 = vld [vmem:[#allocation3 + $0x248] sm:$0xff]
      %v2372 = vld [vmem:[#allocation3 + $0x250] sm:$0xff]
      %v2373 = vld [vmem:[#allocation3 + $0x258] sm:$0xff]
      %v2374 = vld [vmem:[#allocation3 + $0x260] sm:$0xf]
      %v2375 = vld [vmem:[#allocation3 + $0x264] sm:$0xff]
      %v2376 = vld [vmem:[#allocation3 + $0x26c] sm:$0xff]
      %v2377 = vld [vmem:[#allocation3 + $0x274] sm:$0xff]
      %v2378 = vld [vmem:[#allocation3 + $0x27c] sm:$0xff]
      %v2379 = vld [vmem:[#allocation3 + $0x284] sm:$0xf]
      %v2380 = vld [vmem:[#allocation3 + $0x288] sm:$0xff]
      %v2381 = vld [vmem:[#allocation3 + $0x290] sm:$0xff]
      %v2382 = vld [vmem:[#allocation3 + $0x298] sm:$0xff]
      %v2383 = vld [vmem:[#allocation3 + $0x2a0] sm:$0xff]
      %v2384 = vld [vmem:[#allocation3 + $0x2a8] sm:$0xf]
      %v2385 = vld [vmem:[#allocation3 + $0x2ac] sm:$0xff]
      %v2386 = vld [vmem:[#allocation3 + $0x2b4] sm:$0xff]
      %v2387 = vld [vmem:[#allocation3 + $0x2bc] sm:$0xff]
      %v2388 = vld [vmem:[#allocation3 + $0x2c4] sm:$0xff]
      %v2389 = vld [vmem:[#allocation3 + $0x2cc] sm:$0xf]
      %v2390 = vld [vmem:[#allocation3 + $0x2d0] sm:$0xff]
      %v2391 = vld [vmem:[#allocation3 + $0x2d8] sm:$0xff]
      %v2392 = vld [vmem:[#allocation3 + $0x2e0] sm:$0xff]
      %v2393 = vld [vmem:[#allocation3 + $0x2e8] sm:$0xff]
      %v2394 = vld [vmem:[#allocation3 + $0x2f0] sm:$0xf]
      %v2395 = vld [vmem:[#allocation3 + $0x2f4] sm:$0xff]
      %v2396 = vld [vmem:[#allocation3 + $0x2fc] sm:$0xff]
      %v2397 = vld [vmem:[#allocation3 + $0x304] sm:$0xff]
      %v2398 = vld [vmem:[#allocation3 + $0x30c] sm:$0xff]
      %v2399 = vld [vmem:[#allocation3 + $0x314] sm:$0xf]
      %v2400 = vld [vmem:[#allocation3 + $0x318] sm:$0xff]
      %v2401 = vld [vmem:[#allocation3 + $0x320] sm:$0xff]
      %v2402 = vld [vmem:[#allocation3 + $0x328] sm:$0xff]
      %v2403 = vld [vmem:[#allocation3 + $0x330] sm:$0xff]
      %v2404 = vld [vmem:[#allocation3 + $0x338] sm:$0xf]
      %v2405 = vld [vmem:[#allocation3 + $0x33c] sm:$0xff]
      %v2406 = vld [vmem:[#allocation3 + $0x344] sm:$0xff]
      %v2407 = vld [vmem:[#allocation3 + $0x34c] sm:$0xff]
      %v2408 = vld [vmem:[#allocation3 + $0x354] sm:$0xff]
      %v2409 = vld [vmem:[#allocation3 + $0x35c] sm:$0xf]
      %v2410 = vld [vmem:[#allocation3 + $0x360] sm:$0xff]
      %v2411 = vld [vmem:[#allocation3 + $0x368] sm:$0xff]
      %v2412 = vld [vmem:[#allocation3 + $0x370] sm:$0xff]
      %v2413 = vld [vmem:[#allocation3 + $0x378] sm:$0xff]
      %v2414 = vld [vmem:[#allocation3 + $0x380] sm:$0xf]
      %v2415 = vld [vmem:[#allocation3 + $0x384] sm:$0xff]
      %v2416 = vld [vmem:[#allocation3 + $0x38c] sm:$0xff]
      %v2417 = vld [vmem:[#allocation3 + $0x394] sm:$0xff]
      %v2418 = vld [vmem:[#allocation3 + $0x39c] sm:$0xff]
      %v2419 = vld [vmem:[#allocation3 + $0x3a4] sm:$0xf]
      %v2420 = vld [vmem:[#allocation3 + $0x3a8] sm:$0xff]
      %v2421 = vld [vmem:[#allocation3 + $0x3b0] sm:$0xff]
      %v2422 = vld [vmem:[#allocation3 + $0x3b8] sm:$0xff]
      %v2423 = vld [vmem:[#allocation3 + $0x3c0] sm:$0xff]
      %v2424 = vld [vmem:[#allocation3 + $0x3c8] sm:$0xf]
      %v2425 = vld [vmem:[#allocation3 + $0x3cc] sm:$0xff]
      %v2426 = vld [vmem:[#allocation3 + $0x3d4] sm:$0xff]
      %v2427 = vld [vmem:[#allocation3 + $0x3dc] sm:$0xff]
      %v2428 = vld [vmem:[#allocation3 + $0x3e4] sm:$0xff]
      %v2429 = vld [vmem:[#allocation3 + $0x3ec] sm:$0xf]
      %v2430 = vld [vmem:[#allocation3 + $0x3f0] sm:$0xff]
      %v2431 = vld [vmem:[#allocation3 + $0x3f8] sm:$0xff]
      %v2432 = vld [vmem:[#allocation3 + $0x400] sm:$0xff]
      %v2433 = vld [vmem:[#allocation3 + $0x408] sm:$0xff]
      %v2434 = vld [vmem:[#allocation3 + $0x410] sm:$0xf]
      %v2435 = vld [vmem:[#allocation3 + $0x414] sm:$0xff]
      %v2436 = vld [vmem:[#allocation3 + $0x41c] sm:$0xff]
      %v2437 = vld [vmem:[#allocation3 + $0x424] sm:$0xff]
      %v2438 = vld [vmem:[#allocation3 + $0x42c] sm:$0xff]
      %v2439 = vld [vmem:[#allocation3 + $0x434] sm:$0xf]
      %v2440 = vld [vmem:[#allocation3 + $0x438] sm:$0xff]
      %v2441 = vld [vmem:[#allocation3 + $0x440] sm:$0xff]
      %v2442 = vld [vmem:[#allocation3 + $0x448] sm:$0xff]
      %v2443 = vld [vmem:[#allocation3 + $0x450] sm:$0xff]
      %v2444 = vld [vmem:[#allocation3 + $0x458] sm:$0xf]
      %v2445 = vld [vmem:[#allocation3 + $0x45c] sm:$0xff]
      %v2446 = vld [vmem:[#allocation3 + $0x464] sm:$0xff]
      %v2447 = vld [vmem:[#allocation3 + $0x46c] sm:$0xff]
      %v2448 = vld [vmem:[#allocation3 + $0x474] sm:$0xff]
      %v2449 = vld [vmem:[#allocation3 + $0x47c] sm:$0xf]
      %v2450 = vld [vmem:[#allocation3 + $0x480] sm:$0xff]
      %v2451 = vld [vmem:[#allocation3 + $0x488] sm:$0xff]
      %v2452 = vld [vmem:[#allocation3 + $0x490] sm:$0xff]
      %v2453 = vld [vmem:[#allocation3 + $0x498] sm:$0xff]
      %v2454 = vld [vmem:[#allocation3 + $0x4a0] sm:$0xf]
      %v2455 = vld [vmem:[#allocation3 + $0x4a4] sm:$0xff]
      %v2456 = vld [vmem:[#allocation3 + $0x4ac] sm:$0xff]
      %v2457 = vld [vmem:[#allocation3 + $0x4b4] sm:$0xff]
      %v2458 = vld [vmem:[#allocation3 + $0x4bc] sm:$0xff]
      %v2459 = vld [vmem:[#allocation3 + $0x4c4] sm:$0xf]
      %v2460 = vld [vmem:[#allocation3 + $0x4c8] sm:$0xff]
      %v2461 = vld [vmem:[#allocation3 + $0x4d0] sm:$0xff]
      %v2462 = vld [vmem:[#allocation3 + $0x4d8] sm:$0xff]
      %v2463 = vld [vmem:[#allocation3 + $0x4e0] sm:$0xff]
      %v2464 = vld [vmem:[#allocation3 + $0x4e8] sm:$0xf]
      %v2465 = vld [vmem:[#allocation3 + $0x4ec] sm:$0xff]
      %v2466 = vld [vmem:[#allocation3 + $0x4f4] sm:$0xff]
      %v2467 = vld [vmem:[#allocation3 + $0x4fc] sm:$0xff]
      %v2468 = vld [vmem:[#allocation3 + $0x504] sm:$0xff]
      %v2469 = vld [vmem:[#allocation3 + $0x50c] sm:$0xf]
      %v2470 = vld [vmem:[#allocation3 + $0x510] sm:$0xff]
      %v2471 = vld [vmem:[#allocation3 + $0x518] sm:$0xff]
      %v2472 = vld [vmem:[#allocation3 + $0x520] sm:$0xff]
      %v2473 = vld [vmem:[#allocation3 + $0x528] sm:$0xff]
      %v2474 = vld [vmem:[#allocation3 + $0x530] sm:$0xf]
      %v2475 = vld [vmem:[#allocation3 + $0x534] sm:$0xff]
      %v2476 = vld [vmem:[#allocation3 + $0x53c] sm:$0xff]
      %v2477 = vld [vmem:[#allocation3 + $0x544] sm:$0xff]
      %v2478 = vld [vmem:[#allocation3 + $0x54c] sm:$0xff]
      %v2479 = vld [vmem:[#allocation3 + $0x554] sm:$0xf]
      %v2480 = vld [vmem:[#allocation3 + $0x558] sm:$0xff]
      %v2481 = vld [vmem:[#allocation3 + $0x560] sm:$0xff]
      %v2482 = vld [vmem:[#allocation3 + $0x568] sm:$0xff]
      %v2483 = vld [vmem:[#allocation3 + $0x570] sm:$0xff]
      %v2484 = vld [vmem:[#allocation3 + $0x578] sm:$0xf]
      %v2485 = vld [vmem:[#allocation3 + $0x57c] sm:$0xff]
      %v2486 = vld [vmem:[#allocation3 + $0x584] sm:$0xff]
      %v2487 = vld [vmem:[#allocation3 + $0x58c] sm:$0xff]
      %v2488 = vld [vmem:[#allocation3 + $0x594] sm:$0xff]
      %v2489 = vld [vmem:[#allocation3 + $0x59c] sm:$0xf]
      %v2490 = vld [vmem:[#allocation3 + $0x5a0] sm:$0xff]
      %v2491 = vld [vmem:[#allocation3 + $0x5a8] sm:$0xff]
      %v2492 = vld [vmem:[#allocation3 + $0x5b0] sm:$0xff]
      %v2493 = vld [vmem:[#allocation3 + $0x5b8] sm:$0xff]
      %v2494 = vld [vmem:[#allocation3 + $0x5c0] sm:$0xf]
      %v2495 = vld [vmem:[#allocation3 + $0x5c4] sm:$0xff]
      %v2496 = vld [vmem:[#allocation3 + $0x5cc] sm:$0xff]
      %v2497 = vld [vmem:[#allocation3 + $0x5d4] sm:$0xff]
      %v2498 = vld [vmem:[#allocation3 + $0x5dc] sm:$0xff]
      %v2499 = vld [vmem:[#allocation3 + $0x5e4] sm:$0xf]
      %v2500 = vld [vmem:[#allocation3 + $0x5e8] sm:$0xff]
      %v2501 = vld [vmem:[#allocation3 + $0x5f0] sm:$0xff]
      %v2502 = vld [vmem:[#allocation3 + $0x5f8] sm:$0xff]
      %v2503 = vld [vmem:[#allocation3 + $0x600] sm:$0xff]
      %v2504 = vld [vmem:[#allocation3 + $0x608] sm:$0xf]
      %v2505 = vld [vmem:[#allocation3 + $0x60c] sm:$0xff]
      %v2506 = vld [vmem:[#allocation3 + $0x614] sm:$0xff]
      %v2507 = vld [vmem:[#allocation3 + $0x61c] sm:$0xff]
      %v2508 = vld [vmem:[#allocation3 + $0x624] sm:$0xff]
      %v2509 = vld [vmem:[#allocation3 + $0x62c] sm:$0xf]
      %v2510 = vld [vmem:[#allocation3 + $0x630] sm:$0xff]
      %v2511 = vld [vmem:[#allocation3 + $0x638] sm:$0xff]
      %v2512 = vld [vmem:[#allocation3 + $0x640] sm:$0xff]
      %v2513 = vld [vmem:[#allocation3 + $0x648] sm:$0xff]
      %v2514 = vld [vmem:[#allocation3 + $0x650] sm:$0xf]
      %v2515 = vld [vmem:[#allocation3 + $0x654] sm:$0xff]
      %v2516 = vld [vmem:[#allocation3 + $0x65c] sm:$0xff]
      %v2517 = vld [vmem:[#allocation3 + $0x664] sm:$0xff]
      %v2518 = vld [vmem:[#allocation3 + $0x66c] sm:$0xff]
      %v2519 = vld [vmem:[#allocation3 + $0x674] sm:$0xf]
      %v2520 = vld [vmem:[#allocation3 + $0x678] sm:$0xff]
      %v2521 = vld [vmem:[#allocation3 + $0x680] sm:$0xff]
      %v2522 = vld [vmem:[#allocation3 + $0x688] sm:$0xff]
      %v2523 = vld [vmem:[#allocation3 + $0x690] sm:$0xff]
      %v2524 = vld [vmem:[#allocation3 + $0x698] sm:$0xf]
      %v2525 = vld [vmem:[#allocation3 + $0x69c] sm:$0xff]
      %v2526 = vld [vmem:[#allocation3 + $0x6a4] sm:$0xff]
      %v2527 = vld [vmem:[#allocation3 + $0x6ac] sm:$0xff]
      %v2528 = vld [vmem:[#allocation3 + $0x6b4] sm:$0xff]
      %v2529 = vld [vmem:[#allocation3 + $0x6bc] sm:$0xf]
      %v2530 = vld [vmem:[%s1] sm:$0xf]
      %v2531 = vld [vmem:[%s1 + $0x4] sm:$0xf]
      %v2532 = vld [vmem:[%s1 + $0x8] sm:$0xf]
      %v2533 = vld [vmem:[%s1 + $0xc] sm:$0xf]
      %v2534 = vld [vmem:[%s1 + $0x10] sm:$0xf]
      %v2535 = vld [vmem:[%s1 + $0x14] sm:$0xf]
      %v2536 = vld [vmem:[%s1 + $0x18] sm:$0xf]
      %v2537 = vld [vmem:[%s1 + $0x1c] sm:$0xf]
      %v2538 = vld [vmem:[%s1 + $0x20] sm:$0xf]
      %v2539 = vld [vmem:[%s1 + $0x24] sm:$0xf]
      %v2540 = vld [vmem:[%s1 + $0x28] sm:$0xf]
      %v2541 = vld [vmem:[%s1 + $0x2c] sm:$0xf]
      %v2542 = vld [vmem:[%s1 + $0x30] sm:$0xf]
      %v2543 = vld [vmem:[%s1 + $0x34] sm:$0xf]
      %v2544 = vld [vmem:[%s1 + $0x38] sm:$0xf]
      %v2545 = vld [vmem:[%s1 + $0x3c] sm:$0xf]
      %v2546 = vld [vmem:[%s1 + $0x40] sm:$0xf]
      %v2547 = vld [vmem:[%s1 + $0x44] sm:$0xf]
      %v2548 = vld [vmem:[%s1 + $0x48] sm:$0xf]
      %v2549 = vld [vmem:[%s1 + $0x4c] sm:$0xf]
      %v2550 = vld [vmem:[%s1 + $0x50] sm:$0xf]
      %v2551 = vld [vmem:[%s1 + $0x54] sm:$0xf]
      %v2552 = vld [vmem:[%s1 + $0x58] sm:$0xf]
      %v2553 = vld [vmem:[%s1 + $0x5c] sm:$0xf]
      %v2554 = vld [vmem:[%s1 + $0x60] sm:$0xf]
      %v2555 = vld [vmem:[%s1 + $0x64] sm:$0xf]
      %v2556 = vld [vmem:[%s1 + $0x68] sm:$0xf]
      %v2557 = vld [vmem:[%s1 + $0x6c] sm:$0xf]
      %v2558 = vld [vmem:[%s1 + $0x70] sm:$0xf]
      %v2559 = vld [vmem:[%s1 + $0x74] sm:$0xf]
      %v2560 = vld [vmem:[%s1 + $0x78] sm:$0xf]
      %v2561 = vld [vmem:[%s1 + $0x7c] sm:$0xf]
      %v2562 = vld [vmem:[%s1 + $0x80] sm:$0xf]
      %v2563 = vld [vmem:[%s1 + $0x84] sm:$0xf]
      %v2564 = vld [vmem:[%s1 + $0x88] sm:$0xf]
      %v2565 = vld [vmem:[%s1 + $0x8c] sm:$0xf]
      %v2566 = vld [vmem:[%s1 + $0x90] sm:$0xf]
      %v2567 = vld [vmem:[%s1 + $0x94] sm:$0xf]
      %v2568 = vld [vmem:[%s1 + $0x98] sm:$0xf]
      %v2569 = vld [vmem:[%s1 + $0x9c] sm:$0xf]
      %v2570 = vld [vmem:[%s1 + $0xa0] sm:$0xf]
      %v2571 = vld [vmem:[%s1 + $0xa4] sm:$0xf]
      %v2572 = vld [vmem:[%s1 + $0xa8] sm:$0xf]
      %v2573 = vld [vmem:[%s1 + $0xac] sm:$0xf]
      %v2574 = vld [vmem:[%s1 + $0xb0] sm:$0xf]
      %v2575 = vld [vmem:[%s1 + $0xb4] sm:$0xf]
      %v2576 = vld [vmem:[%s1 + $0xb8] sm:$0xf]
      %v2577 = vld [vmem:[%s1 + $0xbc] sm:$0xf]
      %v2578 = vld [vmem:[%s1 + $0xc0] sm:$0xf]
      %v2579 = vld [vmem:[%s1 + $0xc4] sm:$0xf]
      %v2580 = vld [vmem:[%s1 + $0xc8] sm:$0xf]
      %v2581 = vld [vmem:[%s1 + $0xcc] sm:$0xf]
      %v2582 = vld [vmem:[%s1 + $0xd0] sm:$0xf]
      %v2583 = vld [vmem:[%s1 + $0xd4] sm:$0xf]
      %v2584 = vld [vmem:[%s1 + $0xd8] sm:$0xf]
      %v2585 = vld [vmem:[%s1 + $0xdc] sm:$0xf]
      %v2586 = vld [vmem:[%s1 + $0xe0] sm:$0xf]
      %v2587 = vld [vmem:[%s1 + $0xe4] sm:$0xf]
      %v2588 = vld [vmem:[%s1 + $0xe8] sm:$0xf]
      %v2589 = vld [vmem:[%s1 + $0xec] sm:$0xf]
      %v2590 = vld [vmem:[%s1 + $0xf0] sm:$0xf]
      %v2591 = vld [vmem:[%s1 + $0xf4] sm:$0xf]
      %v2592 = vld [vmem:[%s1 + $0xf8] sm:$0xf]
      %v2593 = vld [vmem:[%s1 + $0xfc] sm:$0xf]
      %v2594 = vld [vmem:[%s1 + $0x100] sm:$0xf]
      %v2595 = vld [vmem:[%s1 + $0x104] sm:$0xf]
      %v2596 = vld [vmem:[%s1 + $0x108] sm:$0xf]
      %v2597 = vld [vmem:[%s1 + $0x10c] sm:$0xf]
      %v2598 = vld [vmem:[%s1 + $0x110] sm:$0xf]
      %v2599 = vld [vmem:[%s1 + $0x114] sm:$0xf]
      %v2600 = vld [vmem:[%s1 + $0x118] sm:$0xf]
      %v2601 = vld [vmem:[%s1 + $0x11c] sm:$0xf]
      %v2602 = vld [vmem:[%s1 + $0x120] sm:$0xf]
      %v2603 = vld [vmem:[%s1 + $0x124] sm:$0xf]
      %v2604 = vld [vmem:[%s1 + $0x128] sm:$0xf]
      %v2605 = vld [vmem:[%s1 + $0x12c] sm:$0xf]
      %v2606 = vld [vmem:[%s1 + $0x130] sm:$0xf]
      %v2607 = vld [vmem:[%s1 + $0x134] sm:$0xf]
      %v2608 = vld [vmem:[%s1 + $0x138] sm:$0xf]
      %v2609 = vld [vmem:[%s1 + $0x13c] sm:$0xf]
      %v2610 = vld [vmem:[%s1 + $0x140] sm:$0xf]
      %v2611 = vld [vmem:[%s1 + $0x144] sm:$0xf]
      %v2612 = vld [vmem:[%s1 + $0x148] sm:$0xf]
      %v2613 = vld [vmem:[%s1 + $0x14c] sm:$0xf]
      %v2614 = vld [vmem:[%s1 + $0x150] sm:$0xf]
      %v2615 = vld [vmem:[%s1 + $0x154] sm:$0xf]
      %v2616 = vld [vmem:[%s1 + $0x158] sm:$0xf]
      %v2617 = vld [vmem:[%s1 + $0x15c] sm:$0xf]
      %v2618 = vld [vmem:[%s1 + $0x160] sm:$0xf]
      %v2619 = vld [vmem:[%s1 + $0x164] sm:$0xf]
      %v2620 = vld [vmem:[%s1 + $0x168] sm:$0xf]
      %v2621 = vld [vmem:[%s1 + $0x16c] sm:$0xf]
      %v2622 = vld [vmem:[%s1 + $0x170] sm:$0xf]
      %v2623 = vld [vmem:[%s1 + $0x174] sm:$0xf]
      %v2624 = vld [vmem:[%s1 + $0x178] sm:$0xf]
      %v2625 = vld [vmem:[%s1 + $0x17c] sm:$0xf]
      %v2626 = vld [vmem:[%s1 + $0x180] sm:$0xf]
      %v2627 = vld [vmem:[%s1 + $0x184] sm:$0xf]
      %v2628 = vld [vmem:[%s1 + $0x188] sm:$0xf]
      %v2629 = vld [vmem:[%s1 + $0x18c] sm:$0xf]
      %v2630 = vld [vmem:[%s1 + $0x190] sm:$0xf]
      %v2631 = vld [vmem:[%s1 + $0x194] sm:$0xf]
      %v2632 = vld [vmem:[%s1 + $0x198] sm:$0xf]
      %v2633 = vld [vmem:[%s1 + $0x19c] sm:$0xf]
      %v2634 = vld [vmem:[%s1 + $0x1a0] sm:$0xf]
      %v2635 = vld [vmem:[%s1 + $0x1a4] sm:$0xf]
      %v2636 = vld [vmem:[%s1 + $0x1a8] sm:$0xf]
      %v2637 = vld [vmem:[%s1 + $0x1ac] sm:$0xf]
      %v2638 = vld [vmem:[%s1 + $0x1b0] sm:$0xf]
      %v2639 = vld [vmem:[%s1 + $0x1b4] sm:$0xf]
      %v2640 = vld [vmem:[%s1 + $0x1b8] sm:$0xf]
      %v2641 = vld [vmem:[%s1 + $0x1bc] sm:$0xf]
      %v2642 = vld [vmem:[%s1 + $0x1c0] sm:$0xf]
      %v2643 = vld [vmem:[%s1 + $0x1c4] sm:$0xf]
      %v2644 = vld [vmem:[%s1 + $0x1c8] sm:$0xf]
      %v2645 = vld [vmem:[%s1 + $0x1cc] sm:$0xf]
      %v2646 = vld [vmem:[%s1 + $0x1d0] sm:$0xf]
      %v2647 = vld [vmem:[%s1 + $0x1d4] sm:$0xf]
      %v2648 = vld [vmem:[%s1 + $0x1d8] sm:$0xf]
      %v2649 = vld [vmem:[%s1 + $0x1dc] sm:$0xf]
      %v2650 = vld [vmem:[%s1 + $0x1e0] sm:$0xf]
      %v2651 = vld [vmem:[%s1 + $0x1e4] sm:$0xf]
      %v2652 = vld [vmem:[%s1 + $0x1e8] sm:$0xf]
      %v2653 = vld [vmem:[%s1 + $0x1ec] sm:$0xf]
      %v2654 = vld [vmem:[%s1 + $0x1f0] sm:$0xf]
      %v2655 = vld [vmem:[%s1 + $0x1f4] sm:$0xf]
      %v2656 = vld [vmem:[%s1 + $0x1f8] sm:$0xf]
      %v2657 = vld [vmem:[%s1 + $0x1fc] sm:$0xf]
      %v2658 = vld [vmem:[%s1 + $0x200] sm:$0xf]
      %v2659 = vld [vmem:[%s1 + $0x204] sm:$0xf]
      %v2660 = vld [vmem:[%s1 + $0x208] sm:$0xf]
      %v2661 = vld [vmem:[%s1 + $0x20c] sm:$0xf]
      %v2662 = vld [vmem:[%s1 + $0x210] sm:$0xf]
      %v2663 = vld [vmem:[%s1 + $0x214] sm:$0xf]
      %v2664 = vld [vmem:[%s1 + $0x218] sm:$0xf]
      %v2665 = vld [vmem:[%s1 + $0x21c] sm:$0xf]
      %v2666 = vld [vmem:[%s1 + $0x220] sm:$0xf]
      %v2667 = vld [vmem:[%s1 + $0x224] sm:$0xf]
      %v2668 = vld [vmem:[%s1 + $0x228] sm:$0xf]
      %v2669 = vld [vmem:[%s1 + $0x22c] sm:$0xf]
      %v2670 = vld [vmem:[%s1 + $0x230] sm:$0xf]
      %v2671 = vld [vmem:[%s1 + $0x234] sm:$0xf]
      %v2672 = vld [vmem:[%s1 + $0x238] sm:$0xf]
      %v2673 = vld [vmem:[%s1 + $0x23c] sm:$0xf]
      %v2674 = vld [vmem:[%s3] sm:$0x1]
      %v2676 = vlaneseq
      %v2677 = vshrl.u32 %v2676, 7
      %v2678 = vsub.s32 0, %v2677
      %v2679 = vrot.slane %v2674, %v2678
      %v2921 = vunpack.c.l.b16 %v2290
      %v2922 = vunpack.c.h.b16 %v2290
      %v2923 = vunpack.c.l.b16 %v2291
      %v2924 = vunpack.c.h.b16 %v2291
      %v2925 = vunpack.c.l.b16 %v2292
      %v2926 = vunpack.c.h.b16 %v2292
      %v2927 = vunpack.c.l.b16 %v2293
      %v2928 = vunpack.c.h.b16 %v2293
      %v2929 = vunpack.c.l.b16 %v2294
      %v2930 = vunpack.c.l.b16 %v2295
      %v2931 = vunpack.c.h.b16 %v2295
      %v2932 = vunpack.c.l.b16 %v2296
      %v2933 = vunpack.c.h.b16 %v2296
      %v2934 = vunpack.c.l.b16 %v2297
      %v2935 = vunpack.c.h.b16 %v2297
      %v2936 = vunpack.c.l.b16 %v2298
      %v2937 = vunpack.c.h.b16 %v2298
      %v2938 = vunpack.c.l.b16 %v2299
      %v2939 = vunpack.c.l.b16 %v2300
      %v2940 = vunpack.c.h.b16 %v2300
      %v2941 = vunpack.c.l.b16 %v2301
      %v2942 = vunpack.c.h.b16 %v2301
      %v2943 = vunpack.c.l.b16 %v2302
      %v2944 = vunpack.c.h.b16 %v2302
      %v2945 = vunpack.c.l.b16 %v2303
      %v2946 = vunpack.c.h.b16 %v2303
      %v2947 = vunpack.c.l.b16 %v2304
      %v2948 = vunpack.c.l.b16 %v2305
      %v2949 = vunpack.c.h.b16 %v2305
      %v2950 = vunpack.c.l.b16 %v2306
      %v2951 = vunpack.c.h.b16 %v2306
      %v2952 = vunpack.c.l.b16 %v2307
      %v2953 = vunpack.c.h.b16 %v2307
      %v2954 = vunpack.c.l.b16 %v2308
      %v2955 = vunpack.c.h.b16 %v2308
      %v2956 = vunpack.c.l.b16 %v2309
      %v2957 = vunpack.c.l.b16 %v2310
      %v2958 = vunpack.c.h.b16 %v2310
      %v2959 = vunpack.c.l.b16 %v2311
      %v2960 = vunpack.c.h.b16 %v2311
      %v2961 = vunpack.c.l.b16 %v2312
      %v2962 = vunpack.c.h.b16 %v2312
      %v2963 = vunpack.c.l.b16 %v2313
      %v2964 = vunpack.c.h.b16 %v2313
      %v2965 = vunpack.c.l.b16 %v2314
      %v2966 = vunpack.c.l.b16 %v2315
      %v2967 = vunpack.c.h.b16 %v2315
      %v2968 = vunpack.c.l.b16 %v2316
      %v2969 = vunpack.c.h.b16 %v2316
      %v2970 = vunpack.c.l.b16 %v2317
      %v2971 = vunpack.c.h.b16 %v2317
      %v2972 = vunpack.c.l.b16 %v2318
      %v2973 = vunpack.c.h.b16 %v2318
      %v2974 = vunpack.c.l.b16 %v2319
      %v2975 = vunpack.c.l.b16 %v2320
      %v2976 = vunpack.c.h.b16 %v2320
      %v2977 = vunpack.c.l.b16 %v2321
      %v2978 = vunpack.c.h.b16 %v2321
      %v2979 = vunpack.c.l.b16 %v2322
      %v2980 = vunpack.c.h.b16 %v2322
      %v2981 = vunpack.c.l.b16 %v2323
      %v2982 = vunpack.c.h.b16 %v2323
      %v2983 = vunpack.c.l.b16 %v2324
      %v2984 = vunpack.c.l.b16 %v2325
      %v2985 = vunpack.c.h.b16 %v2325
      %v2986 = vunpack.c.l.b16 %v2326
      %v2987 = vunpack.c.h.b16 %v2326
      %v2988 = vunpack.c.l.b16 %v2327
      %v2989 = vunpack.c.h.b16 %v2327
      %v2990 = vunpack.c.l.b16 %v2328
      %v2991 = vunpack.c.h.b16 %v2328
      %v2992 = vunpack.c.l.b16 %v2329
      %v2993 = vunpack.c.l.b16 %v2330
      %v2994 = vunpack.c.h.b16 %v2330
      %v2995 = vunpack.c.l.b16 %v2331
      %v2996 = vunpack.c.h.b16 %v2331
      %v2997 = vunpack.c.l.b16 %v2332
      %v2998 = vunpack.c.h.b16 %v2332
      %v2999 = vunpack.c.l.b16 %v2333
      %v3000 = vunpack.c.h.b16 %v2333
      %v3001 = vunpack.c.l.b16 %v2334
      %v3002 = vunpack.c.l.b16 %v2335
      %v3003 = vunpack.c.h.b16 %v2335
      %v3004 = vunpack.c.l.b16 %v2336
      %v3005 = vunpack.c.h.b16 %v2336
      %v3006 = vunpack.c.l.b16 %v2337
      %v3007 = vunpack.c.h.b16 %v2337
      %v3008 = vunpack.c.l.b16 %v2338
      %v3009 = vunpack.c.h.b16 %v2338
      %v3010 = vunpack.c.l.b16 %v2339
      %v3011 = vunpack.c.l.b16 %v2340
      %v3012 = vunpack.c.h.b16 %v2340
      %v3013 = vunpack.c.l.b16 %v2341
      %v3014 = vunpack.c.h.b16 %v2341
      %v3015 = vunpack.c.l.b16 %v2342
      %v3016 = vunpack.c.h.b16 %v2342
      %v3017 = vunpack.c.l.b16 %v2343
      %v3018 = vunpack.c.h.b16 %v2343
      %v3019 = vunpack.c.l.b16 %v2344
      %v3020 = vunpack.c.l.b16 %v2345
      %v3021 = vunpack.c.h.b16 %v2345
      %v3022 = vunpack.c.l.b16 %v2346
      %v3023 = vunpack.c.h.b16 %v2346
      %v3024 = vunpack.c.l.b16 %v2347
      %v3025 = vunpack.c.h.b16 %v2347
      %v3026 = vunpack.c.l.b16 %v2348
      %v3027 = vunpack.c.h.b16 %v2348
      %v3028 = vunpack.c.l.b16 %v2349
      %v3029 = vunpack.c.l.b16 %v2350
      %v3030 = vunpack.c.h.b16 %v2350
      %v3031 = vunpack.c.l.b16 %v2351
      %v3032 = vunpack.c.h.b16 %v2351
      %v3033 = vunpack.c.l.b16 %v2352
      %v3034 = vunpack.c.h.b16 %v2352
      %v3035 = vunpack.c.l.b16 %v2353
      %v3036 = vunpack.c.h.b16 %v2353
      %v3037 = vunpack.c.l.b16 %v2354
      %v3038 = vunpack.c.l.b16 %v2355
      %v3039 = vunpack.c.h.b16 %v2355
      %v3040 = vunpack.c.l.b16 %v2356
      %v3041 = vunpack.c.h.b16 %v2356
      %v3042 = vunpack.c.l.b16 %v2357
      %v3043 = vunpack.c.h.b16 %v2357
      %v3044 = vunpack.c.l.b16 %v2358
      %v3045 = vunpack.c.h.b16 %v2358
      %v3046 = vunpack.c.l.b16 %v2359
      %v3047 = vunpack.c.l.b16 %v2360
      %v3048 = vunpack.c.h.b16 %v2360
      %v3049 = vunpack.c.l.b16 %v2361
      %v3050 = vunpack.c.h.b16 %v2361
      %v3051 = vunpack.c.l.b16 %v2362
      %v3052 = vunpack.c.h.b16 %v2362
      %v3053 = vunpack.c.l.b16 %v2363
      %v3054 = vunpack.c.h.b16 %v2363
      %v3055 = vunpack.c.l.b16 %v2364
      %v3056 = vunpack.c.l.b16 %v2365
      %v3057 = vunpack.c.h.b16 %v2365
      %v3058 = vunpack.c.l.b16 %v2366
      %v3059 = vunpack.c.h.b16 %v2366
      %v3060 = vunpack.c.l.b16 %v2367
      %v3061 = vunpack.c.h.b16 %v2367
      %v3062 = vunpack.c.l.b16 %v2368
      %v3063 = vunpack.c.h.b16 %v2368
      %v3064 = vunpack.c.l.b16 %v2369
      %v3065 = vunpack.c.l.b16 %v2370
      %v3066 = vunpack.c.h.b16 %v2370
      %v3067 = vunpack.c.l.b16 %v2371
      %v3068 = vunpack.c.h.b16 %v2371
      %v3069 = vunpack.c.l.b16 %v2372
      %v3070 = vunpack.c.h.b16 %v2372
      %v3071 = vunpack.c.l.b16 %v2373
      %v3072 = vunpack.c.h.b16 %v2373
      %v3073 = vunpack.c.l.b16 %v2374
      %v3074 = vunpack.c.l.b16 %v2375
      %v3075 = vunpack.c.h.b16 %v2375
      %v3076 = vunpack.c.l.b16 %v2376
      %v3077 = vunpack.c.h.b16 %v2376
      %v3078 = vunpack.c.l.b16 %v2377
      %v3079 = vunpack.c.h.b16 %v2377
      %v3080 = vunpack.c.l.b16 %v2378
      %v3081 = vunpack.c.h.b16 %v2378
      %v3082 = vunpack.c.l.b16 %v2379
      %v3083 = vunpack.c.l.b16 %v2380
      %v3084 = vunpack.c.h.b16 %v2380
      %v3085 = vunpack.c.l.b16 %v2381
      %v3086 = vunpack.c.h.b16 %v2381
      %v3087 = vunpack.c.l.b16 %v2382
      %v3088 = vunpack.c.h.b16 %v2382
      %v3089 = vunpack.c.l.b16 %v2383
      %v3090 = vunpack.c.h.b16 %v2383
      %v3091 = vunpack.c.l.b16 %v2384
      %v3092 = vunpack.c.l.b16 %v2385
      %v3093 = vunpack.c.h.b16 %v2385
      %v3094 = vunpack.c.l.b16 %v2386
      %v3095 = vunpack.c.h.b16 %v2386
      %v3096 = vunpack.c.l.b16 %v2387
      %v3097 = vunpack.c.h.b16 %v2387
      %v3098 = vunpack.c.l.b16 %v2388
      %v3099 = vunpack.c.h.b16 %v2388
      %v3100 = vunpack.c.l.b16 %v2389
      %v3101 = vunpack.c.l.b16 %v2390
      %v3102 = vunpack.c.h.b16 %v2390
      %v3103 = vunpack.c.l.b16 %v2391
      %v3104 = vunpack.c.h.b16 %v2391
      %v3105 = vunpack.c.l.b16 %v2392
      %v3106 = vunpack.c.h.b16 %v2392
      %v3107 = vunpack.c.l.b16 %v2393
      %v3108 = vunpack.c.h.b16 %v2393
      %v3109 = vunpack.c.l.b16 %v2394
      %v3110 = vunpack.c.l.b16 %v2395
      %v3111 = vunpack.c.h.b16 %v2395
      %v3112 = vunpack.c.l.b16 %v2396
      %v3113 = vunpack.c.h.b16 %v2396
      %v3114 = vunpack.c.l.b16 %v2397
      %v3115 = vunpack.c.h.b16 %v2397
      %v3116 = vunpack.c.l.b16 %v2398
      %v3117 = vunpack.c.h.b16 %v2398
      %v3118 = vunpack.c.l.b16 %v2399
      %v3119 = vunpack.c.l.b16 %v2400
      %v3120 = vunpack.c.h.b16 %v2400
      %v3121 = vunpack.c.l.b16 %v2401
      %v3122 = vunpack.c.h.b16 %v2401
      %v3123 = vunpack.c.l.b16 %v2402
      %v3124 = vunpack.c.h.b16 %v2402
      %v3125 = vunpack.c.l.b16 %v2403
      %v3126 = vunpack.c.h.b16 %v2403
      %v3127 = vunpack.c.l.b16 %v2404
      %v3128 = vunpack.c.l.b16 %v2405
      %v3129 = vunpack.c.h.b16 %v2405
      %v3130 = vunpack.c.l.b16 %v2406
      %v3131 = vunpack.c.h.b16 %v2406
      %v3132 = vunpack.c.l.b16 %v2407
      %v3133 = vunpack.c.h.b16 %v2407
      %v3134 = vunpack.c.l.b16 %v2408
      %v3135 = vunpack.c.h.b16 %v2408
      %v3136 = vunpack.c.l.b16 %v2409
      %v3137 = vunpack.c.l.b16 %v2410
      %v3138 = vunpack.c.h.b16 %v2410
      %v3139 = vunpack.c.l.b16 %v2411
      %v3140 = vunpack.c.h.b16 %v2411
      %v3141 = vunpack.c.l.b16 %v2412
      %v3142 = vunpack.c.h.b16 %v2412
      %v3143 = vunpack.c.l.b16 %v2413
      %v3144 = vunpack.c.h.b16 %v2413
      %v3145 = vunpack.c.l.b16 %v2414
      %v3146 = vunpack.c.l.b16 %v2415
      %v3147 = vunpack.c.h.b16 %v2415
      %v3148 = vunpack.c.l.b16 %v2416
      %v3149 = vunpack.c.h.b16 %v2416
      %v3150 = vunpack.c.l.b16 %v2417
      %v3151 = vunpack.c.h.b16 %v2417
      %v3152 = vunpack.c.l.b16 %v2418
      %v3153 = vunpack.c.h.b16 %v2418
      %v3154 = vunpack.c.l.b16 %v2419
      %v3155 = vunpack.c.l.b16 %v2420
      %v3156 = vunpack.c.h.b16 %v2420
      %v3157 = vunpack.c.l.b16 %v2421
      %v3158 = vunpack.c.h.b16 %v2421
      %v3159 = vunpack.c.l.b16 %v2422
      %v3160 = vunpack.c.h.b16 %v2422
      %v3161 = vunpack.c.l.b16 %v2423
      %v3162 = vunpack.c.h.b16 %v2423
      %v3163 = vunpack.c.l.b16 %v2424
      %v3164 = vunpack.c.l.b16 %v2425
      %v3165 = vunpack.c.h.b16 %v2425
      %v3166 = vunpack.c.l.b16 %v2426
      %v3167 = vunpack.c.h.b16 %v2426
      %v3168 = vunpack.c.l.b16 %v2427
      %v3169 = vunpack.c.h.b16 %v2427
      %v3170 = vunpack.c.l.b16 %v2428
      %v3171 = vunpack.c.h.b16 %v2428
      %v3172 = vunpack.c.l.b16 %v2429
      %v3173 = vunpack.c.l.b16 %v2430
      %v3174 = vunpack.c.h.b16 %v2430
      %v3175 = vunpack.c.l.b16 %v2431
      %v3176 = vunpack.c.h.b16 %v2431
      %v3177 = vunpack.c.l.b16 %v2432
      %v3178 = vunpack.c.h.b16 %v2432
      %v3179 = vunpack.c.l.b16 %v2433
      %v3180 = vunpack.c.h.b16 %v2433
      %v3181 = vunpack.c.l.b16 %v2434
      %v3182 = vunpack.c.l.b16 %v2435
      %v3183 = vunpack.c.h.b16 %v2435
      %v3184 = vunpack.c.l.b16 %v2436
      %v3185 = vunpack.c.h.b16 %v2436
      %v3186 = vunpack.c.l.b16 %v2437
      %v3187 = vunpack.c.h.b16 %v2437
      %v3188 = vunpack.c.l.b16 %v2438
      %v3189 = vunpack.c.h.b16 %v2438
      %v3190 = vunpack.c.l.b16 %v2439
      %v3191 = vunpack.c.l.b16 %v2440
      %v3192 = vunpack.c.h.b16 %v2440
      %v3193 = vunpack.c.l.b16 %v2441
      %v3194 = vunpack.c.h.b16 %v2441
      %v3195 = vunpack.c.l.b16 %v2442
      %v3196 = vunpack.c.h.b16 %v2442
      %v3197 = vunpack.c.l.b16 %v2443
      %v3198 = vunpack.c.h.b16 %v2443
      %v3199 = vunpack.c.l.b16 %v2444
      %v3200 = vunpack.c.l.b16 %v2445
      %v3201 = vunpack.c.h.b16 %v2445
      %v3202 = vunpack.c.l.b16 %v2446
      %v3203 = vunpack.c.h.b16 %v2446
      %v3204 = vunpack.c.l.b16 %v2447
      %v3205 = vunpack.c.h.b16 %v2447
      %v3206 = vunpack.c.l.b16 %v2448
      %v3207 = vunpack.c.h.b16 %v2448
      %v3208 = vunpack.c.l.b16 %v2449
      %v3209 = vunpack.c.l.b16 %v2450
      %v3210 = vunpack.c.h.b16 %v2450
      %v3211 = vunpack.c.l.b16 %v2451
      %v3212 = vunpack.c.h.b16 %v2451
      %v3213 = vunpack.c.l.b16 %v2452
      %v3214 = vunpack.c.h.b16 %v2452
      %v3215 = vunpack.c.l.b16 %v2453
      %v3216 = vunpack.c.h.b16 %v2453
      %v3217 = vunpack.c.l.b16 %v2454
      %v3218 = vunpack.c.l.b16 %v2455
      %v3219 = vunpack.c.h.b16 %v2455
      %v3220 = vunpack.c.l.b16 %v2456
      %v3221 = vunpack.c.h.b16 %v2456
      %v3222 = vunpack.c.l.b16 %v2457
      %v3223 = vunpack.c.h.b16 %v2457
      %v3224 = vunpack.c.l.b16 %v2458
      %v3225 = vunpack.c.h.b16 %v2458
      %v3226 = vunpack.c.l.b16 %v2459
      %v3227 = vunpack.c.l.b16 %v2460
      %v3228 = vunpack.c.h.b16 %v2460
      %v3229 = vunpack.c.l.b16 %v2461
      %v3230 = vunpack.c.h.b16 %v2461
      %v3231 = vunpack.c.l.b16 %v2462
      %v3232 = vunpack.c.h.b16 %v2462
      %v3233 = vunpack.c.l.b16 %v2463
      %v3234 = vunpack.c.h.b16 %v2463
      %v3235 = vunpack.c.l.b16 %v2464
      %v3236 = vunpack.c.l.b16 %v2465
      %v3237 = vunpack.c.h.b16 %v2465
      %v3238 = vunpack.c.l.b16 %v2466
      %v3239 = vunpack.c.h.b16 %v2466
      %v3240 = vunpack.c.l.b16 %v2467
      %v3241 = vunpack.c.h.b16 %v2467
      %v3242 = vunpack.c.l.b16 %v2468
      %v3243 = vunpack.c.h.b16 %v2468
      %v3244 = vunpack.c.l.b16 %v2469
      %v3245 = vunpack.c.l.b16 %v2470
      %v3246 = vunpack.c.h.b16 %v2470
      %v3247 = vunpack.c.l.b16 %v2471
      %v3248 = vunpack.c.h.b16 %v2471
      %v3249 = vunpack.c.l.b16 %v2472
      %v3250 = vunpack.c.h.b16 %v2472
      %v3251 = vunpack.c.l.b16 %v2473
      %v3252 = vunpack.c.h.b16 %v2473
      %v3253 = vunpack.c.l.b16 %v2474
      %v3254 = vunpack.c.l.b16 %v2475
      %v3255 = vunpack.c.h.b16 %v2475
      %v3256 = vunpack.c.l.b16 %v2476
      %v3257 = vunpack.c.h.b16 %v2476
      %v3258 = vunpack.c.l.b16 %v2477
      %v3259 = vunpack.c.h.b16 %v2477
      %v3260 = vunpack.c.l.b16 %v2478
      %v3261 = vunpack.c.h.b16 %v2478
      %v3262 = vunpack.c.l.b16 %v2479
      %v3263 = vunpack.c.l.b16 %v2480
      %v3264 = vunpack.c.h.b16 %v2480
      %v3265 = vunpack.c.l.b16 %v2481
      %v3266 = vunpack.c.h.b16 %v2481
      %v3267 = vunpack.c.l.b16 %v2482
      %v3268 = vunpack.c.h.b16 %v2482
      %v3269 = vunpack.c.l.b16 %v2483
      %v3270 = vunpack.c.h.b16 %v2483
      %v3271 = vunpack.c.l.b16 %v2484
      %v3272 = vunpack.c.l.b16 %v2485
      %v3273 = vunpack.c.h.b16 %v2485
      %v3274 = vunpack.c.l.b16 %v2486
      %v3275 = vunpack.c.h.b16 %v2486
      %v3276 = vunpack.c.l.b16 %v2487
      %v3277 = vunpack.c.h.b16 %v2487
      %v3278 = vunpack.c.l.b16 %v2488
      %v3279 = vunpack.c.h.b16 %v2488
      %v3280 = vunpack.c.l.b16 %v2489
      %v3281 = vunpack.c.l.b16 %v2490
      %v3282 = vunpack.c.h.b16 %v2490
      %v3283 = vunpack.c.l.b16 %v2491
      %v3284 = vunpack.c.h.b16 %v2491
      %v3285 = vunpack.c.l.b16 %v2492
      %v3286 = vunpack.c.h.b16 %v2492
      %v3287 = vunpack.c.l.b16 %v2493
      %v3288 = vunpack.c.h.b16 %v2493
      %v3289 = vunpack.c.l.b16 %v2494
      %v3290 = vunpack.c.l.b16 %v2495
      %v3291 = vunpack.c.h.b16 %v2495
      %v3292 = vunpack.c.l.b16 %v2496
      %v3293 = vunpack.c.h.b16 %v2496
      %v3294 = vunpack.c.l.b16 %v2497
      %v3295 = vunpack.c.h.b16 %v2497
      %v3296 = vunpack.c.l.b16 %v2498
      %v3297 = vunpack.c.h.b16 %v2498
      %v3298 = vunpack.c.l.b16 %v2499
      %v3299 = vunpack.c.l.b16 %v2500
      %v3300 = vunpack.c.h.b16 %v2500
      %v3301 = vunpack.c.l.b16 %v2501
      %v3302 = vunpack.c.h.b16 %v2501
      %v3303 = vunpack.c.l.b16 %v2502
      %v3304 = vunpack.c.h.b16 %v2502
      %v3305 = vunpack.c.l.b16 %v2503
      %v3306 = vunpack.c.h.b16 %v2503
      %v3307 = vunpack.c.l.b16 %v2504
      %v3308 = vunpack.c.l.b16 %v2505
      %v3309 = vunpack.c.h.b16 %v2505
      %v3310 = vunpack.c.l.b16 %v2506
      %v3311 = vunpack.c.h.b16 %v2506
      %v3312 = vunpack.c.l.b16 %v2507
      %v3313 = vunpack.c.h.b16 %v2507
      %v3314 = vunpack.c.l.b16 %v2508
      %v3315 = vunpack.c.h.b16 %v2508
      %v3316 = vunpack.c.l.b16 %v2509
      %v3317 = vunpack.c.l.b16 %v2510
      %v3318 = vunpack.c.h.b16 %v2510
      %v3319 = vunpack.c.l.b16 %v2511
      %v3320 = vunpack.c.h.b16 %v2511
      %v3321 = vunpack.c.l.b16 %v2512
      %v3322 = vunpack.c.h.b16 %v2512
      %v3323 = vunpack.c.l.b16 %v2513
      %v3324 = vunpack.c.h.b16 %v2513
      %v3325 = vunpack.c.l.b16 %v2514
      %v3326 = vunpack.c.l.b16 %v2515
      %v3327 = vunpack.c.h.b16 %v2515
      %v3328 = vunpack.c.l.b16 %v2516
      %v3329 = vunpack.c.h.b16 %v2516
      %v3330 = vunpack.c.l.b16 %v2517
      %v3331 = vunpack.c.h.b16 %v2517
      %v3332 = vunpack.c.l.b16 %v2518
      %v3333 = vunpack.c.h.b16 %v2518
      %v3334 = vunpack.c.l.b16 %v2519
      %v3335 = vunpack.c.l.b16 %v2520
      %v3336 = vunpack.c.h.b16 %v2520
      %v3337 = vunpack.c.l.b16 %v2521
      %v3338 = vunpack.c.h.b16 %v2521
      %v3339 = vunpack.c.l.b16 %v2522
      %v3340 = vunpack.c.h.b16 %v2522
      %v3341 = vunpack.c.l.b16 %v2523
      %v3342 = vunpack.c.h.b16 %v2523
      %v3343 = vunpack.c.l.b16 %v2524
      %v3344 = vunpack.c.l.b16 %v2525
      %v3345 = vunpack.c.h.b16 %v2525
      %v3346 = vunpack.c.l.b16 %v2526
      %v3347 = vunpack.c.h.b16 %v2526
      %v3348 = vunpack.c.l.b16 %v2527
      %v3349 = vunpack.c.h.b16 %v2527
      %v3350 = vunpack.c.l.b16 %v2528
      %v3351 = vunpack.c.h.b16 %v2528
      %v3352 = vunpack.c.l.b16 %v2529
      %v3353 = vpack.c.b16 %v2930, %v2921
      %v3354 = vpack.c.b16 %v2931, %v2922
      %v3355 = vpack.c.b16 %v2932, %v2923
      %v3356 = vpack.c.b16 %v2933, %v2924
      %v3357 = vpack.c.b16 %v2934, %v2925
      %v3358 = vpack.c.b16 %v2935, %v2926
      %v3359 = vpack.c.b16 %v2936, %v2927
      %v3360 = vpack.c.b16 %v2937, %v2928
      %v3361 = vpack.c.b16 %v2938, %v2929
      %v3362 = vpack.c.b16 %v2948, %v2939
      %v3363 = vpack.c.b16 %v2949, %v2940
      %v3364 = vpack.c.b16 %v2950, %v2941
      %v3365 = vpack.c.b16 %v2951, %v2942
      %v3366 = vpack.c.b16 %v2952, %v2943
      %v3367 = vpack.c.b16 %v2953, %v2944
      %v3368 = vpack.c.b16 %v2954, %v2945
      %v3369 = vpack.c.b16 %v2955, %v2946
      %v3370 = vpack.c.b16 %v2956, %v2947
      %v3371 = vpack.c.b16 %v2966, %v2957
      %v3372 = vpack.c.b16 %v2967, %v2958
      %v3373 = vpack.c.b16 %v2968, %v2959
      %v3374 = vpack.c.b16 %v2969, %v2960
      %v3375 = vpack.c.b16 %v2970, %v2961
      %v3376 = vpack.c.b16 %v2971, %v2962
      %v3377 = vpack.c.b16 %v2972, %v2963
      %v3378 = vpack.c.b16 %v2973, %v2964
      %v3379 = vpack.c.b16 %v2974, %v2965
      %v3380 = vpack.c.b16 %v2984, %v2975
      %v3381 = vpack.c.b16 %v2985, %v2976
      %v3382 = vpack.c.b16 %v2986, %v2977
      %v3383 = vpack.c.b16 %v2987, %v2978
      %v3384 = vpack.c.b16 %v2988, %v2979
      %v3385 = vpack.c.b16 %v2989, %v2980
      %v3386 = vpack.c.b16 %v2990, %v2981
      %v3387 = vpack.c.b16 %v2991, %v2982
      %v3388 = vpack.c.b16 %v2992, %v2983
      %v3389 = vpack.c.b16 %v3002, %v2993
      %v3390 = vpack.c.b16 %v3003, %v2994
      %v3391 = vpack.c.b16 %v3004, %v2995
      %v3392 = vpack.c.b16 %v3005, %v2996
      %v3393 = vpack.c.b16 %v3006, %v2997
      %v3394 = vpack.c.b16 %v3007, %v2998
      %v3395 = vpack.c.b16 %v3008, %v2999
      %v3396 = vpack.c.b16 %v3009, %v3000
      %v3397 = vpack.c.b16 %v3010, %v3001
      %v3398 = vpack.c.b16 %v3020, %v3011
      %v3399 = vpack.c.b16 %v3021, %v3012
      %v3400 = vpack.c.b16 %v3022, %v3013
      %v3401 = vpack.c.b16 %v3023, %v3014
      %v3402 = vpack.c.b16 %v3024, %v3015
      %v3403 = vpack.c.b16 %v3025, %v3016
      %v3404 = vpack.c.b16 %v3026, %v3017
      %v3405 = vpack.c.b16 %v3027, %v3018
      %v3406 = vpack.c.b16 %v3028, %v3019
      %v3407 = vpack.c.b16 %v3038, %v3029
      %v3408 = vpack.c.b16 %v3039, %v3030
      %v3409 = vpack.c.b16 %v3040, %v3031
      %v3410 = vpack.c.b16 %v3041, %v3032
      %v3411 = vpack.c.b16 %v3042, %v3033
      %v3412 = vpack.c.b16 %v3043, %v3034
      %v3413 = vpack.c.b16 %v3044, %v3035
      %v3414 = vpack.c.b16 %v3045, %v3036
      %v3415 = vpack.c.b16 %v3046, %v3037
      %v3416 = vpack.c.b16 %v3056, %v3047
      %v3417 = vpack.c.b16 %v3057, %v3048
      %v3418 = vpack.c.b16 %v3058, %v3049
      %v3419 = vpack.c.b16 %v3059, %v3050
      %v3420 = vpack.c.b16 %v3060, %v3051
      %v3421 = vpack.c.b16 %v3061, %v3052
      %v3422 = vpack.c.b16 %v3062, %v3053
      %v3423 = vpack.c.b16 %v3063, %v3054
      %v3424 = vpack.c.b16 %v3064, %v3055
      %v3425 = vpack.c.b16 %v3074, %v3065
      %v3426 = vpack.c.b16 %v3075, %v3066
      %v3427 = vpack.c.b16 %v3076, %v3067
      %v3428 = vpack.c.b16 %v3077, %v3068
      %v3429 = vpack.c.b16 %v3078, %v3069
      %v3430 = vpack.c.b16 %v3079, %v3070
      %v3431 = vpack.c.b16 %v3080, %v3071
      %v3432 = vpack.c.b16 %v3081, %v3072
      %v3433 = vpack.c.b16 %v3082, %v3073
      %v3434 = vpack.c.b16 %v3092, %v3083
      %v3435 = vpack.c.b16 %v3093, %v3084
      %v3436 = vpack.c.b16 %v3094, %v3085
      %v3437 = vpack.c.b16 %v3095, %v3086
      %v3438 = vpack.c.b16 %v3096, %v3087
      %v3439 = vpack.c.b16 %v3097, %v3088
      %v3440 = vpack.c.b16 %v3098, %v3089
      %v3441 = vpack.c.b16 %v3099, %v3090
      %v3442 = vpack.c.b16 %v3100, %v3091
      %v3443 = vpack.c.b16 %v3110, %v3101
      %v3444 = vpack.c.b16 %v3111, %v3102
      %v3445 = vpack.c.b16 %v3112, %v3103
      %v3446 = vpack.c.b16 %v3113, %v3104
      %v3447 = vpack.c.b16 %v3114, %v3105
      %v3448 = vpack.c.b16 %v3115, %v3106
      %v3449 = vpack.c.b16 %v3116, %v3107
      %v3450 = vpack.c.b16 %v3117, %v3108
      %v3451 = vpack.c.b16 %v3118, %v3109
      %v3452 = vpack.c.b16 %v3128, %v3119
      %v3453 = vpack.c.b16 %v3129, %v3120
      %v3454 = vpack.c.b16 %v3130, %v3121
      %v3455 = vpack.c.b16 %v3131, %v3122
      %v3456 = vpack.c.b16 %v3132, %v3123
      %v3457 = vpack.c.b16 %v3133, %v3124
      %v3458 = vpack.c.b16 %v3134, %v3125
      %v3459 = vpack.c.b16 %v3135, %v3126
      %v3460 = vpack.c.b16 %v3136, %v3127
      %v3461 = vpack.c.b16 %v3146, %v3137
      %v3462 = vpack.c.b16 %v3147, %v3138
      %v3463 = vpack.c.b16 %v3148, %v3139
      %v3464 = vpack.c.b16 %v3149, %v3140
      %v3465 = vpack.c.b16 %v3150, %v3141
      %v3466 = vpack.c.b16 %v3151, %v3142
      %v3467 = vpack.c.b16 %v3152, %v3143
      %v3468 = vpack.c.b16 %v3153, %v3144
      %v3469 = vpack.c.b16 %v3154, %v3145
      %v3470 = vpack.c.b16 %v3164, %v3155
      %v3471 = vpack.c.b16 %v3165, %v3156
      %v3472 = vpack.c.b16 %v3166, %v3157
      %v3473 = vpack.c.b16 %v3167, %v3158
      %v3474 = vpack.c.b16 %v3168, %v3159
      %v3475 = vpack.c.b16 %v3169, %v3160
      %v3476 = vpack.c.b16 %v3170, %v3161
      %v3477 = vpack.c.b16 %v3171, %v3162
      %v3478 = vpack.c.b16 %v3172, %v3163
      %v3479 = vpack.c.b16 %v3182, %v3173
      %v3480 = vpack.c.b16 %v3183, %v3174
      %v3481 = vpack.c.b16 %v3184, %v3175
      %v3482 = vpack.c.b16 %v3185, %v3176
      %v3483 = vpack.c.b16 %v3186, %v3177
      %v3484 = vpack.c.b16 %v3187, %v3178
      %v3485 = vpack.c.b16 %v3188, %v3179
      %v3486 = vpack.c.b16 %v3189, %v3180
      %v3487 = vpack.c.b16 %v3190, %v3181
      %v3488 = vpack.c.b16 %v3200, %v3191
      %v3489 = vpack.c.b16 %v3201, %v3192
      %v3490 = vpack.c.b16 %v3202, %v3193
      %v3491 = vpack.c.b16 %v3203, %v3194
      %v3492 = vpack.c.b16 %v3204, %v3195
      %v3493 = vpack.c.b16 %v3205, %v3196
      %v3494 = vpack.c.b16 %v3206, %v3197
      %v3495 = vpack.c.b16 %v3207, %v3198
      %v3496 = vpack.c.b16 %v3208, %v3199
      %v3497 = vpack.c.b16 %v3218, %v3209
      %v3498 = vpack.c.b16 %v3219, %v3210
      %v3499 = vpack.c.b16 %v3220, %v3211
      %v3500 = vpack.c.b16 %v3221, %v3212
      %v3501 = vpack.c.b16 %v3222, %v3213
      %v3502 = vpack.c.b16 %v3223, %v3214
      %v3503 = vpack.c.b16 %v3224, %v3215
      %v3504 = vpack.c.b16 %v3225, %v3216
      %v3505 = vpack.c.b16 %v3226, %v3217
      %v3506 = vpack.c.b16 %v3236, %v3227
      %v3507 = vpack.c.b16 %v3237, %v3228
      %v3508 = vpack.c.b16 %v3238, %v3229
      %v3509 = vpack.c.b16 %v3239, %v3230
      %v3510 = vpack.c.b16 %v3240, %v3231
      %v3511 = vpack.c.b16 %v3241, %v3232
      %v3512 = vpack.c.b16 %v3242, %v3233
      %v3513 = vpack.c.b16 %v3243, %v3234
      %v3514 = vpack.c.b16 %v3244, %v3235
      %v3515 = vpack.c.b16 %v3254, %v3245
      %v3516 = vpack.c.b16 %v3255, %v3246
      %v3517 = vpack.c.b16 %v3256, %v3247
      %v3518 = vpack.c.b16 %v3257, %v3248
      %v3519 = vpack.c.b16 %v3258, %v3249
      %v3520 = vpack.c.b16 %v3259, %v3250
      %v3521 = vpack.c.b16 %v3260, %v3251
      %v3522 = vpack.c.b16 %v3261, %v3252
      %v3523 = vpack.c.b16 %v3262, %v3253
      %v3524 = vpack.c.b16 %v3272, %v3263
      %v3525 = vpack.c.b16 %v3273, %v3264
      %v3526 = vpack.c.b16 %v3274, %v3265
      %v3527 = vpack.c.b16 %v3275, %v3266
      %v3528 = vpack.c.b16 %v3276, %v3267
      %v3529 = vpack.c.b16 %v3277, %v3268
      %v3530 = vpack.c.b16 %v3278, %v3269
      %v3531 = vpack.c.b16 %v3279, %v3270
      %v3532 = vpack.c.b16 %v3280, %v3271
      %v3533 = vpack.c.b16 %v3290, %v3281
      %v3534 = vpack.c.b16 %v3291, %v3282
      %v3535 = vpack.c.b16 %v3292, %v3283
      %v3536 = vpack.c.b16 %v3293, %v3284
      %v3537 = vpack.c.b16 %v3294, %v3285
      %v3538 = vpack.c.b16 %v3295, %v3286
      %v3539 = vpack.c.b16 %v3296, %v3287
      %v3540 = vpack.c.b16 %v3297, %v3288
      %v3541 = vpack.c.b16 %v3298, %v3289
      %v3542 = vpack.c.b16 %v3308, %v3299
      %v3543 = vpack.c.b16 %v3309, %v3300
      %v3544 = vpack.c.b16 %v3310, %v3301
      %v3545 = vpack.c.b16 %v3311, %v3302
      %v3546 = vpack.c.b16 %v3312, %v3303
      %v3547 = vpack.c.b16 %v3313, %v3304
      %v3548 = vpack.c.b16 %v3314, %v3305
      %v3549 = vpack.c.b16 %v3315, %v3306
      %v3550 = vpack.c.b16 %v3316, %v3307
      %v3551 = vpack.c.b16 %v3326, %v3317
      %v3552 = vpack.c.b16 %v3327, %v3318
      %v3553 = vpack.c.b16 %v3328, %v3319
      %v3554 = vpack.c.b16 %v3329, %v3320
      %v3555 = vpack.c.b16 %v3330, %v3321
      %v3556 = vpack.c.b16 %v3331, %v3322
      %v3557 = vpack.c.b16 %v3332, %v3323
      %v3558 = vpack.c.b16 %v3333, %v3324
      %v3559 = vpack.c.b16 %v3334, %v3325
      %v3560 = vpack.c.b16 %v3344, %v3335
      %v3561 = vpack.c.b16 %v3345, %v3336
      %v3562 = vpack.c.b16 %v3346, %v3337
      %v3563 = vpack.c.b16 %v3347, %v3338
      %v3564 = vpack.c.b16 %v3348, %v3339
      %v3565 = vpack.c.b16 %v3349, %v3340
      %v3566 = vpack.c.b16 %v3350, %v3341
      %v3567 = vpack.c.b16 %v3351, %v3342
      %v3568 = vpack.c.b16 %v3352, %v3343
      %v3929 = vunpack.c.l.b16 %v2530
      %v3930 = vunpack.c.l.b16 %v2531
      %v3931 = vunpack.c.l.b16 %v2532
      %v3932 = vunpack.c.l.b16 %v2533
      %v3933 = vunpack.c.l.b16 %v2534
      %v3934 = vunpack.c.l.b16 %v2535
      %v3935 = vunpack.c.l.b16 %v2536
      %v3936 = vunpack.c.l.b16 %v2537
      %v3937 = vunpack.c.l.b16 %v2538
      %v3938 = vunpack.c.l.b16 %v2539
      %v3939 = vunpack.c.l.b16 %v2540
      %v3940 = vunpack.c.l.b16 %v2541
      %v3941 = vunpack.c.l.b16 %v2542
      %v3942 = vunpack.c.l.b16 %v2543
      %v3943 = vunpack.c.l.b16 %v2544
      %v3944 = vunpack.c.l.b16 %v2545
      %v3945 = vunpack.c.l.b16 %v2546
      %v3946 = vunpack.c.l.b16 %v2547
      %v3947 = vunpack.c.l.b16 %v2548
      %v3948 = vunpack.c.l.b16 %v2549
      %v3949 = vunpack.c.l.b16 %v2550
      %v3950 = vunpack.c.l.b16 %v2551
      %v3951 = vunpack.c.l.b16 %v2552
      %v3952 = vunpack.c.l.b16 %v2553
      %v3953 = vunpack.c.l.b16 %v2554
      %v3954 = vunpack.c.l.b16 %v2555
      %v3955 = vunpack.c.l.b16 %v2556
      %v3956 = vunpack.c.l.b16 %v2557
      %v3957 = vunpack.c.l.b16 %v2558
      %v3958 = vunpack.c.l.b16 %v2559
      %v3959 = vunpack.c.l.b16 %v2560
      %v3960 = vunpack.c.l.b16 %v2561
      %v3961 = vunpack.c.l.b16 %v2562
      %v3962 = vunpack.c.l.b16 %v2563
      %v3963 = vunpack.c.l.b16 %v2564
      %v3964 = vunpack.c.l.b16 %v2565
      %v3965 = vunpack.c.l.b16 %v2566
      %v3966 = vunpack.c.l.b16 %v2567
      %v3967 = vunpack.c.l.b16 %v2568
      %v3968 = vunpack.c.l.b16 %v2569
      %v3969 = vunpack.c.l.b16 %v2570
      %v3970 = vunpack.c.l.b16 %v2571
      %v3971 = vunpack.c.l.b16 %v2572
      %v3972 = vunpack.c.l.b16 %v2573
      %v3973 = vunpack.c.l.b16 %v2574
      %v3974 = vunpack.c.l.b16 %v2575
      %v3975 = vunpack.c.l.b16 %v2576
      %v3976 = vunpack.c.l.b16 %v2577
      %v3977 = vunpack.c.l.b16 %v2578
      %v3978 = vunpack.c.l.b16 %v2579
      %v3979 = vunpack.c.l.b16 %v2580
      %v3980 = vunpack.c.l.b16 %v2581
      %v3981 = vunpack.c.l.b16 %v2582
      %v3982 = vunpack.c.l.b16 %v2583
      %v3983 = vunpack.c.l.b16 %v2584
      %v3984 = vunpack.c.l.b16 %v2585
      %v3985 = vunpack.c.l.b16 %v2586
      %v3986 = vunpack.c.l.b16 %v2587
      %v3987 = vunpack.c.l.b16 %v2588
      %v3988 = vunpack.c.l.b16 %v2589
      %v3989 = vunpack.c.l.b16 %v2590
      %v3990 = vunpack.c.l.b16 %v2591
      %v3991 = vunpack.c.l.b16 %v2592
      %v3992 = vunpack.c.l.b16 %v2593
      %v3993 = vunpack.c.l.b16 %v2594
      %v3994 = vunpack.c.l.b16 %v2595
      %v3995 = vunpack.c.l.b16 %v2596
      %v3996 = vunpack.c.l.b16 %v2597
      %v3997 = vunpack.c.l.b16 %v2598
      %v3998 = vunpack.c.l.b16 %v2599
      %v3999 = vunpack.c.l.b16 %v2600
      %v4000 = vunpack.c.l.b16 %v2601
      %v4001 = vunpack.c.l.b16 %v2602
      %v4002 = vunpack.c.l.b16 %v2603
      %v4003 = vunpack.c.l.b16 %v2604
      %v4004 = vunpack.c.l.b16 %v2605
      %v4005 = vunpack.c.l.b16 %v2606
      %v4006 = vunpack.c.l.b16 %v2607
      %v4007 = vunpack.c.l.b16 %v2608
      %v4008 = vunpack.c.l.b16 %v2609
      %v4009 = vunpack.c.l.b16 %v2610
      %v4010 = vunpack.c.l.b16 %v2611
      %v4011 = vunpack.c.l.b16 %v2612
      %v4012 = vunpack.c.l.b16 %v2613
      %v4013 = vunpack.c.l.b16 %v2614
      %v4014 = vunpack.c.l.b16 %v2615
      %v4015 = vunpack.c.l.b16 %v2616
      %v4016 = vunpack.c.l.b16 %v2617
      %v4017 = vunpack.c.l.b16 %v2618
      %v4018 = vunpack.c.l.b16 %v2619
      %v4019 = vunpack.c.l.b16 %v2620
      %v4020 = vunpack.c.l.b16 %v2621
      %v4021 = vunpack.c.l.b16 %v2622
      %v4022 = vunpack.c.l.b16 %v2623
      %v4023 = vunpack.c.l.b16 %v2624
      %v4024 = vunpack.c.l.b16 %v2625
      %v4025 = vunpack.c.l.b16 %v2626
      %v4026 = vunpack.c.l.b16 %v2627
      %v4027 = vunpack.c.l.b16 %v2628
      %v4028 = vunpack.c.l.b16 %v2629
      %v4029 = vunpack.c.l.b16 %v2630
      %v4030 = vunpack.c.l.b16 %v2631
      %v4031 = vunpack.c.l.b16 %v2632
      %v4032 = vunpack.c.l.b16 %v2633
      %v4033 = vunpack.c.l.b16 %v2634
      %v4034 = vunpack.c.l.b16 %v2635
      %v4035 = vunpack.c.l.b16 %v2636
      %v4036 = vunpack.c.l.b16 %v2637
      %v4037 = vunpack.c.l.b16 %v2638
      %v4038 = vunpack.c.l.b16 %v2639
      %v4039 = vunpack.c.l.b16 %v2640
      %v4040 = vunpack.c.l.b16 %v2641
      %v4041 = vunpack.c.l.b16 %v2642
      %v4042 = vunpack.c.l.b16 %v2643
      %v4043 = vunpack.c.l.b16 %v2644
      %v4044 = vunpack.c.l.b16 %v2645
      %v4045 = vunpack.c.l.b16 %v2646
      %v4046 = vunpack.c.l.b16 %v2647
      %v4047 = vunpack.c.l.b16 %v2648
      %v4048 = vunpack.c.l.b16 %v2649
      %v4049 = vunpack.c.l.b16 %v2650
      %v4050 = vunpack.c.l.b16 %v2651
      %v4051 = vunpack.c.l.b16 %v2652
      %v4052 = vunpack.c.l.b16 %v2653
      %v4053 = vunpack.c.l.b16 %v2654
      %v4054 = vunpack.c.l.b16 %v2655
      %v4055 = vunpack.c.l.b16 %v2656
      %v4056 = vunpack.c.l.b16 %v2657
      %v4057 = vunpack.c.l.b16 %v2658
      %v4058 = vunpack.c.l.b16 %v2659
      %v4059 = vunpack.c.l.b16 %v2660
      %v4060 = vunpack.c.l.b16 %v2661
      %v4061 = vunpack.c.l.b16 %v2662
      %v4062 = vunpack.c.l.b16 %v2663
      %v4063 = vunpack.c.l.b16 %v2664
      %v4064 = vunpack.c.l.b16 %v2665
      %v4065 = vunpack.c.l.b16 %v2666
      %v4066 = vunpack.c.l.b16 %v2667
      %v4067 = vunpack.c.l.b16 %v2668
      %v4068 = vunpack.c.l.b16 %v2669
      %v4069 = vunpack.c.l.b16 %v2670
      %v4070 = vunpack.c.l.b16 %v2671
      %v4071 = vunpack.c.l.b16 %v2672
      %v4072 = vunpack.c.l.b16 %v2673
      %v4073 = vpack.c.b16 %v3930, %v3929
      %v4074 = vpack.c.b16 %v3932, %v3931
      %v4075 = vpack.c.b16 %v3934, %v3933
      %v4076 = vpack.c.b16 %v3936, %v3935
      %v4077 = vpack.c.b16 %v3938, %v3937
      %v4078 = vpack.c.b16 %v3940, %v3939
      %v4079 = vpack.c.b16 %v3942, %v3941
      %v4080 = vpack.c.b16 %v3944, %v3943
      %v4081 = vpack.c.b16 %v3946, %v3945
      %v4082 = vpack.c.b16 %v3948, %v3947
      %v4083 = vpack.c.b16 %v3950, %v3949
      %v4084 = vpack.c.b16 %v3952, %v3951
      %v4085 = vpack.c.b16 %v3954, %v3953
      %v4086 = vpack.c.b16 %v3956, %v3955
      %v4087 = vpack.c.b16 %v3958, %v3957
      %v4088 = vpack.c.b16 %v3960, %v3959
      %v4089 = vpack.c.b16 %v3962, %v3961
      %v4090 = vpack.c.b16 %v3964, %v3963
      %v4091 = vpack.c.b16 %v3966, %v3965
      %v4092 = vpack.c.b16 %v3968, %v3967
      %v4093 = vpack.c.b16 %v3970, %v3969
      %v4094 = vpack.c.b16 %v3972, %v3971
      %v4095 = vpack.c.b16 %v3974, %v3973
      %v4096 = vpack.c.b16 %v3976, %v3975
      %v4097 = vpack.c.b16 %v3978, %v3977
      %v4098 = vpack.c.b16 %v3980, %v3979
      %v4099 = vpack.c.b16 %v3982, %v3981
      %v4100 = vpack.c.b16 %v3984, %v3983
      %v4101 = vpack.c.b16 %v3986, %v3985
      %v4102 = vpack.c.b16 %v3988, %v3987
      %v4103 = vpack.c.b16 %v3990, %v3989
      %v4104 = vpack.c.b16 %v3992, %v3991
      %v4105 = vpack.c.b16 %v3994, %v3993
      %v4106 = vpack.c.b16 %v3996, %v3995
      %v4107 = vpack.c.b16 %v3998, %v3997
      %v4108 = vpack.c.b16 %v4000, %v3999
      %v4109 = vpack.c.b16 %v4002, %v4001
      %v4110 = vpack.c.b16 %v4004, %v4003
      %v4111 = vpack.c.b16 %v4006, %v4005
      %v4112 = vpack.c.b16 %v4008, %v4007
      %v4113 = vpack.c.b16 %v4010, %v4009
      %v4114 = vpack.c.b16 %v4012, %v4011
      %v4115 = vpack.c.b16 %v4014, %v4013
      %v4116 = vpack.c.b16 %v4016, %v4015
      %v4117 = vpack.c.b16 %v4018, %v4017
      %v4118 = vpack.c.b16 %v4020, %v4019
      %v4119 = vpack.c.b16 %v4022, %v4021
      %v4120 = vpack.c.b16 %v4024, %v4023
      %v4121 = vpack.c.b16 %v4026, %v4025
      %v4122 = vpack.c.b16 %v4028, %v4027
      %v4123 = vpack.c.b16 %v4030, %v4029
      %v4124 = vpack.c.b16 %v4032, %v4031
      %v4125 = vpack.c.b16 %v4034, %v4033
      %v4126 = vpack.c.b16 %v4036, %v4035
      %v4127 = vpack.c.b16 %v4038, %v4037
      %v4128 = vpack.c.b16 %v4040, %v4039
      %v4129 = vpack.c.b16 %v4042, %v4041
      %v4130 = vpack.c.b16 %v4044, %v4043
      %v4131 = vpack.c.b16 %v4046, %v4045
      %v4132 = vpack.c.b16 %v4048, %v4047
      %v4133 = vpack.c.b16 %v4050, %v4049
      %v4134 = vpack.c.b16 %v4052, %v4051
      %v4135 = vpack.c.b16 %v4054, %v4053
      %v4136 = vpack.c.b16 %v4056, %v4055
      %v4137 = vpack.c.b16 %v4058, %v4057
      %v4138 = vpack.c.b16 %v4060, %v4059
      %v4139 = vpack.c.b16 %v4062, %v4061
      %v4140 = vpack.c.b16 %v4064, %v4063
      %v4141 = vpack.c.b16 %v4066, %v4065
      %v4142 = vpack.c.b16 %v4068, %v4067
      %v4143 = vpack.c.b16 %v4070, %v4069
      %v4144 = vpack.c.b16 %v4072, %v4071
      %4217 = vmatprep.subr.bf16.mxu0 0
      %4218 = vmatpush1.bf16.msra.mxu0 %v4080
      %4219 = vmatprep.subr.bf16.mxu0 0
      %4220 = vmatpush1.bf16.msra.mxu0 %v4079
      %4221 = vmatprep.subr.bf16.mxu0 0
      %4222 = vmatpush1.bf16.msra.mxu0 %v4078
      %4223 = vmatprep.subr.bf16.mxu0 0
      %4224 = vmatpush1.bf16.msra.mxu0 %v4077
      %4225 = vmatprep.subr.bf16.mxu0 0
      %4226 = vmatpush1.bf16.msra.mxu0 %v4076
      %4227 = vmatprep.subr.bf16.mxu0 0
      %4228 = vmatpush1.bf16.msra.mxu0 %v4075
      %4229 = vmatprep.subr.bf16.mxu0 0
      %4230 = vmatpush1.bf16.msra.mxu0 %v4074
      %4231 = vmatprep.subr.bf16.mxu0 0
      %4232 = vmatpush1.bf16.msra.mxu0 %v4073
      %4233 = vmatprep.subr.bf16.mxu0 0
      %4234 = vmatpush2.bf16.msra.mxu0 %v4088
      %4235 = vmatprep.subr.bf16.mxu0 0
      %4236 = vmatpush2.bf16.msra.mxu0 %v4087
      %4237 = vmatprep.subr.bf16.mxu0 0
      %4238 = vmatpush2.bf16.msra.mxu0 %v4086
      %4239 = vmatprep.subr.bf16.mxu0 0
      %4240 = vmatpush2.bf16.msra.mxu0 %v4085
      %4241 = vmatprep.subr.bf16.mxu0 0
      %4242 = vmatpush2.bf16.msra.mxu0 %v4084
      %4243 = vmatprep.subr.bf16.mxu0 0
      %4244 = vmatpush2.bf16.msra.mxu0 %v4083
      %4245 = vmatprep.subr.bf16.mxu0 0
      %4246 = vmatpush2.bf16.msra.mxu0 %v4082
      %4247 = vmatprep.subr.bf16.mxu0 0
      %4248 = vmatpush2.bf16.msra.mxu0 %v4081
      %4249 = vmatprep.mubr.bf16.mxu0 %v3354
      %4250 = vmatmul.mubr.bf16.gmra.mxu0 %v3353
      %v4251 = vpop.f32.mrf.mxu0
      %v4252 = vadd.f32 %v2679, %v4251
      %v4253 = vpop.f32.mrf.mxu0
      %v4254 = vpop.f32.mrf.mxu0
      %v4255 = vadd.f32 %v2679, %v4254
      %v4256 = vpop.f32.mrf.mxu0
      %4257 = vmatprep.mubr.bf16.mxu0 %v3363
      %4258 = vmatmul.mubr.bf16.gmra.mxu0 %v3362
      %v4259 = vpop.f32.mrf.mxu0
      %v4260 = vpop.f32.mrf.mxu0
      %v4261 = vpop.f32.mrf.mxu0
      %v4262 = vadd.f32 %v2679, %v4261
      %v4263 = vpop.f32.mrf.mxu0
      %4264 = vmatprep.mubr.bf16.mxu0 %v3372
      %4265 = vmatmul.mubr.bf16.gmra.mxu0 %v3371
      %v4266 = vpop.f32.mrf.mxu0
      %v4267 = vadd.f32 %v2679, %v4266
      %v4268 = vpop.f32.mrf.mxu0
      %v4269 = vpop.f32.mrf.mxu0
      %v4270 = vpop.f32.mrf.mxu0
      %4271 = vmatprep.mubr.bf16.mxu0 %v3381
      %4272 = vmatmul.mubr.bf16.gmra.mxu0 %v3380
      %v4273 = vpop.f32.mrf.mxu0
      %v4274 = vadd.f32 %v2679, %v4273
      %v4275 = vpop.f32.mrf.mxu0
      %v4276 = vpop.f32.mrf.mxu0
      %v4277 = vadd.f32 %v2679, %v4276
      %v4278 = vpop.f32.mrf.mxu0
      %4279 = vmatprep.mubr.bf16.mxu0 %v3390
      %4280 = vmatmul.mubr.bf16.gmra.mxu0 %v3389
      %v4281 = vpop.f32.mrf.mxu0
      %v4282 = vpop.f32.mrf.mxu0
      %v4283 = vpop.f32.mrf.mxu0
      %v4284 = vadd.f32 %v2679, %v4283
      %v4285 = vpop.f32.mrf.mxu0
      %4286 = vmatprep.mubr.bf16.mxu0 %v3399
      %4287 = vmatmul.mubr.bf16.gmra.mxu0 %v3398
      %v4288 = vpop.f32.mrf.mxu0
      %v4289 = vadd.f32 %v2679, %v4288
      %v4290 = vpop.f32.mrf.mxu0
      %v4291 = vpop.f32.mrf.mxu0
      %v4292 = vpop.f32.mrf.mxu0
      %4293 = vmatprep.mubr.bf16.mxu0 %v3408
      %4294 = vmatmul.mubr.bf16.gmra.mxu0 %v3407
      %v4295 = vpop.f32.mrf.mxu0
      %v4296 = vadd.f32 %v2679, %v4295
      %v4297 = vpop.f32.mrf.mxu0
      %v4298 = vpop.f32.mrf.mxu0
      %v4299 = vadd.f32 %v2679, %v4298
      %v4300 = vpop.f32.mrf.mxu0
      %4301 = vmatprep.mubr.bf16.mxu0 %v3417
      %4302 = vmatmul.mubr.bf16.gmra.mxu0 %v3416
      %v4303 = vpop.f32.mrf.mxu0
      %v4304 = vpop.f32.mrf.mxu0
      %v4305 = vpop.f32.mrf.mxu0
      %v4306 = vadd.f32 %v2679, %v4305
      %v4307 = vpop.f32.mrf.mxu0
      %4308 = vmatprep.mubr.bf16.mxu0 %v3426
      %4309 = vmatmul.mubr.bf16.gmra.mxu0 %v3425
      %v4310 = vpop.f32.mrf.mxu0
      %v4311 = vadd.f32 %v2679, %v4310
      %v4312 = vpop.f32.mrf.mxu0
      %v4313 = vpop.f32.mrf.mxu0
      %v4314 = vpop.f32.mrf.mxu0
      %4315 = vmatprep.mubr.bf16.mxu0 %v3435
      %4316 = vmatmul.mubr.bf16.gmra.mxu0 %v3434
      %v4317 = vpop.f32.mrf.mxu0
      %v4318 = vadd.f32 %v2679, %v4317
      %v4319 = vpop.f32.mrf.mxu0
      %v4320 = vpop.f32.mrf.mxu0
      %v4321 = vadd.f32 %v2679, %v4320
      %v4322 = vpop.f32.mrf.mxu0
      %4323 = vmatprep.mubr.bf16.mxu0 %v3444
      %4324 = vmatmul.mubr.bf16.gmra.mxu0 %v3443
      %v4325 = vpop.f32.mrf.mxu0
      %v4326 = vpop.f32.mrf.mxu0
      %v4327 = vpop.f32.mrf.mxu0
      %v4328 = vadd.f32 %v2679, %v4327
      %v4329 = vpop.f32.mrf.mxu0
      %4330 = vmatprep.mubr.bf16.mxu0 %v3453
      %4331 = vmatmul.mubr.bf16.gmra.mxu0 %v3452
      %v4332 = vpop.f32.mrf.mxu0
      %v4333 = vadd.f32 %v2679, %v4332
      %v4334 = vpop.f32.mrf.mxu0
      %v4335 = vpop.f32.mrf.mxu0
      %v4336 = vpop.f32.mrf.mxu0
      %4337 = vmatprep.mubr.bf16.mxu0 %v3462
      %4338 = vmatmul.mubr.bf16.gmra.mxu0 %v3461
      %v4339 = vpop.f32.mrf.mxu0
      %v4340 = vadd.f32 %v2679, %v4339
      %v4341 = vpop.f32.mrf.mxu0
      %v4342 = vpop.f32.mrf.mxu0
      %v4343 = vadd.f32 %v2679, %v4342
      %v4344 = vpop.f32.mrf.mxu0
      %4345 = vmatprep.mubr.bf16.mxu0 %v3471
      %4346 = vmatmul.mubr.bf16.gmra.mxu0 %v3470
      %v4347 = vpop.f32.mrf.mxu0
      %v4348 = vpop.f32.mrf.mxu0
      %v4349 = vpop.f32.mrf.mxu0
      %v4350 = vadd.f32 %v2679, %v4349
      %v4351 = vpop.f32.mrf.mxu0
      %4352 = vmatprep.mubr.bf16.mxu0 %v3480
      %4353 = vmatmul.mubr.bf16.gmra.mxu0 %v3479
      %v4354 = vpop.f32.mrf.mxu0
      %v4355 = vadd.f32 %v2679, %v4354
      %v4356 = vpop.f32.mrf.mxu0
      %v4357 = vpop.f32.mrf.mxu0
      %v4358 = vpop.f32.mrf.mxu0
      %4359 = vmatprep.mubr.bf16.mxu0 %v3489
      %4360 = vmatmul.mubr.bf16.gmra.mxu0 %v3488
      %v4361 = vpop.f32.mrf.mxu0
      %v4362 = vadd.f32 %v2679, %v4361
      %v4363 = vpop.f32.mrf.mxu0
      %v4364 = vpop.f32.mrf.mxu0
      %v4365 = vadd.f32 %v2679, %v4364
      %v4366 = vpop.f32.mrf.mxu0
      %4367 = vmatprep.mubr.bf16.mxu0 %v3498
      %4368 = vmatmul.mubr.bf16.gmra.mxu0 %v3497
      %v4369 = vpop.f32.mrf.mxu0
      %v4370 = vpop.f32.mrf.mxu0
      %v4371 = vpop.f32.mrf.mxu0
      %v4372 = vadd.f32 %v2679, %v4371
      %v4373 = vpop.f32.mrf.mxu0
      %4374 = vmatprep.mubr.bf16.mxu0 %v3507
      %4375 = vmatmul.mubr.bf16.gmra.mxu0 %v3506
      %v4376 = vpop.f32.mrf.mxu0
      %v4377 = vadd.f32 %v2679, %v4376
      %v4378 = vpop.f32.mrf.mxu0
      %v4379 = vpop.f32.mrf.mxu0
      %v4380 = vpop.f32.mrf.mxu0
      %4381 = vmatprep.mubr.bf16.mxu0 %v3516
      %4382 = vmatmul.mubr.bf16.gmra.mxu0 %v3515
      %v4383 = vpop.f32.mrf.mxu0
      %v4384 = vadd.f32 %v2679, %v4383
      %v4385 = vpop.f32.mrf.mxu0
      %v4386 = vpop.f32.mrf.mxu0
      %v4387 = vadd.f32 %v2679, %v4386
      %v4388 = vpop.f32.mrf.mxu0
      %4389 = vmatprep.mubr.bf16.mxu0 %v3525
      %4390 = vmatmul.mubr.bf16.gmra.mxu0 %v3524
      %v4391 = vpop.f32.mrf.mxu0
      %v4392 = vpop.f32.mrf.mxu0
      %v4393 = vpop.f32.mrf.mxu0
      %v4394 = vadd.f32 %v2679, %v4393
      %v4395 = vpop.f32.mrf.mxu0
      %4396 = vmatprep.mubr.bf16.mxu0 %v3534
      %4397 = vmatmul.mubr.bf16.gmra.mxu0 %v3533
      %v4398 = vpop.f32.mrf.mxu0
      %v4399 = vadd.f32 %v2679, %v4398
      %v4400 = vpop.f32.mrf.mxu0
      %v4401 = vpop.f32.mrf.mxu0
      %v4402 = vpop.f32.mrf.mxu0
      %4403 = vmatprep.mubr.bf16.mxu0 %v3543
      %4404 = vmatmul.mubr.bf16.gmra.mxu0 %v3542
      %v4405 = vpop.f32.mrf.mxu0
      %v4406 = vadd.f32 %v2679, %v4405
      %v4407 = vpop.f32.mrf.mxu0
      %v4408 = vpop.f32.mrf.mxu0
      %v4409 = vadd.f32 %v2679, %v4408
      %v4410 = vpop.f32.mrf.mxu0
      %4411 = vmatprep.mubr.bf16.mxu0 %v3552
      %4412 = vmatmul.mubr.bf16.gmra.mxu0 %v3551
      %v4413 = vpop.f32.mrf.mxu0
      %v4414 = vpop.f32.mrf.mxu0
      %v4415 = vpop.f32.mrf.mxu0
      %v4416 = vadd.f32 %v2679, %v4415
      %v4417 = vpop.f32.mrf.mxu0
      %4418 = vmatprep.mubr.bf16.mxu0 %v3561
      %4419 = vmatmul.mubr.bf16.gmra.mxu0 %v3560
      %v4420 = vpop.f32.mrf.mxu0
      %v4421 = vadd.f32 %v2679, %v4420
      %v4422 = vpop.f32.mrf.mxu0
      %v4423 = vpop.f32.mrf.mxu0
      %v4424 = vpop.f32.mrf.mxu0
      %4425 = vdwg.mxu0
      %4426 = vmatprep.subr.bf16.mxu0 0
      %4427 = vmatpush1.bf16.msra.mxu0 %v4096
      %4428 = vmatprep.subr.bf16.mxu0 0
      %4429 = vmatpush1.bf16.msra.mxu0 %v4095
      %4430 = vmatprep.subr.bf16.mxu0 0
      %4431 = vmatpush1.bf16.msra.mxu0 %v4094
      %4432 = vmatprep.subr.bf16.mxu0 0
      %4433 = vmatpush1.bf16.msra.mxu0 %v4093
      %4434 = vmatprep.subr.bf16.mxu0 0
      %4435 = vmatpush1.bf16.msra.mxu0 %v4092
      %4436 = vmatprep.subr.bf16.mxu0 0
      %4437 = vmatpush1.bf16.msra.mxu0 %v4091
      %4438 = vmatprep.subr.bf16.mxu0 0
      %4439 = vmatpush1.bf16.msra.mxu0 %v4090
      %4440 = vmatprep.subr.bf16.mxu0 0
      %4441 = vmatpush1.bf16.msra.mxu0 %v4089
      %4442 = vmatprep.subr.bf16.mxu0 0
      %4443 = vmatpush2.bf16.msra.mxu0 %v4104
      %4444 = vmatprep.subr.bf16.mxu0 0
      %4445 = vmatpush2.bf16.msra.mxu0 %v4103
      %4446 = vmatprep.subr.bf16.mxu0 0
      %4447 = vmatpush2.bf16.msra.mxu0 %v4102
      %4448 = vmatprep.subr.bf16.mxu0 0
      %4449 = vmatpush2.bf16.msra.mxu0 %v4101
      %4450 = vmatprep.subr.bf16.mxu0 0
      %4451 = vmatpush2.bf16.msra.mxu0 %v4100
      %4452 = vmatprep.subr.bf16.mxu0 0
      %4453 = vmatpush2.bf16.msra.mxu0 %v4099
      %4454 = vmatprep.subr.bf16.mxu0 0
      %4455 = vmatpush2.bf16.msra.mxu0 %v4098
      %4456 = vmatprep.subr.bf16.mxu0 0
      %4457 = vmatpush2.bf16.msra.mxu0 %v4097
      %4458 = vmatprep.mubr.bf16.mxu0 %v3356
      %4459 = vmatmul.mubr.bf16.gmra.mxu0 %v3355
      %v4460 = vpop.f32.mrf.mxu0
      %v4461 = vadd.f32 %v4252, %v4460
      %v4462 = vpop.f32.mrf.mxu0
      %v4463 = vpop.f32.mrf.mxu0
      %v4464 = vadd.f32 %v4255, %v4463
      %v4465 = vpop.f32.mrf.mxu0
      %4466 = vmatprep.mubr.bf16.mxu0 %v3365
      %4467 = vmatmul.mubr.bf16.gmra.mxu0 %v3364
      %v4468 = vpop.f32.mrf.mxu0
      %v4469 = vpop.f32.mrf.mxu0
      %v4470 = vpop.f32.mrf.mxu0
      %v4471 = vadd.f32 %v4262, %v4470
      %v4472 = vpop.f32.mrf.mxu0
      %4473 = vmatprep.mubr.bf16.mxu0 %v3374
      %4474 = vmatmul.mubr.bf16.gmra.mxu0 %v3373
      %v4475 = vpop.f32.mrf.mxu0
      %v4476 = vadd.f32 %v4267, %v4475
      %v4477 = vpop.f32.mrf.mxu0
      %v4478 = vpop.f32.mrf.mxu0
      %v4479 = vpop.f32.mrf.mxu0
      %4480 = vmatprep.mubr.bf16.mxu0 %v3383
      %4481 = vmatmul.mubr.bf16.gmra.mxu0 %v3382
      %v4482 = vpop.f32.mrf.mxu0
      %v4483 = vadd.f32 %v4274, %v4482
      %v4484 = vpop.f32.mrf.mxu0
      %v4485 = vpop.f32.mrf.mxu0
      %v4486 = vadd.f32 %v4277, %v4485
      %v4487 = vpop.f32.mrf.mxu0
      %4488 = vmatprep.mubr.bf16.mxu0 %v3392
      %4489 = vmatmul.mubr.bf16.gmra.mxu0 %v3391
      %v4490 = vpop.f32.mrf.mxu0
      %v4491 = vpop.f32.mrf.mxu0
      %v4492 = vpop.f32.mrf.mxu0
      %v4493 = vadd.f32 %v4284, %v4492
      %v4494 = vpop.f32.mrf.mxu0
      %4495 = vmatprep.mubr.bf16.mxu0 %v3401
      %4496 = vmatmul.mubr.bf16.gmra.mxu0 %v3400
      %v4497 = vpop.f32.mrf.mxu0
      %v4498 = vadd.f32 %v4289, %v4497
      %v4499 = vpop.f32.mrf.mxu0
      %v4500 = vpop.f32.mrf.mxu0
      %v4501 = vpop.f32.mrf.mxu0
      %4502 = vmatprep.mubr.bf16.mxu0 %v3410
      %4503 = vmatmul.mubr.bf16.gmra.mxu0 %v3409
      %v4504 = vpop.f32.mrf.mxu0
      %v4505 = vadd.f32 %v4296, %v4504
      %v4506 = vpop.f32.mrf.mxu0
      %v4507 = vpop.f32.mrf.mxu0
      %v4508 = vadd.f32 %v4299, %v4507
      %v4509 = vpop.f32.mrf.mxu0
      %4510 = vmatprep.mubr.bf16.mxu0 %v3419
      %4511 = vmatmul.mubr.bf16.gmra.mxu0 %v3418
      %v4512 = vpop.f32.mrf.mxu0
      %v4513 = vpop.f32.mrf.mxu0
      %v4514 = vpop.f32.mrf.mxu0
      %v4515 = vadd.f32 %v4306, %v4514
      %v4516 = vpop.f32.mrf.mxu0
      %4517 = vmatprep.mubr.bf16.mxu0 %v3428
      %4518 = vmatmul.mubr.bf16.gmra.mxu0 %v3427
      %v4519 = vpop.f32.mrf.mxu0
      %v4520 = vadd.f32 %v4311, %v4519
      %v4521 = vpop.f32.mrf.mxu0
      %v4522 = vpop.f32.mrf.mxu0
      %v4523 = vpop.f32.mrf.mxu0
      %4524 = vmatprep.mubr.bf16.mxu0 %v3437
      %4525 = vmatmul.mubr.bf16.gmra.mxu0 %v3436
      %v4526 = vpop.f32.mrf.mxu0
      %v4527 = vadd.f32 %v4318, %v4526
      %v4528 = vpop.f32.mrf.mxu0
      %v4529 = vpop.f32.mrf.mxu0
      %v4530 = vadd.f32 %v4321, %v4529
      %v4531 = vpop.f32.mrf.mxu0
      %4532 = vmatprep.mubr.bf16.mxu0 %v3446
      %4533 = vmatmul.mubr.bf16.gmra.mxu0 %v3445
      %v4534 = vpop.f32.mrf.mxu0
      %v4535 = vpop.f32.mrf.mxu0
      %v4536 = vpop.f32.mrf.mxu0
      %v4537 = vadd.f32 %v4328, %v4536
      %v4538 = vpop.f32.mrf.mxu0
      %4539 = vmatprep.mubr.bf16.mxu0 %v3455
      %4540 = vmatmul.mubr.bf16.gmra.mxu0 %v3454
      %v4541 = vpop.f32.mrf.mxu0
      %v4542 = vadd.f32 %v4333, %v4541
      %v4543 = vpop.f32.mrf.mxu0
      %v4544 = vpop.f32.mrf.mxu0
      %v4545 = vpop.f32.mrf.mxu0
      %4546 = vmatprep.mubr.bf16.mxu0 %v3464
      %4547 = vmatmul.mubr.bf16.gmra.mxu0 %v3463
      %v4548 = vpop.f32.mrf.mxu0
      %v4549 = vadd.f32 %v4340, %v4548
      %v4550 = vpop.f32.mrf.mxu0
      %v4551 = vpop.f32.mrf.mxu0
      %v4552 = vadd.f32 %v4343, %v4551
      %v4553 = vpop.f32.mrf.mxu0
      %4554 = vmatprep.mubr.bf16.mxu0 %v3473
      %4555 = vmatmul.mubr.bf16.gmra.mxu0 %v3472
      %v4556 = vpop.f32.mrf.mxu0
      %v4557 = vpop.f32.mrf.mxu0
      %v4558 = vpop.f32.mrf.mxu0
      %v4559 = vadd.f32 %v4350, %v4558
      %v4560 = vpop.f32.mrf.mxu0
      %4561 = vmatprep.mubr.bf16.mxu0 %v3482
      %4562 = vmatmul.mubr.bf16.gmra.mxu0 %v3481
      %v4563 = vpop.f32.mrf.mxu0
      %v4564 = vadd.f32 %v4355, %v4563
      %v4565 = vpop.f32.mrf.mxu0
      %v4566 = vpop.f32.mrf.mxu0
      %v4567 = vpop.f32.mrf.mxu0
      %4568 = vmatprep.mubr.bf16.mxu0 %v3491
      %4569 = vmatmul.mubr.bf16.gmra.mxu0 %v3490
      %v4570 = vpop.f32.mrf.mxu0
      %v4571 = vadd.f32 %v4362, %v4570
      %v4572 = vpop.f32.mrf.mxu0
      %v4573 = vpop.f32.mrf.mxu0
      %v4574 = vadd.f32 %v4365, %v4573
      %v4575 = vpop.f32.mrf.mxu0
      %4576 = vmatprep.mubr.bf16.mxu0 %v3500
      %4577 = vmatmul.mubr.bf16.gmra.mxu0 %v3499
      %v4578 = vpop.f32.mrf.mxu0
      %v4579 = vpop.f32.mrf.mxu0
      %v4580 = vpop.f32.mrf.mxu0
      %v4581 = vadd.f32 %v4372, %v4580
      %v4582 = vpop.f32.mrf.mxu0
      %4583 = vmatprep.mubr.bf16.mxu0 %v3509
      %4584 = vmatmul.mubr.bf16.gmra.mxu0 %v3508
      %v4585 = vpop.f32.mrf.mxu0
      %v4586 = vadd.f32 %v4377, %v4585
      %v4587 = vpop.f32.mrf.mxu0
      %v4588 = vpop.f32.mrf.mxu0
      %v4589 = vpop.f32.mrf.mxu0
      %4590 = vmatprep.mubr.bf16.mxu0 %v3518
      %4591 = vmatmul.mubr.bf16.gmra.mxu0 %v3517
      %v4592 = vpop.f32.mrf.mxu0
      %v4593 = vadd.f32 %v4384, %v4592
      %v4594 = vpop.f32.mrf.mxu0
      %v4595 = vpop.f32.mrf.mxu0
      %v4596 = vadd.f32 %v4387, %v4595
      %v4597 = vpop.f32.mrf.mxu0
      %4598 = vmatprep.mubr.bf16.mxu0 %v3527
      %4599 = vmatmul.mubr.bf16.gmra.mxu0 %v3526
      %v4600 = vpop.f32.mrf.mxu0
      %v4601 = vpop.f32.mrf.mxu0
      %v4602 = vpop.f32.mrf.mxu0
      %v4603 = vadd.f32 %v4394, %v4602
      %v4604 = vpop.f32.mrf.mxu0
      %4605 = vmatprep.mubr.bf16.mxu0 %v3536
      %4606 = vmatmul.mubr.bf16.gmra.mxu0 %v3535
      %v4607 = vpop.f32.mrf.mxu0
      %v4608 = vadd.f32 %v4399, %v4607
      %v4609 = vpop.f32.mrf.mxu0
      %v4610 = vpop.f32.mrf.mxu0
      %v4611 = vpop.f32.mrf.mxu0
      %4612 = vmatprep.mubr.bf16.mxu0 %v3545
      %4613 = vmatmul.mubr.bf16.gmra.mxu0 %v3544
      %v4614 = vpop.f32.mrf.mxu0
      %v4615 = vadd.f32 %v4406, %v4614
      %v4616 = vpop.f32.mrf.mxu0
      %v4617 = vpop.f32.mrf.mxu0
      %v4618 = vadd.f32 %v4409, %v4617
      %v4619 = vpop.f32.mrf.mxu0
      %4620 = vmatprep.mubr.bf16.mxu0 %v3554
      %4621 = vmatmul.mubr.bf16.gmra.mxu0 %v3553
      %v4622 = vpop.f32.mrf.mxu0
      %v4623 = vpop.f32.mrf.mxu0
      %v4624 = vpop.f32.mrf.mxu0
      %v4625 = vadd.f32 %v4416, %v4624
      %v4626 = vpop.f32.mrf.mxu0
      %4627 = vmatprep.mubr.bf16.mxu0 %v3563
      %4628 = vmatmul.mubr.bf16.gmra.mxu0 %v3562
      %v4629 = vpop.f32.mrf.mxu0
      %v4630 = vadd.f32 %v4421, %v4629
      %v4631 = vpop.f32.mrf.mxu0
      %v4632 = vpop.f32.mrf.mxu0
      %v4633 = vpop.f32.mrf.mxu0
      %4634 = vdwg.mxu0
      %4635 = vmatprep.subr.bf16.mxu0 0
      %4636 = vmatpush1.bf16.msra.mxu0 %v4112
      %4637 = vmatprep.subr.bf16.mxu0 0
      %4638 = vmatpush1.bf16.msra.mxu0 %v4111
      %4639 = vmatprep.subr.bf16.mxu0 0
      %4640 = vmatpush1.bf16.msra.mxu0 %v4110
      %4641 = vmatprep.subr.bf16.mxu0 0
      %4642 = vmatpush1.bf16.msra.mxu0 %v4109
      %4643 = vmatprep.subr.bf16.mxu0 0
      %4644 = vmatpush1.bf16.msra.mxu0 %v4108
      %4645 = vmatprep.subr.bf16.mxu0 0
      %4646 = vmatpush1.bf16.msra.mxu0 %v4107
      %4647 = vmatprep.subr.bf16.mxu0 0
      %4648 = vmatpush1.bf16.msra.mxu0 %v4106
      %4649 = vmatprep.subr.bf16.mxu0 0
      %4650 = vmatpush1.bf16.msra.mxu0 %v4105
      %4651 = vmatprep.subr.bf16.mxu0 0
      %4652 = vmatpush2.bf16.msra.mxu0 %v4120
      %4653 = vmatprep.subr.bf16.mxu0 0
      %4654 = vmatpush2.bf16.msra.mxu0 %v4119
      %4655 = vmatprep.subr.bf16.mxu0 0
      %4656 = vmatpush2.bf16.msra.mxu0 %v4118
      %4657 = vmatprep.subr.bf16.mxu0 0
      %4658 = vmatpush2.bf16.msra.mxu0 %v4117
      %4659 = vmatprep.subr.bf16.mxu0 0
      %4660 = vmatpush2.bf16.msra.mxu0 %v4116
      %4661 = vmatprep.subr.bf16.mxu0 0
      %4662 = vmatpush2.bf16.msra.mxu0 %v4115
      %4663 = vmatprep.subr.bf16.mxu0 0
      %4664 = vmatpush2.bf16.msra.mxu0 %v4114
      %4665 = vmatprep.subr.bf16.mxu0 0
      %4666 = vmatpush2.bf16.msra.mxu0 %v4113
      %4667 = vmatprep.mubr.bf16.mxu0 %v3358
      %4668 = vmatmul.mubr.bf16.gmra.mxu0 %v3357
      %v4669 = vpop.f32.mrf.mxu0
      %v4670 = vadd.f32 %v4461, %v4669
      %v4671 = vpop.f32.mrf.mxu0
      %v4672 = vpop.f32.mrf.mxu0
      %v4673 = vadd.f32 %v4464, %v4672
      %v4674 = vpop.f32.mrf.mxu0
      %4675 = vmatprep.mubr.bf16.mxu0 %v3367
      %4676 = vmatmul.mubr.bf16.gmra.mxu0 %v3366
      %v4677 = vpop.f32.mrf.mxu0
      %v4678 = vpop.f32.mrf.mxu0
      %v4679 = vpop.f32.mrf.mxu0
      %v4680 = vadd.f32 %v4471, %v4679
      %v4681 = vpop.f32.mrf.mxu0
      %4682 = vmatprep.mubr.bf16.mxu0 %v3376
      %4683 = vmatmul.mubr.bf16.gmra.mxu0 %v3375
      %v4684 = vpop.f32.mrf.mxu0
      %v4685 = vadd.f32 %v4476, %v4684
      %v4686 = vpop.f32.mrf.mxu0
      %v4687 = vpop.f32.mrf.mxu0
      %v4688 = vpop.f32.mrf.mxu0
      %4689 = vmatprep.mubr.bf16.mxu0 %v3385
      %4690 = vmatmul.mubr.bf16.gmra.mxu0 %v3384
      %v4691 = vpop.f32.mrf.mxu0
      %v4692 = vadd.f32 %v4483, %v4691
      %v4693 = vpop.f32.mrf.mxu0
      %v4694 = vpop.f32.mrf.mxu0
      %v4695 = vadd.f32 %v4486, %v4694
      %v4696 = vpop.f32.mrf.mxu0
      %4697 = vmatprep.mubr.bf16.mxu0 %v3394
      %4698 = vmatmul.mubr.bf16.gmra.mxu0 %v3393
      %v4699 = vpop.f32.mrf.mxu0
      %v4700 = vpop.f32.mrf.mxu0
      %v4701 = vpop.f32.mrf.mxu0
      %v4702 = vadd.f32 %v4493, %v4701
      %v4703 = vpop.f32.mrf.mxu0
      %4704 = vmatprep.mubr.bf16.mxu0 %v3403
      %4705 = vmatmul.mubr.bf16.gmra.mxu0 %v3402
      %v4706 = vpop.f32.mrf.mxu0
      %v4707 = vadd.f32 %v4498, %v4706
      %v4708 = vpop.f32.mrf.mxu0
      %v4709 = vpop.f32.mrf.mxu0
      %v4710 = vpop.f32.mrf.mxu0
      %4711 = vmatprep.mubr.bf16.mxu0 %v3412
      %4712 = vmatmul.mubr.bf16.gmra.mxu0 %v3411
      %v4713 = vpop.f32.mrf.mxu0
      %v4714 = vadd.f32 %v4505, %v4713
      %v4715 = vpop.f32.mrf.mxu0
      %v4716 = vpop.f32.mrf.mxu0
      %v4717 = vadd.f32 %v4508, %v4716
      %v4718 = vpop.f32.mrf.mxu0
      %4719 = vmatprep.mubr.bf16.mxu0 %v3421
      %4720 = vmatmul.mubr.bf16.gmra.mxu0 %v3420
      %v4721 = vpop.f32.mrf.mxu0
      %v4722 = vpop.f32.mrf.mxu0
      %v4723 = vpop.f32.mrf.mxu0
      %v4724 = vadd.f32 %v4515, %v4723
      %v4725 = vpop.f32.mrf.mxu0
      %4726 = vmatprep.mubr.bf16.mxu0 %v3430
      %4727 = vmatmul.mubr.bf16.gmra.mxu0 %v3429
      %v4728 = vpop.f32.mrf.mxu0
      %v4729 = vadd.f32 %v4520, %v4728
      %v4730 = vpop.f32.mrf.mxu0
      %v4731 = vpop.f32.mrf.mxu0
      %v4732 = vpop.f32.mrf.mxu0
      %4733 = vmatprep.mubr.bf16.mxu0 %v3439
      %4734 = vmatmul.mubr.bf16.gmra.mxu0 %v3438
      %v4735 = vpop.f32.mrf.mxu0
      %v4736 = vadd.f32 %v4527, %v4735
      %v4737 = vpop.f32.mrf.mxu0
      %v4738 = vpop.f32.mrf.mxu0
      %v4739 = vadd.f32 %v4530, %v4738
      %v4740 = vpop.f32.mrf.mxu0
      %4741 = vmatprep.mubr.bf16.mxu0 %v3448
      %4742 = vmatmul.mubr.bf16.gmra.mxu0 %v3447
      %v4743 = vpop.f32.mrf.mxu0
      %v4744 = vpop.f32.mrf.mxu0
      %v4745 = vpop.f32.mrf.mxu0
      %v4746 = vadd.f32 %v4537, %v4745
      %v4747 = vpop.f32.mrf.mxu0
      %4748 = vmatprep.mubr.bf16.mxu0 %v3457
      %4749 = vmatmul.mubr.bf16.gmra.mxu0 %v3456
      %v4750 = vpop.f32.mrf.mxu0
      %v4751 = vadd.f32 %v4542, %v4750
      %v4752 = vpop.f32.mrf.mxu0
      %v4753 = vpop.f32.mrf.mxu0
      %v4754 = vpop.f32.mrf.mxu0
      %4755 = vmatprep.mubr.bf16.mxu0 %v3466
      %4756 = vmatmul.mubr.bf16.gmra.mxu0 %v3465
      %v4757 = vpop.f32.mrf.mxu0
      %v4758 = vadd.f32 %v4549, %v4757
      %v4759 = vpop.f32.mrf.mxu0
      %v4760 = vpop.f32.mrf.mxu0
      %v4761 = vadd.f32 %v4552, %v4760
      %v4762 = vpop.f32.mrf.mxu0
      %4763 = vmatprep.mubr.bf16.mxu0 %v3475
      %4764 = vmatmul.mubr.bf16.gmra.mxu0 %v3474
      %v4765 = vpop.f32.mrf.mxu0
      %v4766 = vpop.f32.mrf.mxu0
      %v4767 = vpop.f32.mrf.mxu0
      %v4768 = vadd.f32 %v4559, %v4767
      %v4769 = vpop.f32.mrf.mxu0
      %4770 = vmatprep.mubr.bf16.mxu0 %v3484
      %4771 = vmatmul.mubr.bf16.gmra.mxu0 %v3483
      %v4772 = vpop.f32.mrf.mxu0
      %v4773 = vadd.f32 %v4564, %v4772
      %v4774 = vpop.f32.mrf.mxu0
      %v4775 = vpop.f32.mrf.mxu0
      %v4776 = vpop.f32.mrf.mxu0
      %4777 = vmatprep.mubr.bf16.mxu0 %v3493
      %4778 = vmatmul.mubr.bf16.gmra.mxu0 %v3492
      %v4779 = vpop.f32.mrf.mxu0
      %v4780 = vadd.f32 %v4571, %v4779
      %v4781 = vpop.f32.mrf.mxu0
      %v4782 = vpop.f32.mrf.mxu0
      %v4783 = vadd.f32 %v4574, %v4782
      %v4784 = vpop.f32.mrf.mxu0
      %4785 = vmatprep.mubr.bf16.mxu0 %v3502
      %4786 = vmatmul.mubr.bf16.gmra.mxu0 %v3501
      %v4787 = vpop.f32.mrf.mxu0
      %v4788 = vpop.f32.mrf.mxu0
      %v4789 = vpop.f32.mrf.mxu0
      %v4790 = vadd.f32 %v4581, %v4789
      %v4791 = vpop.f32.mrf.mxu0
      %4792 = vmatprep.mubr.bf16.mxu0 %v3511
      %4793 = vmatmul.mubr.bf16.gmra.mxu0 %v3510
      %v4794 = vpop.f32.mrf.mxu0
      %v4795 = vadd.f32 %v4586, %v4794
      %v4796 = vpop.f32.mrf.mxu0
      %v4797 = vpop.f32.mrf.mxu0
      %v4798 = vpop.f32.mrf.mxu0
      %4799 = vmatprep.mubr.bf16.mxu0 %v3520
      %4800 = vmatmul.mubr.bf16.gmra.mxu0 %v3519
      %v4801 = vpop.f32.mrf.mxu0
      %v4802 = vadd.f32 %v4593, %v4801
      %v4803 = vpop.f32.mrf.mxu0
      %v4804 = vpop.f32.mrf.mxu0
      %v4805 = vadd.f32 %v4596, %v4804
      %v4806 = vpop.f32.mrf.mxu0
      %4807 = vmatprep.mubr.bf16.mxu0 %v3529
      %4808 = vmatmul.mubr.bf16.gmra.mxu0 %v3528
      %v4809 = vpop.f32.mrf.mxu0
      %v4810 = vpop.f32.mrf.mxu0
      %v4811 = vpop.f32.mrf.mxu0
      %v4812 = vadd.f32 %v4603, %v4811
      %v4813 = vpop.f32.mrf.mxu0
      %4814 = vmatprep.mubr.bf16.mxu0 %v3538
      %4815 = vmatmul.mubr.bf16.gmra.mxu0 %v3537
      %v4816 = vpop.f32.mrf.mxu0
      %v4817 = vadd.f32 %v4608, %v4816
      %v4818 = vpop.f32.mrf.mxu0
      %v4819 = vpop.f32.mrf.mxu0
      %v4820 = vpop.f32.mrf.mxu0
      %4821 = vmatprep.mubr.bf16.mxu0 %v3547
      %4822 = vmatmul.mubr.bf16.gmra.mxu0 %v3546
      %v4823 = vpop.f32.mrf.mxu0
      %v4824 = vadd.f32 %v4615, %v4823
      %v4825 = vpop.f32.mrf.mxu0
      %v4826 = vpop.f32.mrf.mxu0
      %v4827 = vadd.f32 %v4618, %v4826
      %v4828 = vpop.f32.mrf.mxu0
      %4829 = vmatprep.mubr.bf16.mxu0 %v3556
      %4830 = vmatmul.mubr.bf16.gmra.mxu0 %v3555
      %v4831 = vpop.f32.mrf.mxu0
      %v4832 = vpop.f32.mrf.mxu0
      %v4833 = vpop.f32.mrf.mxu0
      %v4834 = vadd.f32 %v4625, %v4833
      %v4835 = vpop.f32.mrf.mxu0
      %4836 = vmatprep.mubr.bf16.mxu0 %v3565
      %4837 = vmatmul.mubr.bf16.gmra.mxu0 %v3564
      %v4838 = vpop.f32.mrf.mxu0
      %v4839 = vadd.f32 %v4630, %v4838
      %v4840 = vpop.f32.mrf.mxu0
      %v4841 = vpop.f32.mrf.mxu0
      %v4842 = vpop.f32.mrf.mxu0
      %4843 = vdwg.mxu0
      %4844 = vmatprep.subr.bf16.mxu0 0
      %4845 = vmatpush1.bf16.msra.mxu0 %v4128
      %4846 = vmatprep.subr.bf16.mxu0 0
      %4847 = vmatpush1.bf16.msra.mxu0 %v4127
      %4848 = vmatprep.subr.bf16.mxu0 0
      %4849 = vmatpush1.bf16.msra.mxu0 %v4126
      %4850 = vmatprep.subr.bf16.mxu0 0
      %4851 = vmatpush1.bf16.msra.mxu0 %v4125
      %4852 = vmatprep.subr.bf16.mxu0 0
      %4853 = vmatpush1.bf16.msra.mxu0 %v4124
      %4854 = vmatprep.subr.bf16.mxu0 0
      %4855 = vmatpush1.bf16.msra.mxu0 %v4123
      %4856 = vmatprep.subr.bf16.mxu0 0
      %4857 = vmatpush1.bf16.msra.mxu0 %v4122
      %4858 = vmatprep.subr.bf16.mxu0 0
      %4859 = vmatpush1.bf16.msra.mxu0 %v4121
      %4860 = vmatprep.subr.bf16.mxu0 0
      %4861 = vmatpush2.bf16.msra.mxu0 %v4136
      %4862 = vmatprep.subr.bf16.mxu0 0
      %4863 = vmatpush2.bf16.msra.mxu0 %v4135
      %4864 = vmatprep.subr.bf16.mxu0 0
      %4865 = vmatpush2.bf16.msra.mxu0 %v4134
      %4866 = vmatprep.subr.bf16.mxu0 0
      %4867 = vmatpush2.bf16.msra.mxu0 %v4133
      %4868 = vmatprep.subr.bf16.mxu0 0
      %4869 = vmatpush2.bf16.msra.mxu0 %v4132
      %4870 = vmatprep.subr.bf16.mxu0 0
      %4871 = vmatpush2.bf16.msra.mxu0 %v4131
      %4872 = vmatprep.subr.bf16.mxu0 0
      %4873 = vmatpush2.bf16.msra.mxu0 %v4130
      %4874 = vmatprep.subr.bf16.mxu0 0
      %4875 = vmatpush2.bf16.msra.mxu0 %v4129
      %4876 = vmatprep.mubr.bf16.mxu0 %v3360
      %4877 = vmatmul.mubr.bf16.gmra.mxu0 %v3359
      %v4878 = vpop.f32.mrf.mxu0
      %v4879 = vadd.f32 %v4670, %v4878
      %v4880 = vpop.f32.mrf.mxu0
      %v4881 = vpop.f32.mrf.mxu0
      %v4882 = vadd.f32 %v4673, %v4881
      %v4883 = vpop.f32.mrf.mxu0
      %4884 = vmatprep.mubr.bf16.mxu0 %v3369
      %4885 = vmatmul.mubr.bf16.gmra.mxu0 %v3368
      %v4886 = vpop.f32.mrf.mxu0
      %v4887 = vpop.f32.mrf.mxu0
      %v4888 = vpop.f32.mrf.mxu0
      %v4889 = vadd.f32 %v4680, %v4888
      %v4890 = vpop.f32.mrf.mxu0
      %4891 = vmatprep.mubr.bf16.mxu0 %v3378
      %4892 = vmatmul.mubr.bf16.gmra.mxu0 %v3377
      %v4893 = vpop.f32.mrf.mxu0
      %v4894 = vadd.f32 %v4685, %v4893
      %v4895 = vpop.f32.mrf.mxu0
      %v4896 = vpop.f32.mrf.mxu0
      %v4897 = vpop.f32.mrf.mxu0
      %4898 = vmatprep.mubr.bf16.mxu0 %v3387
      %4899 = vmatmul.mubr.bf16.gmra.mxu0 %v3386
      %v4900 = vpop.f32.mrf.mxu0
      %v4901 = vadd.f32 %v4692, %v4900
      %v4902 = vpop.f32.mrf.mxu0
      %v4903 = vpop.f32.mrf.mxu0
      %v4904 = vadd.f32 %v4695, %v4903
      %v4905 = vpop.f32.mrf.mxu0
      %4906 = vmatprep.mubr.bf16.mxu0 %v3396
      %4907 = vmatmul.mubr.bf16.gmra.mxu0 %v3395
      %v4908 = vpop.f32.mrf.mxu0
      %v4909 = vpop.f32.mrf.mxu0
      %v4910 = vpop.f32.mrf.mxu0
      %v4911 = vadd.f32 %v4702, %v4910
      %v4912 = vpop.f32.mrf.mxu0
      %4913 = vmatprep.mubr.bf16.mxu0 %v3405
      %4914 = vmatmul.mubr.bf16.gmra.mxu0 %v3404
      %v4915 = vpop.f32.mrf.mxu0
      %v4916 = vadd.f32 %v4707, %v4915
      %v4917 = vpop.f32.mrf.mxu0
      %v4918 = vpop.f32.mrf.mxu0
      %v4919 = vpop.f32.mrf.mxu0
      %4920 = vmatprep.mubr.bf16.mxu0 %v3414
      %4921 = vmatmul.mubr.bf16.gmra.mxu0 %v3413
      %v4922 = vpop.f32.mrf.mxu0
      %v4923 = vadd.f32 %v4714, %v4922
      %v4924 = vpop.f32.mrf.mxu0
      %v4925 = vpop.f32.mrf.mxu0
      %v4926 = vadd.f32 %v4717, %v4925
      %v4927 = vpop.f32.mrf.mxu0
      %4928 = vmatprep.mubr.bf16.mxu0 %v3423
      %4929 = vmatmul.mubr.bf16.gmra.mxu0 %v3422
      %v4930 = vpop.f32.mrf.mxu0
      %v4931 = vpop.f32.mrf.mxu0
      %v4932 = vpop.f32.mrf.mxu0
      %v4933 = vadd.f32 %v4724, %v4932
      %v4934 = vpop.f32.mrf.mxu0
      %4935 = vmatprep.mubr.bf16.mxu0 %v3432
      %4936 = vmatmul.mubr.bf16.gmra.mxu0 %v3431
      %v4937 = vpop.f32.mrf.mxu0
      %v4938 = vadd.f32 %v4729, %v4937
      %v4939 = vpop.f32.mrf.mxu0
      %v4940 = vpop.f32.mrf.mxu0
      %v4941 = vpop.f32.mrf.mxu0
      %4942 = vmatprep.mubr.bf16.mxu0 %v3441
      %4943 = vmatmul.mubr.bf16.gmra.mxu0 %v3440
      %v4944 = vpop.f32.mrf.mxu0
      %v4945 = vadd.f32 %v4736, %v4944
      %v4946 = vpop.f32.mrf.mxu0
      %v4947 = vpop.f32.mrf.mxu0
      %v4948 = vadd.f32 %v4739, %v4947
      %v4949 = vpop.f32.mrf.mxu0
      %4950 = vmatprep.mubr.bf16.mxu0 %v3450
      %4951 = vmatmul.mubr.bf16.gmra.mxu0 %v3449
      %v4952 = vpop.f32.mrf.mxu0
      %v4953 = vpop.f32.mrf.mxu0
      %v4954 = vpop.f32.mrf.mxu0
      %v4955 = vadd.f32 %v4746, %v4954
      %v4956 = vpop.f32.mrf.mxu0
      %4957 = vmatprep.mubr.bf16.mxu0 %v3459
      %4958 = vmatmul.mubr.bf16.gmra.mxu0 %v3458
      %v4959 = vpop.f32.mrf.mxu0
      %v4960 = vadd.f32 %v4751, %v4959
      %v4961 = vpop.f32.mrf.mxu0
      %v4962 = vpop.f32.mrf.mxu0
      %v4963 = vpop.f32.mrf.mxu0
      %4964 = vmatprep.mubr.bf16.mxu0 %v3468
      %4965 = vmatmul.mubr.bf16.gmra.mxu0 %v3467
      %v4966 = vpop.f32.mrf.mxu0
      %v4967 = vadd.f32 %v4758, %v4966
      %v4968 = vpop.f32.mrf.mxu0
      %v4969 = vpop.f32.mrf.mxu0
      %v4970 = vadd.f32 %v4761, %v4969
      %v4971 = vpop.f32.mrf.mxu0
      %4972 = vmatprep.mubr.bf16.mxu0 %v3477
      %4973 = vmatmul.mubr.bf16.gmra.mxu0 %v3476
      %v4974 = vpop.f32.mrf.mxu0
      %v4975 = vpop.f32.mrf.mxu0
      %v4976 = vpop.f32.mrf.mxu0
      %v4977 = vadd.f32 %v4768, %v4976
      %v4978 = vpop.f32.mrf.mxu0
      %4979 = vmatprep.mubr.bf16.mxu0 %v3486
      %4980 = vmatmul.mubr.bf16.gmra.mxu0 %v3485
      %v4981 = vpop.f32.mrf.mxu0
      %v4982 = vadd.f32 %v4773, %v4981
      %v4983 = vpop.f32.mrf.mxu0
      %v4984 = vpop.f32.mrf.mxu0
      %v4985 = vpop.f32.mrf.mxu0
      %4986 = vmatprep.mubr.bf16.mxu0 %v3495
      %4987 = vmatmul.mubr.bf16.gmra.mxu0 %v3494
      %v4988 = vpop.f32.mrf.mxu0
      %v4989 = vadd.f32 %v4780, %v4988
      %v4990 = vpop.f32.mrf.mxu0
      %v4991 = vpop.f32.mrf.mxu0
      %v4992 = vadd.f32 %v4783, %v4991
      %v4993 = vpop.f32.mrf.mxu0
      %4994 = vmatprep.mubr.bf16.mxu0 %v3504
      %4995 = vmatmul.mubr.bf16.gmra.mxu0 %v3503
      %v4996 = vpop.f32.mrf.mxu0
      %v4997 = vpop.f32.mrf.mxu0
      %v4998 = vpop.f32.mrf.mxu0
      %v4999 = vadd.f32 %v4790, %v4998
      %v5000 = vpop.f32.mrf.mxu0
      %5001 = vmatprep.mubr.bf16.mxu0 %v3513
      %5002 = vmatmul.mubr.bf16.gmra.mxu0 %v3512
      %v5003 = vpop.f32.mrf.mxu0
      %v5004 = vadd.f32 %v4795, %v5003
      %v5005 = vpop.f32.mrf.mxu0
      %v5006 = vpop.f32.mrf.mxu0
      %v5007 = vpop.f32.mrf.mxu0
      %5008 = vmatprep.mubr.bf16.mxu0 %v3522
      %5009 = vmatmul.mubr.bf16.gmra.mxu0 %v3521
      %v5010 = vpop.f32.mrf.mxu0
      %v5011 = vadd.f32 %v4802, %v5010
      %v5012 = vpop.f32.mrf.mxu0
      %v5013 = vpop.f32.mrf.mxu0
      %v5014 = vadd.f32 %v4805, %v5013
      %v5015 = vpop.f32.mrf.mxu0
      %5016 = vmatprep.mubr.bf16.mxu0 %v3531
      %5017 = vmatmul.mubr.bf16.gmra.mxu0 %v3530
      %v5018 = vpop.f32.mrf.mxu0
      %v5019 = vpop.f32.mrf.mxu0
      %v5020 = vpop.f32.mrf.mxu0
      %v5021 = vadd.f32 %v4812, %v5020
      %v5022 = vpop.f32.mrf.mxu0
      %5023 = vmatprep.mubr.bf16.mxu0 %v3540
      %5024 = vmatmul.mubr.bf16.gmra.mxu0 %v3539
      %v5025 = vpop.f32.mrf.mxu0
      %v5026 = vadd.f32 %v4817, %v5025
      %v5027 = vpop.f32.mrf.mxu0
      %v5028 = vpop.f32.mrf.mxu0
      %v5029 = vpop.f32.mrf.mxu0
      %5030 = vmatprep.mubr.bf16.mxu0 %v3549
      %5031 = vmatmul.mubr.bf16.gmra.mxu0 %v3548
      %v5032 = vpop.f32.mrf.mxu0
      %v5033 = vadd.f32 %v4824, %v5032
      %v5034 = vpop.f32.mrf.mxu0
      %v5035 = vpop.f32.mrf.mxu0
      %v5036 = vadd.f32 %v4827, %v5035
      %v5037 = vpop.f32.mrf.mxu0
      %5038 = vmatprep.mubr.bf16.mxu0 %v3558
      %5039 = vmatmul.mubr.bf16.gmra.mxu0 %v3557
      %v5040 = vpop.f32.mrf.mxu0
      %v5041 = vpop.f32.mrf.mxu0
      %v5042 = vpop.f32.mrf.mxu0
      %v5043 = vadd.f32 %v4834, %v5042
      %v5044 = vpop.f32.mrf.mxu0
      %5045 = vmatprep.mubr.bf16.mxu0 %v3567
      %5046 = vmatmul.mubr.bf16.gmra.mxu0 %v3566
      %v5047 = vpop.f32.mrf.mxu0
      %v5048 = vadd.f32 %v4839, %v5047
      %v5049 = vpop.f32.mrf.mxu0
      %v5050 = vpop.f32.mrf.mxu0
      %v5051 = vpop.f32.mrf.mxu0
      %5052 = vdwg.mxu0
      %5053 = vmatprep.subr.bf16.mxu0 0
      %5054 = vmatpush1.bf16.msra.mxu0 %v4144
      %5055 = vmatprep.subr.bf16.mxu0 0
      %5056 = vmatpush1.bf16.msra.mxu0 %v4143
      %5057 = vmatprep.subr.bf16.mxu0 0
      %5058 = vmatpush1.bf16.msra.mxu0 %v4142
      %5059 = vmatprep.subr.bf16.mxu0 0
      %5060 = vmatpush1.bf16.msra.mxu0 %v4141
      %5061 = vmatprep.subr.bf16.mxu0 0
      %5062 = vmatpush1.bf16.msra.mxu0 %v4140
      %5063 = vmatprep.subr.bf16.mxu0 0
      %5064 = vmatpush1.bf16.msra.mxu0 %v4139
      %5065 = vmatprep.subr.bf16.mxu0 0
      %5066 = vmatpush1.bf16.msra.mxu0 %v4138
      %5067 = vmatprep.subr.bf16.mxu0 0
      %5068 = vmatpush1.bf16.msra.mxu0 %v4137
      %5069 = vmatprep.subr.bf16.mxu0 0
      %5070 = vmatpush2.bf16.msra.mxu0 0
      %5071 = vmatprep.subr.bf16.mxu0 0
      %5072 = vmatpush2.bf16.msra.mxu0 0
      %5073 = vmatprep.subr.bf16.mxu0 0
      %5074 = vmatpush2.bf16.msra.mxu0 0
      %5075 = vmatprep.subr.bf16.mxu0 0
      %5076 = vmatpush2.bf16.msra.mxu0 0
      %5077 = vmatprep.subr.bf16.mxu0 0
      %5078 = vmatpush2.bf16.msra.mxu0 0
      %5079 = vmatprep.subr.bf16.mxu0 0
      %5080 = vmatpush2.bf16.msra.mxu0 0
      %5081 = vmatprep.subr.bf16.mxu0 0
      %5082 = vmatpush2.bf16.msra.mxu0 0
      %5083 = vmatprep.subr.bf16.mxu0 0
      %5084 = vmatpush2.bf16.msra.mxu0 0
      %5085 = vmatprep.mubr.bf16.mxu0 0
      %5086 = vmatmul.mubr.bf16.gmra.mxu0 %v3361
      %v5087 = vpop.f32.mrf.mxu0
      %v5088 = vadd.f32 %v4879, %v5087
      %v5089 = vpop.f32.mrf.mxu0
      %v5090 = vpop.f32.mrf.mxu0
      %v5091 = vadd.f32 %v4882, %v5090
      %v5092 = vpop.f32.mrf.mxu0
      %5093 = vmatprep.mubr.bf16.mxu0 0
      %5094 = vmatmul.mubr.bf16.gmra.mxu0 %v3370
      %v5095 = vpop.f32.mrf.mxu0
      %v5096 = vpop.f32.mrf.mxu0
      %v5097 = vpop.f32.mrf.mxu0
      %v5098 = vadd.f32 %v4889, %v5097
      %v5099 = vpop.f32.mrf.mxu0
      %5100 = vmatprep.mubr.bf16.mxu0 0
      %5101 = vmatmul.mubr.bf16.gmra.mxu0 %v3379
      %v5102 = vpop.f32.mrf.mxu0
      %v5103 = vadd.f32 %v4894, %v5102
      %v5104 = vpop.f32.mrf.mxu0
      %v5105 = vpop.f32.mrf.mxu0
      %v5106 = vpop.f32.mrf.mxu0
      %5107 = vmatprep.mubr.bf16.mxu0 0
      %5108 = vmatmul.mubr.bf16.gmra.mxu0 %v3388
      %v5109 = vpop.f32.mrf.mxu0
      %v5110 = vadd.f32 %v4901, %v5109
      %v5111 = vpop.f32.mrf.mxu0
      %v5112 = vpop.f32.mrf.mxu0
      %v5113 = vadd.f32 %v4904, %v5112
      %v5114 = vpop.f32.mrf.mxu0
      %5115 = vmatprep.mubr.bf16.mxu0 0
      %5116 = vmatmul.mubr.bf16.gmra.mxu0 %v3397
      %v5117 = vpop.f32.mrf.mxu0
      %v5118 = vpop.f32.mrf.mxu0
      %v5119 = vpop.f32.mrf.mxu0
      %v5120 = vadd.f32 %v4911, %v5119
      %v5121 = vpop.f32.mrf.mxu0
      %5122 = vmatprep.mubr.bf16.mxu0 0
      %5123 = vmatmul.mubr.bf16.gmra.mxu0 %v3406
      %v5124 = vpop.f32.mrf.mxu0
      %v5125 = vadd.f32 %v4916, %v5124
      %v5126 = vpop.f32.mrf.mxu0
      %v5127 = vpop.f32.mrf.mxu0
      %v5128 = vpop.f32.mrf.mxu0
      %5129 = vmatprep.mubr.bf16.mxu0 0
      %5130 = vmatmul.mubr.bf16.gmra.mxu0 %v3415
      %v5131 = vpop.f32.mrf.mxu0
      %v5132 = vadd.f32 %v4923, %v5131
      %v5133 = vpop.f32.mrf.mxu0
      %v5134 = vpop.f32.mrf.mxu0
      %v5135 = vadd.f32 %v4926, %v5134
      %v5136 = vpop.f32.mrf.mxu0
      %5137 = vmatprep.mubr.bf16.mxu0 0
      %5138 = vmatmul.mubr.bf16.gmra.mxu0 %v3424
      %v5139 = vpop.f32.mrf.mxu0
      %v5140 = vpop.f32.mrf.mxu0
      %v5141 = vpop.f32.mrf.mxu0
      %v5142 = vadd.f32 %v4933, %v5141
      %v5143 = vpop.f32.mrf.mxu0
      %5144 = vmatprep.mubr.bf16.mxu0 0
      %5145 = vmatmul.mubr.bf16.gmra.mxu0 %v3433
      %v5146 = vpop.f32.mrf.mxu0
      %v5147 = vadd.f32 %v4938, %v5146
      %v5148 = vpop.f32.mrf.mxu0
      %v5149 = vpop.f32.mrf.mxu0
      %v5150 = vpop.f32.mrf.mxu0
      %5151 = vmatprep.mubr.bf16.mxu0 0
      %5152 = vmatmul.mubr.bf16.gmra.mxu0 %v3442
      %v5153 = vpop.f32.mrf.mxu0
      %v5154 = vadd.f32 %v4945, %v5153
      %v5155 = vpop.f32.mrf.mxu0
      %v5156 = vpop.f32.mrf.mxu0
      %v5157 = vadd.f32 %v4948, %v5156
      %v5158 = vpop.f32.mrf.mxu0
      %5159 = vmatprep.mubr.bf16.mxu0 0
      %5160 = vmatmul.mubr.bf16.gmra.mxu0 %v3451
      %v5161 = vpop.f32.mrf.mxu0
      %v5162 = vpop.f32.mrf.mxu0
      %v5163 = vpop.f32.mrf.mxu0
      %v5164 = vadd.f32 %v4955, %v5163
      %v5165 = vpop.f32.mrf.mxu0
      %5166 = vmatprep.mubr.bf16.mxu0 0
      %5167 = vmatmul.mubr.bf16.gmra.mxu0 %v3460
      %v5168 = vpop.f32.mrf.mxu0
      %v5169 = vadd.f32 %v4960, %v5168
      %v5170 = vpop.f32.mrf.mxu0
      %v5171 = vpop.f32.mrf.mxu0
      %v5172 = vpop.f32.mrf.mxu0
      %5173 = vmatprep.mubr.bf16.mxu0 0
      %5174 = vmatmul.mubr.bf16.gmra.mxu0 %v3469
      %v5175 = vpop.f32.mrf.mxu0
      %v5176 = vadd.f32 %v4967, %v5175
      %v5177 = vpop.f32.mrf.mxu0
      %v5178 = vpop.f32.mrf.mxu0
      %v5179 = vadd.f32 %v4970, %v5178
      %v5180 = vpop.f32.mrf.mxu0
      %5181 = vmatprep.mubr.bf16.mxu0 0
      %5182 = vmatmul.mubr.bf16.gmra.mxu0 %v3478
      %v5183 = vpop.f32.mrf.mxu0
      %v5184 = vpop.f32.mrf.mxu0
      %v5185 = vpop.f32.mrf.mxu0
      %v5186 = vadd.f32 %v4977, %v5185
      %v5187 = vpop.f32.mrf.mxu0
      %5188 = vmatprep.mubr.bf16.mxu0 0
      %5189 = vmatmul.mubr.bf16.gmra.mxu0 %v3487
      %v5190 = vpop.f32.mrf.mxu0
      %v5191 = vadd.f32 %v4982, %v5190
      %v5192 = vpop.f32.mrf.mxu0
      %v5193 = vpop.f32.mrf.mxu0
      %v5194 = vpop.f32.mrf.mxu0
      %5195 = vmatprep.mubr.bf16.mxu0 0
      %5196 = vmatmul.mubr.bf16.gmra.mxu0 %v3496
      %v5197 = vpop.f32.mrf.mxu0
      %v5198 = vadd.f32 %v4989, %v5197
      %v5199 = vpop.f32.mrf.mxu0
      %v5200 = vpop.f32.mrf.mxu0
      %v5201 = vadd.f32 %v4992, %v5200
      %v5202 = vpop.f32.mrf.mxu0
      %5203 = vmatprep.mubr.bf16.mxu0 0
      %5204 = vmatmul.mubr.bf16.gmra.mxu0 %v3505
      %v5205 = vpop.f32.mrf.mxu0
      %v5206 = vpop.f32.mrf.mxu0
      %v5207 = vpop.f32.mrf.mxu0
      %v5208 = vadd.f32 %v4999, %v5207
      %v5209 = vpop.f32.mrf.mxu0
      %5210 = vmatprep.mubr.bf16.mxu0 0
      %5211 = vmatmul.mubr.bf16.gmra.mxu0 %v3514
      %v5212 = vpop.f32.mrf.mxu0
      %v5213 = vadd.f32 %v5004, %v5212
      %v5214 = vpop.f32.mrf.mxu0
      %v5215 = vpop.f32.mrf.mxu0
      %v5216 = vpop.f32.mrf.mxu0
      %5217 = vmatprep.mubr.bf16.mxu0 0
      %5218 = vmatmul.mubr.bf16.gmra.mxu0 %v3523
      %v5219 = vpop.f32.mrf.mxu0
      %v5220 = vadd.f32 %v5011, %v5219
      %v5221 = vpop.f32.mrf.mxu0
      %v5222 = vpop.f32.mrf.mxu0
      %v5223 = vadd.f32 %v5014, %v5222
      %v5224 = vpop.f32.mrf.mxu0
      %5225 = vmatprep.mubr.bf16.mxu0 0
      %5226 = vmatmul.mubr.bf16.gmra.mxu0 %v3532
      %v5227 = vpop.f32.mrf.mxu0
      %v5228 = vpop.f32.mrf.mxu0
      %v5229 = vpop.f32.mrf.mxu0
      %v5230 = vadd.f32 %v5021, %v5229
      %v5231 = vpop.f32.mrf.mxu0
      %5232 = vmatprep.mubr.bf16.mxu0 0
      %5233 = vmatmul.mubr.bf16.gmra.mxu0 %v3541
      %v5234 = vpop.f32.mrf.mxu0
      %v5235 = vadd.f32 %v5026, %v5234
      %v5236 = vpop.f32.mrf.mxu0
      %v5237 = vpop.f32.mrf.mxu0
      %v5238 = vpop.f32.mrf.mxu0
      %5239 = vmatprep.mubr.bf16.mxu0 0
      %5240 = vmatmul.mubr.bf16.gmra.mxu0 %v3550
      %v5241 = vpop.f32.mrf.mxu0
      %v5242 = vadd.f32 %v5033, %v5241
      %v5243 = vpop.f32.mrf.mxu0
      %v5244 = vpop.f32.mrf.mxu0
      %v5245 = vadd.f32 %v5036, %v5244
      %v5246 = vpop.f32.mrf.mxu0
      %5247 = vmatprep.mubr.bf16.mxu0 0
      %5248 = vmatmul.mubr.bf16.gmra.mxu0 %v3559
      %v5249 = vpop.f32.mrf.mxu0
      %v5250 = vpop.f32.mrf.mxu0
      %v5251 = vpop.f32.mrf.mxu0
      %v5252 = vadd.f32 %v5043, %v5251
      %v5253 = vpop.f32.mrf.mxu0
      %5254 = vmatprep.mubr.bf16.mxu0 0
      %5255 = vmatmul.mubr.bf16.gmra.mxu0 %v3568
      %v5256 = vpop.f32.mrf.mxu0
      %v5257 = vadd.f32 %v5048, %v5256
      %v5258 = vpop.f32.mrf.mxu0
      %v5259 = vpop.f32.mrf.mxu0
      %v5260 = vpop.f32.mrf.mxu0
      %5261 = vdwg.mxu0
      %v5262 = vmax.f32 %v5088, 0.0
      %v5263 = vmax.f32 %v5091, 0.0
      %v5264 = vmax.f32 %v5098, 0.0
      %v5265 = vmax.f32 %v5103, 0.0
      %v5266 = vmax.f32 %v5110, 0.0
      %v5267 = vmax.f32 %v5113, 0.0
      %v5268 = vmax.f32 %v5120, 0.0
      %v5269 = vmax.f32 %v5125, 0.0
      %v5270 = vmax.f32 %v5132, 0.0
      %v5271 = vmax.f32 %v5135, 0.0
      %v5272 = vmax.f32 %v5142, 0.0
      %v5273 = vmax.f32 %v5147, 0.0
      %v5274 = vmax.f32 %v5154, 0.0
      %v5275 = vmax.f32 %v5157, 0.0
      %v5276 = vmax.f32 %v5164, 0.0
      %v5277 = vmax.f32 %v5169, 0.0
      %v5278 = vmax.f32 %v5176, 0.0
      %v5279 = vmax.f32 %v5179, 0.0
      %v5280 = vmax.f32 %v5186, 0.0
      %v5281 = vmax.f32 %v5191, 0.0
      %v5282 = vmax.f32 %v5198, 0.0
      %v5283 = vmax.f32 %v5201, 0.0
      %v5284 = vmax.f32 %v5208, 0.0
      %v5285 = vmax.f32 %v5213, 0.0
      %v5286 = vmax.f32 %v5220, 0.0
      %v5287 = vmax.f32 %v5223, 0.0
      %v5288 = vmax.f32 %v5230, 0.0
      %v5289 = vmax.f32 %v5235, 0.0
      %v5290 = vmax.f32 %v5242, 0.0
      %v5291 = vmax.f32 %v5245, 0.0
      %v5292 = vmax.f32 %v5252, 0.0
      %v5293 = vmax.f32 %v5257, 0.0
      %v5294 = vpack.c.bf16 %v5263, %v5262
      %v5295 = vpack.c.bf16 %v5265, %v5264
      %v5296 = vpack.c.bf16 %v5267, %v5266
      %v5297 = vpack.c.bf16 %v5269, %v5268
      %v5298 = vpack.c.bf16 %v5271, %v5270
      %v5299 = vpack.c.bf16 %v5273, %v5272
      %v5300 = vpack.c.bf16 %v5275, %v5274
      %v5301 = vpack.c.bf16 %v5277, %v5276
      %v5302 = vpack.c.bf16 %v5279, %v5278
      %v5303 = vpack.c.bf16 %v5281, %v5280
      %v5304 = vpack.c.bf16 %v5283, %v5282
      %v5305 = vpack.c.bf16 %v5285, %v5284
      %v5306 = vpack.c.bf16 %v5287, %v5286
      %v5307 = vpack.c.bf16 %v5289, %v5288
      %v5308 = vpack.c.bf16 %v5291, %v5290
      %v5309 = vpack.c.bf16 %v5293, %v5292
      %v5326 = vunpack.c.l.b16 %v5294
      %v5327 = vunpack.c.h.b16 %v5294
      %v5328 = vunpack.c.l.b16 %v5295
      %v5329 = vunpack.c.h.b16 %v5295
      %v5330 = vunpack.c.l.b16 %v5296
      %v5331 = vunpack.c.h.b16 %v5296
      %v5332 = vunpack.c.l.b16 %v5297
      %v5333 = vunpack.c.h.b16 %v5297
      %v5334 = vunpack.c.l.b16 %v5298
      %v5335 = vunpack.c.h.b16 %v5298
      %v5336 = vunpack.c.l.b16 %v5299
      %v5337 = vunpack.c.h.b16 %v5299
      %v5338 = vunpack.c.l.b16 %v5300
      %v5339 = vunpack.c.h.b16 %v5300
      %v5340 = vunpack.c.l.b16 %v5301
      %v5341 = vunpack.c.h.b16 %v5301
      %v5342 = vunpack.c.l.b16 %v5302
      %v5343 = vunpack.c.h.b16 %v5302
      %v5344 = vunpack.c.l.b16 %v5303
      %v5345 = vunpack.c.h.b16 %v5303
      %v5346 = vunpack.c.l.b16 %v5304
      %v5347 = vunpack.c.h.b16 %v5304
      %v5348 = vunpack.c.l.b16 %v5305
      %v5349 = vunpack.c.h.b16 %v5305
      %v5350 = vunpack.c.l.b16 %v5306
      %v5351 = vunpack.c.h.b16 %v5306
      %v5352 = vunpack.c.l.b16 %v5307
      %v5353 = vunpack.c.h.b16 %v5307
      %v5354 = vunpack.c.l.b16 %v5308
      %v5355 = vunpack.c.h.b16 %v5308
      %v5356 = vunpack.c.l.b16 %v5309
      %v5357 = vunpack.c.h.b16 %v5309
      %v5358 = vpack.c.b16 %v5326, %v5326
      %v5359 = vpack.c.b16 %v5327, %v5327
      %v5360 = vpack.c.b16 %v5328, %v5328
      %v5361 = vpack.c.b16 %v5329, %v5329
      %v5362 = vpack.c.b16 %v5330, %v5330
      %v5363 = vpack.c.b16 %v5331, %v5331
      %v5364 = vpack.c.b16 %v5332, %v5332
      %v5365 = vpack.c.b16 %v5333, %v5333
      %v5366 = vpack.c.b16 %v5334, %v5334
      %v5367 = vpack.c.b16 %v5335, %v5335
      %v5368 = vpack.c.b16 %v5336, %v5336
      %v5369 = vpack.c.b16 %v5337, %v5337
      %v5370 = vpack.c.b16 %v5338, %v5338
      %v5371 = vpack.c.b16 %v5339, %v5339
      %v5372 = vpack.c.b16 %v5340, %v5340
      %v5373 = vpack.c.b16 %v5341, %v5341
      %v5374 = vpack.c.b16 %v5342, %v5342
      %v5375 = vpack.c.b16 %v5343, %v5343
      %v5376 = vpack.c.b16 %v5344, %v5344
      %v5377 = vpack.c.b16 %v5345, %v5345
      %v5378 = vpack.c.b16 %v5346, %v5346
      %v5379 = vpack.c.b16 %v5347, %v5347
      %v5380 = vpack.c.b16 %v5348, %v5348
      %v5381 = vpack.c.b16 %v5349, %v5349
      %v5382 = vpack.c.b16 %v5350, %v5350
      %v5383 = vpack.c.b16 %v5351, %v5351
      %v5384 = vpack.c.b16 %v5352, %v5352
      %v5385 = vpack.c.b16 %v5353, %v5353
      %v5386 = vpack.c.b16 %v5354, %v5354
      %v5387 = vpack.c.b16 %v5355, %v5355
      %v5388 = vpack.c.b16 %v5356, %v5356
      %v5389 = vpack.c.b16 %v5357, %v5357
      %5422 = vst [vmem:[%s343 + $0x4] sm:$0xf] %v5358
      %5423 = vst [vmem:[%s343 + $0x8] sm:$0xf] %v5359
      %5424 = vst [vmem:[%s343 + $0x1c] sm:$0xf] %v5360
      %5425 = vst [vmem:[%s343 + $0x20] sm:$0xf] %v5361
      %5426 = vst [vmem:[%s343 + $0x34] sm:$0xf] %v5362
      %5427 = vst [vmem:[%s343 + $0x38] sm:$0xf] %v5363
      %5428 = vst [vmem:[%s343 + $0x4c] sm:$0xf] %v5364
      %5429 = vst [vmem:[%s343 + $0x50] sm:$0xf] %v5365
      %5430 = vst [vmem:[%s343 + $0x64] sm:$0xf] %v5366
      %5431 = vst [vmem:[%s343 + $0x68] sm:$0xf] %v5367
      %5432 = vst [vmem:[%s343 + $0x7c] sm:$0xf] %v5368
      %5433 = vst [vmem:[%s343 + $0x80] sm:$0xf] %v5369
      %5434 = vst [vmem:[%s343 + $0x94] sm:$0xf] %v5370
      %5435 = vst [vmem:[%s343 + $0x98] sm:$0xf] %v5371
      %5436 = vst [vmem:[%s343 + $0xac] sm:$0xf] %v5372
      %5437 = vst [vmem:[%s343 + $0xb0] sm:$0xf] %v5373
      %5438 = vst [vmem:[%s343 + $0xc4] sm:$0xf] %v5374
      %5439 = vst [vmem:[%s343 + $0xc8] sm:$0xf] %v5375
      %5440 = vst [vmem:[%s343 + $0xdc] sm:$0xf] %v5376
      %5441 = vst [vmem:[%s343 + $0xe0] sm:$0xf] %v5377
      %5442 = vst [vmem:[%s343 + $0xf4] sm:$0xf] %v5378
      %5443 = vst [vmem:[%s343 + $0xf8] sm:$0xf] %v5379
      %5444 = vst [vmem:[%s343 + $0x10c] sm:$0xf] %v5380
      %5445 = vst [vmem:[%s343 + $0x110] sm:$0xf] %v5381
      %5446 = vst [vmem:[%s343 + $0x124] sm:$0xf] %v5382
      %5447 = vst [vmem:[%s343 + $0x128] sm:$0xf] %v5383
      %5448 = vst [vmem:[%s343 + $0x13c] sm:$0xf] %v5384
      %5449 = vst [vmem:[%s343 + $0x140] sm:$0xf] %v5385
      %5450 = vst [vmem:[%s343 + $0x154] sm:$0xf] %v5386
      %5451 = vst [vmem:[%s343 + $0x158] sm:$0xf] %v5387
      %5452 = vst [vmem:[%s343 + $0x16c] sm:$0xf] %v5388
      %5453 = vst [vmem:[%s343 + $0x170] sm:$0xf] %v5389
      %v5454 = vld [vmem:[#allocation2] sm:$0x8]
      %v5455 = vld [vmem:[#allocation2 + $0x4] sm:$0xf]
      %v5456 = vld [vmem:[#allocation2 + $0x8] sm:$0xf]
      %v5457 = vld [vmem:[#allocation2 + $0xc] sm:$0xf]
      %v5458 = vld [vmem:[#allocation2 + $0x18] sm:$0x8]
      %v5459 = vld [vmem:[#allocation2 + $0x1c] sm:$0xf]
      %v5460 = vld [vmem:[#allocation2 + $0x20] sm:$0xf]
      %v5461 = vld [vmem:[#allocation2 + $0x24] sm:$0xf]
      %v5462 = vld [vmem:[#allocation2 + $0x30] sm:$0x8]
      %v5463 = vld [vmem:[#allocation2 + $0x34] sm:$0xf]
      %v5464 = vld [vmem:[#allocation2 + $0x38] sm:$0xf]
      %v5465 = vld [vmem:[#allocation2 + $0x3c] sm:$0xf]
      %v5466 = vld [vmem:[#allocation2 + $0x48] sm:$0x8]
      %v5467 = vld [vmem:[#allocation2 + $0x4c] sm:$0xf]
      %v5468 = vld [vmem:[#allocation2 + $0x50] sm:$0xf]
      %v5469 = vld [vmem:[#allocation2 + $0x54] sm:$0xf]
      %v5470 = vld [vmem:[#allocation2 + $0x60] sm:$0x8]
      %v5471 = vld [vmem:[#allocation2 + $0x64] sm:$0xf]
      %v5472 = vld [vmem:[#allocation2 + $0x68] sm:$0xf]
      %v5473 = vld [vmem:[#allocation2 + $0x6c] sm:$0xf]
      %v5474 = vld [vmem:[#allocation2 + $0x78] sm:$0x8]
      %v5475 = vld [vmem:[#allocation2 + $0x7c] sm:$0xf]
      %v5476 = vld [vmem:[#allocation2 + $0x80] sm:$0xf]
      %v5477 = vld [vmem:[#allocation2 + $0x84] sm:$0xf]
      %v5478 = vld [vmem:[#allocation2 + $0x90] sm:$0x8]
      %v5479 = vld [vmem:[#allocation2 + $0x94] sm:$0xf]
      %v5480 = vld [vmem:[#allocation2 + $0x98] sm:$0xf]
      %v5481 = vld [vmem:[#allocation2 + $0x9c] sm:$0xf]
      %v5482 = vld [vmem:[#allocation2 + $0xa8] sm:$0x8]
      %v5483 = vld [vmem:[#allocation2 + $0xac] sm:$0xf]
      %v5484 = vld [vmem:[#allocation2 + $0xb0] sm:$0xf]
      %v5485 = vld [vmem:[#allocation2 + $0xb4] sm:$0xf]
      %v5486 = vld [vmem:[#allocation2 + $0xc0] sm:$0x8]
      %v5487 = vld [vmem:[#allocation2 + $0xc4] sm:$0xf]
      %v5488 = vld [vmem:[#allocation2 + $0xc8] sm:$0xf]
      %v5489 = vld [vmem:[#allocation2 + $0xcc] sm:$0xf]
      %v5490 = vld [vmem:[#allocation2 + $0xd8] sm:$0x8]
      %v5491 = vld [vmem:[#allocation2 + $0xdc] sm:$0xf]
      %v5492 = vld [vmem:[#allocation2 + $0xe0] sm:$0xf]
      %v5493 = vld [vmem:[#allocation2 + $0xe4] sm:$0xf]
      %v5494 = vld [vmem:[#allocation2 + $0xf0] sm:$0x8]
      %v5495 = vld [vmem:[#allocation2 + $0xf4] sm:$0xf]
      %v5496 = vld [vmem:[#allocation2 + $0xf8] sm:$0xf]
      %v5497 = vld [vmem:[#allocation2 + $0xfc] sm:$0xf]
      %v5498 = vld [vmem:[#allocation2 + $0x108] sm:$0x8]
      %v5499 = vld [vmem:[#allocation2 + $0x10c] sm:$0xf]
      %v5500 = vld [vmem:[#allocation2 + $0x110] sm:$0xf]
      %v5501 = vld [vmem:[#allocation2 + $0x114] sm:$0xf]
      %v5502 = vld [vmem:[#allocation2 + $0x120] sm:$0x8]
      %v5503 = vld [vmem:[#allocation2 + $0x124] sm:$0xf]
      %v5504 = vld [vmem:[#allocation2 + $0x128] sm:$0xf]
      %v5505 = vld [vmem:[#allocation2 + $0x12c] sm:$0xf]
      %v5506 = vld [vmem:[#allocation2 + $0x138] sm:$0x8]
      %v5507 = vld [vmem:[#allocation2 + $0x13c] sm:$0xf]
      %v5508 = vld [vmem:[#allocation2 + $0x140] sm:$0xf]
      %v5509 = vld [vmem:[#allocation2 + $0x144] sm:$0xf]
      %v5510 = vld [vmem:[#allocation2 + $0x150] sm:$0x8]
      %v5511 = vld [vmem:[#allocation2 + $0x154] sm:$0xf]
      %v5512 = vld [vmem:[#allocation2 + $0x158] sm:$0xf]
      %v5513 = vld [vmem:[#allocation2 + $0x15c] sm:$0xf]
      %v5514 = vld [vmem:[#allocation2 + $0x168] sm:$0x8]
      %v5515 = vld [vmem:[#allocation2 + $0x16c] sm:$0xf]
      %v5516 = vld [vmem:[#allocation2 + $0x170] sm:$0xf]
      %v5517 = vld [vmem:[#allocation2 + $0x174] sm:$0xf]
      %v5518 = vld [vmem:[#allocation2 + $0x180] sm:$0x8]
      %v5519 = vld [vmem:[#allocation2 + $0x184] sm:$0xf]
      %v5520 = vld [vmem:[#allocation2 + $0x188] sm:$0xf]
      %v5521 = vld [vmem:[#allocation2 + $0x18c] sm:$0xf]
      %v5522 = vld [vmem:[#allocation2 + $0x198] sm:$0x8]
      %v5523 = vld [vmem:[#allocation2 + $0x19c] sm:$0xf]
      %v5524 = vld [vmem:[#allocation2 + $0x1a0] sm:$0xf]
      %v5525 = vld [vmem:[#allocation2 + $0x1a4] sm:$0xf]
      %v5527 = vshrl.u32 %v5454, 16
      %v5529 = vrot.slane %v5527, 7
      %v5530 = vrot.slane %v5529, 4
      %v5532 = vshrl.u32 %v5455, 16
      %v5534 = vrot.slane %v5532, 7
      %v5535 = vshll.u32 %v5455, 16
      %v5537 = vor.u32 %v5534, %v5535
      %v5538 = vsel %vm450, %v5530, %v5537
      %v5539 = vrot.slane %v5534, 4
      %v5541 = vshrl.u32 %v5456, 16
      %v5543 = vrot.slane %v5541, 7
      %v5544 = vshll.u32 %v5456, 16
      %v5546 = vor.u32 %v5543, %v5544
      %v5547 = vsel %vm450, %v5539, %v5546
      %v5548 = vrot.slane %v5543, 4
      %v5550 = vshrl.u32 %v5457, 16
      %v5552 = vrot.slane %v5550, 7
      %v5553 = vshll.u32 %v5457, 16
      %v5555 = vor.u32 %v5552, %v5553
      %v5556 = vsel %vm450, %v5548, %v5555
      %v5558 = vshrl.u32 %v5458, 16
      %v5560 = vrot.slane %v5558, 7
      %v5561 = vrot.slane %v5560, 4
      %v5563 = vshrl.u32 %v5459, 16
      %v5565 = vrot.slane %v5563, 7
      %v5566 = vshll.u32 %v5459, 16
      %v5568 = vor.u32 %v5565, %v5566
      %v5569 = vsel %vm450, %v5561, %v5568
      %v5570 = vrot.slane %v5565, 4
      %v5572 = vshrl.u32 %v5460, 16
      %v5574 = vrot.slane %v5572, 7
      %v5575 = vshll.u32 %v5460, 16
      %v5577 = vor.u32 %v5574, %v5575
      %v5578 = vsel %vm450, %v5570, %v5577
      %v5579 = vrot.slane %v5574, 4
      %v5581 = vshrl.u32 %v5461, 16
      %v5583 = vrot.slane %v5581, 7
      %v5584 = vshll.u32 %v5461, 16
      %v5586 = vor.u32 %v5583, %v5584
      %v5587 = vsel %vm450, %v5579, %v5586
      %v5589 = vshrl.u32 %v5462, 16
      %v5591 = vrot.slane %v5589, 7
      %v5592 = vrot.slane %v5591, 4
      %v5594 = vshrl.u32 %v5463, 16
      %v5596 = vrot.slane %v5594, 7
      %v5597 = vshll.u32 %v5463, 16
      %v5599 = vor.u32 %v5596, %v5597
      %v5600 = vsel %vm450, %v5592, %v5599
      %v5601 = vrot.slane %v5596, 4
      %v5603 = vshrl.u32 %v5464, 16
      %v5605 = vrot.slane %v5603, 7
      %v5606 = vshll.u32 %v5464, 16
      %v5608 = vor.u32 %v5605, %v5606
      %v5609 = vsel %vm450, %v5601, %v5608
      %v5610 = vrot.slane %v5605, 4
      %v5612 = vshrl.u32 %v5465, 16
      %v5614 = vrot.slane %v5612, 7
      %v5615 = vshll.u32 %v5465, 16
      %v5617 = vor.u32 %v5614, %v5615
      %v5618 = vsel %vm450, %v5610, %v5617
      %v5620 = vshrl.u32 %v5466, 16
      %v5622 = vrot.slane %v5620, 7
      %v5623 = vrot.slane %v5622, 4
      %v5625 = vshrl.u32 %v5467, 16
      %v5627 = vrot.slane %v5625, 7
      %v5628 = vshll.u32 %v5467, 16
      %v5630 = vor.u32 %v5627, %v5628
      %v5631 = vsel %vm450, %v5623, %v5630
      %v5632 = vrot.slane %v5627, 4
      %v5634 = vshrl.u32 %v5468, 16
      %v5636 = vrot.slane %v5634, 7
      %v5637 = vshll.u32 %v5468, 16
      %v5639 = vor.u32 %v5636, %v5637
      %v5640 = vsel %vm450, %v5632, %v5639
      %v5641 = vrot.slane %v5636, 4
      %v5643 = vshrl.u32 %v5469, 16
      %v5645 = vrot.slane %v5643, 7
      %v5646 = vshll.u32 %v5469, 16
      %v5648 = vor.u32 %v5645, %v5646
      %v5649 = vsel %vm450, %v5641, %v5648
      %v5651 = vshrl.u32 %v5470, 16
      %v5653 = vrot.slane %v5651, 7
      %v5654 = vrot.slane %v5653, 4
      %v5656 = vshrl.u32 %v5471, 16
      %v5658 = vrot.slane %v5656, 7
      %v5659 = vshll.u32 %v5471, 16
      %v5661 = vor.u32 %v5658, %v5659
      %v5662 = vsel %vm450, %v5654, %v5661
      %v5663 = vrot.slane %v5658, 4
      %v5665 = vshrl.u32 %v5472, 16
      %v5667 = vrot.slane %v5665, 7
      %v5668 = vshll.u32 %v5472, 16
      %v5670 = vor.u32 %v5667, %v5668
      %v5671 = vsel %vm450, %v5663, %v5670
      %v5672 = vrot.slane %v5667, 4
      %v5674 = vshrl.u32 %v5473, 16
      %v5676 = vrot.slane %v5674, 7
      %v5677 = vshll.u32 %v5473, 16
      %v5679 = vor.u32 %v5676, %v5677
      %v5680 = vsel %vm450, %v5672, %v5679
      %v5682 = vshrl.u32 %v5474, 16
      %v5684 = vrot.slane %v5682, 7
      %v5685 = vrot.slane %v5684, 4
      %v5687 = vshrl.u32 %v5475, 16
      %v5689 = vrot.slane %v5687, 7
      %v5690 = vshll.u32 %v5475, 16
      %v5692 = vor.u32 %v5689, %v5690
      %v5693 = vsel %vm450, %v5685, %v5692
      %v5694 = vrot.slane %v5689, 4
      %v5696 = vshrl.u32 %v5476, 16
      %v5698 = vrot.slane %v5696, 7
      %v5699 = vshll.u32 %v5476, 16
      %v5701 = vor.u32 %v5698, %v5699
      %v5702 = vsel %vm450, %v5694, %v5701
      %v5703 = vrot.slane %v5698, 4
      %v5705 = vshrl.u32 %v5477, 16
      %v5707 = vrot.slane %v5705, 7
      %v5708 = vshll.u32 %v5477, 16
      %v5710 = vor.u32 %v5707, %v5708
      %v5711 = vsel %vm450, %v5703, %v5710
      %v5713 = vshrl.u32 %v5478, 16
      %v5715 = vrot.slane %v5713, 7
      %v5716 = vrot.slane %v5715, 4
      %v5718 = vshrl.u32 %v5479, 16
      %v5720 = vrot.slane %v5718, 7
      %v5721 = vshll.u32 %v5479, 16
      %v5723 = vor.u32 %v5720, %v5721
      %v5724 = vsel %vm450, %v5716, %v5723
      %v5725 = vrot.slane %v5720, 4
      %v5727 = vshrl.u32 %v5480, 16
      %v5729 = vrot.slane %v5727, 7
      %v5730 = vshll.u32 %v5480, 16
      %v5732 = vor.u32 %v5729, %v5730
      %v5733 = vsel %vm450, %v5725, %v5732
      %v5734 = vrot.slane %v5729, 4
      %v5736 = vshrl.u32 %v5481, 16
      %v5738 = vrot.slane %v5736, 7
      %v5739 = vshll.u32 %v5481, 16
      %v5741 = vor.u32 %v5738, %v5739
      %v5742 = vsel %vm450, %v5734, %v5741
      %v5744 = vshrl.u32 %v5482, 16
      %v5746 = vrot.slane %v5744, 7
      %v5747 = vrot.slane %v5746, 4
      %v5749 = vshrl.u32 %v5483, 16
      %v5751 = vrot.slane %v5749, 7
      %v5752 = vshll.u32 %v5483, 16
      %v5754 = vor.u32 %v5751, %v5752
      %v5755 = vsel %vm450, %v5747, %v5754
      %v5756 = vrot.slane %v5751, 4
      %v5758 = vshrl.u32 %v5484, 16
      %v5760 = vrot.slane %v5758, 7
      %v5761 = vshll.u32 %v5484, 16
      %v5763 = vor.u32 %v5760, %v5761
      %v5764 = vsel %vm450, %v5756, %v5763
      %v5765 = vrot.slane %v5760, 4
      %v5767 = vshrl.u32 %v5485, 16
      %v5769 = vrot.slane %v5767, 7
      %v5770 = vshll.u32 %v5485, 16
      %v5772 = vor.u32 %v5769, %v5770
      %v5773 = vsel %vm450, %v5765, %v5772
      %v5775 = vshrl.u32 %v5486, 16
      %v5777 = vrot.slane %v5775, 7
      %v5778 = vrot.slane %v5777, 4
      %v5780 = vshrl.u32 %v5487, 16
      %v5782 = vrot.slane %v5780, 7
      %v5783 = vshll.u32 %v5487, 16
      %v5785 = vor.u32 %v5782, %v5783
      %v5786 = vsel %vm450, %v5778, %v5785
      %v5787 = vrot.slane %v5782, 4
      %v5789 = vshrl.u32 %v5488, 16
      %v5791 = vrot.slane %v5789, 7
      %v5792 = vshll.u32 %v5488, 16
      %v5794 = vor.u32 %v5791, %v5792
      %v5795 = vsel %vm450, %v5787, %v5794
      %v5796 = vrot.slane %v5791, 4
      %v5798 = vshrl.u32 %v5489, 16
      %v5800 = vrot.slane %v5798, 7
      %v5801 = vshll.u32 %v5489, 16
      %v5803 = vor.u32 %v5800, %v5801
      %v5804 = vsel %vm450, %v5796, %v5803
      %v5806 = vshrl.u32 %v5490, 16
      %v5808 = vrot.slane %v5806, 7
      %v5809 = vrot.slane %v5808, 4
      %v5811 = vshrl.u32 %v5491, 16
      %v5813 = vrot.slane %v5811, 7
      %v5814 = vshll.u32 %v5491, 16
      %v5816 = vor.u32 %v5813, %v5814
      %v5817 = vsel %vm450, %v5809, %v5816
      %v5818 = vrot.slane %v5813, 4
      %v5820 = vshrl.u32 %v5492, 16
      %v5822 = vrot.slane %v5820, 7
      %v5823 = vshll.u32 %v5492, 16
      %v5825 = vor.u32 %v5822, %v5823
      %v5826 = vsel %vm450, %v5818, %v5825
      %v5827 = vrot.slane %v5822, 4
      %v5829 = vshrl.u32 %v5493, 16
      %v5831 = vrot.slane %v5829, 7
      %v5832 = vshll.u32 %v5493, 16
      %v5834 = vor.u32 %v5831, %v5832
      %v5835 = vsel %vm450, %v5827, %v5834
      %v5837 = vshrl.u32 %v5494, 16
      %v5839 = vrot.slane %v5837, 7
      %v5840 = vrot.slane %v5839, 4
      %v5842 = vshrl.u32 %v5495, 16
      %v5844 = vrot.slane %v5842, 7
      %v5845 = vshll.u32 %v5495, 16
      %v5847 = vor.u32 %v5844, %v5845
      %v5848 = vsel %vm450, %v5840, %v5847
      %v5849 = vrot.slane %v5844, 4
      %v5851 = vshrl.u32 %v5496, 16
      %v5853 = vrot.slane %v5851, 7
      %v5854 = vshll.u32 %v5496, 16
      %v5856 = vor.u32 %v5853, %v5854
      %v5857 = vsel %vm450, %v5849, %v5856
      %v5858 = vrot.slane %v5853, 4
      %v5860 = vshrl.u32 %v5497, 16
      %v5862 = vrot.slane %v5860, 7
      %v5863 = vshll.u32 %v5497, 16
      %v5865 = vor.u32 %v5862, %v5863
      %v5866 = vsel %vm450, %v5858, %v5865
      %v5868 = vshrl.u32 %v5498, 16
      %v5870 = vrot.slane %v5868, 7
      %v5871 = vrot.slane %v5870, 4
      %v5873 = vshrl.u32 %v5499, 16
      %v5875 = vrot.slane %v5873, 7
      %v5876 = vshll.u32 %v5499, 16
      %v5878 = vor.u32 %v5875, %v5876
      %v5879 = vsel %vm450, %v5871, %v5878
      %v5880 = vrot.slane %v5875, 4
      %v5882 = vshrl.u32 %v5500, 16
      %v5884 = vrot.slane %v5882, 7
      %v5885 = vshll.u32 %v5500, 16
      %v5887 = vor.u32 %v5884, %v5885
      %v5888 = vsel %vm450, %v5880, %v5887
      %v5889 = vrot.slane %v5884, 4
      %v5891 = vshrl.u32 %v5501, 16
      %v5893 = vrot.slane %v5891, 7
      %v5894 = vshll.u32 %v5501, 16
      %v5896 = vor.u32 %v5893, %v5894
      %v5897 = vsel %vm450, %v5889, %v5896
      %v5899 = vshrl.u32 %v5502, 16
      %v5901 = vrot.slane %v5899, 7
      %v5902 = vrot.slane %v5901, 4
      %v5904 = vshrl.u32 %v5503, 16
      %v5906 = vrot.slane %v5904, 7
      %v5907 = vshll.u32 %v5503, 16
      %v5909 = vor.u32 %v5906, %v5907
      %v5910 = vsel %vm450, %v5902, %v5909
      %v5911 = vrot.slane %v5906, 4
      %v5913 = vshrl.u32 %v5504, 16
      %v5915 = vrot.slane %v5913, 7
      %v5916 = vshll.u32 %v5504, 16
      %v5918 = vor.u32 %v5915, %v5916
      %v5919 = vsel %vm450, %v5911, %v5918
      %v5920 = vrot.slane %v5915, 4
      %v5922 = vshrl.u32 %v5505, 16
      %v5924 = vrot.slane %v5922, 7
      %v5925 = vshll.u32 %v5505, 16
      %v5927 = vor.u32 %v5924, %v5925
      %v5928 = vsel %vm450, %v5920, %v5927
      %v5930 = vshrl.u32 %v5506, 16
      %v5932 = vrot.slane %v5930, 7
      %v5933 = vrot.slane %v5932, 4
      %v5935 = vshrl.u32 %v5507, 16
      %v5937 = vrot.slane %v5935, 7
      %v5938 = vshll.u32 %v5507, 16
      %v5940 = vor.u32 %v5937, %v5938
      %v5941 = vsel %vm450, %v5933, %v5940
      %v5942 = vrot.slane %v5937, 4
      %v5944 = vshrl.u32 %v5508, 16
      %v5946 = vrot.slane %v5944, 7
      %v5947 = vshll.u32 %v5508, 16
      %v5949 = vor.u32 %v5946, %v5947
      %v5950 = vsel %vm450, %v5942, %v5949
      %v5951 = vrot.slane %v5946, 4
      %v5953 = vshrl.u32 %v5509, 16
      %v5955 = vrot.slane %v5953, 7
      %v5956 = vshll.u32 %v5509, 16
      %v5958 = vor.u32 %v5955, %v5956
      %v5959 = vsel %vm450, %v5951, %v5958
      %v5961 = vshrl.u32 %v5510, 16
      %v5963 = vrot.slane %v5961, 7
      %v5964 = vrot.slane %v5963, 4
      %v5966 = vshrl.u32 %v5511, 16
      %v5968 = vrot.slane %v5966, 7
      %v5969 = vshll.u32 %v5511, 16
      %v5971 = vor.u32 %v5968, %v5969
      %v5972 = vsel %vm450, %v5964, %v5971
      %v5973 = vrot.slane %v5968, 4
      %v5975 = vshrl.u32 %v5512, 16
      %v5977 = vrot.slane %v5975, 7
      %v5978 = vshll.u32 %v5512, 16
      %v5980 = vor.u32 %v5977, %v5978
      %v5981 = vsel %vm450, %v5973, %v5980
      %v5982 = vrot.slane %v5977, 4
      %v5984 = vshrl.u32 %v5513, 16
      %v5986 = vrot.slane %v5984, 7
      %v5987 = vshll.u32 %v5513, 16
      %v5989 = vor.u32 %v5986, %v5987
      %v5990 = vsel %vm450, %v5982, %v5989
      %v5992 = vshrl.u32 %v5514, 16
      %v5994 = vrot.slane %v5992, 7
      %v5995 = vrot.slane %v5994, 4
      %v5997 = vshrl.u32 %v5515, 16
      %v5999 = vrot.slane %v5997, 7
      %v6000 = vshll.u32 %v5515, 16
      %v6002 = vor.u32 %v5999, %v6000
      %v6003 = vsel %vm450, %v5995, %v6002
      %v6004 = vrot.slane %v5999, 4
      %v6006 = vshrl.u32 %v5516, 16
      %v6008 = vrot.slane %v6006, 7
      %v6009 = vshll.u32 %v5516, 16
      %v6011 = vor.u32 %v6008, %v6009
      %v6012 = vsel %vm450, %v6004, %v6011
      %v6013 = vrot.slane %v6008, 4
      %v6015 = vshrl.u32 %v5517, 16
      %v6017 = vrot.slane %v6015, 7
      %v6018 = vshll.u32 %v5517, 16
      %v6020 = vor.u32 %v6017, %v6018
      %v6021 = vsel %vm450, %v6013, %v6020
      %6070 = vst [vmem:[#allocation3] sm:$0xf] %v5538
      %6071 = vst [vmem:[#allocation3 + $0x24] sm:$0xf] %v5547
      %6072 = vst [vmem:[#allocation3 + $0x48] sm:$0xf] %v5556
      %6073 = vst [vmem:[#allocation3 + $0x6c] sm:$0xf] %v5569
      %6074 = vst [vmem:[#allocation3 + $0x90] sm:$0xf] %v5578
      %6075 = vst [vmem:[#allocation3 + $0xb4] sm:$0xf] %v5587
      %6076 = vst [vmem:[#allocation3 + $0xd8] sm:$0xf] %v5600
      %6077 = vst [vmem:[#allocation3 + $0xfc] sm:$0xf] %v5609
      %6078 = vst [vmem:[#allocation3 + $0x120] sm:$0xf] %v5618
      %6079 = vst [vmem:[#allocation3 + $0x144] sm:$0xf] %v5631
      %6080 = vst [vmem:[#allocation3 + $0x168] sm:$0xf] %v5640
      %6081 = vst [vmem:[#allocation3 + $0x18c] sm:$0xf] %v5649
      %6082 = vst [vmem:[#allocation3 + $0x1b0] sm:$0xf] %v5662
      %6083 = vst [vmem:[#allocation3 + $0x1d4] sm:$0xf] %v5671
      %6084 = vst [vmem:[#allocation3 + $0x1f8] sm:$0xf] %v5680
      %6085 = vst [vmem:[#allocation3 + $0x21c] sm:$0xf] %v5693
      %6086 = vst [vmem:[#allocation3 + $0x240] sm:$0xf] %v5702
      %6087 = vst [vmem:[#allocation3 + $0x264] sm:$0xf] %v5711
      %6088 = vst [vmem:[#allocation3 + $0x288] sm:$0xf] %v5724
      %6089 = vst [vmem:[#allocation3 + $0x2ac] sm:$0xf] %v5733
      %6090 = vst [vmem:[#allocation3 + $0x2d0] sm:$0xf] %v5742
      %6091 = vst [vmem:[#allocation3 + $0x2f4] sm:$0xf] %v5755
      %6092 = vst [vmem:[#allocation3 + $0x318] sm:$0xf] %v5764
      %6093 = vst [vmem:[#allocation3 + $0x33c] sm:$0xf] %v5773
      %6094 = vst [vmem:[#allocation3 + $0x360] sm:$0xf] %v5786
      %6095 = vst [vmem:[#allocation3 + $0x384] sm:$0xf] %v5795
      %6096 = vst [vmem:[#allocation3 + $0x3a8] sm:$0xf] %v5804
      %6097 = vst [vmem:[#allocation3 + $0x3cc] sm:$0xf] %v5817
      %6098 = vst [vmem:[#allocation3 + $0x3f0] sm:$0xf] %v5826
      %6099 = vst [vmem:[#allocation3 + $0x414] sm:$0xf] %v5835
      %6100 = vst [vmem:[#allocation3 + $0x438] sm:$0xf] %v5848
      %6101 = vst [vmem:[#allocation3 + $0x45c] sm:$0xf] %v5857
      %6102 = vst [vmem:[#allocation3 + $0x480] sm:$0xf] %v5866
      %6103 = vst [vmem:[#allocation3 + $0x4a4] sm:$0xf] %v5879
      %6104 = vst [vmem:[#allocation3 + $0x4c8] sm:$0xf] %v5888
      %6105 = vst [vmem:[#allocation3 + $0x4ec] sm:$0xf] %v5897
      %6106 = vst [vmem:[#allocation3 + $0x510] sm:$0xf] %v5910
      %6107 = vst [vmem:[#allocation3 + $0x534] sm:$0xf] %v5919
      %6108 = vst [vmem:[#allocation3 + $0x558] sm:$0xf] %v5928
      %6109 = vst [vmem:[#allocation3 + $0x57c] sm:$0xf] %v5941
      %6110 = vst [vmem:[#allocation3 + $0x5a0] sm:$0xf] %v5950
      %6111 = vst [vmem:[#allocation3 + $0x5c4] sm:$0xf] %v5959
      %6112 = vst [vmem:[#allocation3 + $0x5e8] sm:$0xf] %v5972
      %6113 = vst [vmem:[#allocation3 + $0x60c] sm:$0xf] %v5981
      %6114 = vst [vmem:[#allocation3 + $0x630] sm:$0xf] %v5990
      %6115 = vst [vmem:[#allocation3 + $0x654] sm:$0xf] %v6003
      %6116 = vst [vmem:[#allocation3 + $0x678] sm:$0xf] %v6012
      %6117 = vst [vmem:[#allocation3 + $0x69c] sm:$0xf] %v6021
      %v6119 = vshrl.u32 %v5518, 16
      %v6121 = vrot.slane %v6119, 7
      %v6122 = vrot.slane %v6121, 4
      %v6124 = vshrl.u32 %v5519, 16
      %v6126 = vrot.slane %v6124, 7
      %v6127 = vshll.u32 %v5519, 16
      %v6129 = vor.u32 %v6126, %v6127
      %v6130 = vsel %vm450, %v6122, %v6129
      %v6131 = vrot.slane %v6126, 4
      %v6133 = vshrl.u32 %v5520, 16
      %v6135 = vrot.slane %v6133, 7
      %v6136 = vshll.u32 %v5520, 16
      %v6138 = vor.u32 %v6135, %v6136
      %v6139 = vsel %vm450, %v6131, %v6138
      %v6140 = vrot.slane %v6135, 4
      %v6142 = vshrl.u32 %v5521, 16
      %v6144 = vrot.slane %v6142, 7
      %v6145 = vshll.u32 %v5521, 16
      %v6147 = vor.u32 %v6144, %v6145
      %v6148 = vsel %vm450, %v6140, %v6147
      %6152 = vst [vmem:[#allocation3 + $0xc] sm:$0xf] %v5569
      %6153 = vst [vmem:[#allocation3 + $0x30] sm:$0xf] %v5578
      %6154 = vst [vmem:[#allocation3 + $0x54] sm:$0xf] %v5587
      %6155 = vst [vmem:[#allocation3 + $0x78] sm:$0xf] %v5600
      %6156 = vst [vmem:[#allocation3 + $0x9c] sm:$0xf] %v5609
      %6157 = vst [vmem:[#allocation3 + $0xc0] sm:$0xf] %v5618
      %6158 = vst [vmem:[#allocation3 + $0xe4] sm:$0xf] %v5631
      %6159 = vst [vmem:[#allocation3 + $0x108] sm:$0xf] %v5640
      %6160 = vst [vmem:[#allocation3 + $0x12c] sm:$0xf] %v5649
      %6161 = vst [vmem:[#allocation3 + $0x150] sm:$0xf] %v5662
      %6162 = vst [vmem:[#allocation3 + $0x174] sm:$0xf] %v5671
      %6163 = vst [vmem:[#allocation3 + $0x198] sm:$0xf] %v5680
      %6164 = vst [vmem:[#allocation3 + $0x1bc] sm:$0xf] %v5693
      %6165 = vst [vmem:[#allocation3 + $0x1e0] sm:$0xf] %v5702
      %6166 = vst [vmem:[#allocation3 + $0x204] sm:$0xf] %v5711
      %6167 = vst [vmem:[#allocation3 + $0x228] sm:$0xf] %v5724
      %6168 = vst [vmem:[#allocation3 + $0x24c] sm:$0xf] %v5733
      %6169 = vst [vmem:[#allocation3 + $0x270] sm:$0xf] %v5742
      %6170 = vst [vmem:[#allocation3 + $0x294] sm:$0xf] %v5755
      %6171 = vst [vmem:[#allocation3 + $0x2b8] sm:$0xf] %v5764
      %6172 = vst [vmem:[#allocation3 + $0x2dc] sm:$0xf] %v5773
      %6173 = vst [vmem:[#allocation3 + $0x300] sm:$0xf] %v5786
      %6174 = vst [vmem:[#allocation3 + $0x324] sm:$0xf] %v5795
      %6175 = vst [vmem:[#allocation3 + $0x348] sm:$0xf] %v5804
      %6176 = vst [vmem:[#allocation3 + $0x36c] sm:$0xf] %v5817
      %6177 = vst [vmem:[#allocation3 + $0x390] sm:$0xf] %v5826
      %6178 = vst [vmem:[#allocation3 + $0x3b4] sm:$0xf] %v5835
      %6179 = vst [vmem:[#allocation3 + $0x3d8] sm:$0xf] %v5848
      %6180 = vst [vmem:[#allocation3 + $0x3fc] sm:$0xf] %v5857
      %6181 = vst [vmem:[#allocation3 + $0x420] sm:$0xf] %v5866
      %6182 = vst [vmem:[#allocation3 + $0x444] sm:$0xf] %v5879
      %6183 = vst [vmem:[#allocation3 + $0x468] sm:$0xf] %v5888
      %6184 = vst [vmem:[#allocation3 + $0x48c] sm:$0xf] %v5897
      %6185 = vst [vmem:[#allocation3 + $0x4b0] sm:$0xf] %v5910
      %6186 = vst [vmem:[#allocation3 + $0x4d4] sm:$0xf] %v5919
      %6187 = vst [vmem:[#allocation3 + $0x4f8] sm:$0xf] %v5928
      %6188 = vst [vmem:[#allocation3 + $0x51c] sm:$0xf] %v5941
      %6189 = vst [vmem:[#allocation3 + $0x540] sm:$0xf] %v5950
      %6190 = vst [vmem:[#allocation3 + $0x564] sm:$0xf] %v5959
      %6191 = vst [vmem:[#allocation3 + $0x588] sm:$0xf] %v5972
      %6192 = vst [vmem:[#allocation3 + $0x5ac] sm:$0xf] %v5981
      %6193 = vst [vmem:[#allocation3 + $0x5d0] sm:$0xf] %v5990
      %6194 = vst [vmem:[#allocation3 + $0x5f4] sm:$0xf] %v6003
      %6195 = vst [vmem:[#allocation3 + $0x618] sm:$0xf] %v6012
      %6196 = vst [vmem:[#allocation3 + $0x63c] sm:$0xf] %v6021
      %6197 = vst [vmem:[#allocation3 + $0x660] sm:$0xf] %v6130
      %6198 = vst [vmem:[#allocation3 + $0x684] sm:$0xf] %v6139
      %6199 = vst [vmem:[#allocation3 + $0x6a8] sm:$0xf] %v6148
      %v6201 = vshrl.u32 %v5522, 16
      %v6203 = vrot.slane %v6201, 7
      %v6204 = vrot.slane %v6203, 4
      %v6206 = vshrl.u32 %v5523, 16
      %v6208 = vrot.slane %v6206, 7
      %v6209 = vshll.u32 %v5523, 16
      %v6211 = vor.u32 %v6208, %v6209
      %v6212 = vsel %vm450, %v6204, %v6211
      %v6213 = vrot.slane %v6208, 4
      %v6215 = vshrl.u32 %v5524, 16
      %v6217 = vrot.slane %v6215, 7
      %v6218 = vshll.u32 %v5524, 16
      %v6220 = vor.u32 %v6217, %v6218
      %v6221 = vsel %vm450, %v6213, %v6220
      %v6222 = vrot.slane %v6217, 4
      %v6224 = vshrl.u32 %v5525, 16
      %v6226 = vrot.slane %v6224, 7
      %v6227 = vshll.u32 %v5525, 16
      %v6229 = vor.u32 %v6226, %v6227
      %v6230 = vsel %vm450, %v6222, %v6229
      %6234 = vst [vmem:[#allocation3 + $0x18] sm:$0xf] %v5600
      %6235 = vst [vmem:[#allocation3 + $0x3c] sm:$0xf] %v5609
      %6236 = vst [vmem:[#allocation3 + $0x60] sm:$0xf] %v5618
      %6237 = vst [vmem:[#allocation3 + $0x84] sm:$0xf] %v5631
      %6238 = vst [vmem:[#allocation3 + $0xa8] sm:$0xf] %v5640
      %6239 = vst [vmem:[#allocation3 + $0xcc] sm:$0xf] %v5649
      %6240 = vst [vmem:[#allocation3 + $0xf0] sm:$0xf] %v5662
      %6241 = vst [vmem:[#allocation3 + $0x114] sm:$0xf] %v5671
      %6242 = vst [vmem:[#allocation3 + $0x138] sm:$0xf] %v5680
      %6243 = vst [vmem:[#allocation3 + $0x15c] sm:$0xf] %v5693
      %6244 = vst [vmem:[#allocation3 + $0x180] sm:$0xf] %v5702
      %6245 = vst [vmem:[#allocation3 + $0x1a4] sm:$0xf] %v5711
      %6246 = vst [vmem:[#allocation3 + $0x1c8] sm:$0xf] %v5724
      %6247 = vst [vmem:[#allocation3 + $0x1ec] sm:$0xf] %v5733
      %6248 = vst [vmem:[#allocation3 + $0x210] sm:$0xf] %v5742
      %6249 = vst [vmem:[#allocation3 + $0x234] sm:$0xf] %v5755
      %6250 = vst [vmem:[#allocation3 + $0x258] sm:$0xf] %v5764
      %6251 = vst [vmem:[#allocation3 + $0x27c] sm:$0xf] %v5773
      %6252 = vst [vmem:[#allocation3 + $0x2a0] sm:$0xf] %v5786
      %6253 = vst [vmem:[#allocation3 + $0x2c4] sm:$0xf] %v5795
      %6254 = vst [vmem:[#allocation3 + $0x2e8] sm:$0xf] %v5804
      %6255 = vst [vmem:[#allocation3 + $0x30c] sm:$0xf] %v5817
      %6256 = vst [vmem:[#allocation3 + $0x330] sm:$0xf] %v5826
      %6257 = vst [vmem:[#allocation3 + $0x354] sm:$0xf] %v5835
      %6258 = vst [vmem:[#allocation3 + $0x378] sm:$0xf] %v5848
      %6259 = vst [vmem:[#allocation3 + $0x39c] sm:$0xf] %v5857
      %6260 = vst [vmem:[#allocation3 + $0x3c0] sm:$0xf] %v5866
      %6261 = vst [vmem:[#allocation3 + $0x3e4] sm:$0xf] %v5879
      %6262 = vst [vmem:[#allocation3 + $0x408] sm:$0xf] %v5888
      %6263 = vst [vmem:[#allocation3 + $0x42c] sm:$0xf] %v5897
      %6264 = vst [vmem:[#allocation3 + $0x450] sm:$0xf] %v5910
      %6265 = vst [vmem:[#allocation3 + $0x474] sm:$0xf] %v5919
      %6266 = vst [vmem:[#allocation3 + $0x498] sm:$0xf] %v5928
      %6267 = vst [vmem:[#allocation3 + $0x4bc] sm:$0xf] %v5941
      %6268 = vst [vmem:[#allocation3 + $0x4e0] sm:$0xf] %v5950
      %6269 = vst [vmem:[#allocation3 + $0x504] sm:$0xf] %v5959
      %6270 = vst [vmem:[#allocation3 + $0x528] sm:$0xf] %v5972
      %6271 = vst [vmem:[#allocation3 + $0x54c] sm:$0xf] %v5981
      %6272 = vst [vmem:[#allocation3 + $0x570] sm:$0xf] %v5990
      %6273 = vst [vmem:[#allocation3 + $0x594] sm:$0xf] %v6003
      %6274 = vst [vmem:[#allocation3 + $0x5b8] sm:$0xf] %v6012
      %6275 = vst [vmem:[#allocation3 + $0x5dc] sm:$0xf] %v6021
      %6276 = vst [vmem:[#allocation3 + $0x600] sm:$0xf] %v6130
      %6277 = vst [vmem:[#allocation3 + $0x624] sm:$0xf] %v6139
      %6278 = vst [vmem:[#allocation3 + $0x648] sm:$0xf] %v6148
      %6279 = vst [vmem:[#allocation3 + $0x66c] sm:$0xf] %v6212
      %6280 = vst [vmem:[#allocation3 + $0x690] sm:$0xf] %v6221
      %6281 = vst [vmem:[#allocation3 + $0x6b4] sm:$0xf] %v6230
      %v6282 = vld [vmem:[#allocation2 + $0x4] sm:$0xf]
      %v6283 = vld [vmem:[#allocation2 + $0x8] sm:$0xf]
      %v6284 = vld [vmem:[#allocation2 + $0xc] sm:$0xf]
      %v6285 = vld [vmem:[#allocation2 + $0x1c] sm:$0xf]
      %v6286 = vld [vmem:[#allocation2 + $0x20] sm:$0xf]
      %v6287 = vld [vmem:[#allocation2 + $0x24] sm:$0xf]
      %v6288 = vld [vmem:[#allocation2 + $0x34] sm:$0xf]
      %v6289 = vld [vmem:[#allocation2 + $0x38] sm:$0xf]
      %v6290 = vld [vmem:[#allocation2 + $0x3c] sm:$0xf]
      %v6291 = vld [vmem:[#allocation2 + $0x4c] sm:$0xf]
      %v6292 = vld [vmem:[#allocation2 + $0x50] sm:$0xf]
      %v6293 = vld [vmem:[#allocation2 + $0x54] sm:$0xf]
      %v6294 = vld [vmem:[#allocation2 + $0x64] sm:$0xf]
      %v6295 = vld [vmem:[#allocation2 + $0x68] sm:$0xf]
      %v6296 = vld [vmem:[#allocation2 + $0x6c] sm:$0xf]
      %v6297 = vld [vmem:[#allocation2 + $0x7c] sm:$0xf]
      %v6298 = vld [vmem:[#allocation2 + $0x80] sm:$0xf]
      %v6299 = vld [vmem:[#allocation2 + $0x84] sm:$0xf]
      %v6300 = vld [vmem:[#allocation2 + $0x94] sm:$0xf]
      %v6301 = vld [vmem:[#allocation2 + $0x98] sm:$0xf]
      %v6302 = vld [vmem:[#allocation2 + $0x9c] sm:$0xf]
      %v6303 = vld [vmem:[#allocation2 + $0xac] sm:$0xf]
      %v6304 = vld [vmem:[#allocation2 + $0xb0] sm:$0xf]
      %v6305 = vld [vmem:[#allocation2 + $0xb4] sm:$0xf]
      %v6306 = vld [vmem:[#allocation2 + $0xc4] sm:$0xf]
      %v6307 = vld [vmem:[#allocation2 + $0xc8] sm:$0xf]
      %v6308 = vld [vmem:[#allocation2 + $0xcc] sm:$0xf]
      %v6309 = vld [vmem:[#allocation2 + $0xdc] sm:$0xf]
      %v6310 = vld [vmem:[#allocation2 + $0xe0] sm:$0xf]
      %v6311 = vld [vmem:[#allocation2 + $0xe4] sm:$0xf]
      %v6312 = vld [vmem:[#allocation2 + $0xf4] sm:$0xf]
      %v6313 = vld [vmem:[#allocation2 + $0xf8] sm:$0xf]
      %v6314 = vld [vmem:[#allocation2 + $0xfc] sm:$0xf]
      %v6315 = vld [vmem:[#allocation2 + $0x10c] sm:$0xf]
      %v6316 = vld [vmem:[#allocation2 + $0x110] sm:$0xf]
      %v6317 = vld [vmem:[#allocation2 + $0x114] sm:$0xf]
      %v6318 = vld [vmem:[#allocation2 + $0x124] sm:$0xf]
      %v6319 = vld [vmem:[#allocation2 + $0x128] sm:$0xf]
      %v6320 = vld [vmem:[#allocation2 + $0x12c] sm:$0xf]
      %v6321 = vld [vmem:[#allocation2 + $0x13c] sm:$0xf]
      %v6322 = vld [vmem:[#allocation2 + $0x140] sm:$0xf]
      %v6323 = vld [vmem:[#allocation2 + $0x144] sm:$0xf]
      %v6324 = vld [vmem:[#allocation2 + $0x154] sm:$0xf]
      %v6325 = vld [vmem:[#allocation2 + $0x158] sm:$0xf]
      %v6326 = vld [vmem:[#allocation2 + $0x15c] sm:$0xf]
      %v6327 = vld [vmem:[#allocation2 + $0x16c] sm:$0xf]
      %v6328 = vld [vmem:[#allocation2 + $0x170] sm:$0xf]
      %v6329 = vld [vmem:[#allocation2 + $0x174] sm:$0xf]
      %v6330 = vld [vmem:[#allocation2 + $0x184] sm:$0xf]
      %v6331 = vld [vmem:[#allocation2 + $0x188] sm:$0xf]
      %v6332 = vld [vmem:[#allocation2 + $0x18c] sm:$0xf]
      %v6333 = vld [vmem:[#allocation2 + $0x19c] sm:$0xf]
      %v6334 = vld [vmem:[#allocation2 + $0x1a0] sm:$0xf]
      %v6335 = vld [vmem:[#allocation2 + $0x1a4] sm:$0xf]
      %6336 = vst [vmem:[#allocation3 + $0x4] sm:$0xf] %v6282
      %6337 = vst [vmem:[#allocation3 + $0x28] sm:$0xf] %v6283
      %6338 = vst [vmem:[#allocation3 + $0x4c] sm:$0xf] %v6284
      %6339 = vst [vmem:[#allocation3 + $0x70] sm:$0xf] %v6285
      %6340 = vst [vmem:[#allocation3 + $0x94] sm:$0xf] %v6286
      %6341 = vst [vmem:[#allocation3 + $0xb8] sm:$0xf] %v6287
      %6342 = vst [vmem:[#allocation3 + $0xdc] sm:$0xf] %v6288
      %6343 = vst [vmem:[#allocation3 + $0x100] sm:$0xf] %v6289
      %6344 = vst [vmem:[#allocation3 + $0x124] sm:$0xf] %v6290
      %6345 = vst [vmem:[#allocation3 + $0x148] sm:$0xf] %v6291
      %6346 = vst [vmem:[#allocation3 + $0x16c] sm:$0xf] %v6292
      %6347 = vst [vmem:[#allocation3 + $0x190] sm:$0xf] %v6293
      %6348 = vst [vmem:[#allocation3 + $0x1b4] sm:$0xf] %v6294
      %6349 = vst [vmem:[#allocation3 + $0x1d8] sm:$0xf] %v6295
      %6350 = vst [vmem:[#allocation3 + $0x1fc] sm:$0xf] %v6296
      %6351 = vst [vmem:[#allocation3 + $0x220] sm:$0xf] %v6297
      %6352 = vst [vmem:[#allocation3 + $0x244] sm:$0xf] %v6298
      %6353 = vst [vmem:[#allocation3 + $0x268] sm:$0xf] %v6299
      %6354 = vst [vmem:[#allocation3 + $0x28c] sm:$0xf] %v6300
      %6355 = vst [vmem:[#allocation3 + $0x2b0] sm:$0xf] %v6301
      %6356 = vst [vmem:[#allocation3 + $0x2d4] sm:$0xf] %v6302
      %6357 = vst [vmem:[#allocation3 + $0x2f8] sm:$0xf] %v6303
      %6358 = vst [vmem:[#allocation3 + $0x31c] sm:$0xf] %v6304
      %6359 = vst [vmem:[#allocation3 + $0x340] sm:$0xf] %v6305
      %6360 = vst [vmem:[#allocation3 + $0x364] sm:$0xf] %v6306
      %6361 = vst [vmem:[#allocation3 + $0x388] sm:$0xf] %v6307
      %6362 = vst [vmem:[#allocation3 + $0x3ac] sm:$0xf] %v6308
      %6363 = vst [vmem:[#allocation3 + $0x3d0] sm:$0xf] %v6309
      %6364 = vst [vmem:[#allocation3 + $0x3f4] sm:$0xf] %v6310
      %6365 = vst [vmem:[#allocation3 + $0x418] sm:$0xf] %v6311
      %6366 = vst [vmem:[#allocation3 + $0x43c] sm:$0xf] %v6312
      %6367 = vst [vmem:[#allocation3 + $0x460] sm:$0xf] %v6313
      %6368 = vst [vmem:[#allocation3 + $0x484] sm:$0xf] %v6314
      %6369 = vst [vmem:[#allocation3 + $0x4a8] sm:$0xf] %v6315
      %6370 = vst [vmem:[#allocation3 + $0x4cc] sm:$0xf] %v6316
      %6371 = vst [vmem:[#allocation3 + $0x4f0] sm:$0xf] %v6317
      %6372 = vst [vmem:[#allocation3 + $0x514] sm:$0xf] %v6318
      %6373 = vst [vmem:[#allocation3 + $0x538] sm:$0xf] %v6319
      %6374 = vst [vmem:[#allocation3 + $0x55c] sm:$0xf] %v6320
      %6375 = vst [vmem:[#allocation3 + $0x580] sm:$0xf] %v6321
      %6376 = vst [vmem:[#allocation3 + $0x5a4] sm:$0xf] %v6322
      %6377 = vst [vmem:[#allocation3 + $0x5c8] sm:$0xf] %v6323
      %6378 = vst [vmem:[#allocation3 + $0x5ec] sm:$0xf] %v6324
      %6379 = vst [vmem:[#allocation3 + $0x610] sm:$0xf] %v6325
      %6380 = vst [vmem:[#allocation3 + $0x634] sm:$0xf] %v6326
      %6381 = vst [vmem:[#allocation3 + $0x658] sm:$0xf] %v6327
      %6382 = vst [vmem:[#allocation3 + $0x67c] sm:$0xf] %v6328
      %6383 = vst [vmem:[#allocation3 + $0x6a0] sm:$0xf] %v6329
      %6384 = vst [vmem:[#allocation3 + $0x10] sm:$0xf] %v6285
      %6385 = vst [vmem:[#allocation3 + $0x34] sm:$0xf] %v6286
      %6386 = vst [vmem:[#allocation3 + $0x58] sm:$0xf] %v6287
      %6387 = vst [vmem:[#allocation3 + $0x7c] sm:$0xf] %v6288
      %6388 = vst [vmem:[#allocation3 + $0xa0] sm:$0xf] %v6289
      %6389 = vst [vmem:[#allocation3 + $0xc4] sm:$0xf] %v6290
      %6390 = vst [vmem:[#allocation3 + $0xe8] sm:$0xf] %v6291
      %6391 = vst [vmem:[#allocation3 + $0x10c] sm:$0xf] %v6292
      %6392 = vst [vmem:[#allocation3 + $0x130] sm:$0xf] %v6293
      %6393 = vst [vmem:[#allocation3 + $0x154] sm:$0xf] %v6294
      %6394 = vst [vmem:[#allocation3 + $0x178] sm:$0xf] %v6295
      %6395 = vst [vmem:[#allocation3 + $0x19c] sm:$0xf] %v6296
      %6396 = vst [vmem:[#allocation3 + $0x1c0] sm:$0xf] %v6297
      %6397 = vst [vmem:[#allocation3 + $0x1e4] sm:$0xf] %v6298
      %6398 = vst [vmem:[#allocation3 + $0x208] sm:$0xf] %v6299
      %6399 = vst [vmem:[#allocation3 + $0x22c] sm:$0xf] %v6300
      %6400 = vst [vmem:[#allocation3 + $0x250] sm:$0xf] %v6301
      %6401 = vst [vmem:[#allocation3 + $0x274] sm:$0xf] %v6302
      %6402 = vst [vmem:[#allocation3 + $0x298] sm:$0xf] %v6303
      %6403 = vst [vmem:[#allocation3 + $0x2bc] sm:$0xf] %v6304
      %6404 = vst [vmem:[#allocation3 + $0x2e0] sm:$0xf] %v6305
      %6405 = vst [vmem:[#allocation3 + $0x304] sm:$0xf] %v6306
      %6406 = vst [vmem:[#allocation3 + $0x328] sm:$0xf] %v6307
      %6407 = vst [vmem:[#allocation3 + $0x34c] sm:$0xf] %v6308
      %6408 = vst [vmem:[#allocation3 + $0x370] sm:$0xf] %v6309
      %6409 = vst [vmem:[#allocation3 + $0x394] sm:$0xf] %v6310
      %6410 = vst [vmem:[#allocation3 + $0x3b8] sm:$0xf] %v6311
      %6411 = vst [vmem:[#allocation3 + $0x3dc] sm:$0xf] %v6312
      %6412 = vst [vmem:[#allocation3 + $0x400] sm:$0xf] %v6313
      %6413 = vst [vmem:[#allocation3 + $0x424] sm:$0xf] %v6314
      %6414 = vst [vmem:[#allocation3 + $0x448] sm:$0xf] %v6315
      %6415 = vst [vmem:[#allocation3 + $0x46c] sm:$0xf] %v6316
      %6416 = vst [vmem:[#allocation3 + $0x490] sm:$0xf] %v6317
      %6417 = vst [vmem:[#allocation3 + $0x4b4] sm:$0xf] %v6318
      %6418 = vst [vmem:[#allocation3 + $0x4d8] sm:$0xf] %v6319
      %6419 = vst [vmem:[#allocation3 + $0x4fc] sm:$0xf] %v6320
      %6420 = vst [vmem:[#allocation3 + $0x520] sm:$0xf] %v6321
      %6421 = vst [vmem:[#allocation3 + $0x544] sm:$0xf] %v6322
      %6422 = vst [vmem:[#allocation3 + $0x568] sm:$0xf] %v6323
      %6423 = vst [vmem:[#allocation3 + $0x58c] sm:$0xf] %v6324
      %6424 = vst [vmem:[#allocation3 + $0x5b0] sm:$0xf] %v6325
      %6425 = vst [vmem:[#allocation3 + $0x5d4] sm:$0xf] %v6326
      %6426 = vst [vmem:[#allocation3 + $0x5f8] sm:$0xf] %v6327
      %6427 = vst [vmem:[#allocation3 + $0x61c] sm:$0xf] %v6328
      %6428 = vst [vmem:[#allocation3 + $0x640] sm:$0xf] %v6329
      %6429 = vst [vmem:[#allocation3 + $0x664] sm:$0xf] %v6330
      %6430 = vst [vmem:[#allocation3 + $0x688] sm:$0xf] %v6331
      %6431 = vst [vmem:[#allocation3 + $0x6ac] sm:$0xf] %v6332
      %6432 = vst [vmem:[#allocation3 + $0x1c] sm:$0xf] %v6288
      %6433 = vst [vmem:[#allocation3 + $0x40] sm:$0xf] %v6289
      %6434 = vst [vmem:[#allocation3 + $0x64] sm:$0xf] %v6290
      %6435 = vst [vmem:[#allocation3 + $0x88] sm:$0xf] %v6291
      %6436 = vst [vmem:[#allocation3 + $0xac] sm:$0xf] %v6292
      %6437 = vst [vmem:[#allocation3 + $0xd0] sm:$0xf] %v6293
      %6438 = vst [vmem:[#allocation3 + $0xf4] sm:$0xf] %v6294
      %6439 = vst [vmem:[#allocation3 + $0x118] sm:$0xf] %v6295
      %6440 = vst [vmem:[#allocation3 + $0x13c] sm:$0xf] %v6296
      %6441 = vst [vmem:[#allocation3 + $0x160] sm:$0xf] %v6297
      %6442 = vst [vmem:[#allocation3 + $0x184] sm:$0xf] %v6298
      %6443 = vst [vmem:[#allocation3 + $0x1a8] sm:$0xf] %v6299
      %6444 = vst [vmem:[#allocation3 + $0x1cc] sm:$0xf] %v6300
      %6445 = vst [vmem:[#allocation3 + $0x1f0] sm:$0xf] %v6301
      %6446 = vst [vmem:[#allocation3 + $0x214] sm:$0xf] %v6302
      %6447 = vst [vmem:[#allocation3 + $0x238] sm:$0xf] %v6303
      %6448 = vst [vmem:[#allocation3 + $0x25c] sm:$0xf] %v6304
      %6449 = vst [vmem:[#allocation3 + $0x280] sm:$0xf] %v6305
      %6450 = vst [vmem:[#allocation3 + $0x2a4] sm:$0xf] %v6306
      %6451 = vst [vmem:[#allocation3 + $0x2c8] sm:$0xf] %v6307
      %6452 = vst [vmem:[#allocation3 + $0x2ec] sm:$0xf] %v6308
      %6453 = vst [vmem:[#allocation3 + $0x310] sm:$0xf] %v6309
      %6454 = vst [vmem:[#allocation3 + $0x334] sm:$0xf] %v6310
      %6455 = vst [vmem:[#allocation3 + $0x358] sm:$0xf] %v6311
      %6456 = vst [vmem:[#allocation3 + $0x37c] sm:$0xf] %v6312
      %6457 = vst [vmem:[#allocation3 + $0x3a0] sm:$0xf] %v6313
      %6458 = vst [vmem:[#allocation3 + $0x3c4] sm:$0xf] %v6314
      %6459 = vst [vmem:[#allocation3 + $0x3e8] sm:$0xf] %v6315
      %6460 = vst [vmem:[#allocation3 + $0x40c] sm:$0xf] %v6316
      %6461 = vst [vmem:[#allocation3 + $0x430] sm:$0xf] %v6317
      %6462 = vst [vmem:[#allocation3 + $0x454] sm:$0xf] %v6318
      %6463 = vst [vmem:[#allocation3 + $0x478] sm:$0xf] %v6319
      %6464 = vst [vmem:[#allocation3 + $0x49c] sm:$0xf] %v6320
      %6465 = vst [vmem:[#allocation3 + $0x4c0] sm:$0xf] %v6321
      %6466 = vst [vmem:[#allocation3 + $0x4e4] sm:$0xf] %v6322
      %6467 = vst [vmem:[#allocation3 + $0x508] sm:$0xf] %v6323
      %6468 = vst [vmem:[#allocation3 + $0x52c] sm:$0xf] %v6324
      %6469 = vst [vmem:[#allocation3 + $0x550] sm:$0xf] %v6325
      %6470 = vst [vmem:[#allocation3 + $0x574] sm:$0xf] %v6326
      %6471 = vst [vmem:[#allocation3 + $0x598] sm:$0xf] %v6327
      %6472 = vst [vmem:[#allocation3 + $0x5bc] sm:$0xf] %v6328
      %6473 = vst [vmem:[#allocation3 + $0x5e0] sm:$0xf] %v6329
      %6474 = vst [vmem:[#allocation3 + $0x604] sm:$0xf] %v6330
      %6475 = vst [vmem:[#allocation3 + $0x628] sm:$0xf] %v6331
      %6476 = vst [vmem:[#allocation3 + $0x64c] sm:$0xf] %v6332
      %6477 = vst [vmem:[#allocation3 + $0x670] sm:$0xf] %v6333
      %6478 = vst [vmem:[#allocation3 + $0x694] sm:$0xf] %v6334
      %6479 = vst [vmem:[#allocation3 + $0x6b8] sm:$0xf] %v6335
      %v6480 = vld [vmem:[#allocation2 + $0x4] sm:$0xf]
      %v6481 = vld [vmem:[#allocation2 + $0x8] sm:$0xf]
      %v6482 = vld [vmem:[#allocation2 + $0xc] sm:$0xf]
      %v6483 = vld [vmem:[#allocation2 + $0x10] sm:$0x1]
      %v6484 = vld [vmem:[#allocation2 + $0x1c] sm:$0xf]
      %v6485 = vld [vmem:[#allocation2 + $0x20] sm:$0xf]
      %v6486 = vld [vmem:[#allocation2 + $0x24] sm:$0xf]
      %v6487 = vld [vmem:[#allocation2 + $0x28] sm:$0x1]
      %v6488 = vld [vmem:[#allocation2 + $0x34] sm:$0xf]
      %v6489 = vld [vmem:[#allocation2 + $0x38] sm:$0xf]
      %v6490 = vld [vmem:[#allocation2 + $0x3c] sm:$0xf]
      %v6491 = vld [vmem:[#allocation2 + $0x40] sm:$0x1]
      %v6492 = vld [vmem:[#allocation2 + $0x4c] sm:$0xf]
      %v6493 = vld [vmem:[#allocation2 + $0x50] sm:$0xf]
      %v6494 = vld [vmem:[#allocation2 + $0x54] sm:$0xf]
      %v6495 = vld [vmem:[#allocation2 + $0x58] sm:$0x1]
      %v6496 = vld [vmem:[#allocation2 + $0x64] sm:$0xf]
      %v6497 = vld [vmem:[#allocation2 + $0x68] sm:$0xf]
      %v6498 = vld [vmem:[#allocation2 + $0x6c] sm:$0xf]
      %v6499 = vld [vmem:[#allocation2 + $0x70] sm:$0x1]
      %v6500 = vld [vmem:[#allocation2 + $0x7c] sm:$0xf]
      %v6501 = vld [vmem:[#allocation2 + $0x80] sm:$0xf]
      %v6502 = vld [vmem:[#allocation2 + $0x84] sm:$0xf]
      %v6503 = vld [vmem:[#allocation2 + $0x88] sm:$0x1]
      %v6504 = vld [vmem:[#allocation2 + $0x94] sm:$0xf]
      %v6505 = vld [vmem:[#allocation2 + $0x98] sm:$0xf]
      %v6506 = vld [vmem:[#allocation2 + $0x9c] sm:$0xf]
      %v6507 = vld [vmem:[#allocation2 + $0xa0] sm:$0x1]
      %v6508 = vld [vmem:[#allocation2 + $0xac] sm:$0xf]
      %v6509 = vld [vmem:[#allocation2 + $0xb0] sm:$0xf]
      %v6510 = vld [vmem:[#allocation2 + $0xb4] sm:$0xf]
      %v6511 = vld [vmem:[#allocation2 + $0xb8] sm:$0x1]
      %v6512 = vld [vmem:[#allocation2 + $0xc4] sm:$0xf]
      %v6513 = vld [vmem:[#allocation2 + $0xc8] sm:$0xf]
      %v6514 = vld [vmem:[#allocation2 + $0xcc] sm:$0xf]
      %v6515 = vld [vmem:[#allocation2 + $0xd0] sm:$0x1]
      %v6516 = vld [vmem:[#allocation2 + $0xdc] sm:$0xf]
      %v6517 = vld [vmem:[#allocation2 + $0xe0] sm:$0xf]
      %v6518 = vld [vmem:[#allocation2 + $0xe4] sm:$0xf]
      %v6519 = vld [vmem:[#allocation2 + $0xe8] sm:$0x1]
      %v6520 = vld [vmem:[#allocation2 + $0xf4] sm:$0xf]
      %v6521 = vld [vmem:[#allocation2 + $0xf8] sm:$0xf]
      %v6522 = vld [vmem:[#allocation2 + $0xfc] sm:$0xf]
      %v6523 = vld [vmem:[#allocation2 + $0x100] sm:$0x1]
      %v6524 = vld [vmem:[#allocation2 + $0x10c] sm:$0xf]
      %v6525 = vld [vmem:[#allocation2 + $0x110] sm:$0xf]
      %v6526 = vld [vmem:[#allocation2 + $0x114] sm:$0xf]
      %v6527 = vld [vmem:[#allocation2 + $0x118] sm:$0x1]
      %v6528 = vld [vmem:[#allocation2 + $0x124] sm:$0xf]
      %v6529 = vld [vmem:[#allocation2 + $0x128] sm:$0xf]
      %v6530 = vld [vmem:[#allocation2 + $0x12c] sm:$0xf]
      %v6531 = vld [vmem:[#allocation2 + $0x130] sm:$0x1]
      %v6532 = vld [vmem:[#allocation2 + $0x13c] sm:$0xf]
      %v6533 = vld [vmem:[#allocation2 + $0x140] sm:$0xf]
      %v6534 = vld [vmem:[#allocation2 + $0x144] sm:$0xf]
      %v6535 = vld [vmem:[#allocation2 + $0x148] sm:$0x1]
      %v6536 = vld [vmem:[#allocation2 + $0x154] sm:$0xf]
      %v6537 = vld [vmem:[#allocation2 + $0x158] sm:$0xf]
      %v6538 = vld [vmem:[#allocation2 + $0x15c] sm:$0xf]
      %v6539 = vld [vmem:[#allocation2 + $0x160] sm:$0x1]
      %v6540 = vld [vmem:[#allocation2 + $0x16c] sm:$0xf]
      %v6541 = vld [vmem:[#allocation2 + $0x170] sm:$0xf]
      %v6542 = vld [vmem:[#allocation2 + $0x174] sm:$0xf]
      %v6543 = vld [vmem:[#allocation2 + $0x178] sm:$0x1]
      %v6544 = vld [vmem:[#allocation2 + $0x184] sm:$0xf]
      %v6545 = vld [vmem:[#allocation2 + $0x188] sm:$0xf]
      %v6546 = vld [vmem:[#allocation2 + $0x18c] sm:$0xf]
      %v6547 = vld [vmem:[#allocation2 + $0x190] sm:$0x1]
      %v6548 = vld [vmem:[#allocation2 + $0x19c] sm:$0xf]
      %v6549 = vld [vmem:[#allocation2 + $0x1a0] sm:$0xf]
      %v6550 = vld [vmem:[#allocation2 + $0x1a4] sm:$0xf]
      %v6551 = vld [vmem:[#allocation2 + $0x1a8] sm:$0x1]
      %v6553 = vshrl.u32 %v6480, 16
      %v6555 = vrot.slane %v6553, 4
      %v6556 = vshll.u32 %v6480, 16
      %v6558 = vrot.slane %v6556, 5
      %v6559 = vor.u32 %v6555, %v6558
      %v6560 = vrot.slane %v6559, 4
      %v6562 = vshll.u32 %v6481, 16
      %v6564 = vrot.slane %v6562, 5
      %v6565 = vsel %vm1479, %v6560, %v6564
      %v6566 = vshrl.u32 %v6481, 16
      %v6568 = vrot.slane %v6566, 4
      %v6569 = vor.u32 %v6568, %v6564
      %v6570 = vrot.slane %v6569, 4
      %v6572 = vshll.u32 %v6482, 16
      %v6574 = vrot.slane %v6572, 5
      %v6575 = vsel %vm1479, %v6570, %v6574
      %v6576 = vshrl.u32 %v6482, 16
      %v6578 = vrot.slane %v6576, 4
      %v6579 = vor.u32 %v6578, %v6574
      %v6580 = vrot.slane %v6579, 4
      %v6582 = vshll.u32 %v6483, 16
      %v6584 = vrot.slane %v6582, 5
      %v6585 = vsel %vm1479, %v6580, %v6584
      %v6587 = vshrl.u32 %v6484, 16
      %v6589 = vrot.slane %v6587, 4
      %v6590 = vshll.u32 %v6484, 16
      %v6592 = vrot.slane %v6590, 5
      %v6593 = vor.u32 %v6589, %v6592
      %v6594 = vrot.slane %v6593, 4
      %v6596 = vshll.u32 %v6485, 16
      %v6598 = vrot.slane %v6596, 5
      %v6599 = vsel %vm1479, %v6594, %v6598
      %v6600 = vshrl.u32 %v6485, 16
      %v6602 = vrot.slane %v6600, 4
      %v6603 = vor.u32 %v6602, %v6598
      %v6604 = vrot.slane %v6603, 4
      %v6606 = vshll.u32 %v6486, 16
      %v6608 = vrot.slane %v6606, 5
      %v6609 = vsel %vm1479, %v6604, %v6608
      %v6610 = vshrl.u32 %v6486, 16
      %v6612 = vrot.slane %v6610, 4
      %v6613 = vor.u32 %v6612, %v6608
      %v6614 = vrot.slane %v6613, 4
      %v6616 = vshll.u32 %v6487, 16
      %v6618 = vrot.slane %v6616, 5
      %v6619 = vsel %vm1479, %v6614, %v6618
      %v6621 = vshrl.u32 %v6488, 16
      %v6623 = vrot.slane %v6621, 4
      %v6624 = vshll.u32 %v6488, 16
      %v6626 = vrot.slane %v6624, 5
      %v6627 = vor.u32 %v6623, %v6626
      %v6628 = vrot.slane %v6627, 4
      %v6630 = vshll.u32 %v6489, 16
      %v6632 = vrot.slane %v6630, 5
      %v6633 = vsel %vm1479, %v6628, %v6632
      %v6634 = vshrl.u32 %v6489, 16
      %v6636 = vrot.slane %v6634, 4
      %v6637 = vor.u32 %v6636, %v6632
      %v6638 = vrot.slane %v6637, 4
      %v6640 = vshll.u32 %v6490, 16
      %v6642 = vrot.slane %v6640, 5
      %v6643 = vsel %vm1479, %v6638, %v6642
      %v6644 = vshrl.u32 %v6490, 16
      %v6646 = vrot.slane %v6644, 4
      %v6647 = vor.u32 %v6646, %v6642
      %v6648 = vrot.slane %v6647, 4
      %v6650 = vshll.u32 %v6491, 16
      %v6652 = vrot.slane %v6650, 5
      %v6653 = vsel %vm1479, %v6648, %v6652
      %v6655 = vshrl.u32 %v6492, 16
      %v6657 = vrot.slane %v6655, 4
      %v6658 = vshll.u32 %v6492, 16
      %v6660 = vrot.slane %v6658, 5
      %v6661 = vor.u32 %v6657, %v6660
      %v6662 = vrot.slane %v6661, 4
      %v6664 = vshll.u32 %v6493, 16
      %v6666 = vrot.slane %v6664, 5
      %v6667 = vsel %vm1479, %v6662, %v6666
      %v6668 = vshrl.u32 %v6493, 16
      %v6670 = vrot.slane %v6668, 4
      %v6671 = vor.u32 %v6670, %v6666
      %v6672 = vrot.slane %v6671, 4
      %v6674 = vshll.u32 %v6494, 16
      %v6676 = vrot.slane %v6674, 5
      %v6677 = vsel %vm1479, %v6672, %v6676
      %v6678 = vshrl.u32 %v6494, 16
      %v6680 = vrot.slane %v6678, 4
      %v6681 = vor.u32 %v6680, %v6676
      %v6682 = vrot.slane %v6681, 4
      %v6684 = vshll.u32 %v6495, 16
      %v6686 = vrot.slane %v6684, 5
      %v6687 = vsel %vm1479, %v6682, %v6686
      %v6689 = vshrl.u32 %v6496, 16
      %v6691 = vrot.slane %v6689, 4
      %v6692 = vshll.u32 %v6496, 16
      %v6694 = vrot.slane %v6692, 5
      %v6695 = vor.u32 %v6691, %v6694
      %v6696 = vrot.slane %v6695, 4
      %v6698 = vshll.u32 %v6497, 16
      %v6700 = vrot.slane %v6698, 5
      %v6701 = vsel %vm1479, %v6696, %v6700
      %v6702 = vshrl.u32 %v6497, 16
      %v6704 = vrot.slane %v6702, 4
      %v6705 = vor.u32 %v6704, %v6700
      %v6706 = vrot.slane %v6705, 4
      %v6708 = vshll.u32 %v6498, 16
      %v6710 = vrot.slane %v6708, 5
      %v6711 = vsel %vm1479, %v6706, %v6710
      %v6712 = vshrl.u32 %v6498, 16
      %v6714 = vrot.slane %v6712, 4
      %v6715 = vor.u32 %v6714, %v6710
      %v6716 = vrot.slane %v6715, 4
      %v6718 = vshll.u32 %v6499, 16
      %v6720 = vrot.slane %v6718, 5
      %v6721 = vsel %vm1479, %v6716, %v6720
      %v6723 = vshrl.u32 %v6500, 16
      %v6725 = vrot.slane %v6723, 4
      %v6726 = vshll.u32 %v6500, 16
      %v6728 = vrot.slane %v6726, 5
      %v6729 = vor.u32 %v6725, %v6728
      %v6730 = vrot.slane %v6729, 4
      %v6732 = vshll.u32 %v6501, 16
      %v6734 = vrot.slane %v6732, 5
      %v6735 = vsel %vm1479, %v6730, %v6734
      %v6736 = vshrl.u32 %v6501, 16
      %v6738 = vrot.slane %v6736, 4
      %v6739 = vor.u32 %v6738, %v6734
      %v6740 = vrot.slane %v6739, 4
      %v6742 = vshll.u32 %v6502, 16
      %v6744 = vrot.slane %v6742, 5
      %v6745 = vsel %vm1479, %v6740, %v6744
      %v6746 = vshrl.u32 %v6502, 16
      %v6748 = vrot.slane %v6746, 4
      %v6749 = vor.u32 %v6748, %v6744
      %v6750 = vrot.slane %v6749, 4
      %v6752 = vshll.u32 %v6503, 16
      %v6754 = vrot.slane %v6752, 5
      %v6755 = vsel %vm1479, %v6750, %v6754
      %v6757 = vshrl.u32 %v6504, 16
      %v6759 = vrot.slane %v6757, 4
      %v6760 = vshll.u32 %v6504, 16
      %v6762 = vrot.slane %v6760, 5
      %v6763 = vor.u32 %v6759, %v6762
      %v6764 = vrot.slane %v6763, 4
      %v6766 = vshll.u32 %v6505, 16
      %v6768 = vrot.slane %v6766, 5
      %v6769 = vsel %vm1479, %v6764, %v6768
      %v6770 = vshrl.u32 %v6505, 16
      %v6772 = vrot.slane %v6770, 4
      %v6773 = vor.u32 %v6772, %v6768
      %v6774 = vrot.slane %v6773, 4
      %v6776 = vshll.u32 %v6506, 16
      %v6778 = vrot.slane %v6776, 5
      %v6779 = vsel %vm1479, %v6774, %v6778
      %v6780 = vshrl.u32 %v6506, 16
      %v6782 = vrot.slane %v6780, 4
      %v6783 = vor.u32 %v6782, %v6778
      %v6784 = vrot.slane %v6783, 4
      %v6786 = vshll.u32 %v6507, 16
      %v6788 = vrot.slane %v6786, 5
      %v6789 = vsel %vm1479, %v6784, %v6788
      %v6791 = vshrl.u32 %v6508, 16
      %v6793 = vrot.slane %v6791, 4
      %v6794 = vshll.u32 %v6508, 16
      %v6796 = vrot.slane %v6794, 5
      %v6797 = vor.u32 %v6793, %v6796
      %v6798 = vrot.slane %v6797, 4
      %v6800 = vshll.u32 %v6509, 16
      %v6802 = vrot.slane %v6800, 5
      %v6803 = vsel %vm1479, %v6798, %v6802
      %v6804 = vshrl.u32 %v6509, 16
      %v6806 = vrot.slane %v6804, 4
      %v6807 = vor.u32 %v6806, %v6802
      %v6808 = vrot.slane %v6807, 4
      %v6810 = vshll.u32 %v6510, 16
      %v6812 = vrot.slane %v6810, 5
      %v6813 = vsel %vm1479, %v6808, %v6812
      %v6814 = vshrl.u32 %v6510, 16
      %v6816 = vrot.slane %v6814, 4
      %v6817 = vor.u32 %v6816, %v6812
      %v6818 = vrot.slane %v6817, 4
      %v6820 = vshll.u32 %v6511, 16
      %v6822 = vrot.slane %v6820, 5
      %v6823 = vsel %vm1479, %v6818, %v6822
      %v6825 = vshrl.u32 %v6512, 16
      %v6827 = vrot.slane %v6825, 4
      %v6828 = vshll.u32 %v6512, 16
      %v6830 = vrot.slane %v6828, 5
      %v6831 = vor.u32 %v6827, %v6830
      %v6832 = vrot.slane %v6831, 4
      %v6834 = vshll.u32 %v6513, 16
      %v6836 = vrot.slane %v6834, 5
      %v6837 = vsel %vm1479, %v6832, %v6836
      %v6838 = vshrl.u32 %v6513, 16
      %v6840 = vrot.slane %v6838, 4
      %v6841 = vor.u32 %v6840, %v6836
      %v6842 = vrot.slane %v6841, 4
      %v6844 = vshll.u32 %v6514, 16
      %v6846 = vrot.slane %v6844, 5
      %v6847 = vsel %vm1479, %v6842, %v6846
      %v6848 = vshrl.u32 %v6514, 16
      %v6850 = vrot.slane %v6848, 4
      %v6851 = vor.u32 %v6850, %v6846
      %v6852 = vrot.slane %v6851, 4
      %v6854 = vshll.u32 %v6515, 16
      %v6856 = vrot.slane %v6854, 5
      %v6857 = vsel %vm1479, %v6852, %v6856
      %v6859 = vshrl.u32 %v6516, 16
      %v6861 = vrot.slane %v6859, 4
      %v6862 = vshll.u32 %v6516, 16
      %v6864 = vrot.slane %v6862, 5
      %v6865 = vor.u32 %v6861, %v6864
      %v6866 = vrot.slane %v6865, 4
      %v6868 = vshll.u32 %v6517, 16
      %v6870 = vrot.slane %v6868, 5
      %v6871 = vsel %vm1479, %v6866, %v6870
      %v6872 = vshrl.u32 %v6517, 16
      %v6874 = vrot.slane %v6872, 4
      %v6875 = vor.u32 %v6874, %v6870
      %v6876 = vrot.slane %v6875, 4
      %v6878 = vshll.u32 %v6518, 16
      %v6880 = vrot.slane %v6878, 5
      %v6881 = vsel %vm1479, %v6876, %v6880
      %v6882 = vshrl.u32 %v6518, 16
      %v6884 = vrot.slane %v6882, 4
      %v6885 = vor.u32 %v6884, %v6880
      %v6886 = vrot.slane %v6885, 4
      %v6888 = vshll.u32 %v6519, 16
      %v6890 = vrot.slane %v6888, 5
      %v6891 = vsel %vm1479, %v6886, %v6890
      %v6893 = vshrl.u32 %v6520, 16
      %v6895 = vrot.slane %v6893, 4
      %v6896 = vshll.u32 %v6520, 16
      %v6898 = vrot.slane %v6896, 5
      %v6899 = vor.u32 %v6895, %v6898
      %v6900 = vrot.slane %v6899, 4
      %v6902 = vshll.u32 %v6521, 16
      %v6904 = vrot.slane %v6902, 5
      %v6905 = vsel %vm1479, %v6900, %v6904
      %v6906 = vshrl.u32 %v6521, 16
      %v6908 = vrot.slane %v6906, 4
      %v6909 = vor.u32 %v6908, %v6904
      %v6910 = vrot.slane %v6909, 4
      %v6912 = vshll.u32 %v6522, 16
      %v6914 = vrot.slane %v6912, 5
      %v6915 = vsel %vm1479, %v6910, %v6914
      %v6916 = vshrl.u32 %v6522, 16
      %v6918 = vrot.slane %v6916, 4
      %v6919 = vor.u32 %v6918, %v6914
      %v6920 = vrot.slane %v6919, 4
      %v6922 = vshll.u32 %v6523, 16
      %v6924 = vrot.slane %v6922, 5
      %v6925 = vsel %vm1479, %v6920, %v6924
      %v6927 = vshrl.u32 %v6524, 16
      %v6929 = vrot.slane %v6927, 4
      %v6930 = vshll.u32 %v6524, 16
      %v6932 = vrot.slane %v6930, 5
      %v6933 = vor.u32 %v6929, %v6932
      %v6934 = vrot.slane %v6933, 4
      %v6936 = vshll.u32 %v6525, 16
      %v6938 = vrot.slane %v6936, 5
      %v6939 = vsel %vm1479, %v6934, %v6938
      %v6940 = vshrl.u32 %v6525, 16
      %v6942 = vrot.slane %v6940, 4
      %v6943 = vor.u32 %v6942, %v6938
      %v6944 = vrot.slane %v6943, 4
      %v6946 = vshll.u32 %v6526, 16
      %v6948 = vrot.slane %v6946, 5
      %v6949 = vsel %vm1479, %v6944, %v6948
      %v6950 = vshrl.u32 %v6526, 16
      %v6952 = vrot.slane %v6950, 4
      %v6953 = vor.u32 %v6952, %v6948
      %v6954 = vrot.slane %v6953, 4
      %v6956 = vshll.u32 %v6527, 16
      %v6958 = vrot.slane %v6956, 5
      %v6959 = vsel %vm1479, %v6954, %v6958
      %v6961 = vshrl.u32 %v6528, 16
      %v6963 = vrot.slane %v6961, 4
      %v6964 = vshll.u32 %v6528, 16
      %v6966 = vrot.slane %v6964, 5
      %v6967 = vor.u32 %v6963, %v6966
      %v6968 = vrot.slane %v6967, 4
      %v6970 = vshll.u32 %v6529, 16
      %v6972 = vrot.slane %v6970, 5
      %v6973 = vsel %vm1479, %v6968, %v6972
      %v6974 = vshrl.u32 %v6529, 16
      %v6976 = vrot.slane %v6974, 4
      %v6977 = vor.u32 %v6976, %v6972
      %v6978 = vrot.slane %v6977, 4
      %v6980 = vshll.u32 %v6530, 16
      %v6982 = vrot.slane %v6980, 5
      %v6983 = vsel %vm1479, %v6978, %v6982
      %v6984 = vshrl.u32 %v6530, 16
      %v6986 = vrot.slane %v6984, 4
      %v6987 = vor.u32 %v6986, %v6982
      %v6988 = vrot.slane %v6987, 4
      %v6990 = vshll.u32 %v6531, 16
      %v6992 = vrot.slane %v6990, 5
      %v6993 = vsel %vm1479, %v6988, %v6992
      %v6995 = vshrl.u32 %v6532, 16
      %v6997 = vrot.slane %v6995, 4
      %v6998 = vshll.u32 %v6532, 16
      %v7000 = vrot.slane %v6998, 5
      %v7001 = vor.u32 %v6997, %v7000
      %v7002 = vrot.slane %v7001, 4
      %v7004 = vshll.u32 %v6533, 16
      %v7006 = vrot.slane %v7004, 5
      %v7007 = vsel %vm1479, %v7002, %v7006
      %v7008 = vshrl.u32 %v6533, 16
      %v7010 = vrot.slane %v7008, 4
      %v7011 = vor.u32 %v7010, %v7006
      %v7012 = vrot.slane %v7011, 4
      %v7014 = vshll.u32 %v6534, 16
      %v7016 = vrot.slane %v7014, 5
      %v7017 = vsel %vm1479, %v7012, %v7016
      %v7018 = vshrl.u32 %v6534, 16
      %v7020 = vrot.slane %v7018, 4
      %v7021 = vor.u32 %v7020, %v7016
      %v7022 = vrot.slane %v7021, 4
      %v7024 = vshll.u32 %v6535, 16
      %v7026 = vrot.slane %v7024, 5
      %v7027 = vsel %vm1479, %v7022, %v7026
      %v7029 = vshrl.u32 %v6536, 16
      %v7031 = vrot.slane %v7029, 4
      %v7032 = vshll.u32 %v6536, 16
      %v7034 = vrot.slane %v7032, 5
      %v7035 = vor.u32 %v7031, %v7034
      %v7036 = vrot.slane %v7035, 4
      %v7038 = vshll.u32 %v6537, 16
      %v7040 = vrot.slane %v7038, 5
      %v7041 = vsel %vm1479, %v7036, %v7040
      %v7042 = vshrl.u32 %v6537, 16
      %v7044 = vrot.slane %v7042, 4
      %v7045 = vor.u32 %v7044, %v7040
      %v7046 = vrot.slane %v7045, 4
      %v7048 = vshll.u32 %v6538, 16
      %v7050 = vrot.slane %v7048, 5
      %v7051 = vsel %vm1479, %v7046, %v7050
      %v7052 = vshrl.u32 %v6538, 16
      %v7054 = vrot.slane %v7052, 4
      %v7055 = vor.u32 %v7054, %v7050
      %v7056 = vrot.slane %v7055, 4
      %v7058 = vshll.u32 %v6539, 16
      %v7060 = vrot.slane %v7058, 5
      %v7061 = vsel %vm1479, %v7056, %v7060
      %v7063 = vshrl.u32 %v6540, 16
      %v7065 = vrot.slane %v7063, 4
      %v7066 = vshll.u32 %v6540, 16
      %v7068 = vrot.slane %v7066, 5
      %v7069 = vor.u32 %v7065, %v7068
      %v7070 = vrot.slane %v7069, 4
      %v7072 = vshll.u32 %v6541, 16
      %v7074 = vrot.slane %v7072, 5
      %v7075 = vsel %vm1479, %v7070, %v7074
      %v7076 = vshrl.u32 %v6541, 16
      %v7078 = vrot.slane %v7076, 4
      %v7079 = vor.u32 %v7078, %v7074
      %v7080 = vrot.slane %v7079, 4
      %v7082 = vshll.u32 %v6542, 16
      %v7084 = vrot.slane %v7082, 5
      %v7085 = vsel %vm1479, %v7080, %v7084
      %v7086 = vshrl.u32 %v6542, 16
      %v7088 = vrot.slane %v7086, 4
      %v7089 = vor.u32 %v7088, %v7084
      %v7090 = vrot.slane %v7089, 4
      %v7092 = vshll.u32 %v6543, 16
      %v7094 = vrot.slane %v7092, 5
      %v7095 = vsel %vm1479, %v7090, %v7094
      %7144 = vst [vmem:[#allocation3 + $0x8] sm:$0xf] %v6565
      %7145 = vst [vmem:[#allocation3 + $0x2c] sm:$0xf] %v6575
      %7146 = vst [vmem:[#allocation3 + $0x50] sm:$0xf] %v6585
      %7147 = vst [vmem:[#allocation3 + $0x74] sm:$0xf] %v6599
      %7148 = vst [vmem:[#allocation3 + $0x98] sm:$0xf] %v6609
      %7149 = vst [vmem:[#allocation3 + $0xbc] sm:$0xf] %v6619
      %7150 = vst [vmem:[#allocation3 + $0xe0] sm:$0xf] %v6633
      %7151 = vst [vmem:[#allocation3 + $0x104] sm:$0xf] %v6643
      %7152 = vst [vmem:[#allocation3 + $0x128] sm:$0xf] %v6653
      %7153 = vst [vmem:[#allocation3 + $0x14c] sm:$0xf] %v6667
      %7154 = vst [vmem:[#allocation3 + $0x170] sm:$0xf] %v6677
      %7155 = vst [vmem:[#allocation3 + $0x194] sm:$0xf] %v6687
      %7156 = vst [vmem:[#allocation3 + $0x1b8] sm:$0xf] %v6701
      %7157 = vst [vmem:[#allocation3 + $0x1dc] sm:$0xf] %v6711
      %7158 = vst [vmem:[#allocation3 + $0x200] sm:$0xf] %v6721
      %7159 = vst [vmem:[#allocation3 + $0x224] sm:$0xf] %v6735
      %7160 = vst [vmem:[#allocation3 + $0x248] sm:$0xf] %v6745
      %7161 = vst [vmem:[#allocation3 + $0x26c] sm:$0xf] %v6755
      %7162 = vst [vmem:[#allocation3 + $0x290] sm:$0xf] %v6769
      %7163 = vst [vmem:[#allocation3 + $0x2b4] sm:$0xf] %v6779
      %7164 = vst [vmem:[#allocation3 + $0x2d8] sm:$0xf] %v6789
      %7165 = vst [vmem:[#allocation3 + $0x2fc] sm:$0xf] %v6803
      %7166 = vst [vmem:[#allocation3 + $0x320] sm:$0xf] %v6813
      %7167 = vst [vmem:[#allocation3 + $0x344] sm:$0xf] %v6823
      %7168 = vst [vmem:[#allocation3 + $0x368] sm:$0xf] %v6837
      %7169 = vst [vmem:[#allocation3 + $0x38c] sm:$0xf] %v6847
      %7170 = vst [vmem:[#allocation3 + $0x3b0] sm:$0xf] %v6857
      %7171 = vst [vmem:[#allocation3 + $0x3d4] sm:$0xf] %v6871
      %7172 = vst [vmem:[#allocation3 + $0x3f8] sm:$0xf] %v6881
      %7173 = vst [vmem:[#allocation3 + $0x41c] sm:$0xf] %v6891
      %7174 = vst [vmem:[#allocation3 + $0x440] sm:$0xf] %v6905
      %7175 = vst [vmem:[#allocation3 + $0x464] sm:$0xf] %v6915
      %7176 = vst [vmem:[#allocation3 + $0x488] sm:$0xf] %v6925
      %7177 = vst [vmem:[#allocation3 + $0x4ac] sm:$0xf] %v6939
      %7178 = vst [vmem:[#allocation3 + $0x4d0] sm:$0xf] %v6949
      %7179 = vst [vmem:[#allocation3 + $0x4f4] sm:$0xf] %v6959
      %7180 = vst [vmem:[#allocation3 + $0x518] sm:$0xf] %v6973
      %7181 = vst [vmem:[#allocation3 + $0x53c] sm:$0xf] %v6983
      %7182 = vst [vmem:[#allocation3 + $0x560] sm:$0xf] %v6993
      %7183 = vst [vmem:[#allocation3 + $0x584] sm:$0xf] %v7007
      %7184 = vst [vmem:[#allocation3 + $0x5a8] sm:$0xf] %v7017
      %7185 = vst [vmem:[#allocation3 + $0x5cc] sm:$0xf] %v7027
      %7186 = vst [vmem:[#allocation3 + $0x5f0] sm:$0xf] %v7041
      %7187 = vst [vmem:[#allocation3 + $0x614] sm:$0xf] %v7051
      %7188 = vst [vmem:[#allocation3 + $0x638] sm:$0xf] %v7061
      %7189 = vst [vmem:[#allocation3 + $0x65c] sm:$0xf] %v7075
      %7190 = vst [vmem:[#allocation3 + $0x680] sm:$0xf] %v7085
      %7191 = vst [vmem:[#allocation3 + $0x6a4] sm:$0xf] %v7095
      %v7193 = vshrl.u32 %v6544, 16
      %v7195 = vrot.slane %v7193, 4
      %v7196 = vshll.u32 %v6544, 16
      %v7198 = vrot.slane %v7196, 5
      %v7199 = vor.u32 %v7195, %v7198
      %v7200 = vrot.slane %v7199, 4
      %v7202 = vshll.u32 %v6545, 16
      %v7204 = vrot.slane %v7202, 5
      %v7205 = vsel %vm1479, %v7200, %v7204
      %v7206 = vshrl.u32 %v6545, 16
      %v7208 = vrot.slane %v7206, 4
      %v7209 = vor.u32 %v7208, %v7204
      %v7210 = vrot.slane %v7209, 4
      %v7212 = vshll.u32 %v6546, 16
      %v7214 = vrot.slane %v7212, 5
      %v7215 = vsel %vm1479, %v7210, %v7214
      %v7216 = vshrl.u32 %v6546, 16
      %v7218 = vrot.slane %v7216, 4
      %v7219 = vor.u32 %v7218, %v7214
      %v7220 = vrot.slane %v7219, 4
      %v7222 = vshll.u32 %v6547, 16
      %v7224 = vrot.slane %v7222, 5
      %v7225 = vsel %vm1479, %v7220, %v7224
      %7229 = vst [vmem:[#allocation3 + $0x14] sm:$0xf] %v6599
      %7230 = vst [vmem:[#allocation3 + $0x38] sm:$0xf] %v6609
      %7231 = vst [vmem:[#allocation3 + $0x5c] sm:$0xf] %v6619
      %7232 = vst [vmem:[#allocation3 + $0x80] sm:$0xf] %v6633
      %7233 = vst [vmem:[#allocation3 + $0xa4] sm:$0xf] %v6643
      %7234 = vst [vmem:[#allocation3 + $0xc8] sm:$0xf] %v6653
      %7235 = vst [vmem:[#allocation3 + $0xec] sm:$0xf] %v6667
      %7236 = vst [vmem:[#allocation3 + $0x110] sm:$0xf] %v6677
      %7237 = vst [vmem:[#allocation3 + $0x134] sm:$0xf] %v6687
      %7238 = vst [vmem:[#allocation3 + $0x158] sm:$0xf] %v6701
      %7239 = vst [vmem:[#allocation3 + $0x17c] sm:$0xf] %v6711
      %7240 = vst [vmem:[#allocation3 + $0x1a0] sm:$0xf] %v6721
      %7241 = vst [vmem:[#allocation3 + $0x1c4] sm:$0xf] %v6735
      %7242 = vst [vmem:[#allocation3 + $0x1e8] sm:$0xf] %v6745
      %7243 = vst [vmem:[#allocation3 + $0x20c] sm:$0xf] %v6755
      %7244 = vst [vmem:[#allocation3 + $0x230] sm:$0xf] %v6769
      %7245 = vst [vmem:[#allocation3 + $0x254] sm:$0xf] %v6779
      %7246 = vst [vmem:[#allocation3 + $0x278] sm:$0xf] %v6789
      %7247 = vst [vmem:[#allocation3 + $0x29c] sm:$0xf] %v6803
      %7248 = vst [vmem:[#allocation3 + $0x2c0] sm:$0xf] %v6813
      %7249 = vst [vmem:[#allocation3 + $0x2e4] sm:$0xf] %v6823
      %7250 = vst [vmem:[#allocation3 + $0x308] sm:$0xf] %v6837
      %7251 = vst [vmem:[#allocation3 + $0x32c] sm:$0xf] %v6847
      %7252 = vst [vmem:[#allocation3 + $0x350] sm:$0xf] %v6857
      %7253 = vst [vmem:[#allocation3 + $0x374] sm:$0xf] %v6871
      %7254 = vst [vmem:[#allocation3 + $0x398] sm:$0xf] %v6881
      %7255 = vst [vmem:[#allocation3 + $0x3bc] sm:$0xf] %v6891
      %7256 = vst [vmem:[#allocation3 + $0x3e0] sm:$0xf] %v6905
      %7257 = vst [vmem:[#allocation3 + $0x404] sm:$0xf] %v6915
      %7258 = vst [vmem:[#allocation3 + $0x428] sm:$0xf] %v6925
      %7259 = vst [vmem:[#allocation3 + $0x44c] sm:$0xf] %v6939
      %7260 = vst [vmem:[#allocation3 + $0x470] sm:$0xf] %v6949
      %7261 = vst [vmem:[#allocation3 + $0x494] sm:$0xf] %v6959
      %7262 = vst [vmem:[#allocation3 + $0x4b8] sm:$0xf] %v6973
      %7263 = vst [vmem:[#allocation3 + $0x4dc] sm:$0xf] %v6983
      %7264 = vst [vmem:[#allocation3 + $0x500] sm:$0xf] %v6993
      %7265 = vst [vmem:[#allocation3 + $0x524] sm:$0xf] %v7007
      %7266 = vst [vmem:[#allocation3 + $0x548] sm:$0xf] %v7017
      %7267 = vst [vmem:[#allocation3 + $0x56c] sm:$0xf] %v7027
      %7268 = vst [vmem:[#allocation3 + $0x590] sm:$0xf] %v7041
      %7269 = vst [vmem:[#allocation3 + $0x5b4] sm:$0xf] %v7051
      %7270 = vst [vmem:[#allocation3 + $0x5d8] sm:$0xf] %v7061
      %7271 = vst [vmem:[#allocation3 + $0x5fc] sm:$0xf] %v7075
      %7272 = vst [vmem:[#allocation3 + $0x620] sm:$0xf] %v7085
      %7273 = vst [vmem:[#allocation3 + $0x644] sm:$0xf] %v7095
      %7274 = vst [vmem:[#allocation3 + $0x668] sm:$0xf] %v7205
      %7275 = vst [vmem:[#allocation3 + $0x68c] sm:$0xf] %v7215
      %7276 = vst [vmem:[#allocation3 + $0x6b0] sm:$0xf] %v7225
      %v7278 = vshrl.u32 %v6548, 16
      %v7280 = vrot.slane %v7278, 4
      %v7281 = vshll.u32 %v6548, 16
      %v7283 = vrot.slane %v7281, 5
      %v7284 = vor.u32 %v7280, %v7283
      %v7285 = vrot.slane %v7284, 4
      %v7287 = vshll.u32 %v6549, 16
      %v7289 = vrot.slane %v7287, 5
      %v7290 = vsel %vm1479, %v7285, %v7289
      %v7291 = vshrl.u32 %v6549, 16
      %v7293 = vrot.slane %v7291, 4
      %v7294 = vor.u32 %v7293, %v7289
      %v7295 = vrot.slane %v7294, 4
      %v7297 = vshll.u32 %v6550, 16
      %v7299 = vrot.slane %v7297, 5
      %v7300 = vsel %vm1479, %v7295, %v7299
      %v7301 = vshrl.u32 %v6550, 16
      %v7303 = vrot.slane %v7301, 4
      %v7304 = vor.u32 %v7303, %v7299
      %v7305 = vrot.slane %v7304, 4
      %v7307 = vshll.u32 %v6551, 16
      %v7309 = vrot.slane %v7307, 5
      %v7310 = vsel %vm1479, %v7305, %v7309
      %7314 = vst [vmem:[#allocation3 + $0x20] sm:$0xf] %v6633
      %7315 = vst [vmem:[#allocation3 + $0x44] sm:$0xf] %v6643
      %7316 = vst [vmem:[#allocation3 + $0x68] sm:$0xf] %v6653
      %7317 = vst [vmem:[#allocation3 + $0x8c] sm:$0xf] %v6667
      %7318 = vst [vmem:[#allocation3 + $0xb0] sm:$0xf] %v6677
      %7319 = vst [vmem:[#allocation3 + $0xd4] sm:$0xf] %v6687
      %7320 = vst [vmem:[#allocation3 + $0xf8] sm:$0xf] %v6701
      %7321 = vst [vmem:[#allocation3 + $0x11c] sm:$0xf] %v6711
      %7322 = vst [vmem:[#allocation3 + $0x140] sm:$0xf] %v6721
      %7323 = vst [vmem:[#allocation3 + $0x164] sm:$0xf] %v6735
      %7324 = vst [vmem:[#allocation3 + $0x188] sm:$0xf] %v6745
      %7325 = vst [vmem:[#allocation3 + $0x1ac] sm:$0xf] %v6755
      %7326 = vst [vmem:[#allocation3 + $0x1d0] sm:$0xf] %v6769
      %7327 = vst [vmem:[#allocation3 + $0x1f4] sm:$0xf] %v6779
      %7328 = vst [vmem:[#allocation3 + $0x218] sm:$0xf] %v6789
      %7329 = vst [vmem:[#allocation3 + $0x23c] sm:$0xf] %v6803
      %7330 = vst [vmem:[#allocation3 + $0x260] sm:$0xf] %v6813
      %7331 = vst [vmem:[#allocation3 + $0x284] sm:$0xf] %v6823
      %7332 = vst [vmem:[#allocation3 + $0x2a8] sm:$0xf] %v6837
      %7333 = vst [vmem:[#allocation3 + $0x2cc] sm:$0xf] %v6847
      %7334 = vst [vmem:[#allocation3 + $0x2f0] sm:$0xf] %v6857
      %7335 = vst [vmem:[#allocation3 + $0x314] sm:$0xf] %v6871
      %7336 = vst [vmem:[#allocation3 + $0x338] sm:$0xf] %v6881
      %7337 = vst [vmem:[#allocation3 + $0x35c] sm:$0xf] %v6891
      %7338 = vst [vmem:[#allocation3 + $0x380] sm:$0xf] %v6905
      %7339 = vst [vmem:[#allocation3 + $0x3a4] sm:$0xf] %v6915
      %7340 = vst [vmem:[#allocation3 + $0x3c8] sm:$0xf] %v6925
      %7341 = vst [vmem:[#allocation3 + $0x3ec] sm:$0xf] %v6939
      %7342 = vst [vmem:[#allocation3 + $0x410] sm:$0xf] %v6949
      %7343 = vst [vmem:[#allocation3 + $0x434] sm:$0xf] %v6959
      %7344 = vst [vmem:[#allocation3 + $0x458] sm:$0xf] %v6973
      %7345 = vst [vmem:[#allocation3 + $0x47c] sm:$0xf] %v6983
      %7346 = vst [vmem:[#allocation3 + $0x4a0] sm:$0xf] %v6993
      %7347 = vst [vmem:[#allocation3 + $0x4c4] sm:$0xf] %v7007
      %7348 = vst [vmem:[#allocation3 + $0x4e8] sm:$0xf] %v7017
      %7349 = vst [vmem:[#allocation3 + $0x50c] sm:$0xf] %v7027
      %7350 = vst [vmem:[#allocation3 + $0x530] sm:$0xf] %v7041
      %7351 = vst [vmem:[#allocation3 + $0x554] sm:$0xf] %v7051
      %7352 = vst [vmem:[#allocation3 + $0x578] sm:$0xf] %v7061
      %7353 = vst [vmem:[#allocation3 + $0x59c] sm:$0xf] %v7075
      %7354 = vst [vmem:[#allocation3 + $0x5c0] sm:$0xf] %v7085
      %7355 = vst [vmem:[#allocation3 + $0x5e4] sm:$0xf] %v7095
      %7356 = vst [vmem:[#allocation3 + $0x608] sm:$0xf] %v7205
      %7357 = vst [vmem:[#allocation3 + $0x62c] sm:$0xf] %v7215
      %7358 = vst [vmem:[#allocation3 + $0x650] sm:$0xf] %v7225
      %7359 = vst [vmem:[#allocation3 + $0x674] sm:$0xf] %v7290
      %7360 = vst [vmem:[#allocation3 + $0x698] sm:$0xf] %v7300
      %7361 = vst [vmem:[#allocation3 + $0x6bc] sm:$0xf] %v7310
      %v7362 = vld [vmem:[#allocation3] sm:$0xff]
      %v7363 = vld [vmem:[#allocation3 + $0x8] sm:$0xff]
      %v7364 = vld [vmem:[#allocation3 + $0x10] sm:$0xff]
      %v7365 = vld [vmem:[#allocation3 + $0x18] sm:$0xff]
      %v7366 = vld [vmem:[#allocation3 + $0x20] sm:$0xf]
      %v7367 = vld [vmem:[#allocation3 + $0x24] sm:$0xff]
      %v7368 = vld [vmem:[#allocation3 + $0x2c] sm:$0xff]
      %v7369 = vld [vmem:[#allocation3 + $0x34] sm:$0xff]
      %v7370 = vld [vmem:[#allocation3 + $0x3c] sm:$0xff]
      %v7371 = vld [vmem:[#allocation3 + $0x44] sm:$0xf]
      %v7372 = vld [vmem:[#allocation3 + $0x48] sm:$0xff]
      %v7373 = vld [vmem:[#allocation3 + $0x50] sm:$0xff]
      %v7374 = vld [vmem:[#allocation3 + $0x58] sm:$0xff]
      %v7375 = vld [vmem:[#allocation3 + $0x60] sm:$0xff]
      %v7376 = vld [vmem:[#allocation3 + $0x68] sm:$0xf]
      %v7377 = vld [vmem:[#allocation3 + $0x6c] sm:$0xff]
      %v7378 = vld [vmem:[#allocation3 + $0x74] sm:$0xff]
      %v7379 = vld [vmem:[#allocation3 + $0x7c] sm:$0xff]
      %v7380 = vld [vmem:[#allocation3 + $0x84] sm:$0xff]
      %v7381 = vld [vmem:[#allocation3 + $0x8c] sm:$0xf]
      %v7382 = vld [vmem:[#allocation3 + $0x90] sm:$0xff]
      %v7383 = vld [vmem:[#allocation3 + $0x98] sm:$0xff]
      %v7384 = vld [vmem:[#allocation3 + $0xa0] sm:$0xff]
      %v7385 = vld [vmem:[#allocation3 + $0xa8] sm:$0xff]
      %v7386 = vld [vmem:[#allocation3 + $0xb0] sm:$0xf]
      %v7387 = vld [vmem:[#allocation3 + $0xb4] sm:$0xff]
      %v7388 = vld [vmem:[#allocation3 + $0xbc] sm:$0xff]
      %v7389 = vld [vmem:[#allocation3 + $0xc4] sm:$0xff]
      %v7390 = vld [vmem:[#allocation3 + $0xcc] sm:$0xff]
      %v7391 = vld [vmem:[#allocation3 + $0xd4] sm:$0xf]
      %v7392 = vld [vmem:[#allocation3 + $0xd8] sm:$0xff]
      %v7393 = vld [vmem:[#allocation3 + $0xe0] sm:$0xff]
      %v7394 = vld [vmem:[#allocation3 + $0xe8] sm:$0xff]
      %v7395 = vld [vmem:[#allocation3 + $0xf0] sm:$0xff]
      %v7396 = vld [vmem:[#allocation3 + $0xf8] sm:$0xf]
      %v7397 = vld [vmem:[#allocation3 + $0xfc] sm:$0xff]
      %v7398 = vld [vmem:[#allocation3 + $0x104] sm:$0xff]
      %v7399 = vld [vmem:[#allocation3 + $0x10c] sm:$0xff]
      %v7400 = vld [vmem:[#allocation3 + $0x114] sm:$0xff]
      %v7401 = vld [vmem:[#allocation3 + $0x11c] sm:$0xf]
      %v7402 = vld [vmem:[#allocation3 + $0x120] sm:$0xff]
      %v7403 = vld [vmem:[#allocation3 + $0x128] sm:$0xff]
      %v7404 = vld [vmem:[#allocation3 + $0x130] sm:$0xff]
      %v7405 = vld [vmem:[#allocation3 + $0x138] sm:$0xff]
      %v7406 = vld [vmem:[#allocation3 + $0x140] sm:$0xf]
      %v7407 = vld [vmem:[#allocation3 + $0x144] sm:$0xff]
      %v7408 = vld [vmem:[#allocation3 + $0x14c] sm:$0xff]
      %v7409 = vld [vmem:[#allocation3 + $0x154] sm:$0xff]
      %v7410 = vld [vmem:[#allocation3 + $0x15c] sm:$0xff]
      %v7411 = vld [vmem:[#allocation3 + $0x164] sm:$0xf]
      %v7412 = vld [vmem:[#allocation3 + $0x168] sm:$0xff]
      %v7413 = vld [vmem:[#allocation3 + $0x170] sm:$0xff]
      %v7414 = vld [vmem:[#allocation3 + $0x178] sm:$0xff]
      %v7415 = vld [vmem:[#allocation3 + $0x180] sm:$0xff]
      %v7416 = vld [vmem:[#allocation3 + $0x188] sm:$0xf]
      %v7417 = vld [vmem:[#allocation3 + $0x18c] sm:$0xff]
      %v7418 = vld [vmem:[#allocation3 + $0x194] sm:$0xff]
      %v7419 = vld [vmem:[#allocation3 + $0x19c] sm:$0xff]
      %v7420 = vld [vmem:[#allocation3 + $0x1a4] sm:$0xff]
      %v7421 = vld [vmem:[#allocation3 + $0x1ac] sm:$0xf]
      %v7422 = vld [vmem:[#allocation3 + $0x1b0] sm:$0xff]
      %v7423 = vld [vmem:[#allocation3 + $0x1b8] sm:$0xff]
      %v7424 = vld [vmem:[#allocation3 + $0x1c0] sm:$0xff]
      %v7425 = vld [vmem:[#allocation3 + $0x1c8] sm:$0xff]
      %v7426 = vld [vmem:[#allocation3 + $0x1d0] sm:$0xf]
      %v7427 = vld [vmem:[#allocation3 + $0x1d4] sm:$0xff]
      %v7428 = vld [vmem:[#allocation3 + $0x1dc] sm:$0xff]
      %v7429 = vld [vmem:[#allocation3 + $0x1e4] sm:$0xff]
      %v7430 = vld [vmem:[#allocation3 + $0x1ec] sm:$0xff]
      %v7431 = vld [vmem:[#allocation3 + $0x1f4] sm:$0xf]
      %v7432 = vld [vmem:[#allocation3 + $0x1f8] sm:$0xff]
      %v7433 = vld [vmem:[#allocation3 + $0x200] sm:$0xff]
      %v7434 = vld [vmem:[#allocation3 + $0x208] sm:$0xff]
      %v7435 = vld [vmem:[#allocation3 + $0x210] sm:$0xff]
      %v7436 = vld [vmem:[#allocation3 + $0x218] sm:$0xf]
      %v7437 = vld [vmem:[#allocation3 + $0x21c] sm:$0xff]
      %v7438 = vld [vmem:[#allocation3 + $0x224] sm:$0xff]
      %v7439 = vld [vmem:[#allocation3 + $0x22c] sm:$0xff]
      %v7440 = vld [vmem:[#allocation3 + $0x234] sm:$0xff]
      %v7441 = vld [vmem:[#allocation3 + $0x23c] sm:$0xf]
      %v7442 = vld [vmem:[#allocation3 + $0x240] sm:$0xff]
      %v7443 = vld [vmem:[#allocation3 + $0x248] sm:$0xff]
      %v7444 = vld [vmem:[#allocation3 + $0x250] sm:$0xff]
      %v7445 = vld [vmem:[#allocation3 + $0x258] sm:$0xff]
      %v7446 = vld [vmem:[#allocation3 + $0x260] sm:$0xf]
      %v7447 = vld [vmem:[#allocation3 + $0x264] sm:$0xff]
      %v7448 = vld [vmem:[#allocation3 + $0x26c] sm:$0xff]
      %v7449 = vld [vmem:[#allocation3 + $0x274] sm:$0xff]
      %v7450 = vld [vmem:[#allocation3 + $0x27c] sm:$0xff]
      %v7451 = vld [vmem:[#allocation3 + $0x284] sm:$0xf]
      %v7452 = vld [vmem:[#allocation3 + $0x288] sm:$0xff]
      %v7453 = vld [vmem:[#allocation3 + $0x290] sm:$0xff]
      %v7454 = vld [vmem:[#allocation3 + $0x298] sm:$0xff]
      %v7455 = vld [vmem:[#allocation3 + $0x2a0] sm:$0xff]
      %v7456 = vld [vmem:[#allocation3 + $0x2a8] sm:$0xf]
      %v7457 = vld [vmem:[#allocation3 + $0x2ac] sm:$0xff]
      %v7458 = vld [vmem:[#allocation3 + $0x2b4] sm:$0xff]
      %v7459 = vld [vmem:[#allocation3 + $0x2bc] sm:$0xff]
      %v7460 = vld [vmem:[#allocation3 + $0x2c4] sm:$0xff]
      %v7461 = vld [vmem:[#allocation3 + $0x2cc] sm:$0xf]
      %v7462 = vld [vmem:[#allocation3 + $0x2d0] sm:$0xff]
      %v7463 = vld [vmem:[#allocation3 + $0x2d8] sm:$0xff]
      %v7464 = vld [vmem:[#allocation3 + $0x2e0] sm:$0xff]
      %v7465 = vld [vmem:[#allocation3 + $0x2e8] sm:$0xff]
      %v7466 = vld [vmem:[#allocation3 + $0x2f0] sm:$0xf]
      %v7467 = vld [vmem:[#allocation3 + $0x2f4] sm:$0xff]
      %v7468 = vld [vmem:[#allocation3 + $0x2fc] sm:$0xff]
      %v7469 = vld [vmem:[#allocation3 + $0x304] sm:$0xff]
      %v7470 = vld [vmem:[#allocation3 + $0x30c] sm:$0xff]
      %v7471 = vld [vmem:[#allocation3 + $0x314] sm:$0xf]
      %v7472 = vld [vmem:[#allocation3 + $0x318] sm:$0xff]
      %v7473 = vld [vmem:[#allocation3 + $0x320] sm:$0xff]
      %v7474 = vld [vmem:[#allocation3 + $0x328] sm:$0xff]
      %v7475 = vld [vmem:[#allocation3 + $0x330] sm:$0xff]
      %v7476 = vld [vmem:[#allocation3 + $0x338] sm:$0xf]
      %v7477 = vld [vmem:[#allocation3 + $0x33c] sm:$0xff]
      %v7478 = vld [vmem:[#allocation3 + $0x344] sm:$0xff]
      %v7479 = vld [vmem:[#allocation3 + $0x34c] sm:$0xff]
      %v7480 = vld [vmem:[#allocation3 + $0x354] sm:$0xff]
      %v7481 = vld [vmem:[#allocation3 + $0x35c] sm:$0xf]
      %v7482 = vld [vmem:[#allocation3 + $0x360] sm:$0xff]
      %v7483 = vld [vmem:[#allocation3 + $0x368] sm:$0xff]
      %v7484 = vld [vmem:[#allocation3 + $0x370] sm:$0xff]
      %v7485 = vld [vmem:[#allocation3 + $0x378] sm:$0xff]
      %v7486 = vld [vmem:[#allocation3 + $0x380] sm:$0xf]
      %v7487 = vld [vmem:[#allocation3 + $0x384] sm:$0xff]
      %v7488 = vld [vmem:[#allocation3 + $0x38c] sm:$0xff]
      %v7489 = vld [vmem:[#allocation3 + $0x394] sm:$0xff]
      %v7490 = vld [vmem:[#allocation3 + $0x39c] sm:$0xff]
      %v7491 = vld [vmem:[#allocation3 + $0x3a4] sm:$0xf]
      %v7492 = vld [vmem:[#allocation3 + $0x3a8] sm:$0xff]
      %v7493 = vld [vmem:[#allocation3 + $0x3b0] sm:$0xff]
      %v7494 = vld [vmem:[#allocation3 + $0x3b8] sm:$0xff]
      %v7495 = vld [vmem:[#allocation3 + $0x3c0] sm:$0xff]
      %v7496 = vld [vmem:[#allocation3 + $0x3c8] sm:$0xf]
      %v7497 = vld [vmem:[#allocation3 + $0x3cc] sm:$0xff]
      %v7498 = vld [vmem:[#allocation3 + $0x3d4] sm:$0xff]
      %v7499 = vld [vmem:[#allocation3 + $0x3dc] sm:$0xff]
      %v7500 = vld [vmem:[#allocation3 + $0x3e4] sm:$0xff]
      %v7501 = vld [vmem:[#allocation3 + $0x3ec] sm:$0xf]
      %v7502 = vld [vmem:[#allocation3 + $0x3f0] sm:$0xff]
      %v7503 = vld [vmem:[#allocation3 + $0x3f8] sm:$0xff]
      %v7504 = vld [vmem:[#allocation3 + $0x400] sm:$0xff]
      %v7505 = vld [vmem:[#allocation3 + $0x408] sm:$0xff]
      %v7506 = vld [vmem:[#allocation3 + $0x410] sm:$0xf]
      %v7507 = vld [vmem:[#allocation3 + $0x414] sm:$0xff]
      %v7508 = vld [vmem:[#allocation3 + $0x41c] sm:$0xff]
      %v7509 = vld [vmem:[#allocation3 + $0x424] sm:$0xff]
      %v7510 = vld [vmem:[#allocation3 + $0x42c] sm:$0xff]
      %v7511 = vld [vmem:[#allocation3 + $0x434] sm:$0xf]
      %v7512 = vld [vmem:[#allocation3 + $0x438] sm:$0xff]
      %v7513 = vld [vmem:[#allocation3 + $0x440] sm:$0xff]
      %v7514 = vld [vmem:[#allocation3 + $0x448] sm:$0xff]
      %v7515 = vld [vmem:[#allocation3 + $0x450] sm:$0xff]
      %v7516 = vld [vmem:[#allocation3 + $0x458] sm:$0xf]
      %v7517 = vld [vmem:[#allocation3 + $0x45c] sm:$0xff]
      %v7518 = vld [vmem:[#allocation3 + $0x464] sm:$0xff]
      %v7519 = vld [vmem:[#allocation3 + $0x46c] sm:$0xff]
      %v7520 = vld [vmem:[#allocation3 + $0x474] sm:$0xff]
      %v7521 = vld [vmem:[#allocation3 + $0x47c] sm:$0xf]
      %v7522 = vld [vmem:[#allocation3 + $0x480] sm:$0xff]
      %v7523 = vld [vmem:[#allocation3 + $0x488] sm:$0xff]
      %v7524 = vld [vmem:[#allocation3 + $0x490] sm:$0xff]
      %v7525 = vld [vmem:[#allocation3 + $0x498] sm:$0xff]
      %v7526 = vld [vmem:[#allocation3 + $0x4a0] sm:$0xf]
      %v7527 = vld [vmem:[#allocation3 + $0x4a4] sm:$0xff]
      %v7528 = vld [vmem:[#allocation3 + $0x4ac] sm:$0xff]
      %v7529 = vld [vmem:[#allocation3 + $0x4b4] sm:$0xff]
      %v7530 = vld [vmem:[#allocation3 + $0x4bc] sm:$0xff]
      %v7531 = vld [vmem:[#allocation3 + $0x4c4] sm:$0xf]
      %v7532 = vld [vmem:[#allocation3 + $0x4c8] sm:$0xff]
      %v7533 = vld [vmem:[#allocation3 + $0x4d0] sm:$0xff]
      %v7534 = vld [vmem:[#allocation3 + $0x4d8] sm:$0xff]
      %v7535 = vld [vmem:[#allocation3 + $0x4e0] sm:$0xff]
      %v7536 = vld [vmem:[#allocation3 + $0x4e8] sm:$0xf]
      %v7537 = vld [vmem:[#allocation3 + $0x4ec] sm:$0xff]
      %v7538 = vld [vmem:[#allocation3 + $0x4f4] sm:$0xff]
      %v7539 = vld [vmem:[#allocation3 + $0x4fc] sm:$0xff]
      %v7540 = vld [vmem:[#allocation3 + $0x504] sm:$0xff]
      %v7541 = vld [vmem:[#allocation3 + $0x50c] sm:$0xf]
      %v7542 = vld [vmem:[#allocation3 + $0x510] sm:$0xff]
      %v7543 = vld [vmem:[#allocation3 + $0x518] sm:$0xff]
      %v7544 = vld [vmem:[#allocation3 + $0x520] sm:$0xff]
      %v7545 = vld [vmem:[#allocation3 + $0x528] sm:$0xff]
      %v7546 = vld [vmem:[#allocation3 + $0x530] sm:$0xf]
      %v7547 = vld [vmem:[#allocation3 + $0x534] sm:$0xff]
      %v7548 = vld [vmem:[#allocation3 + $0x53c] sm:$0xff]
      %v7549 = vld [vmem:[#allocation3 + $0x544] sm:$0xff]
      %v7550 = vld [vmem:[#allocation3 + $0x54c] sm:$0xff]
      %v7551 = vld [vmem:[#allocation3 + $0x554] sm:$0xf]
      %v7552 = vld [vmem:[#allocation3 + $0x558] sm:$0xff]
      %v7553 = vld [vmem:[#allocation3 + $0x560] sm:$0xff]
      %v7554 = vld [vmem:[#allocation3 + $0x568] sm:$0xff]
      %v7555 = vld [vmem:[#allocation3 + $0x570] sm:$0xff]
      %v7556 = vld [vmem:[#allocation3 + $0x578] sm:$0xf]
      %v7557 = vld [vmem:[#allocation3 + $0x57c] sm:$0xff]
      %v7558 = vld [vmem:[#allocation3 + $0x584] sm:$0xff]
      %v7559 = vld [vmem:[#allocation3 + $0x58c] sm:$0xff]
      %v7560 = vld [vmem:[#allocation3 + $0x594] sm:$0xff]
      %v7561 = vld [vmem:[#allocation3 + $0x59c] sm:$0xf]
      %v7562 = vld [vmem:[#allocation3 + $0x5a0] sm:$0xff]
      %v7563 = vld [vmem:[#allocation3 + $0x5a8] sm:$0xff]
      %v7564 = vld [vmem:[#allocation3 + $0x5b0] sm:$0xff]
      %v7565 = vld [vmem:[#allocation3 + $0x5b8] sm:$0xff]
      %v7566 = vld [vmem:[#allocation3 + $0x5c0] sm:$0xf]
      %v7567 = vld [vmem:[#allocation3 + $0x5c4] sm:$0xff]
      %v7568 = vld [vmem:[#allocation3 + $0x5cc] sm:$0xff]
      %v7569 = vld [vmem:[#allocation3 + $0x5d4] sm:$0xff]
      %v7570 = vld [vmem:[#allocation3 + $0x5dc] sm:$0xff]
      %v7571 = vld [vmem:[#allocation3 + $0x5e4] sm:$0xf]
      %v7572 = vld [vmem:[#allocation3 + $0x5e8] sm:$0xff]
      %v7573 = vld [vmem:[#allocation3 + $0x5f0] sm:$0xff]
      %v7574 = vld [vmem:[#allocation3 + $0x5f8] sm:$0xff]
      %v7575 = vld [vmem:[#allocation3 + $0x600] sm:$0xff]
      %v7576 = vld [vmem:[#allocation3 + $0x608] sm:$0xf]
      %v7577 = vld [vmem:[#allocation3 + $0x60c] sm:$0xff]
      %v7578 = vld [vmem:[#allocation3 + $0x614] sm:$0xff]
      %v7579 = vld [vmem:[#allocation3 + $0x61c] sm:$0xff]
      %v7580 = vld [vmem:[#allocation3 + $0x624] sm:$0xff]
      %v7581 = vld [vmem:[#allocation3 + $0x62c] sm:$0xf]
      %v7582 = vld [vmem:[#allocation3 + $0x630] sm:$0xff]
      %v7583 = vld [vmem:[#allocation3 + $0x638] sm:$0xff]
      %v7584 = vld [vmem:[#allocation3 + $0x640] sm:$0xff]
      %v7585 = vld [vmem:[#allocation3 + $0x648] sm:$0xff]
      %v7586 = vld [vmem:[#allocation3 + $0x650] sm:$0xf]
      %v7587 = vld [vmem:[#allocation3 + $0x654] sm:$0xff]
      %v7588 = vld [vmem:[#allocation3 + $0x65c] sm:$0xff]
      %v7589 = vld [vmem:[#allocation3 + $0x664] sm:$0xff]
      %v7590 = vld [vmem:[#allocation3 + $0x66c] sm:$0xff]
      %v7591 = vld [vmem:[#allocation3 + $0x674] sm:$0xf]
      %v7592 = vld [vmem:[#allocation3 + $0x678] sm:$0xff]
      %v7593 = vld [vmem:[#allocation3 + $0x680] sm:$0xff]
      %v7594 = vld [vmem:[#allocation3 + $0x688] sm:$0xff]
      %v7595 = vld [vmem:[#allocation3 + $0x690] sm:$0xff]
      %v7596 = vld [vmem:[#allocation3 + $0x698] sm:$0xf]
      %v7597 = vld [vmem:[#allocation3 + $0x69c] sm:$0xff]
      %v7598 = vld [vmem:[#allocation3 + $0x6a4] sm:$0xff]
      %v7599 = vld [vmem:[#allocation3 + $0x6ac] sm:$0xff]
      %v7600 = vld [vmem:[#allocation3 + $0x6b4] sm:$0xff]
      %v7601 = vld [vmem:[#allocation3 + $0x6bc] sm:$0xf]
      %v7602 = vld [vmem:[%s2] sm:$0xf]
      %v7603 = vld [vmem:[%s2 + $0x4] sm:$0xf]
      %v7604 = vld [vmem:[%s2 + $0x8] sm:$0xf]
      %v7605 = vld [vmem:[%s2 + $0xc] sm:$0xf]
      %v7606 = vld [vmem:[%s2 + $0x10] sm:$0xf]
      %v7607 = vld [vmem:[%s2 + $0x14] sm:$0xf]
      %v7608 = vld [vmem:[%s2 + $0x18] sm:$0xf]
      %v7609 = vld [vmem:[%s2 + $0x1c] sm:$0xf]
      %v7610 = vld [vmem:[%s2 + $0x20] sm:$0xf]
      %v7611 = vld [vmem:[%s2 + $0x24] sm:$0xf]
      %v7612 = vld [vmem:[%s2 + $0x28] sm:$0xf]
      %v7613 = vld [vmem:[%s2 + $0x2c] sm:$0xf]
      %v7614 = vld [vmem:[%s2 + $0x30] sm:$0xf]
      %v7615 = vld [vmem:[%s2 + $0x34] sm:$0xf]
      %v7616 = vld [vmem:[%s2 + $0x38] sm:$0xf]
      %v7617 = vld [vmem:[%s2 + $0x3c] sm:$0xf]
      %v7618 = vld [vmem:[%s2 + $0x40] sm:$0xf]
      %v7619 = vld [vmem:[%s2 + $0x44] sm:$0xf]
      %v7620 = vld [vmem:[%s2 + $0x48] sm:$0xf]
      %v7621 = vld [vmem:[%s2 + $0x4c] sm:$0xf]
      %v7622 = vld [vmem:[%s2 + $0x50] sm:$0xf]
      %v7623 = vld [vmem:[%s2 + $0x54] sm:$0xf]
      %v7624 = vld [vmem:[%s2 + $0x58] sm:$0xf]
      %v7625 = vld [vmem:[%s2 + $0x5c] sm:$0xf]
      %v7626 = vld [vmem:[%s2 + $0x60] sm:$0xf]
      %v7627 = vld [vmem:[%s2 + $0x64] sm:$0xf]
      %v7628 = vld [vmem:[%s2 + $0x68] sm:$0xf]
      %v7629 = vld [vmem:[%s2 + $0x6c] sm:$0xf]
      %v7630 = vld [vmem:[%s2 + $0x70] sm:$0xf]
      %v7631 = vld [vmem:[%s2 + $0x74] sm:$0xf]
      %v7632 = vld [vmem:[%s2 + $0x78] sm:$0xf]
      %v7633 = vld [vmem:[%s2 + $0x7c] sm:$0xf]
      %v7634 = vld [vmem:[%s2 + $0x80] sm:$0xf]
      %v7635 = vld [vmem:[%s2 + $0x84] sm:$0xf]
      %v7636 = vld [vmem:[%s2 + $0x88] sm:$0xf]
      %v7637 = vld [vmem:[%s2 + $0x8c] sm:$0xf]
      %v7638 = vld [vmem:[%s2 + $0x90] sm:$0xf]
      %v7639 = vld [vmem:[%s2 + $0x94] sm:$0xf]
      %v7640 = vld [vmem:[%s2 + $0x98] sm:$0xf]
      %v7641 = vld [vmem:[%s2 + $0x9c] sm:$0xf]
      %v7642 = vld [vmem:[%s2 + $0xa0] sm:$0xf]
      %v7643 = vld [vmem:[%s2 + $0xa4] sm:$0xf]
      %v7644 = vld [vmem:[%s2 + $0xa8] sm:$0xf]
      %v7645 = vld [vmem:[%s2 + $0xac] sm:$0xf]
      %v7646 = vld [vmem:[%s2 + $0xb0] sm:$0xf]
      %v7647 = vld [vmem:[%s2 + $0xb4] sm:$0xf]
      %v7648 = vld [vmem:[%s2 + $0xb8] sm:$0xf]
      %v7649 = vld [vmem:[%s2 + $0xbc] sm:$0xf]
      %v7650 = vld [vmem:[%s2 + $0xc0] sm:$0xf]
      %v7651 = vld [vmem:[%s2 + $0xc4] sm:$0xf]
      %v7652 = vld [vmem:[%s2 + $0xc8] sm:$0xf]
      %v7653 = vld [vmem:[%s2 + $0xcc] sm:$0xf]
      %v7654 = vld [vmem:[%s2 + $0xd0] sm:$0xf]
      %v7655 = vld [vmem:[%s2 + $0xd4] sm:$0xf]
      %v7656 = vld [vmem:[%s2 + $0xd8] sm:$0xf]
      %v7657 = vld [vmem:[%s2 + $0xdc] sm:$0xf]
      %v7658 = vld [vmem:[%s2 + $0xe0] sm:$0xf]
      %v7659 = vld [vmem:[%s2 + $0xe4] sm:$0xf]
      %v7660 = vld [vmem:[%s2 + $0xe8] sm:$0xf]
      %v7661 = vld [vmem:[%s2 + $0xec] sm:$0xf]
      %v7662 = vld [vmem:[%s2 + $0xf0] sm:$0xf]
      %v7663 = vld [vmem:[%s2 + $0xf4] sm:$0xf]
      %v7664 = vld [vmem:[%s2 + $0xf8] sm:$0xf]
      %v7665 = vld [vmem:[%s2 + $0xfc] sm:$0xf]
      %v7666 = vld [vmem:[%s2 + $0x100] sm:$0xf]
      %v7667 = vld [vmem:[%s2 + $0x104] sm:$0xf]
      %v7668 = vld [vmem:[%s2 + $0x108] sm:$0xf]
      %v7669 = vld [vmem:[%s2 + $0x10c] sm:$0xf]
      %v7670 = vld [vmem:[%s2 + $0x110] sm:$0xf]
      %v7671 = vld [vmem:[%s2 + $0x114] sm:$0xf]
      %v7672 = vld [vmem:[%s2 + $0x118] sm:$0xf]
      %v7673 = vld [vmem:[%s2 + $0x11c] sm:$0xf]
      %v7674 = vld [vmem:[%s2 + $0x120] sm:$0xf]
      %v7675 = vld [vmem:[%s2 + $0x124] sm:$0xf]
      %v7676 = vld [vmem:[%s2 + $0x128] sm:$0xf]
      %v7677 = vld [vmem:[%s2 + $0x12c] sm:$0xf]
      %v7678 = vld [vmem:[%s2 + $0x130] sm:$0xf]
      %v7679 = vld [vmem:[%s2 + $0x134] sm:$0xf]
      %v7680 = vld [vmem:[%s2 + $0x138] sm:$0xf]
      %v7681 = vld [vmem:[%s2 + $0x13c] sm:$0xf]
      %v7682 = vld [vmem:[%s2 + $0x140] sm:$0xf]
      %v7683 = vld [vmem:[%s2 + $0x144] sm:$0xf]
      %v7684 = vld [vmem:[%s2 + $0x148] sm:$0xf]
      %v7685 = vld [vmem:[%s2 + $0x14c] sm:$0xf]
      %v7686 = vld [vmem:[%s2 + $0x150] sm:$0xf]
      %v7687 = vld [vmem:[%s2 + $0x154] sm:$0xf]
      %v7688 = vld [vmem:[%s2 + $0x158] sm:$0xf]
      %v7689 = vld [vmem:[%s2 + $0x15c] sm:$0xf]
      %v7690 = vld [vmem:[%s2 + $0x160] sm:$0xf]
      %v7691 = vld [vmem:[%s2 + $0x164] sm:$0xf]
      %v7692 = vld [vmem:[%s2 + $0x168] sm:$0xf]
      %v7693 = vld [vmem:[%s2 + $0x16c] sm:$0xf]
      %v7694 = vld [vmem:[%s2 + $0x170] sm:$0xf]
      %v7695 = vld [vmem:[%s2 + $0x174] sm:$0xf]
      %v7696 = vld [vmem:[%s2 + $0x178] sm:$0xf]
      %v7697 = vld [vmem:[%s2 + $0x17c] sm:$0xf]
      %v7698 = vld [vmem:[%s2 + $0x180] sm:$0xf]
      %v7699 = vld [vmem:[%s2 + $0x184] sm:$0xf]
      %v7700 = vld [vmem:[%s2 + $0x188] sm:$0xf]
      %v7701 = vld [vmem:[%s2 + $0x18c] sm:$0xf]
      %v7702 = vld [vmem:[%s2 + $0x190] sm:$0xf]
      %v7703 = vld [vmem:[%s2 + $0x194] sm:$0xf]
      %v7704 = vld [vmem:[%s2 + $0x198] sm:$0xf]
      %v7705 = vld [vmem:[%s2 + $0x19c] sm:$0xf]
      %v7706 = vld [vmem:[%s2 + $0x1a0] sm:$0xf]
      %v7707 = vld [vmem:[%s2 + $0x1a4] sm:$0xf]
      %v7708 = vld [vmem:[%s2 + $0x1a8] sm:$0xf]
      %v7709 = vld [vmem:[%s2 + $0x1ac] sm:$0xf]
      %v7710 = vld [vmem:[%s2 + $0x1b0] sm:$0xf]
      %v7711 = vld [vmem:[%s2 + $0x1b4] sm:$0xf]
      %v7712 = vld [vmem:[%s2 + $0x1b8] sm:$0xf]
      %v7713 = vld [vmem:[%s2 + $0x1bc] sm:$0xf]
      %v7714 = vld [vmem:[%s2 + $0x1c0] sm:$0xf]
      %v7715 = vld [vmem:[%s2 + $0x1c4] sm:$0xf]
      %v7716 = vld [vmem:[%s2 + $0x1c8] sm:$0xf]
      %v7717 = vld [vmem:[%s2 + $0x1cc] sm:$0xf]
      %v7718 = vld [vmem:[%s2 + $0x1d0] sm:$0xf]
      %v7719 = vld [vmem:[%s2 + $0x1d4] sm:$0xf]
      %v7720 = vld [vmem:[%s2 + $0x1d8] sm:$0xf]
      %v7721 = vld [vmem:[%s2 + $0x1dc] sm:$0xf]
      %v7722 = vld [vmem:[%s2 + $0x1e0] sm:$0xf]
      %v7723 = vld [vmem:[%s2 + $0x1e4] sm:$0xf]
      %v7724 = vld [vmem:[%s2 + $0x1e8] sm:$0xf]
      %v7725 = vld [vmem:[%s2 + $0x1ec] sm:$0xf]
      %v7726 = vld [vmem:[%s2 + $0x1f0] sm:$0xf]
      %v7727 = vld [vmem:[%s2 + $0x1f4] sm:$0xf]
      %v7728 = vld [vmem:[%s2 + $0x1f8] sm:$0xf]
      %v7729 = vld [vmem:[%s2 + $0x1fc] sm:$0xf]
      %v7730 = vld [vmem:[%s2 + $0x200] sm:$0xf]
      %v7731 = vld [vmem:[%s2 + $0x204] sm:$0xf]
      %v7732 = vld [vmem:[%s2 + $0x208] sm:$0xf]
      %v7733 = vld [vmem:[%s2 + $0x20c] sm:$0xf]
      %v7734 = vld [vmem:[%s2 + $0x210] sm:$0xf]
      %v7735 = vld [vmem:[%s2 + $0x214] sm:$0xf]
      %v7736 = vld [vmem:[%s2 + $0x218] sm:$0xf]
      %v7737 = vld [vmem:[%s2 + $0x21c] sm:$0xf]
      %v7738 = vld [vmem:[%s2 + $0x220] sm:$0xf]
      %v7739 = vld [vmem:[%s2 + $0x224] sm:$0xf]
      %v7740 = vld [vmem:[%s2 + $0x228] sm:$0xf]
      %v7741 = vld [vmem:[%s2 + $0x22c] sm:$0xf]
      %v7742 = vld [vmem:[%s2 + $0x230] sm:$0xf]
      %v7743 = vld [vmem:[%s2 + $0x234] sm:$0xf]
      %v7744 = vld [vmem:[%s2 + $0x238] sm:$0xf]
      %v7745 = vld [vmem:[%s2 + $0x23c] sm:$0xf]
      %v7986 = vunpack.c.l.b16 %v7362
      %v7987 = vunpack.c.h.b16 %v7362
      %v7988 = vunpack.c.l.b16 %v7363
      %v7989 = vunpack.c.h.b16 %v7363
      %v7990 = vunpack.c.l.b16 %v7364
      %v7991 = vunpack.c.h.b16 %v7364
      %v7992 = vunpack.c.l.b16 %v7365
      %v7993 = vunpack.c.h.b16 %v7365
      %v7994 = vunpack.c.l.b16 %v7366
      %v7995 = vunpack.c.l.b16 %v7367
      %v7996 = vunpack.c.h.b16 %v7367
      %v7997 = vunpack.c.l.b16 %v7368
      %v7998 = vunpack.c.h.b16 %v7368
      %v7999 = vunpack.c.l.b16 %v7369
      %v8000 = vunpack.c.h.b16 %v7369
      %v8001 = vunpack.c.l.b16 %v7370
      %v8002 = vunpack.c.h.b16 %v7370
      %v8003 = vunpack.c.l.b16 %v7371
      %v8004 = vunpack.c.l.b16 %v7372
      %v8005 = vunpack.c.h.b16 %v7372
      %v8006 = vunpack.c.l.b16 %v7373
      %v8007 = vunpack.c.h.b16 %v7373
      %v8008 = vunpack.c.l.b16 %v7374
      %v8009 = vunpack.c.h.b16 %v7374
      %v8010 = vunpack.c.l.b16 %v7375
      %v8011 = vunpack.c.h.b16 %v7375
      %v8012 = vunpack.c.l.b16 %v7376
      %v8013 = vunpack.c.l.b16 %v7377
      %v8014 = vunpack.c.h.b16 %v7377
      %v8015 = vunpack.c.l.b16 %v7378
      %v8016 = vunpack.c.h.b16 %v7378
      %v8017 = vunpack.c.l.b16 %v7379
      %v8018 = vunpack.c.h.b16 %v7379
      %v8019 = vunpack.c.l.b16 %v7380
      %v8020 = vunpack.c.h.b16 %v7380
      %v8021 = vunpack.c.l.b16 %v7381
      %v8022 = vunpack.c.l.b16 %v7382
      %v8023 = vunpack.c.h.b16 %v7382
      %v8024 = vunpack.c.l.b16 %v7383
      %v8025 = vunpack.c.h.b16 %v7383
      %v8026 = vunpack.c.l.b16 %v7384
      %v8027 = vunpack.c.h.b16 %v7384
      %v8028 = vunpack.c.l.b16 %v7385
      %v8029 = vunpack.c.h.b16 %v7385
      %v8030 = vunpack.c.l.b16 %v7386
      %v8031 = vunpack.c.l.b16 %v7387
      %v8032 = vunpack.c.h.b16 %v7387
      %v8033 = vunpack.c.l.b16 %v7388
      %v8034 = vunpack.c.h.b16 %v7388
      %v8035 = vunpack.c.l.b16 %v7389
      %v8036 = vunpack.c.h.b16 %v7389
      %v8037 = vunpack.c.l.b16 %v7390
      %v8038 = vunpack.c.h.b16 %v7390
      %v8039 = vunpack.c.l.b16 %v7391
      %v8040 = vunpack.c.l.b16 %v7392
      %v8041 = vunpack.c.h.b16 %v7392
      %v8042 = vunpack.c.l.b16 %v7393
      %v8043 = vunpack.c.h.b16 %v7393
      %v8044 = vunpack.c.l.b16 %v7394
      %v8045 = vunpack.c.h.b16 %v7394
      %v8046 = vunpack.c.l.b16 %v7395
      %v8047 = vunpack.c.h.b16 %v7395
      %v8048 = vunpack.c.l.b16 %v7396
      %v8049 = vunpack.c.l.b16 %v7397
      %v8050 = vunpack.c.h.b16 %v7397
      %v8051 = vunpack.c.l.b16 %v7398
      %v8052 = vunpack.c.h.b16 %v7398
      %v8053 = vunpack.c.l.b16 %v7399
      %v8054 = vunpack.c.h.b16 %v7399
      %v8055 = vunpack.c.l.b16 %v7400
      %v8056 = vunpack.c.h.b16 %v7400
      %v8057 = vunpack.c.l.b16 %v7401
      %v8058 = vunpack.c.l.b16 %v7402
      %v8059 = vunpack.c.h.b16 %v7402
      %v8060 = vunpack.c.l.b16 %v7403
      %v8061 = vunpack.c.h.b16 %v7403
      %v8062 = vunpack.c.l.b16 %v7404
      %v8063 = vunpack.c.h.b16 %v7404
      %v8064 = vunpack.c.l.b16 %v7405
      %v8065 = vunpack.c.h.b16 %v7405
      %v8066 = vunpack.c.l.b16 %v7406
      %v8067 = vunpack.c.l.b16 %v7407
      %v8068 = vunpack.c.h.b16 %v7407
      %v8069 = vunpack.c.l.b16 %v7408
      %v8070 = vunpack.c.h.b16 %v7408
      %v8071 = vunpack.c.l.b16 %v7409
      %v8072 = vunpack.c.h.b16 %v7409
      %v8073 = vunpack.c.l.b16 %v7410
      %v8074 = vunpack.c.h.b16 %v7410
      %v8075 = vunpack.c.l.b16 %v7411
      %v8076 = vunpack.c.l.b16 %v7412
      %v8077 = vunpack.c.h.b16 %v7412
      %v8078 = vunpack.c.l.b16 %v7413
      %v8079 = vunpack.c.h.b16 %v7413
      %v8080 = vunpack.c.l.b16 %v7414
      %v8081 = vunpack.c.h.b16 %v7414
      %v8082 = vunpack.c.l.b16 %v7415
      %v8083 = vunpack.c.h.b16 %v7415
      %v8084 = vunpack.c.l.b16 %v7416
      %v8085 = vunpack.c.l.b16 %v7417
      %v8086 = vunpack.c.h.b16 %v7417
      %v8087 = vunpack.c.l.b16 %v7418
      %v8088 = vunpack.c.h.b16 %v7418
      %v8089 = vunpack.c.l.b16 %v7419
      %v8090 = vunpack.c.h.b16 %v7419
      %v8091 = vunpack.c.l.b16 %v7420
      %v8092 = vunpack.c.h.b16 %v7420
      %v8093 = vunpack.c.l.b16 %v7421
      %v8094 = vunpack.c.l.b16 %v7422
      %v8095 = vunpack.c.h.b16 %v7422
      %v8096 = vunpack.c.l.b16 %v7423
      %v8097 = vunpack.c.h.b16 %v7423
      %v8098 = vunpack.c.l.b16 %v7424
      %v8099 = vunpack.c.h.b16 %v7424
      %v8100 = vunpack.c.l.b16 %v7425
      %v8101 = vunpack.c.h.b16 %v7425
      %v8102 = vunpack.c.l.b16 %v7426
      %v8103 = vunpack.c.l.b16 %v7427
      %v8104 = vunpack.c.h.b16 %v7427
      %v8105 = vunpack.c.l.b16 %v7428
      %v8106 = vunpack.c.h.b16 %v7428
      %v8107 = vunpack.c.l.b16 %v7429
      %v8108 = vunpack.c.h.b16 %v7429
      %v8109 = vunpack.c.l.b16 %v7430
      %v8110 = vunpack.c.h.b16 %v7430
      %v8111 = vunpack.c.l.b16 %v7431
      %v8112 = vunpack.c.l.b16 %v7432
      %v8113 = vunpack.c.h.b16 %v7432
      %v8114 = vunpack.c.l.b16 %v7433
      %v8115 = vunpack.c.h.b16 %v7433
      %v8116 = vunpack.c.l.b16 %v7434
      %v8117 = vunpack.c.h.b16 %v7434
      %v8118 = vunpack.c.l.b16 %v7435
      %v8119 = vunpack.c.h.b16 %v7435
      %v8120 = vunpack.c.l.b16 %v7436
      %v8121 = vunpack.c.l.b16 %v7437
      %v8122 = vunpack.c.h.b16 %v7437
      %v8123 = vunpack.c.l.b16 %v7438
      %v8124 = vunpack.c.h.b16 %v7438
      %v8125 = vunpack.c.l.b16 %v7439
      %v8126 = vunpack.c.h.b16 %v7439
      %v8127 = vunpack.c.l.b16 %v7440
      %v8128 = vunpack.c.h.b16 %v7440
      %v8129 = vunpack.c.l.b16 %v7441
      %v8130 = vunpack.c.l.b16 %v7442
      %v8131 = vunpack.c.h.b16 %v7442
      %v8132 = vunpack.c.l.b16 %v7443
      %v8133 = vunpack.c.h.b16 %v7443
      %v8134 = vunpack.c.l.b16 %v7444
      %v8135 = vunpack.c.h.b16 %v7444
      %v8136 = vunpack.c.l.b16 %v7445
      %v8137 = vunpack.c.h.b16 %v7445
      %v8138 = vunpack.c.l.b16 %v7446
      %v8139 = vunpack.c.l.b16 %v7447
      %v8140 = vunpack.c.h.b16 %v7447
      %v8141 = vunpack.c.l.b16 %v7448
      %v8142 = vunpack.c.h.b16 %v7448
      %v8143 = vunpack.c.l.b16 %v7449
      %v8144 = vunpack.c.h.b16 %v7449
      %v8145 = vunpack.c.l.b16 %v7450
      %v8146 = vunpack.c.h.b16 %v7450
      %v8147 = vunpack.c.l.b16 %v7451
      %v8148 = vunpack.c.l.b16 %v7452
      %v8149 = vunpack.c.h.b16 %v7452
      %v8150 = vunpack.c.l.b16 %v7453
      %v8151 = vunpack.c.h.b16 %v7453
      %v8152 = vunpack.c.l.b16 %v7454
      %v8153 = vunpack.c.h.b16 %v7454
      %v8154 = vunpack.c.l.b16 %v7455
      %v8155 = vunpack.c.h.b16 %v7455
      %v8156 = vunpack.c.l.b16 %v7456
      %v8157 = vunpack.c.l.b16 %v7457
      %v8158 = vunpack.c.h.b16 %v7457
      %v8159 = vunpack.c.l.b16 %v7458
      %v8160 = vunpack.c.h.b16 %v7458
      %v8161 = vunpack.c.l.b16 %v7459
      %v8162 = vunpack.c.h.b16 %v7459
      %v8163 = vunpack.c.l.b16 %v7460
      %v8164 = vunpack.c.h.b16 %v7460
      %v8165 = vunpack.c.l.b16 %v7461
      %v8166 = vunpack.c.l.b16 %v7462
      %v8167 = vunpack.c.h.b16 %v7462
      %v8168 = vunpack.c.l.b16 %v7463
      %v8169 = vunpack.c.h.b16 %v7463
      %v8170 = vunpack.c.l.b16 %v7464
      %v8171 = vunpack.c.h.b16 %v7464
      %v8172 = vunpack.c.l.b16 %v7465
      %v8173 = vunpack.c.h.b16 %v7465
      %v8174 = vunpack.c.l.b16 %v7466
      %v8175 = vunpack.c.l.b16 %v7467
      %v8176 = vunpack.c.h.b16 %v7467
      %v8177 = vunpack.c.l.b16 %v7468
      %v8178 = vunpack.c.h.b16 %v7468
      %v8179 = vunpack.c.l.b16 %v7469
      %v8180 = vunpack.c.h.b16 %v7469
      %v8181 = vunpack.c.l.b16 %v7470
      %v8182 = vunpack.c.h.b16 %v7470
      %v8183 = vunpack.c.l.b16 %v7471
      %v8184 = vunpack.c.l.b16 %v7472
      %v8185 = vunpack.c.h.b16 %v7472
      %v8186 = vunpack.c.l.b16 %v7473
      %v8187 = vunpack.c.h.b16 %v7473
      %v8188 = vunpack.c.l.b16 %v7474
      %v8189 = vunpack.c.h.b16 %v7474
      %v8190 = vunpack.c.l.b16 %v7475
      %v8191 = vunpack.c.h.b16 %v7475
      %v8192 = vunpack.c.l.b16 %v7476
      %v8193 = vunpack.c.l.b16 %v7477
      %v8194 = vunpack.c.h.b16 %v7477
      %v8195 = vunpack.c.l.b16 %v7478
      %v8196 = vunpack.c.h.b16 %v7478
      %v8197 = vunpack.c.l.b16 %v7479
      %v8198 = vunpack.c.h.b16 %v7479
      %v8199 = vunpack.c.l.b16 %v7480
      %v8200 = vunpack.c.h.b16 %v7480
      %v8201 = vunpack.c.l.b16 %v7481
      %v8202 = vunpack.c.l.b16 %v7482
      %v8203 = vunpack.c.h.b16 %v7482
      %v8204 = vunpack.c.l.b16 %v7483
      %v8205 = vunpack.c.h.b16 %v7483
      %v8206 = vunpack.c.l.b16 %v7484
      %v8207 = vunpack.c.h.b16 %v7484
      %v8208 = vunpack.c.l.b16 %v7485
      %v8209 = vunpack.c.h.b16 %v7485
      %v8210 = vunpack.c.l.b16 %v7486
      %v8211 = vunpack.c.l.b16 %v7487
      %v8212 = vunpack.c.h.b16 %v7487
      %v8213 = vunpack.c.l.b16 %v7488
      %v8214 = vunpack.c.h.b16 %v7488
      %v8215 = vunpack.c.l.b16 %v7489
      %v8216 = vunpack.c.h.b16 %v7489
      %v8217 = vunpack.c.l.b16 %v7490
      %v8218 = vunpack.c.h.b16 %v7490
      %v8219 = vunpack.c.l.b16 %v7491
      %v8220 = vunpack.c.l.b16 %v7492
      %v8221 = vunpack.c.h.b16 %v7492
      %v8222 = vunpack.c.l.b16 %v7493
      %v8223 = vunpack.c.h.b16 %v7493
      %v8224 = vunpack.c.l.b16 %v7494
      %v8225 = vunpack.c.h.b16 %v7494
      %v8226 = vunpack.c.l.b16 %v7495
      %v8227 = vunpack.c.h.b16 %v7495
      %v8228 = vunpack.c.l.b16 %v7496
      %v8229 = vunpack.c.l.b16 %v7497
      %v8230 = vunpack.c.h.b16 %v7497
      %v8231 = vunpack.c.l.b16 %v7498
      %v8232 = vunpack.c.h.b16 %v7498
      %v8233 = vunpack.c.l.b16 %v7499
      %v8234 = vunpack.c.h.b16 %v7499
      %v8235 = vunpack.c.l.b16 %v7500
      %v8236 = vunpack.c.h.b16 %v7500
      %v8237 = vunpack.c.l.b16 %v7501
      %v8238 = vunpack.c.l.b16 %v7502
      %v8239 = vunpack.c.h.b16 %v7502
      %v8240 = vunpack.c.l.b16 %v7503
      %v8241 = vunpack.c.h.b16 %v7503
      %v8242 = vunpack.c.l.b16 %v7504
      %v8243 = vunpack.c.h.b16 %v7504
      %v8244 = vunpack.c.l.b16 %v7505
      %v8245 = vunpack.c.h.b16 %v7505
      %v8246 = vunpack.c.l.b16 %v7506
      %v8247 = vunpack.c.l.b16 %v7507
      %v8248 = vunpack.c.h.b16 %v7507
      %v8249 = vunpack.c.l.b16 %v7508
      %v8250 = vunpack.c.h.b16 %v7508
      %v8251 = vunpack.c.l.b16 %v7509
      %v8252 = vunpack.c.h.b16 %v7509
      %v8253 = vunpack.c.l.b16 %v7510
      %v8254 = vunpack.c.h.b16 %v7510
      %v8255 = vunpack.c.l.b16 %v7511
      %v8256 = vunpack.c.l.b16 %v7512
      %v8257 = vunpack.c.h.b16 %v7512
      %v8258 = vunpack.c.l.b16 %v7513
      %v8259 = vunpack.c.h.b16 %v7513
      %v8260 = vunpack.c.l.b16 %v7514
      %v8261 = vunpack.c.h.b16 %v7514
      %v8262 = vunpack.c.l.b16 %v7515
      %v8263 = vunpack.c.h.b16 %v7515
      %v8264 = vunpack.c.l.b16 %v7516
      %v8265 = vunpack.c.l.b16 %v7517
      %v8266 = vunpack.c.h.b16 %v7517
      %v8267 = vunpack.c.l.b16 %v7518
      %v8268 = vunpack.c.h.b16 %v7518
      %v8269 = vunpack.c.l.b16 %v7519
      %v8270 = vunpack.c.h.b16 %v7519
      %v8271 = vunpack.c.l.b16 %v7520
      %v8272 = vunpack.c.h.b16 %v7520
      %v8273 = vunpack.c.l.b16 %v7521
      %v8274 = vunpack.c.l.b16 %v7522
      %v8275 = vunpack.c.h.b16 %v7522
      %v8276 = vunpack.c.l.b16 %v7523
      %v8277 = vunpack.c.h.b16 %v7523
      %v8278 = vunpack.c.l.b16 %v7524
      %v8279 = vunpack.c.h.b16 %v7524
      %v8280 = vunpack.c.l.b16 %v7525
      %v8281 = vunpack.c.h.b16 %v7525
      %v8282 = vunpack.c.l.b16 %v7526
      %v8283 = vunpack.c.l.b16 %v7527
      %v8284 = vunpack.c.h.b16 %v7527
      %v8285 = vunpack.c.l.b16 %v7528
      %v8286 = vunpack.c.h.b16 %v7528
      %v8287 = vunpack.c.l.b16 %v7529
      %v8288 = vunpack.c.h.b16 %v7529
      %v8289 = vunpack.c.l.b16 %v7530
      %v8290 = vunpack.c.h.b16 %v7530
      %v8291 = vunpack.c.l.b16 %v7531
      %v8292 = vunpack.c.l.b16 %v7532
      %v8293 = vunpack.c.h.b16 %v7532
      %v8294 = vunpack.c.l.b16 %v7533
      %v8295 = vunpack.c.h.b16 %v7533
      %v8296 = vunpack.c.l.b16 %v7534
      %v8297 = vunpack.c.h.b16 %v7534
      %v8298 = vunpack.c.l.b16 %v7535
      %v8299 = vunpack.c.h.b16 %v7535
      %v8300 = vunpack.c.l.b16 %v7536
      %v8301 = vunpack.c.l.b16 %v7537
      %v8302 = vunpack.c.h.b16 %v7537
      %v8303 = vunpack.c.l.b16 %v7538
      %v8304 = vunpack.c.h.b16 %v7538
      %v8305 = vunpack.c.l.b16 %v7539
      %v8306 = vunpack.c.h.b16 %v7539
      %v8307 = vunpack.c.l.b16 %v7540
      %v8308 = vunpack.c.h.b16 %v7540
      %v8309 = vunpack.c.l.b16 %v7541
      %v8310 = vunpack.c.l.b16 %v7542
      %v8311 = vunpack.c.h.b16 %v7542
      %v8312 = vunpack.c.l.b16 %v7543
      %v8313 = vunpack.c.h.b16 %v7543
      %v8314 = vunpack.c.l.b16 %v7544
      %v8315 = vunpack.c.h.b16 %v7544
      %v8316 = vunpack.c.l.b16 %v7545
      %v8317 = vunpack.c.h.b16 %v7545
      %v8318 = vunpack.c.l.b16 %v7546
      %v8319 = vunpack.c.l.b16 %v7547
      %v8320 = vunpack.c.h.b16 %v7547
      %v8321 = vunpack.c.l.b16 %v7548
      %v8322 = vunpack.c.h.b16 %v7548
      %v8323 = vunpack.c.l.b16 %v7549
      %v8324 = vunpack.c.h.b16 %v7549
      %v8325 = vunpack.c.l.b16 %v7550
      %v8326 = vunpack.c.h.b16 %v7550
      %v8327 = vunpack.c.l.b16 %v7551
      %v8328 = vunpack.c.l.b16 %v7552
      %v8329 = vunpack.c.h.b16 %v7552
      %v8330 = vunpack.c.l.b16 %v7553
      %v8331 = vunpack.c.h.b16 %v7553
      %v8332 = vunpack.c.l.b16 %v7554
      %v8333 = vunpack.c.h.b16 %v7554
      %v8334 = vunpack.c.l.b16 %v7555
      %v8335 = vunpack.c.h.b16 %v7555
      %v8336 = vunpack.c.l.b16 %v7556
      %v8337 = vunpack.c.l.b16 %v7557
      %v8338 = vunpack.c.h.b16 %v7557
      %v8339 = vunpack.c.l.b16 %v7558
      %v8340 = vunpack.c.h.b16 %v7558
      %v8341 = vunpack.c.l.b16 %v7559
      %v8342 = vunpack.c.h.b16 %v7559
      %v8343 = vunpack.c.l.b16 %v7560
      %v8344 = vunpack.c.h.b16 %v7560
      %v8345 = vunpack.c.l.b16 %v7561
      %v8346 = vunpack.c.l.b16 %v7562
      %v8347 = vunpack.c.h.b16 %v7562
      %v8348 = vunpack.c.l.b16 %v7563
      %v8349 = vunpack.c.h.b16 %v7563
      %v8350 = vunpack.c.l.b16 %v7564
      %v8351 = vunpack.c.h.b16 %v7564
      %v8352 = vunpack.c.l.b16 %v7565
      %v8353 = vunpack.c.h.b16 %v7565
      %v8354 = vunpack.c.l.b16 %v7566
      %v8355 = vunpack.c.l.b16 %v7567
      %v8356 = vunpack.c.h.b16 %v7567
      %v8357 = vunpack.c.l.b16 %v7568
      %v8358 = vunpack.c.h.b16 %v7568
      %v8359 = vunpack.c.l.b16 %v7569
      %v8360 = vunpack.c.h.b16 %v7569
      %v8361 = vunpack.c.l.b16 %v7570
      %v8362 = vunpack.c.h.b16 %v7570
      %v8363 = vunpack.c.l.b16 %v7571
      %v8364 = vunpack.c.l.b16 %v7572
      %v8365 = vunpack.c.h.b16 %v7572
      %v8366 = vunpack.c.l.b16 %v7573
      %v8367 = vunpack.c.h.b16 %v7573
      %v8368 = vunpack.c.l.b16 %v7574
      %v8369 = vunpack.c.h.b16 %v7574
      %v8370 = vunpack.c.l.b16 %v7575
      %v8371 = vunpack.c.h.b16 %v7575
      %v8372 = vunpack.c.l.b16 %v7576
      %v8373 = vunpack.c.l.b16 %v7577
      %v8374 = vunpack.c.h.b16 %v7577
      %v8375 = vunpack.c.l.b16 %v7578
      %v8376 = vunpack.c.h.b16 %v7578
      %v8377 = vunpack.c.l.b16 %v7579
      %v8378 = vunpack.c.h.b16 %v7579
      %v8379 = vunpack.c.l.b16 %v7580
      %v8380 = vunpack.c.h.b16 %v7580
      %v8381 = vunpack.c.l.b16 %v7581
      %v8382 = vunpack.c.l.b16 %v7582
      %v8383 = vunpack.c.h.b16 %v7582
      %v8384 = vunpack.c.l.b16 %v7583
      %v8385 = vunpack.c.h.b16 %v7583
      %v8386 = vunpack.c.l.b16 %v7584
      %v8387 = vunpack.c.h.b16 %v7584
      %v8388 = vunpack.c.l.b16 %v7585
      %v8389 = vunpack.c.h.b16 %v7585
      %v8390 = vunpack.c.l.b16 %v7586
      %v8391 = vunpack.c.l.b16 %v7587
      %v8392 = vunpack.c.h.b16 %v7587
      %v8393 = vunpack.c.l.b16 %v7588
      %v8394 = vunpack.c.h.b16 %v7588
      %v8395 = vunpack.c.l.b16 %v7589
      %v8396 = vunpack.c.h.b16 %v7589
      %v8397 = vunpack.c.l.b16 %v7590
      %v8398 = vunpack.c.h.b16 %v7590
      %v8399 = vunpack.c.l.b16 %v7591
      %v8400 = vunpack.c.l.b16 %v7592
      %v8401 = vunpack.c.h.b16 %v7592
      %v8402 = vunpack.c.l.b16 %v7593
      %v8403 = vunpack.c.h.b16 %v7593
      %v8404 = vunpack.c.l.b16 %v7594
      %v8405 = vunpack.c.h.b16 %v7594
      %v8406 = vunpack.c.l.b16 %v7595
      %v8407 = vunpack.c.h.b16 %v7595
      %v8408 = vunpack.c.l.b16 %v7596
      %v8409 = vunpack.c.l.b16 %v7597
      %v8410 = vunpack.c.h.b16 %v7597
      %v8411 = vunpack.c.l.b16 %v7598
      %v8412 = vunpack.c.h.b16 %v7598
      %v8413 = vunpack.c.l.b16 %v7599
      %v8414 = vunpack.c.h.b16 %v7599
      %v8415 = vunpack.c.l.b16 %v7600
      %v8416 = vunpack.c.h.b16 %v7600
      %v8417 = vunpack.c.l.b16 %v7601
      %v8418 = vpack.c.b16 %v7995, %v7986
      %v8419 = vpack.c.b16 %v7996, %v7987
      %v8420 = vpack.c.b16 %v7997, %v7988
      %v8421 = vpack.c.b16 %v7998, %v7989
      %v8422 = vpack.c.b16 %v7999, %v7990
      %v8423 = vpack.c.b16 %v8000, %v7991
      %v8424 = vpack.c.b16 %v8001, %v7992
      %v8425 = vpack.c.b16 %v8002, %v7993
      %v8426 = vpack.c.b16 %v8003, %v7994
      %v8427 = vpack.c.b16 %v8013, %v8004
      %v8428 = vpack.c.b16 %v8014, %v8005
      %v8429 = vpack.c.b16 %v8015, %v8006
      %v8430 = vpack.c.b16 %v8016, %v8007
      %v8431 = vpack.c.b16 %v8017, %v8008
      %v8432 = vpack.c.b16 %v8018, %v8009
      %v8433 = vpack.c.b16 %v8019, %v8010
      %v8434 = vpack.c.b16 %v8020, %v8011
      %v8435 = vpack.c.b16 %v8021, %v8012
      %v8436 = vpack.c.b16 %v8031, %v8022
      %v8437 = vpack.c.b16 %v8032, %v8023
      %v8438 = vpack.c.b16 %v8033, %v8024
      %v8439 = vpack.c.b16 %v8034, %v8025
      %v8440 = vpack.c.b16 %v8035, %v8026
      %v8441 = vpack.c.b16 %v8036, %v8027
      %v8442 = vpack.c.b16 %v8037, %v8028
      %v8443 = vpack.c.b16 %v8038, %v8029
      %v8444 = vpack.c.b16 %v8039, %v8030
      %v8445 = vpack.c.b16 %v8049, %v8040
      %v8446 = vpack.c.b16 %v8050, %v8041
      %v8447 = vpack.c.b16 %v8051, %v8042
      %v8448 = vpack.c.b16 %v8052, %v8043
      %v8449 = vpack.c.b16 %v8053, %v8044
      %v8450 = vpack.c.b16 %v8054, %v8045
      %v8451 = vpack.c.b16 %v8055, %v8046
      %v8452 = vpack.c.b16 %v8056, %v8047
      %v8453 = vpack.c.b16 %v8057, %v8048
      %v8454 = vpack.c.b16 %v8067, %v8058
      %v8455 = vpack.c.b16 %v8068, %v8059
      %v8456 = vpack.c.b16 %v8069, %v8060
      %v8457 = vpack.c.b16 %v8070, %v8061
      %v8458 = vpack.c.b16 %v8071, %v8062
      %v8459 = vpack.c.b16 %v8072, %v8063
      %v8460 = vpack.c.b16 %v8073, %v8064
      %v8461 = vpack.c.b16 %v8074, %v8065
      %v8462 = vpack.c.b16 %v8075, %v8066
      %v8463 = vpack.c.b16 %v8085, %v8076
      %v8464 = vpack.c.b16 %v8086, %v8077
      %v8465 = vpack.c.b16 %v8087, %v8078
      %v8466 = vpack.c.b16 %v8088, %v8079
      %v8467 = vpack.c.b16 %v8089, %v8080
      %v8468 = vpack.c.b16 %v8090, %v8081
      %v8469 = vpack.c.b16 %v8091, %v8082
      %v8470 = vpack.c.b16 %v8092, %v8083
      %v8471 = vpack.c.b16 %v8093, %v8084
      %v8472 = vpack.c.b16 %v8103, %v8094
      %v8473 = vpack.c.b16 %v8104, %v8095
      %v8474 = vpack.c.b16 %v8105, %v8096
      %v8475 = vpack.c.b16 %v8106, %v8097
      %v8476 = vpack.c.b16 %v8107, %v8098
      %v8477 = vpack.c.b16 %v8108, %v8099
      %v8478 = vpack.c.b16 %v8109, %v8100
      %v8479 = vpack.c.b16 %v8110, %v8101
      %v8480 = vpack.c.b16 %v8111, %v8102
      %v8481 = vpack.c.b16 %v8121, %v8112
      %v8482 = vpack.c.b16 %v8122, %v8113
      %v8483 = vpack.c.b16 %v8123, %v8114
      %v8484 = vpack.c.b16 %v8124, %v8115
      %v8485 = vpack.c.b16 %v8125, %v8116
      %v8486 = vpack.c.b16 %v8126, %v8117
      %v8487 = vpack.c.b16 %v8127, %v8118
      %v8488 = vpack.c.b16 %v8128, %v8119
      %v8489 = vpack.c.b16 %v8129, %v8120
      %v8490 = vpack.c.b16 %v8139, %v8130
      %v8491 = vpack.c.b16 %v8140, %v8131
      %v8492 = vpack.c.b16 %v8141, %v8132
      %v8493 = vpack.c.b16 %v8142, %v8133
      %v8494 = vpack.c.b16 %v8143, %v8134
      %v8495 = vpack.c.b16 %v8144, %v8135
      %v8496 = vpack.c.b16 %v8145, %v8136
      %v8497 = vpack.c.b16 %v8146, %v8137
      %v8498 = vpack.c.b16 %v8147, %v8138
      %v8499 = vpack.c.b16 %v8157, %v8148
      %v8500 = vpack.c.b16 %v8158, %v8149
      %v8501 = vpack.c.b16 %v8159, %v8150
      %v8502 = vpack.c.b16 %v8160, %v8151
      %v8503 = vpack.c.b16 %v8161, %v8152
      %v8504 = vpack.c.b16 %v8162, %v8153
      %v8505 = vpack.c.b16 %v8163, %v8154
      %v8506 = vpack.c.b16 %v8164, %v8155
      %v8507 = vpack.c.b16 %v8165, %v8156
      %v8508 = vpack.c.b16 %v8175, %v8166
      %v8509 = vpack.c.b16 %v8176, %v8167
      %v8510 = vpack.c.b16 %v8177, %v8168
      %v8511 = vpack.c.b16 %v8178, %v8169
      %v8512 = vpack.c.b16 %v8179, %v8170
      %v8513 = vpack.c.b16 %v8180, %v8171
      %v8514 = vpack.c.b16 %v8181, %v8172
      %v8515 = vpack.c.b16 %v8182, %v8173
      %v8516 = vpack.c.b16 %v8183, %v8174
      %v8517 = vpack.c.b16 %v8193, %v8184
      %v8518 = vpack.c.b16 %v8194, %v8185
      %v8519 = vpack.c.b16 %v8195, %v8186
      %v8520 = vpack.c.b16 %v8196, %v8187
      %v8521 = vpack.c.b16 %v8197, %v8188
      %v8522 = vpack.c.b16 %v8198, %v8189
      %v8523 = vpack.c.b16 %v8199, %v8190
      %v8524 = vpack.c.b16 %v8200, %v8191
      %v8525 = vpack.c.b16 %v8201, %v8192
      %v8526 = vpack.c.b16 %v8211, %v8202
      %v8527 = vpack.c.b16 %v8212, %v8203
      %v8528 = vpack.c.b16 %v8213, %v8204
      %v8529 = vpack.c.b16 %v8214, %v8205
      %v8530 = vpack.c.b16 %v8215, %v8206
      %v8531 = vpack.c.b16 %v8216, %v8207
      %v8532 = vpack.c.b16 %v8217, %v8208
      %v8533 = vpack.c.b16 %v8218, %v8209
      %v8534 = vpack.c.b16 %v8219, %v8210
      %v8535 = vpack.c.b16 %v8229, %v8220
      %v8536 = vpack.c.b16 %v8230, %v8221
      %v8537 = vpack.c.b16 %v8231, %v8222
      %v8538 = vpack.c.b16 %v8232, %v8223
      %v8539 = vpack.c.b16 %v8233, %v8224
      %v8540 = vpack.c.b16 %v8234, %v8225
      %v8541 = vpack.c.b16 %v8235, %v8226
      %v8542 = vpack.c.b16 %v8236, %v8227
      %v8543 = vpack.c.b16 %v8237, %v8228
      %v8544 = vpack.c.b16 %v8247, %v8238
      %v8545 = vpack.c.b16 %v8248, %v8239
      %v8546 = vpack.c.b16 %v8249, %v8240
      %v8547 = vpack.c.b16 %v8250, %v8241
      %v8548 = vpack.c.b16 %v8251, %v8242
      %v8549 = vpack.c.b16 %v8252, %v8243
      %v8550 = vpack.c.b16 %v8253, %v8244
      %v8551 = vpack.c.b16 %v8254, %v8245
      %v8552 = vpack.c.b16 %v8255, %v8246
      %v8553 = vpack.c.b16 %v8265, %v8256
      %v8554 = vpack.c.b16 %v8266, %v8257
      %v8555 = vpack.c.b16 %v8267, %v8258
      %v8556 = vpack.c.b16 %v8268, %v8259
      %v8557 = vpack.c.b16 %v8269, %v8260
      %v8558 = vpack.c.b16 %v8270, %v8261
      %v8559 = vpack.c.b16 %v8271, %v8262
      %v8560 = vpack.c.b16 %v8272, %v8263
      %v8561 = vpack.c.b16 %v8273, %v8264
      %v8562 = vpack.c.b16 %v8283, %v8274
      %v8563 = vpack.c.b16 %v8284, %v8275
      %v8564 = vpack.c.b16 %v8285, %v8276
      %v8565 = vpack.c.b16 %v8286, %v8277
      %v8566 = vpack.c.b16 %v8287, %v8278
      %v8567 = vpack.c.b16 %v8288, %v8279
      %v8568 = vpack.c.b16 %v8289, %v8280
      %v8569 = vpack.c.b16 %v8290, %v8281
      %v8570 = vpack.c.b16 %v8291, %v8282
      %v8571 = vpack.c.b16 %v8301, %v8292
      %v8572 = vpack.c.b16 %v8302, %v8293
      %v8573 = vpack.c.b16 %v8303, %v8294
      %v8574 = vpack.c.b16 %v8304, %v8295
      %v8575 = vpack.c.b16 %v8305, %v8296
      %v8576 = vpack.c.b16 %v8306, %v8297
      %v8577 = vpack.c.b16 %v8307, %v8298
      %v8578 = vpack.c.b16 %v8308, %v8299
      %v8579 = vpack.c.b16 %v8309, %v8300
      %v8580 = vpack.c.b16 %v8319, %v8310
      %v8581 = vpack.c.b16 %v8320, %v8311
      %v8582 = vpack.c.b16 %v8321, %v8312
      %v8583 = vpack.c.b16 %v8322, %v8313
      %v8584 = vpack.c.b16 %v8323, %v8314
      %v8585 = vpack.c.b16 %v8324, %v8315
      %v8586 = vpack.c.b16 %v8325, %v8316
      %v8587 = vpack.c.b16 %v8326, %v8317
      %v8588 = vpack.c.b16 %v8327, %v8318
      %v8589 = vpack.c.b16 %v8337, %v8328
      %v8590 = vpack.c.b16 %v8338, %v8329
      %v8591 = vpack.c.b16 %v8339, %v8330
      %v8592 = vpack.c.b16 %v8340, %v8331
      %v8593 = vpack.c.b16 %v8341, %v8332
      %v8594 = vpack.c.b16 %v8342, %v8333
      %v8595 = vpack.c.b16 %v8343, %v8334
      %v8596 = vpack.c.b16 %v8344, %v8335
      %v8597 = vpack.c.b16 %v8345, %v8336
      %v8598 = vpack.c.b16 %v8355, %v8346
      %v8599 = vpack.c.b16 %v8356, %v8347
      %v8600 = vpack.c.b16 %v8357, %v8348
      %v8601 = vpack.c.b16 %v8358, %v8349
      %v8602 = vpack.c.b16 %v8359, %v8350
      %v8603 = vpack.c.b16 %v8360, %v8351
      %v8604 = vpack.c.b16 %v8361, %v8352
      %v8605 = vpack.c.b16 %v8362, %v8353
      %v8606 = vpack.c.b16 %v8363, %v8354
      %v8607 = vpack.c.b16 %v8373, %v8364
      %v8608 = vpack.c.b16 %v8374, %v8365
      %v8609 = vpack.c.b16 %v8375, %v8366
      %v8610 = vpack.c.b16 %v8376, %v8367
      %v8611 = vpack.c.b16 %v8377, %v8368
      %v8612 = vpack.c.b16 %v8378, %v8369
      %v8613 = vpack.c.b16 %v8379, %v8370
      %v8614 = vpack.c.b16 %v8380, %v8371
      %v8615 = vpack.c.b16 %v8381, %v8372
      %v8616 = vpack.c.b16 %v8391, %v8382
      %v8617 = vpack.c.b16 %v8392, %v8383
      %v8618 = vpack.c.b16 %v8393, %v8384
      %v8619 = vpack.c.b16 %v8394, %v8385
      %v8620 = vpack.c.b16 %v8395, %v8386
      %v8621 = vpack.c.b16 %v8396, %v8387
      %v8622 = vpack.c.b16 %v8397, %v8388
      %v8623 = vpack.c.b16 %v8398, %v8389
      %v8624 = vpack.c.b16 %v8399, %v8390
      %v8625 = vpack.c.b16 %v8409, %v8400
      %v8626 = vpack.c.b16 %v8410, %v8401
      %v8627 = vpack.c.b16 %v8411, %v8402
      %v8628 = vpack.c.b16 %v8412, %v8403
      %v8629 = vpack.c.b16 %v8413, %v8404
      %v8630 = vpack.c.b16 %v8414, %v8405
      %v8631 = vpack.c.b16 %v8415, %v8406
      %v8632 = vpack.c.b16 %v8416, %v8407
      %v8633 = vpack.c.b16 %v8417, %v8408
      %v8994 = vunpack.c.l.b16 %v7602
      %v8995 = vunpack.c.l.b16 %v7603
      %v8996 = vunpack.c.l.b16 %v7604
      %v8997 = vunpack.c.l.b16 %v7605
      %v8998 = vunpack.c.l.b16 %v7606
      %v8999 = vunpack.c.l.b16 %v7607
      %v9000 = vunpack.c.l.b16 %v7608
      %v9001 = vunpack.c.l.b16 %v7609
      %v9002 = vunpack.c.l.b16 %v7610
      %v9003 = vunpack.c.l.b16 %v7611
      %v9004 = vunpack.c.l.b16 %v7612
      %v9005 = vunpack.c.l.b16 %v7613
      %v9006 = vunpack.c.l.b16 %v7614
      %v9007 = vunpack.c.l.b16 %v7615
      %v9008 = vunpack.c.l.b16 %v7616
      %v9009 = vunpack.c.l.b16 %v7617
      %v9010 = vunpack.c.l.b16 %v7618
      %v9011 = vunpack.c.l.b16 %v7619
      %v9012 = vunpack.c.l.b16 %v7620
      %v9013 = vunpack.c.l.b16 %v7621
      %v9014 = vunpack.c.l.b16 %v7622
      %v9015 = vunpack.c.l.b16 %v7623
      %v9016 = vunpack.c.l.b16 %v7624
      %v9017 = vunpack.c.l.b16 %v7625
      %v9018 = vunpack.c.l.b16 %v7626
      %v9019 = vunpack.c.l.b16 %v7627
      %v9020 = vunpack.c.l.b16 %v7628
      %v9021 = vunpack.c.l.b16 %v7629
      %v9022 = vunpack.c.l.b16 %v7630
      %v9023 = vunpack.c.l.b16 %v7631
      %v9024 = vunpack.c.l.b16 %v7632
      %v9025 = vunpack.c.l.b16 %v7633
      %v9026 = vunpack.c.l.b16 %v7634
      %v9027 = vunpack.c.l.b16 %v7635
      %v9028 = vunpack.c.l.b16 %v7636
      %v9029 = vunpack.c.l.b16 %v7637
      %v9030 = vunpack.c.l.b16 %v7638
      %v9031 = vunpack.c.l.b16 %v7639
      %v9032 = vunpack.c.l.b16 %v7640
      %v9033 = vunpack.c.l.b16 %v7641
      %v9034 = vunpack.c.l.b16 %v7642
      %v9035 = vunpack.c.l.b16 %v7643
      %v9036 = vunpack.c.l.b16 %v7644
      %v9037 = vunpack.c.l.b16 %v7645
      %v9038 = vunpack.c.l.b16 %v7646
      %v9039 = vunpack.c.l.b16 %v7647
      %v9040 = vunpack.c.l.b16 %v7648
      %v9041 = vunpack.c.l.b16 %v7649
      %v9042 = vunpack.c.l.b16 %v7650
      %v9043 = vunpack.c.l.b16 %v7651
      %v9044 = vunpack.c.l.b16 %v7652
      %v9045 = vunpack.c.l.b16 %v7653
      %v9046 = vunpack.c.l.b16 %v7654
      %v9047 = vunpack.c.l.b16 %v7655
      %v9048 = vunpack.c.l.b16 %v7656
      %v9049 = vunpack.c.l.b16 %v7657
      %v9050 = vunpack.c.l.b16 %v7658
      %v9051 = vunpack.c.l.b16 %v7659
      %v9052 = vunpack.c.l.b16 %v7660
      %v9053 = vunpack.c.l.b16 %v7661
      %v9054 = vunpack.c.l.b16 %v7662
      %v9055 = vunpack.c.l.b16 %v7663
      %v9056 = vunpack.c.l.b16 %v7664
      %v9057 = vunpack.c.l.b16 %v7665
      %v9058 = vunpack.c.l.b16 %v7666
      %v9059 = vunpack.c.l.b16 %v7667
      %v9060 = vunpack.c.l.b16 %v7668
      %v9061 = vunpack.c.l.b16 %v7669
      %v9062 = vunpack.c.l.b16 %v7670
      %v9063 = vunpack.c.l.b16 %v7671
      %v9064 = vunpack.c.l.b16 %v7672
      %v9065 = vunpack.c.l.b16 %v7673
      %v9066 = vunpack.c.l.b16 %v7674
      %v9067 = vunpack.c.l.b16 %v7675
      %v9068 = vunpack.c.l.b16 %v7676
      %v9069 = vunpack.c.l.b16 %v7677
      %v9070 = vunpack.c.l.b16 %v7678
      %v9071 = vunpack.c.l.b16 %v7679
      %v9072 = vunpack.c.l.b16 %v7680
      %v9073 = vunpack.c.l.b16 %v7681
      %v9074 = vunpack.c.l.b16 %v7682
      %v9075 = vunpack.c.l.b16 %v7683
      %v9076 = vunpack.c.l.b16 %v7684
      %v9077 = vunpack.c.l.b16 %v7685
      %v9078 = vunpack.c.l.b16 %v7686
      %v9079 = vunpack.c.l.b16 %v7687
      %v9080 = vunpack.c.l.b16 %v7688
      %v9081 = vunpack.c.l.b16 %v7689
      %v9082 = vunpack.c.l.b16 %v7690
      %v9083 = vunpack.c.l.b16 %v7691
      %v9084 = vunpack.c.l.b16 %v7692
      %v9085 = vunpack.c.l.b16 %v7693
      %v9086 = vunpack.c.l.b16 %v7694
      %v9087 = vunpack.c.l.b16 %v7695
      %v9088 = vunpack.c.l.b16 %v7696
      %v9089 = vunpack.c.l.b16 %v7697
      %v9090 = vunpack.c.l.b16 %v7698
      %v9091 = vunpack.c.l.b16 %v7699
      %v9092 = vunpack.c.l.b16 %v7700
      %v9093 = vunpack.c.l.b16 %v7701
      %v9094 = vunpack.c.l.b16 %v7702
      %v9095 = vunpack.c.l.b16 %v7703
      %v9096 = vunpack.c.l.b16 %v7704
      %v9097 = vunpack.c.l.b16 %v7705
      %v9098 = vunpack.c.l.b16 %v7706
      %v9099 = vunpack.c.l.b16 %v7707
      %v9100 = vunpack.c.l.b16 %v7708
      %v9101 = vunpack.c.l.b16 %v7709
      %v9102 = vunpack.c.l.b16 %v7710
      %v9103 = vunpack.c.l.b16 %v7711
      %v9104 = vunpack.c.l.b16 %v7712
      %v9105 = vunpack.c.l.b16 %v7713
      %v9106 = vunpack.c.l.b16 %v7714
      %v9107 = vunpack.c.l.b16 %v7715
      %v9108 = vunpack.c.l.b16 %v7716
      %v9109 = vunpack.c.l.b16 %v7717
      %v9110 = vunpack.c.l.b16 %v7718
      %v9111 = vunpack.c.l.b16 %v7719
      %v9112 = vunpack.c.l.b16 %v7720
      %v9113 = vunpack.c.l.b16 %v7721
      %v9114 = vunpack.c.l.b16 %v7722
      %v9115 = vunpack.c.l.b16 %v7723
      %v9116 = vunpack.c.l.b16 %v7724
      %v9117 = vunpack.c.l.b16 %v7725
      %v9118 = vunpack.c.l.b16 %v7726
      %v9119 = vunpack.c.l.b16 %v7727
      %v9120 = vunpack.c.l.b16 %v7728
      %v9121 = vunpack.c.l.b16 %v7729
      %v9122 = vunpack.c.l.b16 %v7730
      %v9123 = vunpack.c.l.b16 %v7731
      %v9124 = vunpack.c.l.b16 %v7732
      %v9125 = vunpack.c.l.b16 %v7733
      %v9126 = vunpack.c.l.b16 %v7734
      %v9127 = vunpack.c.l.b16 %v7735
      %v9128 = vunpack.c.l.b16 %v7736
      %v9129 = vunpack.c.l.b16 %v7737
      %v9130 = vunpack.c.l.b16 %v7738
      %v9131 = vunpack.c.l.b16 %v7739
      %v9132 = vunpack.c.l.b16 %v7740
      %v9133 = vunpack.c.l.b16 %v7741
      %v9134 = vunpack.c.l.b16 %v7742
      %v9135 = vunpack.c.l.b16 %v7743
      %v9136 = vunpack.c.l.b16 %v7744
      %v9137 = vunpack.c.l.b16 %v7745
      %v9138 = vpack.c.b16 %v8995, %v8994
      %v9139 = vpack.c.b16 %v8997, %v8996
      %v9140 = vpack.c.b16 %v8999, %v8998
      %v9141 = vpack.c.b16 %v9001, %v9000
      %v9142 = vpack.c.b16 %v9003, %v9002
      %v9143 = vpack.c.b16 %v9005, %v9004
      %v9144 = vpack.c.b16 %v9007, %v9006
      %v9145 = vpack.c.b16 %v9009, %v9008
      %v9146 = vpack.c.b16 %v9011, %v9010
      %v9147 = vpack.c.b16 %v9013, %v9012
      %v9148 = vpack.c.b16 %v9015, %v9014
      %v9149 = vpack.c.b16 %v9017, %v9016
      %v9150 = vpack.c.b16 %v9019, %v9018
      %v9151 = vpack.c.b16 %v9021, %v9020
      %v9152 = vpack.c.b16 %v9023, %v9022
      %v9153 = vpack.c.b16 %v9025, %v9024
      %v9154 = vpack.c.b16 %v9027, %v9026
      %v9155 = vpack.c.b16 %v9029, %v9028
      %v9156 = vpack.c.b16 %v9031, %v9030
      %v9157 = vpack.c.b16 %v9033, %v9032
      %v9158 = vpack.c.b16 %v9035, %v9034
      %v9159 = vpack.c.b16 %v9037, %v9036
      %v9160 = vpack.c.b16 %v9039, %v9038
      %v9161 = vpack.c.b16 %v9041, %v9040
      %v9162 = vpack.c.b16 %v9043, %v9042
      %v9163 = vpack.c.b16 %v9045, %v9044
      %v9164 = vpack.c.b16 %v9047, %v9046
      %v9165 = vpack.c.b16 %v9049, %v9048
      %v9166 = vpack.c.b16 %v9051, %v9050
      %v9167 = vpack.c.b16 %v9053, %v9052
      %v9168 = vpack.c.b16 %v9055, %v9054
      %v9169 = vpack.c.b16 %v9057, %v9056
      %v9170 = vpack.c.b16 %v9059, %v9058
      %v9171 = vpack.c.b16 %v9061, %v9060
      %v9172 = vpack.c.b16 %v9063, %v9062
      %v9173 = vpack.c.b16 %v9065, %v9064
      %v9174 = vpack.c.b16 %v9067, %v9066
      %v9175 = vpack.c.b16 %v9069, %v9068
      %v9176 = vpack.c.b16 %v9071, %v9070
      %v9177 = vpack.c.b16 %v9073, %v9072
      %v9178 = vpack.c.b16 %v9075, %v9074
      %v9179 = vpack.c.b16 %v9077, %v9076
      %v9180 = vpack.c.b16 %v9079, %v9078
      %v9181 = vpack.c.b16 %v9081, %v9080
      %v9182 = vpack.c.b16 %v9083, %v9082
      %v9183 = vpack.c.b16 %v9085, %v9084
      %v9184 = vpack.c.b16 %v9087, %v9086
      %v9185 = vpack.c.b16 %v9089, %v9088
      %v9186 = vpack.c.b16 %v9091, %v9090
      %v9187 = vpack.c.b16 %v9093, %v9092
      %v9188 = vpack.c.b16 %v9095, %v9094
      %v9189 = vpack.c.b16 %v9097, %v9096
      %v9190 = vpack.c.b16 %v9099, %v9098
      %v9191 = vpack.c.b16 %v9101, %v9100
      %v9192 = vpack.c.b16 %v9103, %v9102
      %v9193 = vpack.c.b16 %v9105, %v9104
      %v9194 = vpack.c.b16 %v9107, %v9106
      %v9195 = vpack.c.b16 %v9109, %v9108
      %v9196 = vpack.c.b16 %v9111, %v9110
      %v9197 = vpack.c.b16 %v9113, %v9112
      %v9198 = vpack.c.b16 %v9115, %v9114
      %v9199 = vpack.c.b16 %v9117, %v9116
      %v9200 = vpack.c.b16 %v9119, %v9118
      %v9201 = vpack.c.b16 %v9121, %v9120
      %v9202 = vpack.c.b16 %v9123, %v9122
      %v9203 = vpack.c.b16 %v9125, %v9124
      %v9204 = vpack.c.b16 %v9127, %v9126
      %v9205 = vpack.c.b16 %v9129, %v9128
      %v9206 = vpack.c.b16 %v9131, %v9130
      %v9207 = vpack.c.b16 %v9133, %v9132
      %v9208 = vpack.c.b16 %v9135, %v9134
      %v9209 = vpack.c.b16 %v9137, %v9136
      %9282 = vmatprep.subr.bf16.mxu0 0
      %9283 = vmatpush1.bf16.msra.mxu0 %v9145
      %9284 = vmatprep.subr.bf16.mxu0 0
      %9285 = vmatpush1.bf16.msra.mxu0 %v9144
      %9286 = vmatprep.subr.bf16.mxu0 0
      %9287 = vmatpush1.bf16.msra.mxu0 %v9143
      %9288 = vmatprep.subr.bf16.mxu0 0
      %9289 = vmatpush1.bf16.msra.mxu0 %v9142
      %9290 = vmatprep.subr.bf16.mxu0 0
      %9291 = vmatpush1.bf16.msra.mxu0 %v9141
      %9292 = vmatprep.subr.bf16.mxu0 0
      %9293 = vmatpush1.bf16.msra.mxu0 %v9140
      %9294 = vmatprep.subr.bf16.mxu0 0
      %9295 = vmatpush1.bf16.msra.mxu0 %v9139
      %9296 = vmatprep.subr.bf16.mxu0 0
      %9297 = vmatpush1.bf16.msra.mxu0 %v9138
      %9298 = vmatprep.subr.bf16.mxu0 0
      %9299 = vmatpush2.bf16.msra.mxu0 %v9153
      %9300 = vmatprep.subr.bf16.mxu0 0
      %9301 = vmatpush2.bf16.msra.mxu0 %v9152
      %9302 = vmatprep.subr.bf16.mxu0 0
      %9303 = vmatpush2.bf16.msra.mxu0 %v9151
      %9304 = vmatprep.subr.bf16.mxu0 0
      %9305 = vmatpush2.bf16.msra.mxu0 %v9150
      %9306 = vmatprep.subr.bf16.mxu0 0
      %9307 = vmatpush2.bf16.msra.mxu0 %v9149
      %9308 = vmatprep.subr.bf16.mxu0 0
      %9309 = vmatpush2.bf16.msra.mxu0 %v9148
      %9310 = vmatprep.subr.bf16.mxu0 0
      %9311 = vmatpush2.bf16.msra.mxu0 %v9147
      %9312 = vmatprep.subr.bf16.mxu0 0
      %9313 = vmatpush2.bf16.msra.mxu0 %v9146
      %9314 = vmatprep.mubr.bf16.mxu0 %v8419
      %9315 = vmatmul.mubr.bf16.gmra.mxu0 %v8418
      %v9316 = vpop.f32.mrf.mxu0
      %v9317 = vadd.f32 0.0, %v9316
      %v9318 = vpop.f32.mrf.mxu0
      %v9319 = vpop.f32.mrf.mxu0
      %v9320 = vadd.f32 0.0, %v9319
      %v9321 = vpop.f32.mrf.mxu0
      %9322 = vmatprep.mubr.bf16.mxu0 %v8428
      %9323 = vmatmul.mubr.bf16.gmra.mxu0 %v8427
      %v9324 = vpop.f32.mrf.mxu0
      %v9325 = vpop.f32.mrf.mxu0
      %v9326 = vpop.f32.mrf.mxu0
      %v9327 = vadd.f32 0.0, %v9326
      %v9328 = vpop.f32.mrf.mxu0
      %9329 = vmatprep.mubr.bf16.mxu0 %v8437
      %9330 = vmatmul.mubr.bf16.gmra.mxu0 %v8436
      %v9331 = vpop.f32.mrf.mxu0
      %v9332 = vadd.f32 0.0, %v9331
      %v9333 = vpop.f32.mrf.mxu0
      %v9334 = vpop.f32.mrf.mxu0
      %v9335 = vpop.f32.mrf.mxu0
      %9336 = vmatprep.mubr.bf16.mxu0 %v8446
      %9337 = vmatmul.mubr.bf16.gmra.mxu0 %v8445
      %v9338 = vpop.f32.mrf.mxu0
      %v9339 = vadd.f32 0.0, %v9338
      %v9340 = vpop.f32.mrf.mxu0
      %v9341 = vpop.f32.mrf.mxu0
      %v9342 = vadd.f32 0.0, %v9341
      %v9343 = vpop.f32.mrf.mxu0
      %9344 = vmatprep.mubr.bf16.mxu0 %v8455
      %9345 = vmatmul.mubr.bf16.gmra.mxu0 %v8454
      %v9346 = vpop.f32.mrf.mxu0
      %v9347 = vpop.f32.mrf.mxu0
      %v9348 = vpop.f32.mrf.mxu0
      %v9349 = vadd.f32 0.0, %v9348
      %v9350 = vpop.f32.mrf.mxu0
      %9351 = vmatprep.mubr.bf16.mxu0 %v8464
      %9352 = vmatmul.mubr.bf16.gmra.mxu0 %v8463
      %v9353 = vpop.f32.mrf.mxu0
      %v9354 = vadd.f32 0.0, %v9353
      %v9355 = vpop.f32.mrf.mxu0
      %v9356 = vpop.f32.mrf.mxu0
      %v9357 = vpop.f32.mrf.mxu0
      %9358 = vmatprep.mubr.bf16.mxu0 %v8473
      %9359 = vmatmul.mubr.bf16.gmra.mxu0 %v8472
      %v9360 = vpop.f32.mrf.mxu0
      %v9361 = vadd.f32 0.0, %v9360
      %v9362 = vpop.f32.mrf.mxu0
      %v9363 = vpop.f32.mrf.mxu0
      %v9364 = vadd.f32 0.0, %v9363
      %v9365 = vpop.f32.mrf.mxu0
      %9366 = vmatprep.mubr.bf16.mxu0 %v8482
      %9367 = vmatmul.mubr.bf16.gmra.mxu0 %v8481
      %v9368 = vpop.f32.mrf.mxu0
      %v9369 = vpop.f32.mrf.mxu0
      %v9370 = vpop.f32.mrf.mxu0
      %v9371 = vadd.f32 0.0, %v9370
      %v9372 = vpop.f32.mrf.mxu0
      %9373 = vmatprep.mubr.bf16.mxu0 %v8491
      %9374 = vmatmul.mubr.bf16.gmra.mxu0 %v8490
      %v9375 = vpop.f32.mrf.mxu0
      %v9376 = vadd.f32 0.0, %v9375
      %v9377 = vpop.f32.mrf.mxu0
      %v9378 = vpop.f32.mrf.mxu0
      %v9379 = vpop.f32.mrf.mxu0
      %9380 = vmatprep.mubr.bf16.mxu0 %v8500
      %9381 = vmatmul.mubr.bf16.gmra.mxu0 %v8499
      %v9382 = vpop.f32.mrf.mxu0
      %v9383 = vadd.f32 0.0, %v9382
      %v9384 = vpop.f32.mrf.mxu0
      %v9385 = vpop.f32.mrf.mxu0
      %v9386 = vadd.f32 0.0, %v9385
      %v9387 = vpop.f32.mrf.mxu0
      %9388 = vmatprep.mubr.bf16.mxu0 %v8509
      %9389 = vmatmul.mubr.bf16.gmra.mxu0 %v8508
      %v9390 = vpop.f32.mrf.mxu0
      %v9391 = vpop.f32.mrf.mxu0
      %v9392 = vpop.f32.mrf.mxu0
      %v9393 = vadd.f32 0.0, %v9392
      %v9394 = vpop.f32.mrf.mxu0
      %9395 = vmatprep.mubr.bf16.mxu0 %v8518
      %9396 = vmatmul.mubr.bf16.gmra.mxu0 %v8517
      %v9397 = vpop.f32.mrf.mxu0
      %v9398 = vadd.f32 0.0, %v9397
      %v9399 = vpop.f32.mrf.mxu0
      %v9400 = vpop.f32.mrf.mxu0
      %v9401 = vpop.f32.mrf.mxu0
      %9402 = vmatprep.mubr.bf16.mxu0 %v8527
      %9403 = vmatmul.mubr.bf16.gmra.mxu0 %v8526
      %v9404 = vpop.f32.mrf.mxu0
      %v9405 = vadd.f32 0.0, %v9404
      %v9406 = vpop.f32.mrf.mxu0
      %v9407 = vpop.f32.mrf.mxu0
      %v9408 = vadd.f32 0.0, %v9407
      %v9409 = vpop.f32.mrf.mxu0
      %9410 = vmatprep.mubr.bf16.mxu0 %v8536
      %9411 = vmatmul.mubr.bf16.gmra.mxu0 %v8535
      %v9412 = vpop.f32.mrf.mxu0
      %v9413 = vpop.f32.mrf.mxu0
      %v9414 = vpop.f32.mrf.mxu0
      %v9415 = vadd.f32 0.0, %v9414
      %v9416 = vpop.f32.mrf.mxu0
      %9417 = vmatprep.mubr.bf16.mxu0 %v8545
      %9418 = vmatmul.mubr.bf16.gmra.mxu0 %v8544
      %v9419 = vpop.f32.mrf.mxu0
      %v9420 = vadd.f32 0.0, %v9419
      %v9421 = vpop.f32.mrf.mxu0
      %v9422 = vpop.f32.mrf.mxu0
      %v9423 = vpop.f32.mrf.mxu0
      %9424 = vmatprep.mubr.bf16.mxu0 %v8554
      %9425 = vmatmul.mubr.bf16.gmra.mxu0 %v8553
      %v9426 = vpop.f32.mrf.mxu0
      %v9427 = vadd.f32 0.0, %v9426
      %v9428 = vpop.f32.mrf.mxu0
      %v9429 = vpop.f32.mrf.mxu0
      %v9430 = vadd.f32 0.0, %v9429
      %v9431 = vpop.f32.mrf.mxu0
      %9432 = vmatprep.mubr.bf16.mxu0 %v8563
      %9433 = vmatmul.mubr.bf16.gmra.mxu0 %v8562
      %v9434 = vpop.f32.mrf.mxu0
      %v9435 = vpop.f32.mrf.mxu0
      %v9436 = vpop.f32.mrf.mxu0
      %v9437 = vadd.f32 0.0, %v9436
      %v9438 = vpop.f32.mrf.mxu0
      %9439 = vmatprep.mubr.bf16.mxu0 %v8572
      %9440 = vmatmul.mubr.bf16.gmra.mxu0 %v8571
      %v9441 = vpop.f32.mrf.mxu0
      %v9442 = vadd.f32 0.0, %v9441
      %v9443 = vpop.f32.mrf.mxu0
      %v9444 = vpop.f32.mrf.mxu0
      %v9445 = vpop.f32.mrf.mxu0
      %9446 = vmatprep.mubr.bf16.mxu0 %v8581
      %9447 = vmatmul.mubr.bf16.gmra.mxu0 %v8580
      %v9448 = vpop.f32.mrf.mxu0
      %v9449 = vadd.f32 0.0, %v9448
      %v9450 = vpop.f32.mrf.mxu0
      %v9451 = vpop.f32.mrf.mxu0
      %v9452 = vadd.f32 0.0, %v9451
      %v9453 = vpop.f32.mrf.mxu0
      %9454 = vmatprep.mubr.bf16.mxu0 %v8590
      %9455 = vmatmul.mubr.bf16.gmra.mxu0 %v8589
      %v9456 = vpop.f32.mrf.mxu0
      %v9457 = vpop.f32.mrf.mxu0
      %v9458 = vpop.f32.mrf.mxu0
      %v9459 = vadd.f32 0.0, %v9458
      %v9460 = vpop.f32.mrf.mxu0
      %9461 = vmatprep.mubr.bf16.mxu0 %v8599
      %9462 = vmatmul.mubr.bf16.gmra.mxu0 %v8598
      %v9463 = vpop.f32.mrf.mxu0
      %v9464 = vadd.f32 0.0, %v9463
      %v9465 = vpop.f32.mrf.mxu0
      %v9466 = vpop.f32.mrf.mxu0
      %v9467 = vpop.f32.mrf.mxu0
      %9468 = vmatprep.mubr.bf16.mxu0 %v8608
      %9469 = vmatmul.mubr.bf16.gmra.mxu0 %v8607
      %v9470 = vpop.f32.mrf.mxu0
      %v9471 = vadd.f32 0.0, %v9470
      %v9472 = vpop.f32.mrf.mxu0
      %v9473 = vpop.f32.mrf.mxu0
      %v9474 = vadd.f32 0.0, %v9473
      %v9475 = vpop.f32.mrf.mxu0
      %9476 = vmatprep.mubr.bf16.mxu0 %v8617
      %9477 = vmatmul.mubr.bf16.gmra.mxu0 %v8616
      %v9478 = vpop.f32.mrf.mxu0
      %v9479 = vpop.f32.mrf.mxu0
      %v9480 = vpop.f32.mrf.mxu0
      %v9481 = vadd.f32 0.0, %v9480
      %v9482 = vpop.f32.mrf.mxu0
      %9483 = vmatprep.mubr.bf16.mxu0 %v8626
      %9484 = vmatmul.mubr.bf16.gmra.mxu0 %v8625
      %v9485 = vpop.f32.mrf.mxu0
      %v9486 = vadd.f32 0.0, %v9485
      %v9487 = vpop.f32.mrf.mxu0
      %v9488 = vpop.f32.mrf.mxu0
      %v9489 = vpop.f32.mrf.mxu0
      %9490 = vdwg.mxu0
      %9491 = vmatprep.subr.bf16.mxu0 0
      %9492 = vmatpush1.bf16.msra.mxu0 %v9161
      %9493 = vmatprep.subr.bf16.mxu0 0
      %9494 = vmatpush1.bf16.msra.mxu0 %v9160
      %9495 = vmatprep.subr.bf16.mxu0 0
      %9496 = vmatpush1.bf16.msra.mxu0 %v9159
      %9497 = vmatprep.subr.bf16.mxu0 0
      %9498 = vmatpush1.bf16.msra.mxu0 %v9158
      %9499 = vmatprep.subr.bf16.mxu0 0
      %9500 = vmatpush1.bf16.msra.mxu0 %v9157
      %9501 = vmatprep.subr.bf16.mxu0 0
      %9502 = vmatpush1.bf16.msra.mxu0 %v9156
      %9503 = vmatprep.subr.bf16.mxu0 0
      %9504 = vmatpush1.bf16.msra.mxu0 %v9155
      %9505 = vmatprep.subr.bf16.mxu0 0
      %9506 = vmatpush1.bf16.msra.mxu0 %v9154
      %9507 = vmatprep.subr.bf16.mxu0 0
      %9508 = vmatpush2.bf16.msra.mxu0 %v9169
      %9509 = vmatprep.subr.bf16.mxu0 0
      %9510 = vmatpush2.bf16.msra.mxu0 %v9168
      %9511 = vmatprep.subr.bf16.mxu0 0
      %9512 = vmatpush2.bf16.msra.mxu0 %v9167
      %9513 = vmatprep.subr.bf16.mxu0 0
      %9514 = vmatpush2.bf16.msra.mxu0 %v9166
      %9515 = vmatprep.subr.bf16.mxu0 0
      %9516 = vmatpush2.bf16.msra.mxu0 %v9165
      %9517 = vmatprep.subr.bf16.mxu0 0
      %9518 = vmatpush2.bf16.msra.mxu0 %v9164
      %9519 = vmatprep.subr.bf16.mxu0 0
      %9520 = vmatpush2.bf16.msra.mxu0 %v9163
      %9521 = vmatprep.subr.bf16.mxu0 0
      %9522 = vmatpush2.bf16.msra.mxu0 %v9162
      %9523 = vmatprep.mubr.bf16.mxu0 %v8421
      %9524 = vmatmul.mubr.bf16.gmra.mxu0 %v8420
      %v9525 = vpop.f32.mrf.mxu0
      %v9526 = vadd.f32 %v9317, %v9525
      %v9527 = vpop.f32.mrf.mxu0
      %v9528 = vpop.f32.mrf.mxu0
      %v9529 = vadd.f32 %v9320, %v9528
      %v9530 = vpop.f32.mrf.mxu0
      %9531 = vmatprep.mubr.bf16.mxu0 %v8430
      %9532 = vmatmul.mubr.bf16.gmra.mxu0 %v8429
      %v9533 = vpop.f32.mrf.mxu0
      %v9534 = vpop.f32.mrf.mxu0
      %v9535 = vpop.f32.mrf.mxu0
      %v9536 = vadd.f32 %v9327, %v9535
      %v9537 = vpop.f32.mrf.mxu0
      %9538 = vmatprep.mubr.bf16.mxu0 %v8439
      %9539 = vmatmul.mubr.bf16.gmra.mxu0 %v8438
      %v9540 = vpop.f32.mrf.mxu0
      %v9541 = vadd.f32 %v9332, %v9540
      %v9542 = vpop.f32.mrf.mxu0
      %v9543 = vpop.f32.mrf.mxu0
      %v9544 = vpop.f32.mrf.mxu0
      %9545 = vmatprep.mubr.bf16.mxu0 %v8448
      %9546 = vmatmul.mubr.bf16.gmra.mxu0 %v8447
      %v9547 = vpop.f32.mrf.mxu0
      %v9548 = vadd.f32 %v9339, %v9547
      %v9549 = vpop.f32.mrf.mxu0
      %v9550 = vpop.f32.mrf.mxu0
      %v9551 = vadd.f32 %v9342, %v9550
      %v9552 = vpop.f32.mrf.mxu0
      %9553 = vmatprep.mubr.bf16.mxu0 %v8457
      %9554 = vmatmul.mubr.bf16.gmra.mxu0 %v8456
      %v9555 = vpop.f32.mrf.mxu0
      %v9556 = vpop.f32.mrf.mxu0
      %v9557 = vpop.f32.mrf.mxu0
      %v9558 = vadd.f32 %v9349, %v9557
      %v9559 = vpop.f32.mrf.mxu0
      %9560 = vmatprep.mubr.bf16.mxu0 %v8466
      %9561 = vmatmul.mubr.bf16.gmra.mxu0 %v8465
      %v9562 = vpop.f32.mrf.mxu0
      %v9563 = vadd.f32 %v9354, %v9562
      %v9564 = vpop.f32.mrf.mxu0
      %v9565 = vpop.f32.mrf.mxu0
      %v9566 = vpop.f32.mrf.mxu0
      %9567 = vmatprep.mubr.bf16.mxu0 %v8475
      %9568 = vmatmul.mubr.bf16.gmra.mxu0 %v8474
      %v9569 = vpop.f32.mrf.mxu0
      %v9570 = vadd.f32 %v9361, %v9569
      %v9571 = vpop.f32.mrf.mxu0
      %v9572 = vpop.f32.mrf.mxu0
      %v9573 = vadd.f32 %v9364, %v9572
      %v9574 = vpop.f32.mrf.mxu0
      %9575 = vmatprep.mubr.bf16.mxu0 %v8484
      %9576 = vmatmul.mubr.bf16.gmra.mxu0 %v8483
      %v9577 = vpop.f32.mrf.mxu0
      %v9578 = vpop.f32.mrf.mxu0
      %v9579 = vpop.f32.mrf.mxu0
      %v9580 = vadd.f32 %v9371, %v9579
      %v9581 = vpop.f32.mrf.mxu0
      %9582 = vmatprep.mubr.bf16.mxu0 %v8493
      %9583 = vmatmul.mubr.bf16.gmra.mxu0 %v8492
      %v9584 = vpop.f32.mrf.mxu0
      %v9585 = vadd.f32 %v9376, %v9584
      %v9586 = vpop.f32.mrf.mxu0
      %v9587 = vpop.f32.mrf.mxu0
      %v9588 = vpop.f32.mrf.mxu0
      %9589 = vmatprep.mubr.bf16.mxu0 %v8502
      %9590 = vmatmul.mubr.bf16.gmra.mxu0 %v8501
      %v9591 = vpop.f32.mrf.mxu0
      %v9592 = vadd.f32 %v9383, %v9591
      %v9593 = vpop.f32.mrf.mxu0
      %v9594 = vpop.f32.mrf.mxu0
      %v9595 = vadd.f32 %v9386, %v9594
      %v9596 = vpop.f32.mrf.mxu0
      %9597 = vmatprep.mubr.bf16.mxu0 %v8511
      %9598 = vmatmul.mubr.bf16.gmra.mxu0 %v8510
      %v9599 = vpop.f32.mrf.mxu0
      %v9600 = vpop.f32.mrf.mxu0
      %v9601 = vpop.f32.mrf.mxu0
      %v9602 = vadd.f32 %v9393, %v9601
      %v9603 = vpop.f32.mrf.mxu0
      %9604 = vmatprep.mubr.bf16.mxu0 %v8520
      %9605 = vmatmul.mubr.bf16.gmra.mxu0 %v8519
      %v9606 = vpop.f32.mrf.mxu0
      %v9607 = vadd.f32 %v9398, %v9606
      %v9608 = vpop.f32.mrf.mxu0
      %v9609 = vpop.f32.mrf.mxu0
      %v9610 = vpop.f32.mrf.mxu0
      %9611 = vmatprep.mubr.bf16.mxu0 %v8529
      %9612 = vmatmul.mubr.bf16.gmra.mxu0 %v8528
      %v9613 = vpop.f32.mrf.mxu0
      %v9614 = vadd.f32 %v9405, %v9613
      %v9615 = vpop.f32.mrf.mxu0
      %v9616 = vpop.f32.mrf.mxu0
      %v9617 = vadd.f32 %v9408, %v9616
      %v9618 = vpop.f32.mrf.mxu0
      %9619 = vmatprep.mubr.bf16.mxu0 %v8538
      %9620 = vmatmul.mubr.bf16.gmra.mxu0 %v8537
      %v9621 = vpop.f32.mrf.mxu0
      %v9622 = vpop.f32.mrf.mxu0
      %v9623 = vpop.f32.mrf.mxu0
      %v9624 = vadd.f32 %v9415, %v9623
      %v9625 = vpop.f32.mrf.mxu0
      %9626 = vmatprep.mubr.bf16.mxu0 %v8547
      %9627 = vmatmul.mubr.bf16.gmra.mxu0 %v8546
      %v9628 = vpop.f32.mrf.mxu0
      %v9629 = vadd.f32 %v9420, %v9628
      %v9630 = vpop.f32.mrf.mxu0
      %v9631 = vpop.f32.mrf.mxu0
      %v9632 = vpop.f32.mrf.mxu0
      %9633 = vmatprep.mubr.bf16.mxu0 %v8556
      %9634 = vmatmul.mubr.bf16.gmra.mxu0 %v8555
      %v9635 = vpop.f32.mrf.mxu0
      %v9636 = vadd.f32 %v9427, %v9635
      %v9637 = vpop.f32.mrf.mxu0
      %v9638 = vpop.f32.mrf.mxu0
      %v9639 = vadd.f32 %v9430, %v9638
      %v9640 = vpop.f32.mrf.mxu0
      %9641 = vmatprep.mubr.bf16.mxu0 %v8565
      %9642 = vmatmul.mubr.bf16.gmra.mxu0 %v8564
      %v9643 = vpop.f32.mrf.mxu0
      %v9644 = vpop.f32.mrf.mxu0
      %v9645 = vpop.f32.mrf.mxu0
      %v9646 = vadd.f32 %v9437, %v9645
      %v9647 = vpop.f32.mrf.mxu0
      %9648 = vmatprep.mubr.bf16.mxu0 %v8574
      %9649 = vmatmul.mubr.bf16.gmra.mxu0 %v8573
      %v9650 = vpop.f32.mrf.mxu0
      %v9651 = vadd.f32 %v9442, %v9650
      %v9652 = vpop.f32.mrf.mxu0
      %v9653 = vpop.f32.mrf.mxu0
      %v9654 = vpop.f32.mrf.mxu0
      %9655 = vmatprep.mubr.bf16.mxu0 %v8583
      %9656 = vmatmul.mubr.bf16.gmra.mxu0 %v8582
      %v9657 = vpop.f32.mrf.mxu0
      %v9658 = vadd.f32 %v9449, %v9657
      %v9659 = vpop.f32.mrf.mxu0
      %v9660 = vpop.f32.mrf.mxu0
      %v9661 = vadd.f32 %v9452, %v9660
      %v9662 = vpop.f32.mrf.mxu0
      %9663 = vmatprep.mubr.bf16.mxu0 %v8592
      %9664 = vmatmul.mubr.bf16.gmra.mxu0 %v8591
      %v9665 = vpop.f32.mrf.mxu0
      %v9666 = vpop.f32.mrf.mxu0
      %v9667 = vpop.f32.mrf.mxu0
      %v9668 = vadd.f32 %v9459, %v9667
      %v9669 = vpop.f32.mrf.mxu0
      %9670 = vmatprep.mubr.bf16.mxu0 %v8601
      %9671 = vmatmul.mubr.bf16.gmra.mxu0 %v8600
      %v9672 = vpop.f32.mrf.mxu0
      %v9673 = vadd.f32 %v9464, %v9672
      %v9674 = vpop.f32.mrf.mxu0
      %v9675 = vpop.f32.mrf.mxu0
      %v9676 = vpop.f32.mrf.mxu0
      %9677 = vmatprep.mubr.bf16.mxu0 %v8610
      %9678 = vmatmul.mubr.bf16.gmra.mxu0 %v8609
      %v9679 = vpop.f32.mrf.mxu0
      %v9680 = vadd.f32 %v9471, %v9679
      %v9681 = vpop.f32.mrf.mxu0
      %v9682 = vpop.f32.mrf.mxu0
      %v9683 = vadd.f32 %v9474, %v9682
      %v9684 = vpop.f32.mrf.mxu0
      %9685 = vmatprep.mubr.bf16.mxu0 %v8619
      %9686 = vmatmul.mubr.bf16.gmra.mxu0 %v8618
      %v9687 = vpop.f32.mrf.mxu0
      %v9688 = vpop.f32.mrf.mxu0
      %v9689 = vpop.f32.mrf.mxu0
      %v9690 = vadd.f32 %v9481, %v9689
      %v9691 = vpop.f32.mrf.mxu0
      %9692 = vmatprep.mubr.bf16.mxu0 %v8628
      %9693 = vmatmul.mubr.bf16.gmra.mxu0 %v8627
      %v9694 = vpop.f32.mrf.mxu0
      %v9695 = vadd.f32 %v9486, %v9694
      %v9696 = vpop.f32.mrf.mxu0
      %v9697 = vpop.f32.mrf.mxu0
      %v9698 = vpop.f32.mrf.mxu0
      %9699 = vdwg.mxu0
      %9700 = vmatprep.subr.bf16.mxu0 0
      %9701 = vmatpush1.bf16.msra.mxu0 %v9177
      %9702 = vmatprep.subr.bf16.mxu0 0
      %9703 = vmatpush1.bf16.msra.mxu0 %v9176
      %9704 = vmatprep.subr.bf16.mxu0 0
      %9705 = vmatpush1.bf16.msra.mxu0 %v9175
      %9706 = vmatprep.subr.bf16.mxu0 0
      %9707 = vmatpush1.bf16.msra.mxu0 %v9174
      %9708 = vmatprep.subr.bf16.mxu0 0
      %9709 = vmatpush1.bf16.msra.mxu0 %v9173
      %9710 = vmatprep.subr.bf16.mxu0 0
      %9711 = vmatpush1.bf16.msra.mxu0 %v9172
      %9712 = vmatprep.subr.bf16.mxu0 0
      %9713 = vmatpush1.bf16.msra.mxu0 %v9171
      %9714 = vmatprep.subr.bf16.mxu0 0
      %9715 = vmatpush1.bf16.msra.mxu0 %v9170
      %9716 = vmatprep.subr.bf16.mxu0 0
      %9717 = vmatpush2.bf16.msra.mxu0 %v9185
      %9718 = vmatprep.subr.bf16.mxu0 0
      %9719 = vmatpush2.bf16.msra.mxu0 %v9184
      %9720 = vmatprep.subr.bf16.mxu0 0
      %9721 = vmatpush2.bf16.msra.mxu0 %v9183
      %9722 = vmatprep.subr.bf16.mxu0 0
      %9723 = vmatpush2.bf16.msra.mxu0 %v9182
      %9724 = vmatprep.subr.bf16.mxu0 0
      %9725 = vmatpush2.bf16.msra.mxu0 %v9181
      %9726 = vmatprep.subr.bf16.mxu0 0
      %9727 = vmatpush2.bf16.msra.mxu0 %v9180
      %9728 = vmatprep.subr.bf16.mxu0 0
      %9729 = vmatpush2.bf16.msra.mxu0 %v9179
      %9730 = vmatprep.subr.bf16.mxu0 0
      %9731 = vmatpush2.bf16.msra.mxu0 %v9178
      %9732 = vmatprep.mubr.bf16.mxu0 %v8423
      %9733 = vmatmul.mubr.bf16.gmra.mxu0 %v8422
      %v9734 = vpop.f32.mrf.mxu0
      %v9735 = vadd.f32 %v9526, %v9734
      %v9736 = vpop.f32.mrf.mxu0
      %v9737 = vpop.f32.mrf.mxu0
      %v9738 = vadd.f32 %v9529, %v9737
      %v9739 = vpop.f32.mrf.mxu0
      %9740 = vmatprep.mubr.bf16.mxu0 %v8432
      %9741 = vmatmul.mubr.bf16.gmra.mxu0 %v8431
      %v9742 = vpop.f32.mrf.mxu0
      %v9743 = vpop.f32.mrf.mxu0
      %v9744 = vpop.f32.mrf.mxu0
      %v9745 = vadd.f32 %v9536, %v9744
      %v9746 = vpop.f32.mrf.mxu0
      %9747 = vmatprep.mubr.bf16.mxu0 %v8441
      %9748 = vmatmul.mubr.bf16.gmra.mxu0 %v8440
      %v9749 = vpop.f32.mrf.mxu0
      %v9750 = vadd.f32 %v9541, %v9749
      %v9751 = vpop.f32.mrf.mxu0
      %v9752 = vpop.f32.mrf.mxu0
      %v9753 = vpop.f32.mrf.mxu0
      %9754 = vmatprep.mubr.bf16.mxu0 %v8450
      %9755 = vmatmul.mubr.bf16.gmra.mxu0 %v8449
      %v9756 = vpop.f32.mrf.mxu0
      %v9757 = vadd.f32 %v9548, %v9756
      %v9758 = vpop.f32.mrf.mxu0
      %v9759 = vpop.f32.mrf.mxu0
      %v9760 = vadd.f32 %v9551, %v9759
      %v9761 = vpop.f32.mrf.mxu0
      %9762 = vmatprep.mubr.bf16.mxu0 %v8459
      %9763 = vmatmul.mubr.bf16.gmra.mxu0 %v8458
      %v9764 = vpop.f32.mrf.mxu0
      %v9765 = vpop.f32.mrf.mxu0
      %v9766 = vpop.f32.mrf.mxu0
      %v9767 = vadd.f32 %v9558, %v9766
      %v9768 = vpop.f32.mrf.mxu0
      %9769 = vmatprep.mubr.bf16.mxu0 %v8468
      %9770 = vmatmul.mubr.bf16.gmra.mxu0 %v8467
      %v9771 = vpop.f32.mrf.mxu0
      %v9772 = vadd.f32 %v9563, %v9771
      %v9773 = vpop.f32.mrf.mxu0
      %v9774 = vpop.f32.mrf.mxu0
      %v9775 = vpop.f32.mrf.mxu0
      %9776 = vmatprep.mubr.bf16.mxu0 %v8477
      %9777 = vmatmul.mubr.bf16.gmra.mxu0 %v8476
      %v9778 = vpop.f32.mrf.mxu0
      %v9779 = vadd.f32 %v9570, %v9778
      %v9780 = vpop.f32.mrf.mxu0
      %v9781 = vpop.f32.mrf.mxu0
      %v9782 = vadd.f32 %v9573, %v9781
      %v9783 = vpop.f32.mrf.mxu0
      %9784 = vmatprep.mubr.bf16.mxu0 %v8486
      %9785 = vmatmul.mubr.bf16.gmra.mxu0 %v8485
      %v9786 = vpop.f32.mrf.mxu0
      %v9787 = vpop.f32.mrf.mxu0
      %v9788 = vpop.f32.mrf.mxu0
      %v9789 = vadd.f32 %v9580, %v9788
      %v9790 = vpop.f32.mrf.mxu0
      %9791 = vmatprep.mubr.bf16.mxu0 %v8495
      %9792 = vmatmul.mubr.bf16.gmra.mxu0 %v8494
      %v9793 = vpop.f32.mrf.mxu0
      %v9794 = vadd.f32 %v9585, %v9793
      %v9795 = vpop.f32.mrf.mxu0
      %v9796 = vpop.f32.mrf.mxu0
      %v9797 = vpop.f32.mrf.mxu0
      %9798 = vmatprep.mubr.bf16.mxu0 %v8504
      %9799 = vmatmul.mubr.bf16.gmra.mxu0 %v8503
      %v9800 = vpop.f32.mrf.mxu0
      %v9801 = vadd.f32 %v9592, %v9800
      %v9802 = vpop.f32.mrf.mxu0
      %v9803 = vpop.f32.mrf.mxu0
      %v9804 = vadd.f32 %v9595, %v9803
      %v9805 = vpop.f32.mrf.mxu0
      %9806 = vmatprep.mubr.bf16.mxu0 %v8513
      %9807 = vmatmul.mubr.bf16.gmra.mxu0 %v8512
      %v9808 = vpop.f32.mrf.mxu0
      %v9809 = vpop.f32.mrf.mxu0
      %v9810 = vpop.f32.mrf.mxu0
      %v9811 = vadd.f32 %v9602, %v9810
      %v9812 = vpop.f32.mrf.mxu0
      %9813 = vmatprep.mubr.bf16.mxu0 %v8522
      %9814 = vmatmul.mubr.bf16.gmra.mxu0 %v8521
      %v9815 = vpop.f32.mrf.mxu0
      %v9816 = vadd.f32 %v9607, %v9815
      %v9817 = vpop.f32.mrf.mxu0
      %v9818 = vpop.f32.mrf.mxu0
      %v9819 = vpop.f32.mrf.mxu0
      %9820 = vmatprep.mubr.bf16.mxu0 %v8531
      %9821 = vmatmul.mubr.bf16.gmra.mxu0 %v8530
      %v9822 = vpop.f32.mrf.mxu0
      %v9823 = vadd.f32 %v9614, %v9822
      %v9824 = vpop.f32.mrf.mxu0
      %v9825 = vpop.f32.mrf.mxu0
      %v9826 = vadd.f32 %v9617, %v9825
      %v9827 = vpop.f32.mrf.mxu0
      %9828 = vmatprep.mubr.bf16.mxu0 %v8540
      %9829 = vmatmul.mubr.bf16.gmra.mxu0 %v8539
      %v9830 = vpop.f32.mrf.mxu0
      %v9831 = vpop.f32.mrf.mxu0
      %v9832 = vpop.f32.mrf.mxu0
      %v9833 = vadd.f32 %v9624, %v9832
      %v9834 = vpop.f32.mrf.mxu0
      %9835 = vmatprep.mubr.bf16.mxu0 %v8549
      %9836 = vmatmul.mubr.bf16.gmra.mxu0 %v8548
      %v9837 = vpop.f32.mrf.mxu0
      %v9838 = vadd.f32 %v9629, %v9837
      %v9839 = vpop.f32.mrf.mxu0
      %v9840 = vpop.f32.mrf.mxu0
      %v9841 = vpop.f32.mrf.mxu0
      %9842 = vmatprep.mubr.bf16.mxu0 %v8558
      %9843 = vmatmul.mubr.bf16.gmra.mxu0 %v8557
      %v9844 = vpop.f32.mrf.mxu0
      %v9845 = vadd.f32 %v9636, %v9844
      %v9846 = vpop.f32.mrf.mxu0
      %v9847 = vpop.f32.mrf.mxu0
      %v9848 = vadd.f32 %v9639, %v9847
      %v9849 = vpop.f32.mrf.mxu0
      %9850 = vmatprep.mubr.bf16.mxu0 %v8567
      %9851 = vmatmul.mubr.bf16.gmra.mxu0 %v8566
      %v9852 = vpop.f32.mrf.mxu0
      %v9853 = vpop.f32.mrf.mxu0
      %v9854 = vpop.f32.mrf.mxu0
      %v9855 = vadd.f32 %v9646, %v9854
      %v9856 = vpop.f32.mrf.mxu0
      %9857 = vmatprep.mubr.bf16.mxu0 %v8576
      %9858 = vmatmul.mubr.bf16.gmra.mxu0 %v8575
      %v9859 = vpop.f32.mrf.mxu0
      %v9860 = vadd.f32 %v9651, %v9859
      %v9861 = vpop.f32.mrf.mxu0
      %v9862 = vpop.f32.mrf.mxu0
      %v9863 = vpop.f32.mrf.mxu0
      %9864 = vmatprep.mubr.bf16.mxu0 %v8585
      %9865 = vmatmul.mubr.bf16.gmra.mxu0 %v8584
      %v9866 = vpop.f32.mrf.mxu0
      %v9867 = vadd.f32 %v9658, %v9866
      %v9868 = vpop.f32.mrf.mxu0
      %v9869 = vpop.f32.mrf.mxu0
      %v9870 = vadd.f32 %v9661, %v9869
      %v9871 = vpop.f32.mrf.mxu0
      %9872 = vmatprep.mubr.bf16.mxu0 %v8594
      %9873 = vmatmul.mubr.bf16.gmra.mxu0 %v8593
      %v9874 = vpop.f32.mrf.mxu0
      %v9875 = vpop.f32.mrf.mxu0
      %v9876 = vpop.f32.mrf.mxu0
      %v9877 = vadd.f32 %v9668, %v9876
      %v9878 = vpop.f32.mrf.mxu0
      %9879 = vmatprep.mubr.bf16.mxu0 %v8603
      %9880 = vmatmul.mubr.bf16.gmra.mxu0 %v8602
      %v9881 = vpop.f32.mrf.mxu0
      %v9882 = vadd.f32 %v9673, %v9881
      %v9883 = vpop.f32.mrf.mxu0
      %v9884 = vpop.f32.mrf.mxu0
      %v9885 = vpop.f32.mrf.mxu0
      %9886 = vmatprep.mubr.bf16.mxu0 %v8612
      %9887 = vmatmul.mubr.bf16.gmra.mxu0 %v8611
      %v9888 = vpop.f32.mrf.mxu0
      %v9889 = vadd.f32 %v9680, %v9888
      %v9890 = vpop.f32.mrf.mxu0
      %v9891 = vpop.f32.mrf.mxu0
      %v9892 = vadd.f32 %v9683, %v9891
      %v9893 = vpop.f32.mrf.mxu0
      %9894 = vmatprep.mubr.bf16.mxu0 %v8621
      %9895 = vmatmul.mubr.bf16.gmra.mxu0 %v8620
      %v9896 = vpop.f32.mrf.mxu0
      %v9897 = vpop.f32.mrf.mxu0
      %v9898 = vpop.f32.mrf.mxu0
      %v9899 = vadd.f32 %v9690, %v9898
      %v9900 = vpop.f32.mrf.mxu0
      %9901 = vmatprep.mubr.bf16.mxu0 %v8630
      %9902 = vmatmul.mubr.bf16.gmra.mxu0 %v8629
      %v9903 = vpop.f32.mrf.mxu0
      %v9904 = vadd.f32 %v9695, %v9903
      %v9905 = vpop.f32.mrf.mxu0
      %v9906 = vpop.f32.mrf.mxu0
      %v9907 = vpop.f32.mrf.mxu0
      %9908 = vdwg.mxu0
      %9909 = vmatprep.subr.bf16.mxu0 0
      %9910 = vmatpush1.bf16.msra.mxu0 %v9193
      %9911 = vmatprep.subr.bf16.mxu0 0
      %9912 = vmatpush1.bf16.msra.mxu0 %v9192
      %9913 = vmatprep.subr.bf16.mxu0 0
      %9914 = vmatpush1.bf16.msra.mxu0 %v9191
      %9915 = vmatprep.subr.bf16.mxu0 0
      %9916 = vmatpush1.bf16.msra.mxu0 %v9190
      %9917 = vmatprep.subr.bf16.mxu0 0
      %9918 = vmatpush1.bf16.msra.mxu0 %v9189
      %9919 = vmatprep.subr.bf16.mxu0 0
      %9920 = vmatpush1.bf16.msra.mxu0 %v9188
      %9921 = vmatprep.subr.bf16.mxu0 0
      %9922 = vmatpush1.bf16.msra.mxu0 %v9187
      %9923 = vmatprep.subr.bf16.mxu0 0
      %9924 = vmatpush1.bf16.msra.mxu0 %v9186
      %9925 = vmatprep.subr.bf16.mxu0 0
      %9926 = vmatpush2.bf16.msra.mxu0 %v9201
      %9927 = vmatprep.subr.bf16.mxu0 0
      %9928 = vmatpush2.bf16.msra.mxu0 %v9200
      %9929 = vmatprep.subr.bf16.mxu0 0
      %9930 = vmatpush2.bf16.msra.mxu0 %v9199
      %9931 = vmatprep.subr.bf16.mxu0 0
      %9932 = vmatpush2.bf16.msra.mxu0 %v9198
      %9933 = vmatprep.subr.bf16.mxu0 0
      %9934 = vmatpush2.bf16.msra.mxu0 %v9197
      %9935 = vmatprep.subr.bf16.mxu0 0
      %9936 = vmatpush2.bf16.msra.mxu0 %v9196
      %9937 = vmatprep.subr.bf16.mxu0 0
      %9938 = vmatpush2.bf16.msra.mxu0 %v9195
      %9939 = vmatprep.subr.bf16.mxu0 0
      %9940 = vmatpush2.bf16.msra.mxu0 %v9194
      %9941 = vmatprep.mubr.bf16.mxu0 %v8425
      %9942 = vmatmul.mubr.bf16.gmra.mxu0 %v8424
      %v9943 = vpop.f32.mrf.mxu0
      %v9944 = vadd.f32 %v9735, %v9943
      %v9945 = vpop.f32.mrf.mxu0
      %v9946 = vpop.f32.mrf.mxu0
      %v9947 = vadd.f32 %v9738, %v9946
      %v9948 = vpop.f32.mrf.mxu0
      %9949 = vmatprep.mubr.bf16.mxu0 %v8434
      %9950 = vmatmul.mubr.bf16.gmra.mxu0 %v8433
      %v9951 = vpop.f32.mrf.mxu0
      %v9952 = vpop.f32.mrf.mxu0
      %v9953 = vpop.f32.mrf.mxu0
      %v9954 = vadd.f32 %v9745, %v9953
      %v9955 = vpop.f32.mrf.mxu0
      %9956 = vmatprep.mubr.bf16.mxu0 %v8443
      %9957 = vmatmul.mubr.bf16.gmra.mxu0 %v8442
      %v9958 = vpop.f32.mrf.mxu0
      %v9959 = vadd.f32 %v9750, %v9958
      %v9960 = vpop.f32.mrf.mxu0
      %v9961 = vpop.f32.mrf.mxu0
      %v9962 = vpop.f32.mrf.mxu0
      %9963 = vmatprep.mubr.bf16.mxu0 %v8452
      %9964 = vmatmul.mubr.bf16.gmra.mxu0 %v8451
      %v9965 = vpop.f32.mrf.mxu0
      %v9966 = vadd.f32 %v9757, %v9965
      %v9967 = vpop.f32.mrf.mxu0
      %v9968 = vpop.f32.mrf.mxu0
      %v9969 = vadd.f32 %v9760, %v9968
      %v9970 = vpop.f32.mrf.mxu0
      %9971 = vmatprep.mubr.bf16.mxu0 %v8461
      %9972 = vmatmul.mubr.bf16.gmra.mxu0 %v8460
      %v9973 = vpop.f32.mrf.mxu0
      %v9974 = vpop.f32.mrf.mxu0
      %v9975 = vpop.f32.mrf.mxu0
      %v9976 = vadd.f32 %v9767, %v9975
      %v9977 = vpop.f32.mrf.mxu0
      %9978 = vmatprep.mubr.bf16.mxu0 %v8470
      %9979 = vmatmul.mubr.bf16.gmra.mxu0 %v8469
      %v9980 = vpop.f32.mrf.mxu0
      %v9981 = vadd.f32 %v9772, %v9980
      %v9982 = vpop.f32.mrf.mxu0
      %v9983 = vpop.f32.mrf.mxu0
      %v9984 = vpop.f32.mrf.mxu0
      %9985 = vmatprep.mubr.bf16.mxu0 %v8479
      %9986 = vmatmul.mubr.bf16.gmra.mxu0 %v8478
      %v9987 = vpop.f32.mrf.mxu0
      %v9988 = vadd.f32 %v9779, %v9987
      %v9989 = vpop.f32.mrf.mxu0
      %v9990 = vpop.f32.mrf.mxu0
      %v9991 = vadd.f32 %v9782, %v9990
      %v9992 = vpop.f32.mrf.mxu0
      %9993 = vmatprep.mubr.bf16.mxu0 %v8488
      %9994 = vmatmul.mubr.bf16.gmra.mxu0 %v8487
      %v9995 = vpop.f32.mrf.mxu0
      %v9996 = vpop.f32.mrf.mxu0
      %v9997 = vpop.f32.mrf.mxu0
      %v9998 = vadd.f32 %v9789, %v9997
      %v9999 = vpop.f32.mrf.mxu0
      %10000 = vmatprep.mubr.bf16.mxu0 %v8497
      %10001 = vmatmul.mubr.bf16.gmra.mxu0 %v8496
      %v10002 = vpop.f32.mrf.mxu0
      %v10003 = vadd.f32 %v9794, %v10002
      %v10004 = vpop.f32.mrf.mxu0
      %v10005 = vpop.f32.mrf.mxu0
      %v10006 = vpop.f32.mrf.mxu0
      %10007 = vmatprep.mubr.bf16.mxu0 %v8506
      %10008 = vmatmul.mubr.bf16.gmra.mxu0 %v8505
      %v10009 = vpop.f32.mrf.mxu0
      %v10010 = vadd.f32 %v9801, %v10009
      %v10011 = vpop.f32.mrf.mxu0
      %v10012 = vpop.f32.mrf.mxu0
      %v10013 = vadd.f32 %v9804, %v10012
      %v10014 = vpop.f32.mrf.mxu0
      %10015 = vmatprep.mubr.bf16.mxu0 %v8515
      %10016 = vmatmul.mubr.bf16.gmra.mxu0 %v8514
      %v10017 = vpop.f32.mrf.mxu0
      %v10018 = vpop.f32.mrf.mxu0
      %v10019 = vpop.f32.mrf.mxu0
      %v10020 = vadd.f32 %v9811, %v10019
      %v10021 = vpop.f32.mrf.mxu0
      %10022 = vmatprep.mubr.bf16.mxu0 %v8524
      %10023 = vmatmul.mubr.bf16.gmra.mxu0 %v8523
      %v10024 = vpop.f32.mrf.mxu0
      %v10025 = vadd.f32 %v9816, %v10024
      %v10026 = vpop.f32.mrf.mxu0
      %v10027 = vpop.f32.mrf.mxu0
      %v10028 = vpop.f32.mrf.mxu0
      %10029 = vmatprep.mubr.bf16.mxu0 %v8533
      %10030 = vmatmul.mubr.bf16.gmra.mxu0 %v8532
      %v10031 = vpop.f32.mrf.mxu0
      %v10032 = vadd.f32 %v9823, %v10031
      %v10033 = vpop.f32.mrf.mxu0
      %v10034 = vpop.f32.mrf.mxu0
      %v10035 = vadd.f32 %v9826, %v10034
      %v10036 = vpop.f32.mrf.mxu0
      %10037 = vmatprep.mubr.bf16.mxu0 %v8542
      %10038 = vmatmul.mubr.bf16.gmra.mxu0 %v8541
      %v10039 = vpop.f32.mrf.mxu0
      %v10040 = vpop.f32.mrf.mxu0
      %v10041 = vpop.f32.mrf.mxu0
      %v10042 = vadd.f32 %v9833, %v10041
      %v10043 = vpop.f32.mrf.mxu0
      %10044 = vmatprep.mubr.bf16.mxu0 %v8551
      %10045 = vmatmul.mubr.bf16.gmra.mxu0 %v8550
      %v10046 = vpop.f32.mrf.mxu0
      %v10047 = vadd.f32 %v9838, %v10046
      %v10048 = vpop.f32.mrf.mxu0
      %v10049 = vpop.f32.mrf.mxu0
      %v10050 = vpop.f32.mrf.mxu0
      %10051 = vmatprep.mubr.bf16.mxu0 %v8560
      %10052 = vmatmul.mubr.bf16.gmra.mxu0 %v8559
      %v10053 = vpop.f32.mrf.mxu0
      %v10054 = vadd.f32 %v9845, %v10053
      %v10055 = vpop.f32.mrf.mxu0
      %v10056 = vpop.f32.mrf.mxu0
      %v10057 = vadd.f32 %v9848, %v10056
      %v10058 = vpop.f32.mrf.mxu0
      %10059 = vmatprep.mubr.bf16.mxu0 %v8569
      %10060 = vmatmul.mubr.bf16.gmra.mxu0 %v8568
      %v10061 = vpop.f32.mrf.mxu0
      %v10062 = vpop.f32.mrf.mxu0
      %v10063 = vpop.f32.mrf.mxu0
      %v10064 = vadd.f32 %v9855, %v10063
      %v10065 = vpop.f32.mrf.mxu0
      %10066 = vmatprep.mubr.bf16.mxu0 %v8578
      %10067 = vmatmul.mubr.bf16.gmra.mxu0 %v8577
      %v10068 = vpop.f32.mrf.mxu0
      %v10069 = vadd.f32 %v9860, %v10068
      %v10070 = vpop.f32.mrf.mxu0
      %v10071 = vpop.f32.mrf.mxu0
      %v10072 = vpop.f32.mrf.mxu0
      %10073 = vmatprep.mubr.bf16.mxu0 %v8587
      %10074 = vmatmul.mubr.bf16.gmra.mxu0 %v8586
      %v10075 = vpop.f32.mrf.mxu0
      %v10076 = vadd.f32 %v9867, %v10075
      %v10077 = vpop.f32.mrf.mxu0
      %v10078 = vpop.f32.mrf.mxu0
      %v10079 = vadd.f32 %v9870, %v10078
      %v10080 = vpop.f32.mrf.mxu0
      %10081 = vmatprep.mubr.bf16.mxu0 %v8596
      %10082 = vmatmul.mubr.bf16.gmra.mxu0 %v8595
      %v10083 = vpop.f32.mrf.mxu0
      %v10084 = vpop.f32.mrf.mxu0
      %v10085 = vpop.f32.mrf.mxu0
      %v10086 = vadd.f32 %v9877, %v10085
      %v10087 = vpop.f32.mrf.mxu0
      %10088 = vmatprep.mubr.bf16.mxu0 %v8605
      %10089 = vmatmul.mubr.bf16.gmra.mxu0 %v8604
      %v10090 = vpop.f32.mrf.mxu0
      %v10091 = vadd.f32 %v9882, %v10090
      %v10092 = vpop.f32.mrf.mxu0
      %v10093 = vpop.f32.mrf.mxu0
      %v10094 = vpop.f32.mrf.mxu0
      %10095 = vmatprep.mubr.bf16.mxu0 %v8614
      %10096 = vmatmul.mubr.bf16.gmra.mxu0 %v8613
      %v10097 = vpop.f32.mrf.mxu0
      %v10098 = vadd.f32 %v9889, %v10097
      %v10099 = vpop.f32.mrf.mxu0
      %v10100 = vpop.f32.mrf.mxu0
      %v10101 = vadd.f32 %v9892, %v10100
      %v10102 = vpop.f32.mrf.mxu0
      %10103 = vmatprep.mubr.bf16.mxu0 %v8623
      %10104 = vmatmul.mubr.bf16.gmra.mxu0 %v8622
      %v10105 = vpop.f32.mrf.mxu0
      %v10106 = vpop.f32.mrf.mxu0
      %v10107 = vpop.f32.mrf.mxu0
      %v10108 = vadd.f32 %v9899, %v10107
      %v10109 = vpop.f32.mrf.mxu0
      %10110 = vmatprep.mubr.bf16.mxu0 %v8632
      %10111 = vmatmul.mubr.bf16.gmra.mxu0 %v8631
      %v10112 = vpop.f32.mrf.mxu0
      %v10113 = vadd.f32 %v9904, %v10112
      %v10114 = vpop.f32.mrf.mxu0
      %v10115 = vpop.f32.mrf.mxu0
      %v10116 = vpop.f32.mrf.mxu0
      %10117 = vdwg.mxu0
      %10118 = vmatprep.subr.bf16.mxu0 0
      %10119 = vmatpush1.bf16.msra.mxu0 %v9209
      %10120 = vmatprep.subr.bf16.mxu0 0
      %10121 = vmatpush1.bf16.msra.mxu0 %v9208
      %10122 = vmatprep.subr.bf16.mxu0 0
      %10123 = vmatpush1.bf16.msra.mxu0 %v9207
      %10124 = vmatprep.subr.bf16.mxu0 0
      %10125 = vmatpush1.bf16.msra.mxu0 %v9206
      %10126 = vmatprep.subr.bf16.mxu0 0
      %10127 = vmatpush1.bf16.msra.mxu0 %v9205
      %10128 = vmatprep.subr.bf16.mxu0 0
      %10129 = vmatpush1.bf16.msra.mxu0 %v9204
      %10130 = vmatprep.subr.bf16.mxu0 0
      %10131 = vmatpush1.bf16.msra.mxu0 %v9203
      %10132 = vmatprep.subr.bf16.mxu0 0
      %10133 = vmatpush1.bf16.msra.mxu0 %v9202
      %10134 = vmatprep.subr.bf16.mxu0 0
      %10135 = vmatpush2.bf16.msra.mxu0 0
      %10136 = vmatprep.subr.bf16.mxu0 0
      %10137 = vmatpush2.bf16.msra.mxu0 0
      %10138 = vmatprep.subr.bf16.mxu0 0
      %10139 = vmatpush2.bf16.msra.mxu0 0
      %10140 = vmatprep.subr.bf16.mxu0 0
      %10141 = vmatpush2.bf16.msra.mxu0 0
      %10142 = vmatprep.subr.bf16.mxu0 0
      %10143 = vmatpush2.bf16.msra.mxu0 0
      %10144 = vmatprep.subr.bf16.mxu0 0
      %10145 = vmatpush2.bf16.msra.mxu0 0
      %10146 = vmatprep.subr.bf16.mxu0 0
      %10147 = vmatpush2.bf16.msra.mxu0 0
      %10148 = vmatprep.subr.bf16.mxu0 0
      %10149 = vmatpush2.bf16.msra.mxu0 0
      %10150 = vmatprep.mubr.bf16.mxu0 0
      %10151 = vmatmul.mubr.bf16.gmra.mxu0 %v8426
      %v10152 = vpop.f32.mrf.mxu0
      %v10153 = vadd.f32 %v9944, %v10152
      %v10154 = vpop.f32.mrf.mxu0
      %v10155 = vpop.f32.mrf.mxu0
      %v10156 = vadd.f32 %v9947, %v10155
      %v10157 = vpop.f32.mrf.mxu0
      %10158 = vmatprep.mubr.bf16.mxu0 0
      %10159 = vmatmul.mubr.bf16.gmra.mxu0 %v8435
      %v10160 = vpop.f32.mrf.mxu0
      %v10161 = vpop.f32.mrf.mxu0
      %v10162 = vpop.f32.mrf.mxu0
      %v10163 = vadd.f32 %v9954, %v10162
      %v10164 = vpop.f32.mrf.mxu0
      %10165 = vmatprep.mubr.bf16.mxu0 0
      %10166 = vmatmul.mubr.bf16.gmra.mxu0 %v8444
      %v10167 = vpop.f32.mrf.mxu0
      %v10168 = vadd.f32 %v9959, %v10167
      %v10169 = vpop.f32.mrf.mxu0
      %v10170 = vpop.f32.mrf.mxu0
      %v10171 = vpop.f32.mrf.mxu0
      %10172 = vmatprep.mubr.bf16.mxu0 0
      %10173 = vmatmul.mubr.bf16.gmra.mxu0 %v8453
      %v10174 = vpop.f32.mrf.mxu0
      %v10175 = vadd.f32 %v9966, %v10174
      %v10176 = vpop.f32.mrf.mxu0
      %v10177 = vpop.f32.mrf.mxu0
      %v10178 = vadd.f32 %v9969, %v10177
      %v10179 = vpop.f32.mrf.mxu0
      %10180 = vmatprep.mubr.bf16.mxu0 0
      %10181 = vmatmul.mubr.bf16.gmra.mxu0 %v8462
      %v10182 = vpop.f32.mrf.mxu0
      %v10183 = vpop.f32.mrf.mxu0
      %v10184 = vpop.f32.mrf.mxu0
      %v10185 = vadd.f32 %v9976, %v10184
      %v10186 = vpop.f32.mrf.mxu0
      %10187 = vmatprep.mubr.bf16.mxu0 0
      %10188 = vmatmul.mubr.bf16.gmra.mxu0 %v8471
      %v10189 = vpop.f32.mrf.mxu0
      %v10190 = vadd.f32 %v9981, %v10189
      %v10191 = vpop.f32.mrf.mxu0
      %v10192 = vpop.f32.mrf.mxu0
      %v10193 = vpop.f32.mrf.mxu0
      %10194 = vmatprep.mubr.bf16.mxu0 0
      %10195 = vmatmul.mubr.bf16.gmra.mxu0 %v8480
      %v10196 = vpop.f32.mrf.mxu0
      %v10197 = vadd.f32 %v9988, %v10196
      %v10198 = vpop.f32.mrf.mxu0
      %v10199 = vpop.f32.mrf.mxu0
      %v10200 = vadd.f32 %v9991, %v10199
      %v10201 = vpop.f32.mrf.mxu0
      %10202 = vmatprep.mubr.bf16.mxu0 0
      %10203 = vmatmul.mubr.bf16.gmra.mxu0 %v8489
      %v10204 = vpop.f32.mrf.mxu0
      %v10205 = vpop.f32.mrf.mxu0
      %v10206 = vpop.f32.mrf.mxu0
      %v10207 = vadd.f32 %v9998, %v10206
      %v10208 = vpop.f32.mrf.mxu0
      %10209 = vmatprep.mubr.bf16.mxu0 0
      %10210 = vmatmul.mubr.bf16.gmra.mxu0 %v8498
      %v10211 = vpop.f32.mrf.mxu0
      %v10212 = vadd.f32 %v10003, %v10211
      %v10213 = vpop.f32.mrf.mxu0
      %v10214 = vpop.f32.mrf.mxu0
      %v10215 = vpop.f32.mrf.mxu0
      %10216 = vmatprep.mubr.bf16.mxu0 0
      %10217 = vmatmul.mubr.bf16.gmra.mxu0 %v8507
      %v10218 = vpop.f32.mrf.mxu0
      %v10219 = vadd.f32 %v10010, %v10218
      %v10220 = vpop.f32.mrf.mxu0
      %v10221 = vpop.f32.mrf.mxu0
      %v10222 = vadd.f32 %v10013, %v10221
      %v10223 = vpop.f32.mrf.mxu0
      %10224 = vmatprep.mubr.bf16.mxu0 0
      %10225 = vmatmul.mubr.bf16.gmra.mxu0 %v8516
      %v10226 = vpop.f32.mrf.mxu0
      %v10227 = vpop.f32.mrf.mxu0
      %v10228 = vpop.f32.mrf.mxu0
      %v10229 = vadd.f32 %v10020, %v10228
      %v10230 = vpop.f32.mrf.mxu0
      %10231 = vmatprep.mubr.bf16.mxu0 0
      %10232 = vmatmul.mubr.bf16.gmra.mxu0 %v8525
      %v10233 = vpop.f32.mrf.mxu0
      %v10234 = vadd.f32 %v10025, %v10233
      %v10235 = vpop.f32.mrf.mxu0
      %v10236 = vpop.f32.mrf.mxu0
      %v10237 = vpop.f32.mrf.mxu0
      %10238 = vmatprep.mubr.bf16.mxu0 0
      %10239 = vmatmul.mubr.bf16.gmra.mxu0 %v8534
      %v10240 = vpop.f32.mrf.mxu0
      %v10241 = vadd.f32 %v10032, %v10240
      %v10242 = vpop.f32.mrf.mxu0
      %v10243 = vpop.f32.mrf.mxu0
      %v10244 = vadd.f32 %v10035, %v10243
      %v10245 = vpop.f32.mrf.mxu0
      %10246 = vmatprep.mubr.bf16.mxu0 0
      %10247 = vmatmul.mubr.bf16.gmra.mxu0 %v8543
      %v10248 = vpop.f32.mrf.mxu0
      %v10249 = vpop.f32.mrf.mxu0
      %v10250 = vpop.f32.mrf.mxu0
      %v10251 = vadd.f32 %v10042, %v10250
      %v10252 = vpop.f32.mrf.mxu0
      %10253 = vmatprep.mubr.bf16.mxu0 0
      %10254 = vmatmul.mubr.bf16.gmra.mxu0 %v8552
      %v10255 = vpop.f32.mrf.mxu0
      %v10256 = vadd.f32 %v10047, %v10255
      %v10257 = vpop.f32.mrf.mxu0
      %v10258 = vpop.f32.mrf.mxu0
      %v10259 = vpop.f32.mrf.mxu0
      %10260 = vmatprep.mubr.bf16.mxu0 0
      %10261 = vmatmul.mubr.bf16.gmra.mxu0 %v8561
      %v10262 = vpop.f32.mrf.mxu0
      %v10263 = vadd.f32 %v10054, %v10262
      %v10264 = vpop.f32.mrf.mxu0
      %v10265 = vpop.f32.mrf.mxu0
      %v10266 = vadd.f32 %v10057, %v10265
      %v10267 = vpop.f32.mrf.mxu0
      %10268 = vmatprep.mubr.bf16.mxu0 0
      %10269 = vmatmul.mubr.bf16.gmra.mxu0 %v8570
      %v10270 = vpop.f32.mrf.mxu0
      %v10271 = vpop.f32.mrf.mxu0
      %v10272 = vpop.f32.mrf.mxu0
      %v10273 = vadd.f32 %v10064, %v10272
      %v10274 = vpop.f32.mrf.mxu0
      %10275 = vmatprep.mubr.bf16.mxu0 0
      %10276 = vmatmul.mubr.bf16.gmra.mxu0 %v8579
      %v10277 = vpop.f32.mrf.mxu0
      %v10278 = vadd.f32 %v10069, %v10277
      %v10279 = vpop.f32.mrf.mxu0
      %v10280 = vpop.f32.mrf.mxu0
      %v10281 = vpop.f32.mrf.mxu0
      %10282 = vmatprep.mubr.bf16.mxu0 0
      %10283 = vmatmul.mubr.bf16.gmra.mxu0 %v8588
      %v10284 = vpop.f32.mrf.mxu0
      %v10285 = vadd.f32 %v10076, %v10284
      %v10286 = vpop.f32.mrf.mxu0
      %v10287 = vpop.f32.mrf.mxu0
      %v10288 = vadd.f32 %v10079, %v10287
      %v10289 = vpop.f32.mrf.mxu0
      %10290 = vmatprep.mubr.bf16.mxu0 0
      %10291 = vmatmul.mubr.bf16.gmra.mxu0 %v8597
      %v10292 = vpop.f32.mrf.mxu0
      %v10293 = vpop.f32.mrf.mxu0
      %v10294 = vpop.f32.mrf.mxu0
      %v10295 = vadd.f32 %v10086, %v10294
      %v10296 = vpop.f32.mrf.mxu0
      %10297 = vmatprep.mubr.bf16.mxu0 0
      %10298 = vmatmul.mubr.bf16.gmra.mxu0 %v8606
      %v10299 = vpop.f32.mrf.mxu0
      %v10300 = vadd.f32 %v10091, %v10299
      %v10301 = vpop.f32.mrf.mxu0
      %v10302 = vpop.f32.mrf.mxu0
      %v10303 = vpop.f32.mrf.mxu0
      %10304 = vmatprep.mubr.bf16.mxu0 0
      %10305 = vmatmul.mubr.bf16.gmra.mxu0 %v8615
      %v10306 = vpop.f32.mrf.mxu0
      %v10307 = vadd.f32 %v10098, %v10306
      %v10308 = vpop.f32.mrf.mxu0
      %v10309 = vpop.f32.mrf.mxu0
      %v10310 = vadd.f32 %v10101, %v10309
      %v10311 = vpop.f32.mrf.mxu0
      %10312 = vmatprep.mubr.bf16.mxu0 0
      %10313 = vmatmul.mubr.bf16.gmra.mxu0 %v8624
      %v10314 = vpop.f32.mrf.mxu0
      %v10315 = vpop.f32.mrf.mxu0
      %v10316 = vpop.f32.mrf.mxu0
      %v10317 = vadd.f32 %v10108, %v10316
      %v10318 = vpop.f32.mrf.mxu0
      %10319 = vmatprep.mubr.bf16.mxu0 0
      %10320 = vmatmul.mubr.bf16.gmra.mxu0 %v8633
      %v10321 = vpop.f32.mrf.mxu0
      %v10322 = vadd.f32 %v10113, %v10321
      %v10323 = vpop.f32.mrf.mxu0
      %v10324 = vpop.f32.mrf.mxu0
      %v10325 = vpop.f32.mrf.mxu0
      %10326 = vdwg.mxu0
      %v10327 = vld [vmem:[%s4] sm:$0x1]
      %v10329 = vlaneseq
      %v10330 = vshrl.u32 %v10329, 7
      %v10331 = vsub.s32 0, %v10330
      %v10332 = vrot.slane %v10327, %v10331
      %v10334 = vadd.f32 %v10153, %v10332
      %v10335 = vadd.f32 %v10156, %v10332
      %v10336 = vadd.f32 %v10163, %v10332
      %v10337 = vadd.f32 %v10168, %v10332
      %v10338 = vadd.f32 %v10175, %v10332
      %v10339 = vadd.f32 %v10178, %v10332
      %v10340 = vadd.f32 %v10185, %v10332
      %v10341 = vadd.f32 %v10190, %v10332
      %v10342 = vadd.f32 %v10197, %v10332
      %v10343 = vadd.f32 %v10200, %v10332
      %v10344 = vadd.f32 %v10207, %v10332
      %v10345 = vadd.f32 %v10212, %v10332
      %v10346 = vadd.f32 %v10219, %v10332
      %v10347 = vadd.f32 %v10222, %v10332
      %v10348 = vadd.f32 %v10229, %v10332
      %v10349 = vadd.f32 %v10234, %v10332
      %v10350 = vadd.f32 %v10241, %v10332
      %v10351 = vadd.f32 %v10244, %v10332
      %v10352 = vadd.f32 %v10251, %v10332
      %v10353 = vadd.f32 %v10256, %v10332
      %v10354 = vadd.f32 %v10263, %v10332
      %v10355 = vadd.f32 %v10266, %v10332
      %v10356 = vadd.f32 %v10273, %v10332
      %v10357 = vadd.f32 %v10278, %v10332
      %v10358 = vadd.f32 %v10285, %v10332
      %v10359 = vadd.f32 %v10288, %v10332
      %v10360 = vadd.f32 %v10295, %v10332
      %v10361 = vadd.f32 %v10300, %v10332
      %v10362 = vadd.f32 %v10307, %v10332
      %v10363 = vadd.f32 %v10310, %v10332
      %v10364 = vadd.f32 %v10317, %v10332
      %v10365 = vadd.f32 %v10322, %v10332
      %v10366 = vld [vmem:[%s219] sm:$0xf]
      %v10367 = vld [vmem:[%s219 + $0x4] sm:$0xf]
      %v10368 = vld [vmem:[%s219 + $0x8] sm:$0xf]
      %v10369 = vld [vmem:[%s219 + $0xc] sm:$0xf]
      %v10370 = vld [vmem:[%s219 + $0x10] sm:$0xf]
      %v10371 = vld [vmem:[%s219 + $0x14] sm:$0xf]
      %v10372 = vld [vmem:[%s219 + $0x18] sm:$0xf]
      %v10373 = vld [vmem:[%s219 + $0x1c] sm:$0xf]
      %v10374 = vld [vmem:[%s219 + $0x20] sm:$0xf]
      %v10375 = vld [vmem:[%s219 + $0x24] sm:$0xf]
      %v10376 = vld [vmem:[%s219 + $0x28] sm:$0xf]
      %v10377 = vld [vmem:[%s219 + $0x2c] sm:$0xf]
      %v10378 = vld [vmem:[%s219 + $0x30] sm:$0xf]
      %v10379 = vld [vmem:[%s219 + $0x34] sm:$0xf]
      %v10380 = vld [vmem:[%s219 + $0x38] sm:$0xf]
      %v10381 = vld [vmem:[%s219 + $0x3c] sm:$0xf]
      %v10382 = vld [vmem:[%s219 + $0x40] sm:$0xf]
      %v10383 = vld [vmem:[%s219 + $0x44] sm:$0xf]
      %v10384 = vld [vmem:[%s219 + $0x48] sm:$0xf]
      %v10385 = vld [vmem:[%s219 + $0x4c] sm:$0xf]
      %v10386 = vld [vmem:[%s219 + $0x50] sm:$0xf]
      %v10387 = vld [vmem:[%s219 + $0x54] sm:$0xf]
      %v10388 = vld [vmem:[%s219 + $0x58] sm:$0xf]
      %v10389 = vld [vmem:[%s219 + $0x5c] sm:$0xf]
      %v10390 = vld [vmem:[%s219 + $0x60] sm:$0xf]
      %v10391 = vld [vmem:[%s219 + $0x64] sm:$0xf]
      %v10392 = vld [vmem:[%s219 + $0x68] sm:$0xf]
      %v10393 = vld [vmem:[%s219 + $0x6c] sm:$0xf]
      %v10394 = vld [vmem:[%s219 + $0x70] sm:$0xf]
      %v10395 = vld [vmem:[%s219 + $0x74] sm:$0xf]
      %v10396 = vld [vmem:[%s219 + $0x78] sm:$0xf]
      %v10397 = vld [vmem:[%s219 + $0x7c] sm:$0xf]
      %v10398 = vunpack.c.l.bf16 %v10366
      %v10399 = vunpack.c.l.bf16 %v10367
      %v10400 = vunpack.c.l.bf16 %v10368
      %v10401 = vunpack.c.l.bf16 %v10369
      %v10402 = vunpack.c.l.bf16 %v10370
      %v10403 = vunpack.c.l.bf16 %v10371
      %v10404 = vunpack.c.l.bf16 %v10372
      %v10405 = vunpack.c.l.bf16 %v10373
      %v10406 = vunpack.c.l.bf16 %v10374
      %v10407 = vunpack.c.l.bf16 %v10375
      %v10408 = vunpack.c.l.bf16 %v10376
      %v10409 = vunpack.c.l.bf16 %v10377
      %v10410 = vunpack.c.l.bf16 %v10378
      %v10411 = vunpack.c.l.bf16 %v10379
      %v10412 = vunpack.c.l.bf16 %v10380
      %v10413 = vunpack.c.l.bf16 %v10381
      %v10414 = vunpack.c.l.bf16 %v10382
      %v10415 = vunpack.c.l.bf16 %v10383
      %v10416 = vunpack.c.l.bf16 %v10384
      %v10417 = vunpack.c.l.bf16 %v10385
      %v10418 = vunpack.c.l.bf16 %v10386
      %v10419 = vunpack.c.l.bf16 %v10387
      %v10420 = vunpack.c.l.bf16 %v10388
      %v10421 = vunpack.c.l.bf16 %v10389
      %v10422 = vunpack.c.l.bf16 %v10390
      %v10423 = vunpack.c.l.bf16 %v10391
      %v10424 = vunpack.c.l.bf16 %v10392
      %v10425 = vunpack.c.l.bf16 %v10393
      %v10426 = vunpack.c.l.bf16 %v10394
      %v10427 = vunpack.c.l.bf16 %v10395
      %v10428 = vunpack.c.l.bf16 %v10396
      %v10429 = vunpack.c.l.bf16 %v10397
      %v10430 = vadd.f32 %v10334, %v10398
      %v10431 = vadd.f32 %v10335, %v10399
      %v10432 = vadd.f32 %v10336, %v10400
      %v10433 = vadd.f32 %v10337, %v10401
      %v10434 = vadd.f32 %v10338, %v10402
      %v10435 = vadd.f32 %v10339, %v10403
      %v10436 = vadd.f32 %v10340, %v10404
      %v10437 = vadd.f32 %v10341, %v10405
      %v10438 = vadd.f32 %v10342, %v10406
      %v10439 = vadd.f32 %v10343, %v10407
      %v10440 = vadd.f32 %v10344, %v10408
      %v10441 = vadd.f32 %v10345, %v10409
      %v10442 = vadd.f32 %v10346, %v10410
      %v10443 = vadd.f32 %v10347, %v10411
      %v10444 = vadd.f32 %v10348, %v10412
      %v10445 = vadd.f32 %v10349, %v10413
      %v10446 = vadd.f32 %v10350, %v10414
      %v10447 = vadd.f32 %v10351, %v10415
      %v10448 = vadd.f32 %v10352, %v10416
      %v10449 = vadd.f32 %v10353, %v10417
      %v10450 = vadd.f32 %v10354, %v10418
      %v10451 = vadd.f32 %v10355, %v10419
      %v10452 = vadd.f32 %v10356, %v10420
      %v10453 = vadd.f32 %v10357, %v10421
      %v10454 = vadd.f32 %v10358, %v10422
      %v10455 = vadd.f32 %v10359, %v10423
      %v10456 = vadd.f32 %v10360, %v10424
      %v10457 = vadd.f32 %v10361, %v10425
      %v10458 = vadd.f32 %v10362, %v10426
      %v10459 = vadd.f32 %v10363, %v10427
      %v10460 = vadd.f32 %v10364, %v10428
      %v10461 = vadd.f32 %v10365, %v10429
      %v10462 = vmax.f32 %v10430, 0.0
      %v10463 = vmax.f32 %v10431, 0.0
      %v10464 = vmax.f32 %v10432, 0.0
      %v10465 = vmax.f32 %v10433, 0.0
      %v10466 = vmax.f32 %v10434, 0.0
      %v10467 = vmax.f32 %v10435, 0.0
      %v10468 = vmax.f32 %v10436, 0.0
      %v10469 = vmax.f32 %v10437, 0.0
      %v10470 = vmax.f32 %v10438, 0.0
      %v10471 = vmax.f32 %v10439, 0.0
      %v10472 = vmax.f32 %v10440, 0.0
      %v10473 = vmax.f32 %v10441, 0.0
      %v10474 = vmax.f32 %v10442, 0.0
      %v10475 = vmax.f32 %v10443, 0.0
      %v10476 = vmax.f32 %v10444, 0.0
      %v10477 = vmax.f32 %v10445, 0.0
      %v10478 = vmax.f32 %v10446, 0.0
      %v10479 = vmax.f32 %v10447, 0.0
      %v10480 = vmax.f32 %v10448, 0.0
      %v10481 = vmax.f32 %v10449, 0.0
      %v10482 = vmax.f32 %v10450, 0.0
      %v10483 = vmax.f32 %v10451, 0.0
      %v10484 = vmax.f32 %v10452, 0.0
      %v10485 = vmax.f32 %v10453, 0.0
      %v10486 = vmax.f32 %v10454, 0.0
      %v10487 = vmax.f32 %v10455, 0.0
      %v10488 = vmax.f32 %v10456, 0.0
      %v10489 = vmax.f32 %v10457, 0.0
      %v10490 = vmax.f32 %v10458, 0.0
      %v10491 = vmax.f32 %v10459, 0.0
      %v10492 = vmax.f32 %v10460, 0.0
      %v10493 = vmax.f32 %v10461, 0.0
      %v10494 = vpack.c.bf16 %v10463, %v10462
      %v10495 = vpack.c.bf16 %v10465, %v10464
      %v10496 = vpack.c.bf16 %v10467, %v10466
      %v10497 = vpack.c.bf16 %v10469, %v10468
      %v10498 = vpack.c.bf16 %v10471, %v10470
      %v10499 = vpack.c.bf16 %v10473, %v10472
      %v10500 = vpack.c.bf16 %v10475, %v10474
      %v10501 = vpack.c.bf16 %v10477, %v10476
      %v10502 = vpack.c.bf16 %v10479, %v10478
      %v10503 = vpack.c.bf16 %v10481, %v10480
      %v10504 = vpack.c.bf16 %v10483, %v10482
      %v10505 = vpack.c.bf16 %v10485, %v10484
      %v10506 = vpack.c.bf16 %v10487, %v10486
      %v10507 = vpack.c.bf16 %v10489, %v10488
      %v10508 = vpack.c.bf16 %v10491, %v10490
      %v10509 = vpack.c.bf16 %v10493, %v10492
      %v10526 = vunpack.c.l.b16 %v10494
      %v10527 = vunpack.c.h.b16 %v10494
      %v10528 = vunpack.c.l.b16 %v10495
      %v10529 = vunpack.c.h.b16 %v10495
      %v10530 = vunpack.c.l.b16 %v10496
      %v10531 = vunpack.c.h.b16 %v10496
      %v10532 = vunpack.c.l.b16 %v10497
      %v10533 = vunpack.c.h.b16 %v10497
      %v10534 = vunpack.c.l.b16 %v10498
      %v10535 = vunpack.c.h.b16 %v10498
      %v10536 = vunpack.c.l.b16 %v10499
      %v10537 = vunpack.c.h.b16 %v10499
      %v10538 = vunpack.c.l.b16 %v10500
      %v10539 = vunpack.c.h.b16 %v10500
      %v10540 = vunpack.c.l.b16 %v10501
      %v10541 = vunpack.c.h.b16 %v10501
      %v10542 = vunpack.c.l.b16 %v10502
      %v10543 = vunpack.c.h.b16 %v10502
      %v10544 = vunpack.c.l.b16 %v10503
      %v10545 = vunpack.c.h.b16 %v10503
      %v10546 = vunpack.c.l.b16 %v10504
      %v10547 = vunpack.c.h.b16 %v10504
      %v10548 = vunpack.c.l.b16 %v10505
      %v10549 = vunpack.c.h.b16 %v10505
      %v10550 = vunpack.c.l.b16 %v10506
      %v10551 = vunpack.c.h.b16 %v10506
      %v10552 = vunpack.c.l.b16 %v10507
      %v10553 = vunpack.c.h.b16 %v10507
      %v10554 = vunpack.c.l.b16 %v10508
      %v10555 = vunpack.c.h.b16 %v10508
      %v10556 = vunpack.c.l.b16 %v10509
      %v10557 = vunpack.c.h.b16 %v10509
      %v10558 = vpack.c.b16 %v10526, %v10526
      %v10559 = vpack.c.b16 %v10527, %v10527
      %v10560 = vpack.c.b16 %v10528, %v10528
      %v10561 = vpack.c.b16 %v10529, %v10529
      %v10562 = vpack.c.b16 %v10530, %v10530
      %v10563 = vpack.c.b16 %v10531, %v10531
      %v10564 = vpack.c.b16 %v10532, %v10532
      %v10565 = vpack.c.b16 %v10533, %v10533
      %v10566 = vpack.c.b16 %v10534, %v10534
      %v10567 = vpack.c.b16 %v10535, %v10535
      %v10568 = vpack.c.b16 %v10536, %v10536
      %v10569 = vpack.c.b16 %v10537, %v10537
      %v10570 = vpack.c.b16 %v10538, %v10538
      %v10571 = vpack.c.b16 %v10539, %v10539
      %v10572 = vpack.c.b16 %v10540, %v10540
      %v10573 = vpack.c.b16 %v10541, %v10541
      %v10574 = vpack.c.b16 %v10542, %v10542
      %v10575 = vpack.c.b16 %v10543, %v10543
      %v10576 = vpack.c.b16 %v10544, %v10544
      %v10577 = vpack.c.b16 %v10545, %v10545
      %v10578 = vpack.c.b16 %v10546, %v10546
      %v10579 = vpack.c.b16 %v10547, %v10547
      %v10580 = vpack.c.b16 %v10548, %v10548
      %v10581 = vpack.c.b16 %v10549, %v10549
      %v10582 = vpack.c.b16 %v10550, %v10550
      %v10583 = vpack.c.b16 %v10551, %v10551
      %v10584 = vpack.c.b16 %v10552, %v10552
      %v10585 = vpack.c.b16 %v10553, %v10553
      %v10586 = vpack.c.b16 %v10554, %v10554
      %v10587 = vpack.c.b16 %v10555, %v10555
      %v10588 = vpack.c.b16 %v10556, %v10556
      %v10589 = vpack.c.b16 %v10557, %v10557
      %10622 = vst [vmem:[%s224] sm:$0xf] %v10558
      %10623 = vst [vmem:[%s224 + $0x4] sm:$0xf] %v10559
      %10624 = vst [vmem:[%s224 + $0x8] sm:$0xf] %v10560
      %10625 = vst [vmem:[%s224 + $0xc] sm:$0xf] %v10561
      %10626 = vst [vmem:[%s224 + $0x10] sm:$0xf] %v10562
      %10627 = vst [vmem:[%s224 + $0x14] sm:$0xf] %v10563
      %10628 = vst [vmem:[%s224 + $0x18] sm:$0xf] %v10564
      %10629 = vst [vmem:[%s224 + $0x1c] sm:$0xf] %v10565
      %10630 = vst [vmem:[%s224 + $0x20] sm:$0xf] %v10566
      %10631 = vst [vmem:[%s224 + $0x24] sm:$0xf] %v10567
      %10632 = vst [vmem:[%s224 + $0x28] sm:$0xf] %v10568
      %10633 = vst [vmem:[%s224 + $0x2c] sm:$0xf] %v10569
      %10634 = vst [vmem:[%s224 + $0x30] sm:$0xf] %v10570
      %10635 = vst [vmem:[%s224 + $0x34] sm:$0xf] %v10571
      %10636 = vst [vmem:[%s224 + $0x38] sm:$0xf] %v10572
      %10637 = vst [vmem:[%s224 + $0x3c] sm:$0xf] %v10573
      %10638 = vst [vmem:[%s224 + $0x40] sm:$0xf] %v10574
      %10639 = vst [vmem:[%s224 + $0x44] sm:$0xf] %v10575
      %10640 = vst [vmem:[%s224 + $0x48] sm:$0xf] %v10576
      %10641 = vst [vmem:[%s224 + $0x4c] sm:$0xf] %v10577
      %10642 = vst [vmem:[%s224 + $0x50] sm:$0xf] %v10578
      %10643 = vst [vmem:[%s224 + $0x54] sm:$0xf] %v10579
      %10644 = vst [vmem:[%s224 + $0x58] sm:$0xf] %v10580
      %10645 = vst [vmem:[%s224 + $0x5c] sm:$0xf] %v10581
      %10646 = vst [vmem:[%s224 + $0x60] sm:$0xf] %v10582
      %10647 = vst [vmem:[%s224 + $0x64] sm:$0xf] %v10583
      %10648 = vst [vmem:[%s224 + $0x68] sm:$0xf] %v10584
      %10649 = vst [vmem:[%s224 + $0x6c] sm:$0xf] %v10585
      %10650 = vst [vmem:[%s224 + $0x70] sm:$0xf] %v10586
      %10651 = vst [vmem:[%s224 + $0x74] sm:$0xf] %v10587
      %10652 = vst [vmem:[%s224 + $0x78] sm:$0xf] %v10588
      %10653 = vst [vmem:[%s224 + $0x7c] sm:$0xf] %v10589
      %p10654 = scmp.lt.s32.totalorder %s16, 1
      %s10655 = scalar_select %p10654, %s16, 1
      %s10656 = smul.addr %s10655, 32
      %s10657 = smul.addr %s10656, 4
      %s10658 = scalar_lea.vmem %s5, %s10657
      // Predicated region
      $region41: #{basic_block_forward.1} parent=39 // pred_check
        %p10659 = pneg %p144
      $region42: #{basic_block_forward.1} parent=39 // pred_check_branch
        %10661 = sbr.rel (%p10659) target = $region44
      $region43: #{basic_block_forward.1} parent=39 // pred_region
        _
      $region44: #{basic_block_forward.1} parent=39 // pred_fallthru
        _
    $region40: #{basic_block_forward.1} parent=5 // pred_fallthru
      _
    %p10662 = scmp.le.s32.totalorder 2, %s11
    // Predicated region
    $region45: #{basic_block_forward.1} parent=5 // pred_check
      %p10663 = pneg %p10662
    $region46: #{basic_block_forward.1} parent=5 // pred_check_branch
      %10665 = sbr.rel (%p10663) target = $region48
    $region47: #{basic_block_forward.1} parent=5 // pred_region
      %s10666 = ssub.s32 %s11, 2
      // Predicated region
      $region49: #{basic_block_forward.1} parent=47 // pred_check
        %p10667 = pneg %p150
      $region50: #{basic_block_forward.1} parent=47 // pred_check_branch
        %10669 = sbr.rel (%p10667) target = $region52
      $region51: #{basic_block_forward.1} parent=47 // pred_region
        %p10670 = scmp.lt.s32.totalorder %s17, 1
        %s10671 = scalar_select %p10670, %s17, 1
        %s10672 = smul.addr %s10671, 32
        %s10673 = smul.addr %s10672, 4
        %s10674 = scalar_lea.vmem %s5, %s10673
      $region52: #{basic_block_forward.1} parent=47 // pred_fallthru
        _
    $region48: #{basic_block_forward.1} parent=5 // pred_fallthru
      _
  $region6: #{basic_block_forward.1} parent=0 // loop_footer
    %s15 = sadd.s32 1, %s11
  $region7: #{basic_block_forward.1} parent=0 // loop_footer_branch
    %10 = sbr.rel target = $region3
  $region8: #{basic_block_forward.1} parent=0 // loop_exit
    _

</llo_original>
